<compile_context>
chip_gen: v6e
topology: v6e:2x2x1
jax: 0.10.0
libtpu: 0.0.40
codegen_flags: <defaults>
</compile_context>

<pallas_src>
import math

import jax
import jax.numpy as jnp
from jax.experimental import pallas as pl
from jax.experimental.pallas import tpu as pltpu

# ------------------------------ model constants ------------------------------
HIDDEN_SIZE = 32
NUM_LAYERS = 4                                   # output_dim = (L + 1) * H = 160
NUM_HEADS = 4
HEAD_DIM = HIDDEN_SIZE // NUM_HEADS
FFN_DIM = 64
VOCAB = 64
MAX_POS = 64
HIDDEN_DIM1 = 1000
HIDDEN_DIM1_PAD = 1024                           # lane-aligned padding of hidden_dim1
HIDDEN_DIM2 = 40
HIDDEN_DIM2_PAD = 128                            # lane-aligned padding of hidden_dim2
FINAL_SIZE = 1
ADD_FEATURES = 0                                 # args.add_features == 0
OUTPUT_DIM = (NUM_LAYERS + 1) * HIDDEN_SIZE      # 160
OUT_LANES = 128                                  # lane-dense output width


# ============================ fused Pallas kernel =============================
def _fused_forward_kernel(
    ids_ref,        # [T, 1]  int32 token ids for this block
    qbid_ref,       # [T, 1]  int32 local batch id per query row
    kbid_ref,       # [1, 1, T] int32 local batch id per key (or -1 for pad keys)
    pos_ref,        # [T, H]  f32 positional embeddings (block-invariant)
    tok_emb_ref,    # [VOCAB, H] f32
    embg_ref, embb_ref,                           # [1, H]
    wq_ref, bq_ref, wk_ref, bk_ref, wv_ref, bv_ref, wo_ref, bo_ref,
    wf1_ref, bf1_ref, wf2_ref, bf2_ref,
    l1g_ref, l1b_ref, l2g_ref, l2b_ref,
    w1_ref, b1_ref, w2_ref, b2_ref, w3_ref, b3_ref,
    out_ref,        # [T, OUT_LANES] f32, column 0 = sigmoid(fc3) per token (lane-dense)
    acc_ref,        # [T, HIDDEN_DIM1_PAD] f32 VMEM scratch: streamed fc1 accumulator
):
    T = ids_ref.shape[0]
    H = tok_emb_ref.shape[1]
    L = wq_ref.shape[0]

    def layer_norm(x, g, b, eps=1e-12):
        mu = jnp.mean(x, axis=-1, keepdims=True)
        var = jnp.mean(jnp.square(x - mu), axis=-1, keepdims=True)
        return (x - mu) * jax.lax.rsqrt(var + eps) * g + b

    def gelu(x):  # tanh approximation (EUP-friendly)
        c = 0.7978845608028654
        return 0.5 * x * (1.0 + jnp.tanh(c * (x + 0.044715 * x * x * x)))

    # ---- embeddings: token lookup as a one-hot MXU matmul (no in-kernel gather) ----
    ids = ids_ref[...]                                                    # [T, 1]
    onehot = (jax.lax.broadcasted_iota(jnp.int32, (T, VOCAB), 1) == ids).astype(jnp.float32)
    h = jnp.dot(onehot, tok_emb_ref[...], preferred_element_type=jnp.float32) + pos_ref[...]
    h = layer_norm(h, embg_ref[...], embb_ref[...])

    # ---- block-diagonal attention bias rebuilt in-kernel (no [M,M] HBM input) ----
    # key j attendable from query i  iff  kbid[j] == qbid[i]  (kbid == -1 for pad keys)
    bias = jnp.where(qbid_ref[...] == kbid_ref[0], 0.0, -1e9).astype(jnp.float32)  # [T, T]

    lane = jax.lax.broadcasted_iota(jnp.int32, (1, H), 1)
    scale = 1.0 / math.sqrt(float(HEAD_DIM))

    # ---- streamed fc1 "concat": layer-0 (embedding) hidden-state contribution ----
    acc_ref[...] = jnp.dot(h.astype(jnp.bfloat16), w1_ref[pl.ds(0, H), :],
                           preferred_element_type=jnp.float32)

    # ---- 4 transformer layers, hidden state kept resident across layers ----
    for l in range(L):
        hb = h.astype(jnp.bfloat16)                                       # bf16 MXU operands
        q = jnp.dot(hb, wq_ref[l], preferred_element_type=jnp.float32) + bq_ref[l]
        k = jnp.dot(hb, wk_ref[l], preferred_element_type=jnp.float32) + bk_ref[l]
        v = jnp.dot(hb, wv_ref[l], preferred_element_type=jnp.float32) + bv_ref[l]
        ctx = jnp.zeros((T, H), jnp.float32)
        for hd in range(NUM_HEADS):
            # per-head lane mask; mask ONLY q (zero lanes kill cross-head terms),
            # so the same k operand/layout is reused by all 4 heads.
            mh = ((lane >= hd * HEAD_DIM) & (lane < (hd + 1) * HEAD_DIM)).astype(jnp.float32)
            s = jax.lax.dot_general(q * mh, k, (((1,), (1,)), ((), ())),
                                    preferred_element_type=jnp.float32)   # [T, T]
            s = s * scale + bias
            s = s - jnp.max(s, axis=-1, keepdims=True)
            e = jnp.exp(s)
            a = e * pl.reciprocal(jnp.sum(e, axis=-1, keepdims=True), approx=True)
            ctx = ctx + jnp.dot(a, v * mh, preferred_element_type=jnp.float32)
        attn_out = jnp.dot(ctx.astype(jnp.bfloat16), wo_ref[l],
                           preferred_element_type=jnp.float32) + bo_ref[l]
        h = layer_norm(h + attn_out, l1g_ref[l], l1b_ref[l])
        ff = gelu(jnp.dot(h.astype(jnp.bfloat16), wf1_ref[l],
                          preferred_element_type=jnp.float32) + bf1_ref[l])
        ff = jnp.dot(ff.astype(jnp.bfloat16), wf2_ref[l],
                     preferred_element_type=jnp.float32) + bf2_ref[l]
        h = layer_norm(h + ff, l2g_ref[l], l2b_ref[l])
        # stream this layer's slice of torch.cat(hidden_states, dim=2) @ fc1
        acc_ref[...] += jnp.dot(h.astype(jnp.bfloat16),
                                w1_ref[pl.ds((l + 1) * H, H), :],
                                preferred_element_type=jnp.float32)

    # ---- MLP head: fc1 -> relu -> fc2 -> relu -> fc3 -> sigmoid ----
    h1 = jnp.maximum(acc_ref[...] + b1_ref[...], 0.0)                     # relu(fc1)
    h2 = jnp.dot(h1.astype(jnp.bfloat16), w2_ref[...],
                 preferred_element_type=jnp.float32) + b2_ref[...]
    h2 = jnp.maximum(h2, 0.0)                                             # relu(fc2)
    # fc3 has a single output column: VPU multiply + lane reduce (no N=1 MXU dot)
    z = jnp.sum(h2 * w3_ref[...], axis=-1, keepdims=True) + b3_ref[...]   # [T, 1]
    probs = 1.0 / (1.0 + jnp.exp(-z))                                     # sigmoid(fc3)

    # lane-dense writeback; the wrapper reads column 0
    out_ref[...] = jnp.broadcast_to(probs, (T, out_ref.shape[1]))


# ========================== deterministic parameters ==========================
def _norm(key, shape, scale=0.02):
    return (scale * jax.random.normal(key, shape)).astype(jnp.float32)


def init_params(key):
    k_tok, k_pos, k_attn, k_ffn, k_head = jax.random.split(key, 5)
    L, H, F = NUM_LAYERS, HIDDEN_SIZE, FFN_DIM
    ka = jax.random.split(k_attn, 4)
    kf = jax.random.split(k_ffn, 2)
    kh = jax.random.split(k_head, 3)

    enc = dict(
        tok_emb=_norm(k_tok, (VOCAB, H)),
        pos_emb=_norm(k_pos, (MAX_POS, H)),
        emb_ln_g=jnp.ones((1, H), jnp.float32),
        emb_ln_b=jnp.zeros((1, H), jnp.float32),
        # encoder matmul weights stored bf16 (MXU-native); biases / LN stay f32
        wq=_norm(ka[0], (L, H, H)).astype(jnp.bfloat16), bq=jnp.zeros((L, 1, H), jnp.float32),
        wk=_norm(ka[1], (L, H, H)).astype(jnp.bfloat16), bk=jnp.zeros((L, 1, H), jnp.float32),
        wv=_norm(ka[2], (L, H, H)).astype(jnp.bfloat16), bv=jnp.zeros((L, 1, H), jnp.float32),
        wo=_norm(ka[3], (L, H, H)).astype(jnp.bfloat16), bo=jnp.zeros((L, 1, H), jnp.float32),
        wf1=_norm(kf[0], (L, H, F)).astype(jnp.bfloat16), bf1=jnp.zeros((L, 1, F), jnp.float32),
        wf2=_norm(kf[1], (L, F, H)).astype(jnp.bfloat16), bf2=jnp.zeros((L, 1, H), jnp.float32),
        ln1_g=jnp.ones((L, 1, H), jnp.float32), ln1_b=jnp.zeros((L, 1, H), jnp.float32),
        ln2_g=jnp.ones((L, 1, H), jnp.float32), ln2_b=jnp.zeros((L, 1, H), jnp.float32),
    )

    # fc1/fc2 zero-padded to lane-aligned widths (1000->1024, 40->128), stored bf16.
    # Padding is numerically exact: padded fc1/fc2 outputs are relu(0)=0 and the
    # corresponding fc2/fc3 weight rows are zero.
    w1 = jnp.zeros((OUTPUT_DIM, HIDDEN_DIM1_PAD), jnp.float32)
    w1 = w1.at[:, :HIDDEN_DIM1].set(_norm(kh[0], (OUTPUT_DIM, HIDDEN_DIM1)))
    w2 = jnp.zeros((HIDDEN_DIM1_PAD, HIDDEN_DIM2_PAD), jnp.float32)
    w2 = w2.at[:HIDDEN_DIM1, :HIDDEN_DIM2].set(_norm(kh[1], (HIDDEN_DIM1, HIDDEN_DIM2)))
    # fc3 stored as a [1, hidden_dim2_pad] row so the kernel does a VPU reduce (no N=1 dot)
    w3 = jnp.zeros((1, HIDDEN_DIM2_PAD), jnp.float32)
    w3 = w3.at[:, :HIDDEN_DIM2].set(_norm(kh[2], (1, HIDDEN_DIM2)))

    head = dict(
        w1=w1.astype(jnp.bfloat16),
        b1=jnp.zeros((1, HIDDEN_DIM1_PAD), jnp.float32),
        w2=w2.astype(jnp.bfloat16),
        b2=jnp.zeros((1, HIDDEN_DIM2_PAD), jnp.float32),
        w3=w3,
        b3=jnp.zeros((1, 1), jnp.float32),
    )
    return dict(encoder=enc, head=head)


# ============================== tiling selection ===============================
def _choose_tile_b(B, P, target_rows=256):
    """Largest divisor of B whose row count (tile_b*P) is <= target and sublane-aligned."""
    tile_b = max(1, min(B, target_rows // max(P, 1)))
    while tile_b > 1 and (B % tile_b != 0 or (tile_b * P) % 8 != 0):
        tile_b -= 1
    if (tile_b * P) % 8 != 0 or B % tile_b != 0:
        tile_b = B                      # full-array block is always legal
    return tile_b


def _const_spec(a):
    """Full-array block with a constant index map (resident across grid steps)."""
    n = a.ndim
    return pl.BlockSpec(a.shape, lambda i, _n=n: (0,) * _n)


# ================================ full forward ================================
def transformer_model_forward(params, token_ids, token_starts, sents_other_feats):
    # TODO(synk): labels/BCE training branch (pack_padded_sequence + BCELoss) not
    #             implemented; inference path (labels=None) returns loss = 0.0.
    # TODO(synk): args.add_features > 0 feature concat not fused (ADD_FEATURES == 0 here);
    #             dropout is the eval-mode identity.
    del sents_other_feats
    enc, head = params["encoder"], params["head"]
    B, P = token_ids.shape
    M = B * P

    TILE_B = _choose_tile_b(B, P)
    TILE_M = TILE_B * P
    G = B // TILE_B

    token_ids = token_ids.astype(jnp.int32)
    ids_col = token_ids.reshape(M, 1)
    flat_ids = token_ids.reshape(M)

    # Local (within-tile) batch id per row; keys additionally carry -1 when padded.
    local_bid = (jnp.arange(M, dtype=jnp.int32) // P) % TILE_B
    qbid = local_bid.reshape(M, 1)
    kbid = jnp.where(flat_ids != 0, local_bid, jnp.int32(-1)).reshape(G, 1, TILE_M)

    # Positional embeddings are identical for every block (whole batch elements per tile).
    pos_tile = jnp.tile(enc["pos_emb"][:P], (TILE_B, 1))                  # [TILE_M, H]

    args = (
        ids_col, qbid, kbid, pos_tile,
        enc["tok_emb"], enc["emb_ln_g"], enc["emb_ln_b"],
        enc["wq"], enc["bq"], enc["wk"], enc["bk"], enc["wv"], enc["bv"], enc["wo"], enc["bo"],
        enc["wf1"], enc["bf1"], enc["wf2"], enc["bf2"],
        enc["ln1_g"], enc["ln1_b"], enc["ln2_g"], enc["ln2_b"],
        head["w1"], head["b1"], head["w2"], head["b2"], head["w3"], head["b3"],
    )

    in_specs = [
        pl.BlockSpec((TILE_M, 1), lambda i: (i, 0)),          # ids
        pl.BlockSpec((TILE_M, 1), lambda i: (i, 0)),          # query batch ids
        pl.BlockSpec((1, 1, TILE_M), lambda i: (i, 0, 0)),    # key batch ids (-1 = pad)
        _const_spec(pos_tile),
    ] + [_const_spec(a) for a in args[4:]]

    grid_spec = pltpu.PrefetchScalarGridSpec(
        num_scalar_prefetch=0,
        grid=(G,),
        in_specs=in_specs,
        out_specs=pl.BlockSpec((TILE_M, OUT_LANES), lambda i: (i, 0)),
        scratch_shapes=[pltpu.VMEM((TILE_M, HIDDEN_DIM1_PAD), jnp.float32)],
    )

    probs_slab = pl.pallas_call(
        _fused_forward_kernel,
        out_shape=jax.ShapeDtypeStruct((M, OUT_LANES), jnp.float32),
        grid_spec=grid_spec,
        compiler_params=pltpu.CompilerParams(
            dimension_semantics=("parallel",),               # v7x: shard blocks over 2 TCs
            vmem_limit_bytes=32 * 1024 * 1024,               # safe on v7x's 64 MiB physical
        ),
    )(*args)

    # pred_logits per token (column 0 of the lane-dense slab), then the tiny O(M)
    # per-word gather is done here in plain XLA (per review: gather in the wrapper).
    probs = probs_slab[:, 0].reshape(B, P)
    idx = token_starts.astype(jnp.int32)
    valid = (idx != 0) & (idx < P)
    gathered = jnp.take_along_axis(probs, jnp.where(valid, idx, 0), axis=1)
    # TODO(synk): original allocates float64 pred_labels; JAX default keeps float32.
    pred_labels = jnp.where(valid, gathered, 0.0)
    return 0.0, pred_labels


# ==================================== main ====================================
if __name__ == "__main__":
    key = jax.random.PRNGKey(0)
    pkey, ikey = jax.random.split(key)
    params = init_params(pkey)

    B, P = 2, 8
    k1, k2 = jax.random.split(ikey, 2)
    # token ids: nonzero tokens with a padded tail of zeros
    token_ids = jax.random.randint(k1, (B, P), 1, VOCAB).astype(jnp.int32)
    token_ids = token_ids.at[:, P - 2:].set(0)
    # word-start positions inside the (sub)token sequence; 0 means "no word here"
    token_starts = jnp.array([[1, 3, 5, 0, 0, 0, 0, 0],
                              [1, 2, 4, 6, 0, 0, 0, 0]], dtype=jnp.int32)
    sents_other_feats = jax.random.normal(k2, (B, P, 3), dtype=jnp.float32)

    fwd = jax.jit(transformer_model_forward)
    loss, pred_labels = fwd(params, token_ids, token_starts, sents_other_feats)
    pred_labels = jax.block_until_ready(pred_labels)
    assert pred_labels.shape == (B, P)
    print("KERNEL_OK")
</pallas_src>

<mosaic_0001>
module attributes {stable_mosaic.version = 11 : i64} {
  func.func @_fused_forward_kernel(%arg0: i32, %arg1: memref<16x1xi32, #tpu.memory_space<vmem>>, %arg2: memref<16x1xi32, #tpu.memory_space<vmem>>, %arg3: memref<1x1x16xi32, #tpu.memory_space<vmem>>, %arg4: memref<16x32xf32, #tpu.memory_space<vmem>>, %arg5: memref<64x32xf32, #tpu.memory_space<vmem>>, %arg6: memref<1x32xf32, #tpu.memory_space<vmem>>, %arg7: memref<1x32xf32, #tpu.memory_space<vmem>>, %arg8: memref<4x32x32xbf16, #tpu.memory_space<vmem>>, %arg9: memref<4x1x32xf32, #tpu.memory_space<vmem>>, %arg10: memref<4x32x32xbf16, #tpu.memory_space<vmem>>, %arg11: memref<4x1x32xf32, #tpu.memory_space<vmem>>, %arg12: memref<4x32x32xbf16, #tpu.memory_space<vmem>>, %arg13: memref<4x1x32xf32, #tpu.memory_space<vmem>>, %arg14: memref<4x32x32xbf16, #tpu.memory_space<vmem>>, %arg15: memref<4x1x32xf32, #tpu.memory_space<vmem>>, %arg16: memref<4x32x64xbf16, #tpu.memory_space<vmem>>, %arg17: memref<4x1x64xf32, #tpu.memory_space<vmem>>, %arg18: memref<4x64x32xbf16, #tpu.memory_space<vmem>>, %arg19: memref<4x1x32xf32, #tpu.memory_space<vmem>>, %arg20: memref<4x1x32xf32, #tpu.memory_space<vmem>>, %arg21: memref<4x1x32xf32, #tpu.memory_space<vmem>>, %arg22: memref<4x1x32xf32, #tpu.memory_space<vmem>>, %arg23: memref<4x1x32xf32, #tpu.memory_space<vmem>>, %arg24: memref<160x1024xbf16, #tpu.memory_space<vmem>>, %arg25: memref<1x1024xf32, #tpu.memory_space<vmem>>, %arg26: memref<1024x128xbf16, #tpu.memory_space<vmem>>, %arg27: memref<1x128xf32, #tpu.memory_space<vmem>>, %arg28: memref<1x128xf32, #tpu.memory_space<vmem>>, %arg29: memref<1x1xf32, #tpu.memory_space<vmem>>, %arg30: memref<16x128xf32, #tpu.memory_space<vmem>>, %arg31: memref<16x1024xf32, #tpu.memory_space<vmem>>) attributes {dimension_semantics = [#tpu.dimension_semantics<parallel>], iteration_bounds = array<i64: 1>, scalar_prefetch = 0 : i64, scratch_operands = 1 : i64, tpu.core_type = #tpu.core_type<tc>, window_params = [{transform_indices = @transform_0, window_bounds = array<i64: 16, 1>}, {transform_indices = @transform_1, window_bounds = array<i64: 16, 1>}, {transform_indices = @transform_2, window_bounds = array<i64: 1, 1, 16>}, {pipeline_mode = #tpu.pipeline_mode<synchronous>, transform_indices = @transform_3, window_bounds = array<i64: 16, 32>}, {pipeline_mode = #tpu.pipeline_mode<synchronous>, transform_indices = @transform_4, window_bounds = array<i64: 64, 32>}, {pipeline_mode = #tpu.pipeline_mode<synchronous>, transform_indices = @transform_5, window_bounds = array<i64: 1, 32>}, {pipeline_mode = #tpu.pipeline_mode<synchronous>, transform_indices = @transform_6, window_bounds = array<i64: 1, 32>}, {pipeline_mode = #tpu.pipeline_mode<synchronous>, transform_indices = @transform_7, window_bounds = array<i64: 4, 32, 32>}, {pipeline_mode = #tpu.pipeline_mode<synchronous>, transform_indices = @transform_8, window_bounds = array<i64: 4, 1, 32>}, {pipeline_mode = #tpu.pipeline_mode<synchronous>, transform_indices = @transform_9, window_bounds = array<i64: 4, 32, 32>}, {pipeline_mode = #tpu.pipeline_mode<synchronous>, transform_indices = @transform_10, window_bounds = array<i64: 4, 1, 32>}, {pipeline_mode = #tpu.pipeline_mode<synchronous>, transform_indices = @transform_11, window_bounds = array<i64: 4, 32, 32>}, {pipeline_mode = #tpu.pipeline_mode<synchronous>, transform_indices = @transform_12, window_bounds = array<i64: 4, 1, 32>}, {pipeline_mode = #tpu.pipeline_mode<synchronous>, transform_indices = @transform_13, window_bounds = array<i64: 4, 32, 32>}, {pipeline_mode = #tpu.pipeline_mode<synchronous>, transform_indices = @transform_14, window_bounds = array<i64: 4, 1, 32>}, {pipeline_mode = #tpu.pipeline_mode<synchronous>, transform_indices = @transform_15, window_bounds = array<i64: 4, 32, 64>}, {pipeline_mode = #tpu.pipeline_mode<synchronous>, transform_indices = @transform_16, window_bounds = array<i64: 4, 1, 64>}, {pipeline_mode = #tpu.pipeline_mode<synchronous>, transform_indices = @transform_17, window_bounds = array<i64: 4, 64, 32>}, {pipeline_mode = #tpu.pipeline_mode<synchronous>, transform_indices = @transform_18, window_bounds = array<i64: 4, 1, 32>}, {pipeline_mode = #tpu.pipeline_mode<synchronous>, transform_indices = @transform_19, window_bounds = array<i64: 4, 1, 32>}, {pipeline_mode = #tpu.pipeline_mode<synchronous>, transform_indices = @transform_20, window_bounds = array<i64: 4, 1, 32>}, {pipeline_mode = #tpu.pipeline_mode<synchronous>, transform_indices = @transform_21, window_bounds = array<i64: 4, 1, 32>}, {pipeline_mode = #tpu.pipeline_mode<synchronous>, transform_indices = @transform_22, window_bounds = array<i64: 4, 1, 32>}, {pipeline_mode = #tpu.pipeline_mode<synchronous>, transform_indices = @transform_23, window_bounds = array<i64: 160, 1024>}, {pipeline_mode = #tpu.pipeline_mode<synchronous>, transform_indices = @transform_24, window_bounds = array<i64: 1, 1024>}, {pipeline_mode = #tpu.pipeline_mode<synchronous>, transform_indices = @transform_25, window_bounds = array<i64: 1024, 128>}, {pipeline_mode = #tpu.pipeline_mode<synchronous>, transform_indices = @transform_26, window_bounds = array<i64: 1, 128>}, {pipeline_mode = #tpu.pipeline_mode<synchronous>, transform_indices = @transform_27, window_bounds = array<i64: 1, 128>}, {pipeline_mode = #tpu.pipeline_mode<synchronous>, transform_indices = @transform_28, window_bounds = array<i64: 1, 1>}, {transform_indices = @transform_29, window_bounds = array<i64: 16, 128>}]} {
    %c0 = arith.constant 0 : index
    %c0_0 = arith.constant 0 : index
    %0 = vector.load %arg1[%c0, %c0_0] : memref<16x1xi32, #tpu.memory_space<vmem>>, vector<16x1xi32>
    %1 = tpu.iota {dimensions = array<i32: 1>} : vector<16x64xi32>
    %2 = vector.broadcast %0 : vector<16x1xi32> to vector<16x64xi32>
    %3 = arith.cmpi eq, %1, %2 : vector<16x64xi32>
    %4 = arith.extui %3 : vector<16x64xi1> to vector<16x64xi32>
    %5 = arith.sitofp %4 : vector<16x64xi32> to vector<16x64xf32>
    %c0_1 = arith.constant 0 : index
    %c0_2 = arith.constant 0 : index
    %6 = vector.load %arg5[%c0_1, %c0_2] : memref<64x32xf32, #tpu.memory_space<vmem>>, vector<64x32xf32>
    %cst = arith.constant dense<0.000000e+00> : vector<16x32xf32>
    %7 = tpu.matmul %5, %6, %cst {dimension_numbers = #tpu.dot_dimension_numbers<[1], [0], [0], [1], [0, 0, 1, 1], [], []>} : vector<16x64xf32>, vector<64x32xf32>, vector<16x32xf32> -> vector<16x32xf32>
    %c0_3 = arith.constant 0 : index
    %c0_4 = arith.constant 0 : index
    %8 = vector.load %arg4[%c0_3, %c0_4] : memref<16x32xf32, #tpu.memory_space<vmem>>, vector<16x32xf32>
    %9 = arith.addf %7, %8 : vector<16x32xf32>
    %c0_5 = arith.constant 0 : index
    %c0_6 = arith.constant 0 : index
    %10 = vector.load %arg6[%c0_5, %c0_6] : memref<1x32xf32, #tpu.memory_space<vmem>>, vector<1x32xf32>
    %c0_7 = arith.constant 0 : index
    %c0_8 = arith.constant 0 : index
    %11 = vector.load %arg7[%c0_7, %c0_8] : memref<1x32xf32, #tpu.memory_space<vmem>>, vector<1x32xf32>
    %cst_9 = arith.constant dense<0.000000e+00> : vector<16xf32>
    %12 = vector.multi_reduction <add>, %9, %cst_9 [1] : vector<16x32xf32> to vector<16xf32>
    %13 = vector.shape_cast %12 : vector<16xf32> to vector<16x1xf32>
    %cst_10 = arith.constant 3.200000e+01 : f32
    %14 = vector.broadcast %cst_10 : f32 to vector<16x1xf32>
    %15 = arith.divf %13, %14 : vector<16x1xf32>
    %16 = vector.broadcast %15 : vector<16x1xf32> to vector<16x32xf32>
    %17 = arith.subf %9, %16 : vector<16x32xf32>
    %18 = arith.mulf %17, %17 : vector<16x32xf32>
    %cst_11 = arith.constant dense<0.000000e+00> : vector<16xf32>
    %19 = vector.multi_reduction <add>, %18, %cst_11 [1] : vector<16x32xf32> to vector<16xf32>
    %20 = vector.shape_cast %19 : vector<16xf32> to vector<16x1xf32>
    %cst_12 = arith.constant 3.200000e+01 : f32
    %21 = vector.broadcast %cst_12 : f32 to vector<16x1xf32>
    %22 = arith.divf %20, %21 : vector<16x1xf32>
    %23 = vector.broadcast %15 : vector<16x1xf32> to vector<16x32xf32>
    %24 = arith.subf %9, %23 : vector<16x32xf32>
    %cst_13 = arith.constant 9.99999996E-13 : f32
    %25 = vector.broadcast %cst_13 : f32 to vector<16x1xf32>
    %26 = arith.addf %22, %25 : vector<16x1xf32>
    %27 = math.rsqrt %26 : vector<16x1xf32>
    %28 = vector.broadcast %27 : vector<16x1xf32> to vector<16x32xf32>
    %29 = arith.mulf %24, %28 : vector<16x32xf32>
    %30 = vector.broadcast %10 : vector<1x32xf32> to vector<16x32xf32>
    %31 = arith.mulf %29, %30 : vector<16x32xf32>
    %32 = vector.broadcast %11 : vector<1x32xf32> to vector<16x32xf32>
    %33 = arith.addf %31, %32 : vector<16x32xf32>
    %c0_14 = arith.constant 0 : index
    %c0_15 = arith.constant 0 : index
    %34 = vector.load %arg2[%c0_14, %c0_15] : memref<16x1xi32, #tpu.memory_space<vmem>>, vector<16x1xi32>
    %c0_16 = arith.constant 0 : index
    %c0_17 = arith.constant 0 : index
    %c0_18 = arith.constant 0 : index
    %35 = vector.load %arg3[%c0_16, %c0_17, %c0_18] : memref<1x1x16xi32, #tpu.memory_space<vmem>>, vector<1x1x16xi32>
    %36 = vector.shape_cast %35 : vector<1x1x16xi32> to vector<1x16xi32>
    %37 = vector.broadcast %34 : vector<16x1xi32> to vector<16x16xi32>
    %38 = vector.broadcast %36 : vector<1x16xi32> to vector<16x16xi32>
    %39 = arith.cmpi eq, %37, %38 : vector<16x16xi32>
    %cst_19 = arith.constant 0.000000e+00 : f32
    %cst_20 = arith.constant -1.000000e+09 : f32
    %40 = vector.broadcast %cst_19 : f32 to vector<16x16xf32>
    %41 = vector.broadcast %cst_20 : f32 to vector<16x16xf32>
    %42 = arith.select %39, %40, %41 : vector<16x16xi1>, vector<16x16xf32>
    %43 = tpu.iota {dimensions = array<i32: 1>} : vector<1x32xi32>
    %44 = arith.truncf %33 : vector<16x32xf32> to vector<16x32xbf16>
    %c0_21 = arith.constant 0 : index
    %c0_22 = arith.constant 0 : index
    %45 = vector.load %arg24[%c0_21, %c0_22] : memref<160x1024xbf16, #tpu.memory_space<vmem>>, vector<32x1024xbf16>
    %cst_23 = arith.constant dense<0.000000e+00> : vector<16x1024xf32>
    %46 = tpu.matmul %44, %45, %cst_23 {dimension_numbers = #tpu.dot_dimension_numbers<[1], [0], [0], [1], [0, 0, 1, 1], [], []>} : vector<16x32xbf16>, vector<32x1024xbf16>, vector<16x1024xf32> -> vector<16x1024xf32>
    %c0_24 = arith.constant 0 : index
    %c0_25 = arith.constant 0 : index
    %47 = vector.load %arg31[%c0_24, %c0_25] : memref<16x1024xf32, #tpu.memory_space<vmem>>, vector<16x1024xf32>
    tpu.vector_store %arg31[%c0_24, %c0_25], %46 {strides = array<i32>} : memref<16x1024xf32, #tpu.memory_space<vmem>>, vector<16x1024xf32>,
    %48 = arith.truncf %33 : vector<16x32xf32> to vector<16x32xbf16>
    %c0_26 = arith.constant 0 : index
    %c0_27 = arith.constant 0 : index
    %c0_28 = arith.constant 0 : index
    %49 = vector.load %arg8[%c0_26, %c0_27, %c0_28] : memref<4x32x32xbf16, #tpu.memory_space<vmem>>, vector<1x32x32xbf16>
    %50 = vector.shape_cast %49 : vector<1x32x32xbf16> to vector<32x32xbf16>
    %cst_29 = arith.constant dense<0.000000e+00> : vector<16x32xf32>
    %51 = tpu.matmul %48, %50, %cst_29 {dimension_numbers = #tpu.dot_dimension_numbers<[1], [0], [0], [1], [0, 0, 1, 1], [], []>} : vector<16x32xbf16>, vector<32x32xbf16>, vector<16x32xf32> -> vector<16x32xf32>
    %c0_30 = arith.constant 0 : index
    %c0_31 = arith.constant 0 : index
    %c0_32 = arith.constant 0 : index
    %52 = vector.load %arg9[%c0_30, %c0_31, %c0_32] : memref<4x1x32xf32, #tpu.memory_space<vmem>>, vector<1x1x32xf32>
    %53 = vector.shape_cast %52 : vector<1x1x32xf32> to vector<1x32xf32>
    %54 = vector.broadcast %53 : vector<1x32xf32> to vector<16x32xf32>
    %55 = arith.addf %51, %54 : vector<16x32xf32>
    %c0_33 = arith.constant 0 : index
    %c0_34 = arith.constant 0 : index
    %c0_35 = arith.constant 0 : index
    %56 = vector.load %arg10[%c0_33, %c0_34, %c0_35] : memref<4x32x32xbf16, #tpu.memory_space<vmem>>, vector<1x32x32xbf16>
    %57 = vector.shape_cast %56 : vector<1x32x32xbf16> to vector<32x32xbf16>
    %cst_36 = arith.constant dense<0.000000e+00> : vector<16x32xf32>
    %58 = tpu.matmul %48, %57, %cst_36 {dimension_numbers = #tpu.dot_dimension_numbers<[1], [0], [0], [1], [0, 0, 1, 1], [], []>} : vector<16x32xbf16>, vector<32x32xbf16>, vector<16x32xf32> -> vector<16x32xf32>
    %c0_37 = arith.constant 0 : index
    %c0_38 = arith.constant 0 : index
    %c0_39 = arith.constant 0 : index
    %59 = vector.load %arg11[%c0_37, %c0_38, %c0_39] : memref<4x1x32xf32, #tpu.memory_space<vmem>>, vector<1x1x32xf32>
    %60 = vector.shape_cast %59 : vector<1x1x32xf32> to vector<1x32xf32>
    %61 = vector.broadcast %60 : vector<1x32xf32> to vector<16x32xf32>
    %62 = arith.addf %58, %61 : vector<16x32xf32>
    %c0_40 = arith.constant 0 : index
    %c0_41 = arith.constant 0 : index
    %c0_42 = arith.constant 0 : index
    %63 = vector.load %arg12[%c0_40, %c0_41, %c0_42] : memref<4x32x32xbf16, #tpu.memory_space<vmem>>, vector<1x32x32xbf16>
    %64 = vector.shape_cast %63 : vector<1x32x32xbf16> to vector<32x32xbf16>
    %cst_43 = arith.constant dense<0.000000e+00> : vector<16x32xf32>
    %65 = tpu.matmul %48, %64, %cst_43 {dimension_numbers = #tpu.dot_dimension_numbers<[1], [0], [0], [1], [0, 0, 1, 1], [], []>} : vector<16x32xbf16>, vector<32x32xbf16>, vector<16x32xf32> -> vector<16x32xf32>
    %c0_44 = arith.constant 0 : index
    %c0_45 = arith.constant 0 : index
    %c0_46 = arith.constant 0 : index
    %66 = vector.load %arg13[%c0_44, %c0_45, %c0_46] : memref<4x1x32xf32, #tpu.memory_space<vmem>>, vector<1x1x32xf32>
    %67 = vector.shape_cast %66 : vector<1x1x32xf32> to vector<1x32xf32>
    %68 = vector.broadcast %67 : vector<1x32xf32> to vector<16x32xf32>
    %69 = arith.addf %65, %68 : vector<16x32xf32>
    %cst_47 = arith.constant 0.000000e+00 : f32
    %70 = vector.broadcast %cst_47 : f32 to vector<16x32xf32>
    %c0_i32 = arith.constant 0 : i32
    %71 = vector.broadcast %c0_i32 : i32 to vector<1x32xi32>
    %72 = arith.cmpi sge, %43, %71 : vector<1x32xi32>
    %c8_i32 = arith.constant 8 : i32
    %73 = vector.broadcast %c8_i32 : i32 to vector<1x32xi32>
    %74 = arith.cmpi slt, %43, %73 : vector<1x32xi32>
    %75 = arith.andi %72, %74 : vector<1x32xi1>
    %76 = arith.extui %75 : vector<1x32xi1> to vector<1x32xi32>
    %77 = arith.sitofp %76 : vector<1x32xi32> to vector<1x32xf32>
    %78 = vector.broadcast %77 : vector<1x32xf32> to vector<16x32xf32>
    %79 = arith.mulf %55, %78 : vector<16x32xf32>
    %cst_48 = arith.constant dense<0.000000e+00> : vector<16x16xf32>
    %80 = tpu.matmul %79, %62, %cst_48 {dimension_numbers = #tpu.dot_dimension_numbers<[1], [1], [0], [0], [0, 0, 1, 0], [], []>} : vector<16x32xf32>, vector<16x32xf32>, vector<16x16xf32> -> vector<16x16xf32>
    %cst_49 = arith.constant 0.353553385 : f32
    %81 = vector.broadcast %cst_49 : f32 to vector<16x16xf32>
    %82 = arith.mulf %80, %81 : vector<16x16xf32>
    %83 = arith.addf %82, %42 : vector<16x16xf32>
    %cst_50 = arith.constant dense<0xFF800000> : vector<16xf32>
    %84 = vector.multi_reduction <maximumf>, %83, %cst_50 [1] : vector<16x16xf32> to vector<16xf32>
    %85 = vector.shape_cast %84 : vector<16xf32> to vector<16x1xf32>
    %86 = vector.broadcast %85 : vector<16x1xf32> to vector<16x16xf32>
    %87 = arith.subf %83, %86 : vector<16x16xf32>
    %88 = math.exp %87 : vector<16x16xf32>
    %cst_51 = arith.constant dense<0.000000e+00> : vector<16xf32>
    %89 = vector.multi_reduction <add>, %88, %cst_51 [1] : vector<16x16xf32> to vector<16xf32>
    %90 = vector.shape_cast %89 : vector<16xf32> to vector<16x1xf32>
    %91 = tpu.reciprocal %90 {approx = true} : vector<16x1xf32> -> vector<16x1xf32>
    %92 = vector.broadcast %91 : vector<16x1xf32> to vector<16x16xf32>
    %93 = arith.mulf %88, %92 : vector<16x16xf32>
    %94 = vector.broadcast %77 : vector<1x32xf32> to vector<16x32xf32>
    %95 = arith.mulf %69, %94 : vector<16x32xf32>
    %cst_52 = arith.constant dense<0.000000e+00> : vector<16x32xf32>
    %96 = tpu.matmul %93, %95, %cst_52 {dimension_numbers = #tpu.dot_dimension_numbers<[1], [0], [0], [1], [0, 0, 1, 1], [], []>} : vector<16x16xf32>, vector<16x32xf32>, vector<16x32xf32> -> vector<16x32xf32>
    %97 = arith.addf %70, %96 : vector<16x32xf32>
    %c8_i32_53 = arith.constant 8 : i32
    %98 = vector.broadcast %c8_i32_53 : i32 to vector<1x32xi32>
    %99 = arith.cmpi sge, %43, %98 : vector<1x32xi32>
    %c16_i32 = arith.constant 16 : i32
    %100 = vector.broadcast %c16_i32 : i32 to vector<1x32xi32>
    %101 = arith.cmpi slt, %43, %100 : vector<1x32xi32>
    %102 = arith.andi %99, %101 : vector<1x32xi1>
    %103 = arith.extui %102 : vector<1x32xi1> to vector<1x32xi32>
    %104 = arith.sitofp %103 : vector<1x32xi32> to vector<1x32xf32>
    %105 = vector.broadcast %104 : vector<1x32xf32> to vector<16x32xf32>
    %106 = arith.mulf %55, %105 : vector<16x32xf32>
    %cst_54 = arith.constant dense<0.000000e+00> : vector<16x16xf32>
    %107 = tpu.matmul %106, %62, %cst_54 {dimension_numbers = #tpu.dot_dimension_numbers<[1], [1], [0], [0], [0, 0, 1, 0], [], []>} : vector<16x32xf32>, vector<16x32xf32>, vector<16x16xf32> -> vector<16x16xf32>
    %cst_55 = arith.constant 0.353553385 : f32
    %108 = vector.broadcast %cst_55 : f32 to vector<16x16xf32>
    %109 = arith.mulf %107, %108 : vector<16x16xf32>
    %110 = arith.addf %109, %42 : vector<16x16xf32>
    %cst_56 = arith.constant dense<0xFF800000> : vector<16xf32>
    %111 = vector.multi_reduction <maximumf>, %110, %cst_56 [1] : vector<16x16xf32> to vector<16xf32>
    %112 = vector.shape_cast %111 : vector<16xf32> to vector<16x1xf32>
    %113 = vector.broadcast %112 : vector<16x1xf32> to vector<16x16xf32>
    %114 = arith.subf %110, %113 : vector<16x16xf32>
    %115 = math.exp %114 : vector<16x16xf32>
    %cst_57 = arith.constant dense<0.000000e+00> : vector<16xf32>
    %116 = vector.multi_reduction <add>, %115, %cst_57 [1] : vector<16x16xf32> to vector<16xf32>
    %117 = vector.shape_cast %116 : vector<16xf32> to vector<16x1xf32>
    %118 = tpu.reciprocal %117 {approx = true} : vector<16x1xf32> -> vector<16x1xf32>
    %119 = vector.broadcast %118 : vector<16x1xf32> to vector<16x16xf32>
    %120 = arith.mulf %115, %119 : vector<16x16xf32>
    %121 = vector.broadcast %104 : vector<1x32xf32> to vector<16x32xf32>
    %122 = arith.mulf %69, %121 : vector<16x32xf32>
    %cst_58 = arith.constant dense<0.000000e+00> : vector<16x32xf32>
    %123 = tpu.matmul %120, %122, %cst_58 {dimension_numbers = #tpu.dot_dimension_numbers<[1], [0], [0], [1], [0, 0, 1, 1], [], []>} : vector<16x16xf32>, vector<16x32xf32>, vector<16x32xf32> -> vector<16x32xf32>
    %124 = arith.addf %97, %123 : vector<16x32xf32>
    %c16_i32_59 = arith.constant 16 : i32
    %125 = vector.broadcast %c16_i32_59 : i32 to vector<1x32xi32>
    %126 = arith.cmpi sge, %43, %125 : vector<1x32xi32>
    %c24_i32 = arith.constant 24 : i32
    %127 = vector.broadcast %c24_i32 : i32 to vector<1x32xi32>
    %128 = arith.cmpi slt, %43, %127 : vector<1x32xi32>
    %129 = arith.andi %126, %128 : vector<1x32xi1>
    %130 = arith.extui %129 : vector<1x32xi1> to vector<1x32xi32>
    %131 = arith.sitofp %130 : vector<1x32xi32> to vector<1x32xf32>
    %132 = vector.broadcast %131 : vector<1x32xf32> to vector<16x32xf32>
    %133 = arith.mulf %55, %132 : vector<16x32xf32>
    %cst_60 = arith.constant dense<0.000000e+00> : vector<16x16xf32>
    %134 = tpu.matmul %133, %62, %cst_60 {dimension_numbers = #tpu.dot_dimension_numbers<[1], [1], [0], [0], [0, 0, 1, 0], [], []>} : vector<16x32xf32>, vector<16x32xf32>, vector<16x16xf32> -> vector<16x16xf32>
    %cst_61 = arith.constant 0.353553385 : f32
    %135 = vector.broadcast %cst_61 : f32 to vector<16x16xf32>
    %136 = arith.mulf %134, %135 : vector<16x16xf32>
    %137 = arith.addf %136, %42 : vector<16x16xf32>
    %cst_62 = arith.constant dense<0xFF800000> : vector<16xf32>
    %138 = vector.multi_reduction <maximumf>, %137, %cst_62 [1] : vector<16x16xf32> to vector<16xf32>
    %139 = vector.shape_cast %138 : vector<16xf32> to vector<16x1xf32>
    %140 = vector.broadcast %139 : vector<16x1xf32> to vector<16x16xf32>
    %141 = arith.subf %137, %140 : vector<16x16xf32>
    %142 = math.exp %141 : vector<16x16xf32>
    %cst_63 = arith.constant dense<0.000000e+00> : vector<16xf32>
    %143 = vector.multi_reduction <add>, %142, %cst_63 [1] : vector<16x16xf32> to vector<16xf32>
    %144 = vector.shape_cast %143 : vector<16xf32> to vector<16x1xf32>
    %145 = tpu.reciprocal %144 {approx = true} : vector<16x1xf32> -> vector<16x1xf32>
    %146 = vector.broadcast %145 : vector<16x1xf32> to vector<16x16xf32>
    %147 = arith.mulf %142, %146 : vector<16x16xf32>
    %148 = vector.broadcast %131 : vector<1x32xf32> to vector<16x32xf32>
    %149 = arith.mulf %69, %148 : vector<16x32xf32>
    %cst_64 = arith.constant dense<0.000000e+00> : vector<16x32xf32>
    %150 = tpu.matmul %147, %149, %cst_64 {dimension_numbers = #tpu.dot_dimension_numbers<[1], [0], [0], [1], [0, 0, 1, 1], [], []>} : vector<16x16xf32>, vector<16x32xf32>, vector<16x32xf32> -> vector<16x32xf32>
    %151 = arith.addf %124, %150 : vector<16x32xf32>
    %c24_i32_65 = arith.constant 24 : i32
    %152 = vector.broadcast %c24_i32_65 : i32 to vector<1x32xi32>
    %153 = arith.cmpi sge, %43, %152 : vector<1x32xi32>
    %c32_i32 = arith.constant 32 : i32
    %154 = vector.broadcast %c32_i32 : i32 to vector<1x32xi32>
    %155 = arith.cmpi slt, %43, %154 : vector<1x32xi32>
    %156 = arith.andi %153, %155 : vector<1x32xi1>
    %157 = arith.extui %156 : vector<1x32xi1> to vector<1x32xi32>
    %158 = arith.sitofp %157 : vector<1x32xi32> to vector<1x32xf32>
    %159 = vector.broadcast %158 : vector<1x32xf32> to vector<16x32xf32>
    %160 = arith.mulf %55, %159 : vector<16x32xf32>
    %cst_66 = arith.constant dense<0.000000e+00> : vector<16x16xf32>
    %161 = tpu.matmul %160, %62, %cst_66 {dimension_numbers = #tpu.dot_dimension_numbers<[1], [1], [0], [0], [0, 0, 1, 0], [], []>} : vector<16x32xf32>, vector<16x32xf32>, vector<16x16xf32> -> vector<16x16xf32>
    %cst_67 = arith.constant 0.353553385 : f32
    %162 = vector.broadcast %cst_67 : f32 to vector<16x16xf32>
    %163 = arith.mulf %161, %162 : vector<16x16xf32>
    %164 = arith.addf %163, %42 : vector<16x16xf32>
    %cst_68 = arith.constant dense<0xFF800000> : vector<16xf32>
    %165 = vector.multi_reduction <maximumf>, %164, %cst_68 [1] : vector<16x16xf32> to vector<16xf32>
    %166 = vector.shape_cast %165 : vector<16xf32> to vector<16x1xf32>
    %167 = vector.broadcast %166 : vector<16x1xf32> to vector<16x16xf32>
    %168 = arith.subf %164, %167 : vector<16x16xf32>
    %169 = math.exp %168 : vector<16x16xf32>
    %cst_69 = arith.constant dense<0.000000e+00> : vector<16xf32>
    %170 = vector.multi_reduction <add>, %169, %cst_69 [1] : vector<16x16xf32> to vector<16xf32>
    %171 = vector.shape_cast %170 : vector<16xf32> to vector<16x1xf32>
    %172 = tpu.reciprocal %171 {approx = true} : vector<16x1xf32> -> vector<16x1xf32>
    %173 = vector.broadcast %172 : vector<16x1xf32> to vector<16x16xf32>
    %174 = arith.mulf %169, %173 : vector<16x16xf32>
    %175 = vector.broadcast %158 : vector<1x32xf32> to vector<16x32xf32>
    %176 = arith.mulf %69, %175 : vector<16x32xf32>
    %cst_70 = arith.constant dense<0.000000e+00> : vector<16x32xf32>
    %177 = tpu.matmul %174, %176, %cst_70 {dimension_numbers = #tpu.dot_dimension_numbers<[1], [0], [0], [1], [0, 0, 1, 1], [], []>} : vector<16x16xf32>, vector<16x32xf32>, vector<16x32xf32> -> vector<16x32xf32>
    %178 = arith.addf %151, %177 : vector<16x32xf32>
    %179 = arith.truncf %178 : vector<16x32xf32> to vector<16x32xbf16>
    %c0_71 = arith.constant 0 : index
    %c0_72 = arith.constant 0 : index
    %c0_73 = arith.constant 0 : index
    %180 = vector.load %arg14[%c0_71, %c0_72, %c0_73] : memref<4x32x32xbf16, #tpu.memory_space<vmem>>, vector<1x32x32xbf16>
    %181 = vector.shape_cast %180 : vector<1x32x32xbf16> to vector<32x32xbf16>
    %cst_74 = arith.constant dense<0.000000e+00> : vector<16x32xf32>
    %182 = tpu.matmul %179, %181, %cst_74 {dimension_numbers = #tpu.dot_dimension_numbers<[1], [0], [0], [1], [0, 0, 1, 1], [], []>} : vector<16x32xbf16>, vector<32x32xbf16>, vector<16x32xf32> -> vector<16x32xf32>
    %c0_75 = arith.constant 0 : index
    %c0_76 = arith.constant 0 : index
    %c0_77 = arith.constant 0 : index
    %183 = vector.load %arg15[%c0_75, %c0_76, %c0_77] : memref<4x1x32xf32, #tpu.memory_space<vmem>>, vector<1x1x32xf32>
    %184 = vector.shape_cast %183 : vector<1x1x32xf32> to vector<1x32xf32>
    %185 = vector.broadcast %184 : vector<1x32xf32> to vector<16x32xf32>
    %186 = arith.addf %182, %185 : vector<16x32xf32>
    %187 = arith.addf %33, %186 : vector<16x32xf32>
    %c0_78 = arith.constant 0 : index
    %c0_79 = arith.constant 0 : index
    %c0_80 = arith.constant 0 : index
    %188 = vector.load %arg20[%c0_78, %c0_79, %c0_80] : memref<4x1x32xf32, #tpu.memory_space<vmem>>, vector<1x1x32xf32>
    %189 = vector.shape_cast %188 : vector<1x1x32xf32> to vector<1x32xf32>
    %c0_81 = arith.constant 0 : index
    %c0_82 = arith.constant 0 : index
    %c0_83 = arith.constant 0 : index
    %190 = vector.load %arg21[%c0_81, %c0_82, %c0_83] : memref<4x1x32xf32, #tpu.memory_space<vmem>>, vector<1x1x32xf32>
    %191 = vector.shape_cast %190 : vector<1x1x32xf32> to vector<1x32xf32>
    %cst_84 = arith.constant dense<0.000000e+00> : vector<16xf32>
    %192 = vector.multi_reduction <add>, %187, %cst_84 [1] : vector<16x32xf32> to vector<16xf32>
    %193 = vector.shape_cast %192 : vector<16xf32> to vector<16x1xf32>
    %cst_85 = arith.constant 3.200000e+01 : f32
    %194 = vector.broadcast %cst_85 : f32 to vector<16x1xf32>
    %195 = arith.divf %193, %194 : vector<16x1xf32>
    %196 = vector.broadcast %195 : vector<16x1xf32> to vector<16x32xf32>
    %197 = arith.subf %187, %196 : vector<16x32xf32>
    %198 = arith.mulf %197, %197 : vector<16x32xf32>
    %cst_86 = arith.constant dense<0.000000e+00> : vector<16xf32>
    %199 = vector.multi_reduction <add>, %198, %cst_86 [1] : vector<16x32xf32> to vector<16xf32>
    %200 = vector.shape_cast %199 : vector<16xf32> to vector<16x1xf32>
    %cst_87 = arith.constant 3.200000e+01 : f32
    %201 = vector.broadcast %cst_87 : f32 to vector<16x1xf32>
    %202 = arith.divf %200, %201 : vector<16x1xf32>
    %203 = vector.broadcast %195 : vector<16x1xf32> to vector<16x32xf32>
    %204 = arith.subf %187, %203 : vector<16x32xf32>
    %cst_88 = arith.constant 9.99999996E-13 : f32
    %205 = vector.broadcast %cst_88 : f32 to vector<16x1xf32>
    %206 = arith.addf %202, %205 : vector<16x1xf32>
    %207 = math.rsqrt %206 : vector<16x1xf32>
    %208 = vector.broadcast %207 : vector<16x1xf32> to vector<16x32xf32>
    %209 = arith.mulf %204, %208 : vector<16x32xf32>
    %210 = vector.broadcast %189 : vector<1x32xf32> to vector<16x32xf32>
    %211 = arith.mulf %209, %210 : vector<16x32xf32>
    %212 = vector.broadcast %191 : vector<1x32xf32> to vector<16x32xf32>
    %213 = arith.addf %211, %212 : vector<16x32xf32>
    %214 = arith.truncf %213 : vector<16x32xf32> to vector<16x32xbf16>
    %c0_89 = arith.constant 0 : index
    %c0_90 = arith.constant 0 : index
    %c0_91 = arith.constant 0 : index
    %215 = vector.load %arg16[%c0_89, %c0_90, %c0_91] : memref<4x32x64xbf16, #tpu.memory_space<vmem>>, vector<1x32x64xbf16>
    %216 = vector.shape_cast %215 : vector<1x32x64xbf16> to vector<32x64xbf16>
    %cst_92 = arith.constant dense<0.000000e+00> : vector<16x64xf32>
    %217 = tpu.matmul %214, %216, %cst_92 {dimension_numbers = #tpu.dot_dimension_numbers<[1], [0], [0], [1], [0, 0, 1, 1], [], []>} : vector<16x32xbf16>, vector<32x64xbf16>, vector<16x64xf32> -> vector<16x64xf32>
    %c0_93 = arith.constant 0 : index
    %c0_94 = arith.constant 0 : index
    %c0_95 = arith.constant 0 : index
    %218 = vector.load %arg17[%c0_93, %c0_94, %c0_95] : memref<4x1x64xf32, #tpu.memory_space<vmem>>, vector<1x1x64xf32>
    %219 = vector.shape_cast %218 : vector<1x1x64xf32> to vector<1x64xf32>
    %220 = vector.broadcast %219 : vector<1x64xf32> to vector<16x64xf32>
    %221 = arith.addf %217, %220 : vector<16x64xf32>
    %cst_96 = arith.constant 5.000000e-01 : f32
    %222 = vector.broadcast %cst_96 : f32 to vector<16x64xf32>
    %223 = arith.mulf %222, %221 : vector<16x64xf32>
    %cst_97 = arith.constant 4.471500e-02 : f32
    %224 = vector.broadcast %cst_97 : f32 to vector<16x64xf32>
    %225 = arith.mulf %224, %221 : vector<16x64xf32>
    %226 = arith.mulf %225, %221 : vector<16x64xf32>
    %227 = arith.mulf %226, %221 : vector<16x64xf32>
    %228 = arith.addf %221, %227 : vector<16x64xf32>
    %cst_98 = arith.constant 0.797884583 : f32
    %229 = vector.broadcast %cst_98 : f32 to vector<16x64xf32>
    %230 = arith.mulf %229, %228 : vector<16x64xf32>
    %231 = math.tanh %230 : vector<16x64xf32>
    %cst_99 = arith.constant 1.000000e+00 : f32
    %232 = vector.broadcast %cst_99 : f32 to vector<16x64xf32>
    %233 = arith.addf %232, %231 : vector<16x64xf32>
    %234 = arith.mulf %223, %233 : vector<16x64xf32>
    %235 = arith.truncf %234 : vector<16x64xf32> to vector<16x64xbf16>
    %c0_100 = arith.constant 0 : index
    %c0_101 = arith.constant 0 : index
    %c0_102 = arith.constant 0 : index
    %236 = vector.load %arg18[%c0_100, %c0_101, %c0_102] : memref<4x64x32xbf16, #tpu.memory_space<vmem>>, vector<1x64x32xbf16>
    %237 = vector.shape_cast %236 : vector<1x64x32xbf16> to vector<64x32xbf16>
    %cst_103 = arith.constant dense<0.000000e+00> : vector<16x32xf32>
    %238 = tpu.matmul %235, %237, %cst_103 {dimension_numbers = #tpu.dot_dimension_numbers<[1], [0], [0], [1], [0, 0, 1, 1], [], []>} : vector<16x64xbf16>, vector<64x32xbf16>, vector<16x32xf32> -> vector<16x32xf32>
    %c0_104 = arith.constant 0 : index
    %c0_105 = arith.constant 0 : index
    %c0_106 = arith.constant 0 : index
    %239 = vector.load %arg19[%c0_104, %c0_105, %c0_106] : memref<4x1x32xf32, #tpu.memory_space<vmem>>, vector<1x1x32xf32>
    %240 = vector.shape_cast %239 : vector<1x1x32xf32> to vector<1x32xf32>
    %241 = vector.broadcast %240 : vector<1x32xf32> to vector<16x32xf32>
    %242 = arith.addf %238, %241 : vector<16x32xf32>
    %243 = arith.addf %213, %242 : vector<16x32xf32>
    %c0_107 = arith.constant 0 : index
    %c0_108 = arith.constant 0 : index
    %c0_109 = arith.constant 0 : index
    %244 = vector.load %arg22[%c0_107, %c0_108, %c0_109] : memref<4x1x32xf32, #tpu.memory_space<vmem>>, vector<1x1x32xf32>
    %245 = vector.shape_cast %244 : vector<1x1x32xf32> to vector<1x32xf32>
    %c0_110 = arith.constant 0 : index
    %c0_111 = arith.constant 0 : index
    %c0_112 = arith.constant 0 : index
    %246 = vector.load %arg23[%c0_110, %c0_111, %c0_112] : memref<4x1x32xf32, #tpu.memory_space<vmem>>, vector<1x1x32xf32>
    %247 = vector.shape_cast %246 : vector<1x1x32xf32> to vector<1x32xf32>
    %cst_113 = arith.constant dense<0.000000e+00> : vector<16xf32>
    %248 = vector.multi_reduction <add>, %243, %cst_113 [1] : vector<16x32xf32> to vector<16xf32>
    %249 = vector.shape_cast %248 : vector<16xf32> to vector<16x1xf32>
    %cst_114 = arith.constant 3.200000e+01 : f32
    %250 = vector.broadcast %cst_114 : f32 to vector<16x1xf32>
    %251 = arith.divf %249, %250 : vector<16x1xf32>
    %252 = vector.broadcast %251 : vector<16x1xf32> to vector<16x32xf32>
    %253 = arith.subf %243, %252 : vector<16x32xf32>
    %254 = arith.mulf %253, %253 : vector<16x32xf32>
    %cst_115 = arith.constant dense<0.000000e+00> : vector<16xf32>
    %255 = vector.multi_reduction <add>, %254, %cst_115 [1] : vector<16x32xf32> to vector<16xf32>
    %256 = vector.shape_cast %255 : vector<16xf32> to vector<16x1xf32>
    %cst_116 = arith.constant 3.200000e+01 : f32
    %257 = vector.broadcast %cst_116 : f32 to vector<16x1xf32>
    %258 = arith.divf %256, %257 : vector<16x1xf32>
    %259 = vector.broadcast %251 : vector<16x1xf32> to vector<16x32xf32>
    %260 = arith.subf %243, %259 : vector<16x32xf32>
    %cst_117 = arith.constant 9.99999996E-13 : f32
    %261 = vector.broadcast %cst_117 : f32 to vector<16x1xf32>
    %262 = arith.addf %258, %261 : vector<16x1xf32>
    %263 = math.rsqrt %262 : vector<16x1xf32>
    %264 = vector.broadcast %263 : vector<16x1xf32> to vector<16x32xf32>
    %265 = arith.mulf %260, %264 : vector<16x32xf32>
    %266 = vector.broadcast %245 : vector<1x32xf32> to vector<16x32xf32>
    %267 = arith.mulf %265, %266 : vector<16x32xf32>
    %268 = vector.broadcast %247 : vector<1x32xf32> to vector<16x32xf32>
    %269 = arith.addf %267, %268 : vector<16x32xf32>
    %c0_118 = arith.constant 0 : index
    %c0_119 = arith.constant 0 : index
    %270 = vector.load %arg31[%c0_118, %c0_119] : memref<16x1024xf32, #tpu.memory_space<vmem>>, vector<16x1024xf32>
    %271 = arith.truncf %269 : vector<16x32xf32> to vector<16x32xbf16>
    %c32 = arith.constant 32 : index
    %c0_120 = arith.constant 0 : index
    %272 = vector.load %arg24[%c32, %c0_120] : memref<160x1024xbf16, #tpu.memory_space<vmem>>, vector<32x1024xbf16>
    %cst_121 = arith.constant dense<0.000000e+00> : vector<16x1024xf32>
    %273 = tpu.matmul %271, %272, %cst_121 {dimension_numbers = #tpu.dot_dimension_numbers<[1], [0], [0], [1], [0, 0, 1, 1], [], []>} : vector<16x32xbf16>, vector<32x1024xbf16>, vector<16x1024xf32> -> vector<16x1024xf32>
    %274 = arith.addf %270, %273 : vector<16x1024xf32>
    %c0_122 = arith.constant 0 : index
    %c0_123 = arith.constant 0 : index
    %275 = vector.load %arg31[%c0_122, %c0_123] : memref<16x1024xf32, #tpu.memory_space<vmem>>, vector<16x1024xf32>
    tpu.vector_store %arg31[%c0_122, %c0_123], %274 {strides = array<i32>} : memref<16x1024xf32, #tpu.memory_space<vmem>>, vector<16x1024xf32>,
    %276 = arith.truncf %269 : vector<16x32xf32> to vector<16x32xbf16>
    %c1 = arith.constant 1 : index
    %c0_124 = arith.constant 0 : index
    %c0_125 = arith.constant 0 : index
    %277 = vector.load %arg8[%c1, %c0_124, %c0_125] : memref<4x32x32xbf16, #tpu.memory_space<vmem>>, vector<1x32x32xbf16>
    %278 = vector.shape_cast %277 : vector<1x32x32xbf16> to vector<32x32xbf16>
    %cst_126 = arith.constant dense<0.000000e+00> : vector<16x32xf32>
    %279 = tpu.matmul %276, %278, %cst_126 {dimension_numbers = #tpu.dot_dimension_numbers<[1], [0], [0], [1], [0, 0, 1, 1], [], []>} : vector<16x32xbf16>, vector<32x32xbf16>, vector<16x32xf32> -> vector<16x32xf32>
    %c1_127 = arith.constant 1 : index
    %c0_128 = arith.constant 0 : index
    %c0_129 = arith.constant 0 : index
    %280 = vector.load %arg9[%c1_127, %c0_128, %c0_129] : memref<4x1x32xf32, #tpu.memory_space<vmem>>, vector<1x1x32xf32>
    %281 = vector.shape_cast %280 : vector<1x1x32xf32> to vector<1x32xf32>
    %282 = vector.broadcast %281 : vector<1x32xf32> to vector<16x32xf32>
    %283 = arith.addf %279, %282 : vector<16x32xf32>
    %c1_130 = arith.constant 1 : index
    %c0_131 = arith.constant 0 : index
    %c0_132 = arith.constant 0 : index
    %284 = vector.load %arg10[%c1_130, %c0_131, %c0_132] : memref<4x32x32xbf16, #tpu.memory_space<vmem>>, vector<1x32x32xbf16>
    %285 = vector.shape_cast %284 : vector<1x32x32xbf16> to vector<32x32xbf16>
    %cst_133 = arith.constant dense<0.000000e+00> : vector<16x32xf32>
    %286 = tpu.matmul %276, %285, %cst_133 {dimension_numbers = #tpu.dot_dimension_numbers<[1], [0], [0], [1], [0, 0, 1, 1], [], []>} : vector<16x32xbf16>, vector<32x32xbf16>, vector<16x32xf32> -> vector<16x32xf32>
    %c1_134 = arith.constant 1 : index
    %c0_135 = arith.constant 0 : index
    %c0_136 = arith.constant 0 : index
    %287 = vector.load %arg11[%c1_134, %c0_135, %c0_136] : memref<4x1x32xf32, #tpu.memory_space<vmem>>, vector<1x1x32xf32>
    %288 = vector.shape_cast %287 : vector<1x1x32xf32> to vector<1x32xf32>
    %289 = vector.broadcast %288 : vector<1x32xf32> to vector<16x32xf32>
    %290 = arith.addf %286, %289 : vector<16x32xf32>
    %c1_137 = arith.constant 1 : index
    %c0_138 = arith.constant 0 : index
    %c0_139 = arith.constant 0 : index
    %291 = vector.load %arg12[%c1_137, %c0_138, %c0_139] : memref<4x32x32xbf16, #tpu.memory_space<vmem>>, vector<1x32x32xbf16>
    %292 = vector.shape_cast %291 : vector<1x32x32xbf16> to vector<32x32xbf16>
    %cst_140 = arith.constant dense<0.000000e+00> : vector<16x32xf32>
    %293 = tpu.matmul %276, %292, %cst_140 {dimension_numbers = #tpu.dot_dimension_numbers<[1], [0], [0], [1], [0, 0, 1, 1], [], []>} : vector<16x32xbf16>, vector<32x32xbf16>, vector<16x32xf32> -> vector<16x32xf32>
    %c1_141 = arith.constant 1 : index
    %c0_142 = arith.constant 0 : index
    %c0_143 = arith.constant 0 : index
    %294 = vector.load %arg13[%c1_141, %c0_142, %c0_143] : memref<4x1x32xf32, #tpu.memory_space<vmem>>, vector<1x1x32xf32>
    %295 = vector.shape_cast %294 : vector<1x1x32xf32> to vector<1x32xf32>
    %296 = vector.broadcast %295 : vector<1x32xf32> to vector<16x32xf32>
    %297 = arith.addf %293, %296 : vector<16x32xf32>
    %cst_144 = arith.constant 0.000000e+00 : f32
    %298 = vector.broadcast %cst_144 : f32 to vector<16x32xf32>
    %c0_i32_145 = arith.constant 0 : i32
    %299 = vector.broadcast %c0_i32_145 : i32 to vector<1x32xi32>
    %300 = arith.cmpi sge, %43, %299 : vector<1x32xi32>
    %c8_i32_146 = arith.constant 8 : i32
    %301 = vector.broadcast %c8_i32_146 : i32 to vector<1x32xi32>
    %302 = arith.cmpi slt, %43, %301 : vector<1x32xi32>
    %303 = arith.andi %300, %302 : vector<1x32xi1>
    %304 = arith.extui %303 : vector<1x32xi1> to vector<1x32xi32>
    %305 = arith.sitofp %304 : vector<1x32xi32> to vector<1x32xf32>
    %306 = vector.broadcast %305 : vector<1x32xf32> to vector<16x32xf32>
    %307 = arith.mulf %283, %306 : vector<16x32xf32>
    %cst_147 = arith.constant dense<0.000000e+00> : vector<16x16xf32>
    %308 = tpu.matmul %307, %290, %cst_147 {dimension_numbers = #tpu.dot_dimension_numbers<[1], [1], [0], [0], [0, 0, 1, 0], [], []>} : vector<16x32xf32>, vector<16x32xf32>, vector<16x16xf32> -> vector<16x16xf32>
    %cst_148 = arith.constant 0.353553385 : f32
    %309 = vector.broadcast %cst_148 : f32 to vector<16x16xf32>
    %310 = arith.mulf %308, %309 : vector<16x16xf32>
    %311 = arith.addf %310, %42 : vector<16x16xf32>
    %cst_149 = arith.constant dense<0xFF800000> : vector<16xf32>
    %312 = vector.multi_reduction <maximumf>, %311, %cst_149 [1] : vector<16x16xf32> to vector<16xf32>
    %313 = vector.shape_cast %312 : vector<16xf32> to vector<16x1xf32>
    %314 = vector.broadcast %313 : vector<16x1xf32> to vector<16x16xf32>
    %315 = arith.subf %311, %314 : vector<16x16xf32>
    %316 = math.exp %315 : vector<16x16xf32>
    %cst_150 = arith.constant dense<0.000000e+00> : vector<16xf32>
    %317 = vector.multi_reduction <add>, %316, %cst_150 [1] : vector<16x16xf32> to vector<16xf32>
    %318 = vector.shape_cast %317 : vector<16xf32> to vector<16x1xf32>
    %319 = tpu.reciprocal %318 {approx = true} : vector<16x1xf32> -> vector<16x1xf32>
    %320 = vector.broadcast %319 : vector<16x1xf32> to vector<16x16xf32>
    %321 = arith.mulf %316, %320 : vector<16x16xf32>
    %322 = vector.broadcast %305 : vector<1x32xf32> to vector<16x32xf32>
    %323 = arith.mulf %297, %322 : vector<16x32xf32>
    %cst_151 = arith.constant dense<0.000000e+00> : vector<16x32xf32>
    %324 = tpu.matmul %321, %323, %cst_151 {dimension_numbers = #tpu.dot_dimension_numbers<[1], [0], [0], [1], [0, 0, 1, 1], [], []>} : vector<16x16xf32>, vector<16x32xf32>, vector<16x32xf32> -> vector<16x32xf32>
    %325 = arith.addf %298, %324 : vector<16x32xf32>
    %c8_i32_152 = arith.constant 8 : i32
    %326 = vector.broadcast %c8_i32_152 : i32 to vector<1x32xi32>
    %327 = arith.cmpi sge, %43, %326 : vector<1x32xi32>
    %c16_i32_153 = arith.constant 16 : i32
    %328 = vector.broadcast %c16_i32_153 : i32 to vector<1x32xi32>
    %329 = arith.cmpi slt, %43, %328 : vector<1x32xi32>
    %330 = arith.andi %327, %329 : vector<1x32xi1>
    %331 = arith.extui %330 : vector<1x32xi1> to vector<1x32xi32>
    %332 = arith.sitofp %331 : vector<1x32xi32> to vector<1x32xf32>
    %333 = vector.broadcast %332 : vector<1x32xf32> to vector<16x32xf32>
    %334 = arith.mulf %283, %333 : vector<16x32xf32>
    %cst_154 = arith.constant dense<0.000000e+00> : vector<16x16xf32>
    %335 = tpu.matmul %334, %290, %cst_154 {dimension_numbers = #tpu.dot_dimension_numbers<[1], [1], [0], [0], [0, 0, 1, 0], [], []>} : vector<16x32xf32>, vector<16x32xf32>, vector<16x16xf32> -> vector<16x16xf32>
    %cst_155 = arith.constant 0.353553385 : f32
    %336 = vector.broadcast %cst_155 : f32 to vector<16x16xf32>
    %337 = arith.mulf %335, %336 : vector<16x16xf32>
    %338 = arith.addf %337, %42 : vector<16x16xf32>
    %cst_156 = arith.constant dense<0xFF800000> : vector<16xf32>
    %339 = vector.multi_reduction <maximumf>, %338, %cst_156 [1] : vector<16x16xf32> to vector<16xf32>
    %340 = vector.shape_cast %339 : vector<16xf32> to vector<16x1xf32>
    %341 = vector.broadcast %340 : vector<16x1xf32> to vector<16x16xf32>
    %342 = arith.subf %338, %341 : vector<16x16xf32>
    %343 = math.exp %342 : vector<16x16xf32>
    %cst_157 = arith.constant dense<0.000000e+00> : vector<16xf32>
    %344 = vector.multi_reduction <add>, %343, %cst_157 [1] : vector<16x16xf32> to vector<16xf32>
    %345 = vector.shape_cast %344 : vector<16xf32> to vector<16x1xf32>
    %346 = tpu.reciprocal %345 {approx = true} : vector<16x1xf32> -> vector<16x1xf32>
    %347 = vector.broadcast %346 : vector<16x1xf32> to vector<16x16xf32>
    %348 = arith.mulf %343, %347 : vector<16x16xf32>
    %349 = vector.broadcast %332 : vector<1x32xf32> to vector<16x32xf32>
    %350 = arith.mulf %297, %349 : vector<16x32xf32>
    %cst_158 = arith.constant dense<0.000000e+00> : vector<16x32xf32>
    %351 = tpu.matmul %348, %350, %cst_158 {dimension_numbers = #tpu.dot_dimension_numbers<[1], [0], [0], [1], [0, 0, 1, 1], [], []>} : vector<16x16xf32>, vector<16x32xf32>, vector<16x32xf32> -> vector<16x32xf32>
    %352 = arith.addf %325, %351 : vector<16x32xf32>
    %c16_i32_159 = arith.constant 16 : i32
    %353 = vector.broadcast %c16_i32_159 : i32 to vector<1x32xi32>
    %354 = arith.cmpi sge, %43, %353 : vector<1x32xi32>
    %c24_i32_160 = arith.constant 24 : i32
    %355 = vector.broadcast %c24_i32_160 : i32 to vector<1x32xi32>
    %356 = arith.cmpi slt, %43, %355 : vector<1x32xi32>
    %357 = arith.andi %354, %356 : vector<1x32xi1>
    %358 = arith.extui %357 : vector<1x32xi1> to vector<1x32xi32>
    %359 = arith.sitofp %358 : vector<1x32xi32> to vector<1x32xf32>
    %360 = vector.broadcast %359 : vector<1x32xf32> to vector<16x32xf32>
    %361 = arith.mulf %283, %360 : vector<16x32xf32>
    %cst_161 = arith.constant dense<0.000000e+00> : vector<16x16xf32>
    %362 = tpu.matmul %361, %290, %cst_161 {dimension_numbers = #tpu.dot_dimension_numbers<[1], [1], [0], [0], [0, 0, 1, 0], [], []>} : vector<16x32xf32>, vector<16x32xf32>, vector<16x16xf32> -> vector<16x16xf32>
    %cst_162 = arith.constant 0.353553385 : f32
    %363 = vector.broadcast %cst_162 : f32 to vector<16x16xf32>
    %364 = arith.mulf %362, %363 : vector<16x16xf32>
    %365 = arith.addf %364, %42 : vector<16x16xf32>
    %cst_163 = arith.constant dense<0xFF800000> : vector<16xf32>
    %366 = vector.multi_reduction <maximumf>, %365, %cst_163 [1] : vector<16x16xf32> to vector<16xf32>
    %367 = vector.shape_cast %366 : vector<16xf32> to vector<16x1xf32>
    %368 = vector.broadcast %367 : vector<16x1xf32> to vector<16x16xf32>
    %369 = arith.subf %365, %368 : vector<16x16xf32>
    %370 = math.exp %369 : vector<16x16xf32>
    %cst_164 = arith.constant dense<0.000000e+00> : vector<16xf32>
    %371 = vector.multi_reduction <add>, %370, %cst_164 [1] : vector<16x16xf32> to vector<16xf32>
    %372 = vector.shape_cast %371 : vector<16xf32> to vector<16x1xf32>
    %373 = tpu.reciprocal %372 {approx = true} : vector<16x1xf32> -> vector<16x1xf32>
    %374 = vector.broadcast %373 : vector<16x1xf32> to vector<16x16xf32>
    %375 = arith.mulf %370, %374 : vector<16x16xf32>
    %376 = vector.broadcast %359 : vector<1x32xf32> to vector<16x32xf32>
    %377 = arith.mulf %297, %376 : vector<16x32xf32>
    %cst_165 = arith.constant dense<0.000000e+00> : vector<16x32xf32>
    %378 = tpu.matmul %375, %377, %cst_165 {dimension_numbers = #tpu.dot_dimension_numbers<[1], [0], [0], [1], [0, 0, 1, 1], [], []>} : vector<16x16xf32>, vector<16x32xf32>, vector<16x32xf32> -> vector<16x32xf32>
    %379 = arith.addf %352, %378 : vector<16x32xf32>
    %c24_i32_166 = arith.constant 24 : i32
    %380 = vector.broadcast %c24_i32_166 : i32 to vector<1x32xi32>
    %381 = arith.cmpi sge, %43, %380 : vector<1x32xi32>
    %c32_i32_167 = arith.constant 32 : i32
    %382 = vector.broadcast %c32_i32_167 : i32 to vector<1x32xi32>
    %383 = arith.cmpi slt, %43, %382 : vector<1x32xi32>
    %384 = arith.andi %381, %383 : vector<1x32xi1>
    %385 = arith.extui %384 : vector<1x32xi1> to vector<1x32xi32>
    %386 = arith.sitofp %385 : vector<1x32xi32> to vector<1x32xf32>
    %387 = vector.broadcast %386 : vector<1x32xf32> to vector<16x32xf32>
    %388 = arith.mulf %283, %387 : vector<16x32xf32>
    %cst_168 = arith.constant dense<0.000000e+00> : vector<16x16xf32>
    %389 = tpu.matmul %388, %290, %cst_168 {dimension_numbers = #tpu.dot_dimension_numbers<[1], [1], [0], [0], [0, 0, 1, 0], [], []>} : vector<16x32xf32>, vector<16x32xf32>, vector<16x16xf32> -> vector<16x16xf32>
    %cst_169 = arith.constant 0.353553385 : f32
    %390 = vector.broadcast %cst_169 : f32 to vector<16x16xf32>
    %391 = arith.mulf %389, %390 : vector<16x16xf32>
    %392 = arith.addf %391, %42 : vector<16x16xf32>
    %cst_170 = arith.constant dense<0xFF800000> : vector<16xf32>
    %393 = vector.multi_reduction <maximumf>, %392, %cst_170 [1] : vector<16x16xf32> to vector<16xf32>
    %394 = vector.shape_cast %393 : vector<16xf32> to vector<16x1xf32>
    %395 = vector.broadcast %394 : vector<16x1xf32> to vector<16x16xf32>
    %396 = arith.subf %392, %395 : vector<16x16xf32>
    %397 = math.exp %396 : vector<16x16xf32>
    %cst_171 = arith.constant dense<0.000000e+00> : vector<16xf32>
    %398 = vector.multi_reduction <add>, %397, %cst_171 [1] : vector<16x16xf32> to vector<16xf32>
    %399 = vector.shape_cast %398 : vector<16xf32> to vector<16x1xf32>
    %400 = tpu.reciprocal %399 {approx = true} : vector<16x1xf32> -> vector<16x1xf32>
    %401 = vector.broadcast %400 : vector<16x1xf32> to vector<16x16xf32>
    %402 = arith.mulf %397, %401 : vector<16x16xf32>
    %403 = vector.broadcast %386 : vector<1x32xf32> to vector<16x32xf32>
    %404 = arith.mulf %297, %403 : vector<16x32xf32>
    %cst_172 = arith.constant dense<0.000000e+00> : vector<16x32xf32>
    %405 = tpu.matmul %402, %404, %cst_172 {dimension_numbers = #tpu.dot_dimension_numbers<[1], [0], [0], [1], [0, 0, 1, 1], [], []>} : vector<16x16xf32>, vector<16x32xf32>, vector<16x32xf32> -> vector<16x32xf32>
    %406 = arith.addf %379, %405 : vector<16x32xf32>
    %407 = arith.truncf %406 : vector<16x32xf32> to vector<16x32xbf16>
    %c1_173 = arith.constant 1 : index
    %c0_174 = arith.constant 0 : index
    %c0_175 = arith.constant 0 : index
    %408 = vector.load %arg14[%c1_173, %c0_174, %c0_175] : memref<4x32x32xbf16, #tpu.memory_space<vmem>>, vector<1x32x32xbf16>
    %409 = vector.shape_cast %408 : vector<1x32x32xbf16> to vector<32x32xbf16>
    %cst_176 = arith.constant dense<0.000000e+00> : vector<16x32xf32>
    %410 = tpu.matmul %407, %409, %cst_176 {dimension_numbers = #tpu.dot_dimension_numbers<[1], [0], [0], [1], [0, 0, 1, 1], [], []>} : vector<16x32xbf16>, vector<32x32xbf16>, vector<16x32xf32> -> vector<16x32xf32>
    %c1_177 = arith.constant 1 : index
    %c0_178 = arith.constant 0 : index
    %c0_179 = arith.constant 0 : index
    %411 = vector.load %arg15[%c1_177, %c0_178, %c0_179] : memref<4x1x32xf32, #tpu.memory_space<vmem>>, vector<1x1x32xf32>
    %412 = vector.shape_cast %411 : vector<1x1x32xf32> to vector<1x32xf32>
    %413 = vector.broadcast %412 : vector<1x32xf32> to vector<16x32xf32>
    %414 = arith.addf %410, %413 : vector<16x32xf32>
    %415 = arith.addf %269, %414 : vector<16x32xf32>
    %c1_180 = arith.constant 1 : index
    %c0_181 = arith.constant 0 : index
    %c0_182 = arith.constant 0 : index
    %416 = vector.load %arg20[%c1_180, %c0_181, %c0_182] : memref<4x1x32xf32, #tpu.memory_space<vmem>>, vector<1x1x32xf32>
    %417 = vector.shape_cast %416 : vector<1x1x32xf32> to vector<1x32xf32>
    %c1_183 = arith.constant 1 : index
    %c0_184 = arith.constant 0 : index
    %c0_185 = arith.constant 0 : index
    %418 = vector.load %arg21[%c1_183, %c0_184, %c0_185] : memref<4x1x32xf32, #tpu.memory_space<vmem>>, vector<1x1x32xf32>
    %419 = vector.shape_cast %418 : vector<1x1x32xf32> to vector<1x32xf32>
    %cst_186 = arith.constant dense<0.000000e+00> : vector<16xf32>
    %420 = vector.multi_reduction <add>, %415, %cst_186 [1] : vector<16x32xf32> to vector<16xf32>
    %421 = vector.shape_cast %420 : vector<16xf32> to vector<16x1xf32>
    %cst_187 = arith.constant 3.200000e+01 : f32
    %422 = vector.broadcast %cst_187 : f32 to vector<16x1xf32>
    %423 = arith.divf %421, %422 : vector<16x1xf32>
    %424 = vector.broadcast %423 : vector<16x1xf32> to vector<16x32xf32>
    %425 = arith.subf %415, %424 : vector<16x32xf32>
    %426 = arith.mulf %425, %425 : vector<16x32xf32>
    %cst_188 = arith.constant dense<0.000000e+00> : vector<16xf32>
    %427 = vector.multi_reduction <add>, %426, %cst_188 [1] : vector<16x32xf32> to vector<16xf32>
    %428 = vector.shape_cast %427 : vector<16xf32> to vector<16x1xf32>
    %cst_189 = arith.constant 3.200000e+01 : f32
    %429 = vector.broadcast %cst_189 : f32 to vector<16x1xf32>
    %430 = arith.divf %428, %429 : vector<16x1xf32>
    %431 = vector.broadcast %423 : vector<16x1xf32> to vector<16x32xf32>
    %432 = arith.subf %415, %431 : vector<16x32xf32>
    %cst_190 = arith.constant 9.99999996E-13 : f32
    %433 = vector.broadcast %cst_190 : f32 to vector<16x1xf32>
    %434 = arith.addf %430, %433 : vector<16x1xf32>
    %435 = math.rsqrt %434 : vector<16x1xf32>
    %436 = vector.broadcast %435 : vector<16x1xf32> to vector<16x32xf32>
    %437 = arith.mulf %432, %436 : vector<16x32xf32>
    %438 = vector.broadcast %417 : vector<1x32xf32> to vector<16x32xf32>
    %439 = arith.mulf %437, %438 : vector<16x32xf32>
    %440 = vector.broadcast %419 : vector<1x32xf32> to vector<16x32xf32>
    %441 = arith.addf %439, %440 : vector<16x32xf32>
    %442 = arith.truncf %441 : vector<16x32xf32> to vector<16x32xbf16>
    %c1_191 = arith.constant 1 : index
    %c0_192 = arith.constant 0 : index
    %c0_193 = arith.constant 0 : index
    %443 = vector.load %arg16[%c1_191, %c0_192, %c0_193] : memref<4x32x64xbf16, #tpu.memory_space<vmem>>, vector<1x32x64xbf16>
    %444 = vector.shape_cast %443 : vector<1x32x64xbf16> to vector<32x64xbf16>
    %cst_194 = arith.constant dense<0.000000e+00> : vector<16x64xf32>
    %445 = tpu.matmul %442, %444, %cst_194 {dimension_numbers = #tpu.dot_dimension_numbers<[1], [0], [0], [1], [0, 0, 1, 1], [], []>} : vector<16x32xbf16>, vector<32x64xbf16>, vector<16x64xf32> -> vector<16x64xf32>
    %c1_195 = arith.constant 1 : index
    %c0_196 = arith.constant 0 : index
    %c0_197 = arith.constant 0 : index
    %446 = vector.load %arg17[%c1_195, %c0_196, %c0_197] : memref<4x1x64xf32, #tpu.memory_space<vmem>>, vector<1x1x64xf32>
    %447 = vector.shape_cast %446 : vector<1x1x64xf32> to vector<1x64xf32>
    %448 = vector.broadcast %447 : vector<1x64xf32> to vector<16x64xf32>
    %449 = arith.addf %445, %448 : vector<16x64xf32>
    %cst_198 = arith.constant 5.000000e-01 : f32
    %450 = vector.broadcast %cst_198 : f32 to vector<16x64xf32>
    %451 = arith.mulf %450, %449 : vector<16x64xf32>
    %cst_199 = arith.constant 4.471500e-02 : f32
    %452 = vector.broadcast %cst_199 : f32 to vector<16x64xf32>
    %453 = arith.mulf %452, %449 : vector<16x64xf32>
    %454 = arith.mulf %453, %449 : vector<16x64xf32>
    %455 = arith.mulf %454, %449 : vector<16x64xf32>
    %456 = arith.addf %449, %455 : vector<16x64xf32>
    %cst_200 = arith.constant 0.797884583 : f32
    %457 = vector.broadcast %cst_200 : f32 to vector<16x64xf32>
    %458 = arith.mulf %457, %456 : vector<16x64xf32>
    %459 = math.tanh %458 : vector<16x64xf32>
    %cst_201 = arith.constant 1.000000e+00 : f32
    %460 = vector.broadcast %cst_201 : f32 to vector<16x64xf32>
    %461 = arith.addf %460, %459 : vector<16x64xf32>
    %462 = arith.mulf %451, %461 : vector<16x64xf32>
    %463 = arith.truncf %462 : vector<16x64xf32> to vector<16x64xbf16>
    %c1_202 = arith.constant 1 : index
    %c0_203 = arith.constant 0 : index
    %c0_204 = arith.constant 0 : index
    %464 = vector.load %arg18[%c1_202, %c0_203, %c0_204] : memref<4x64x32xbf16, #tpu.memory_space<vmem>>, vector<1x64x32xbf16>
    %465 = vector.shape_cast %464 : vector<1x64x32xbf16> to vector<64x32xbf16>
    %cst_205 = arith.constant dense<0.000000e+00> : vector<16x32xf32>
    %466 = tpu.matmul %463, %465, %cst_205 {dimension_numbers = #tpu.dot_dimension_numbers<[1], [0], [0], [1], [0, 0, 1, 1], [], []>} : vector<16x64xbf16>, vector<64x32xbf16>, vector<16x32xf32> -> vector<16x32xf32>
    %c1_206 = arith.constant 1 : index
    %c0_207 = arith.constant 0 : index
    %c0_208 = arith.constant 0 : index
    %467 = vector.load %arg19[%c1_206, %c0_207, %c0_208] : memref<4x1x32xf32, #tpu.memory_space<vmem>>, vector<1x1x32xf32>
    %468 = vector.shape_cast %467 : vector<1x1x32xf32> to vector<1x32xf32>
    %469 = vector.broadcast %468 : vector<1x32xf32> to vector<16x32xf32>
    %470 = arith.addf %466, %469 : vector<16x32xf32>
    %471 = arith.addf %441, %470 : vector<16x32xf32>
    %c1_209 = arith.constant 1 : index
    %c0_210 = arith.constant 0 : index
    %c0_211 = arith.constant 0 : index
    %472 = vector.load %arg22[%c1_209, %c0_210, %c0_211] : memref<4x1x32xf32, #tpu.memory_space<vmem>>, vector<1x1x32xf32>
    %473 = vector.shape_cast %472 : vector<1x1x32xf32> to vector<1x32xf32>
    %c1_212 = arith.constant 1 : index
    %c0_213 = arith.constant 0 : index
    %c0_214 = arith.constant 0 : index
    %474 = vector.load %arg23[%c1_212, %c0_213, %c0_214] : memref<4x1x32xf32, #tpu.memory_space<vmem>>, vector<1x1x32xf32>
    %475 = vector.shape_cast %474 : vector<1x1x32xf32> to vector<1x32xf32>
    %cst_215 = arith.constant dense<0.000000e+00> : vector<16xf32>
    %476 = vector.multi_reduction <add>, %471, %cst_215 [1] : vector<16x32xf32> to vector<16xf32>
    %477 = vector.shape_cast %476 : vector<16xf32> to vector<16x1xf32>
    %cst_216 = arith.constant 3.200000e+01 : f32
    %478 = vector.broadcast %cst_216 : f32 to vector<16x1xf32>
    %479 = arith.divf %477, %478 : vector<16x1xf32>
    %480 = vector.broadcast %479 : vector<16x1xf32> to vector<16x32xf32>
    %481 = arith.subf %471, %480 : vector<16x32xf32>
    %482 = arith.mulf %481, %481 : vector<16x32xf32>
    %cst_217 = arith.constant dense<0.000000e+00> : vector<16xf32>
    %483 = vector.multi_reduction <add>, %482, %cst_217 [1] : vector<16x32xf32> to vector<16xf32>
    %484 = vector.shape_cast %483 : vector<16xf32> to vector<16x1xf32>
    %cst_218 = arith.constant 3.200000e+01 : f32
    %485 = vector.broadcast %cst_218 : f32 to vector<16x1xf32>
    %486 = arith.divf %484, %485 : vector<16x1xf32>
    %487 = vector.broadcast %479 : vector<16x1xf32> to vector<16x32xf32>
    %488 = arith.subf %471, %487 : vector<16x32xf32>
    %cst_219 = arith.constant 9.99999996E-13 : f32
    %489 = vector.broadcast %cst_219 : f32 to vector<16x1xf32>
    %490 = arith.addf %486, %489 : vector<16x1xf32>
    %491 = math.rsqrt %490 : vector<16x1xf32>
    %492 = vector.broadcast %491 : vector<16x1xf32> to vector<16x32xf32>
    %493 = arith.mulf %488, %492 : vector<16x32xf32>
    %494 = vector.broadcast %473 : vector<1x32xf32> to vector<16x32xf32>
    %495 = arith.mulf %493, %494 : vector<16x32xf32>
    %496 = vector.broadcast %475 : vector<1x32xf32> to vector<16x32xf32>
    %497 = arith.addf %495, %496 : vector<16x32xf32>
    %c0_220 = arith.constant 0 : index
    %c0_221 = arith.constant 0 : index
    %498 = vector.load %arg31[%c0_220, %c0_221] : memref<16x1024xf32, #tpu.memory_space<vmem>>, vector<16x1024xf32>
    %499 = arith.truncf %497 : vector<16x32xf32> to vector<16x32xbf16>
    %c64 = arith.constant 64 : index
    %c0_222 = arith.constant 0 : index
    %500 = vector.load %arg24[%c64, %c0_222] : memref<160x1024xbf16, #tpu.memory_space<vmem>>, vector<32x1024xbf16>
    %cst_223 = arith.constant dense<0.000000e+00> : vector<16x1024xf32>
    %501 = tpu.matmul %499, %500, %cst_223 {dimension_numbers = #tpu.dot_dimension_numbers<[1], [0], [0], [1], [0, 0, 1, 1], [], []>} : vector<16x32xbf16>, vector<32x1024xbf16>, vector<16x1024xf32> -> vector<16x1024xf32>
    %502 = arith.addf %498, %501 : vector<16x1024xf32>
    %c0_224 = arith.constant 0 : index
    %c0_225 = arith.constant 0 : index
    %503 = vector.load %arg31[%c0_224, %c0_225] : memref<16x1024xf32, #tpu.memory_space<vmem>>, vector<16x1024xf32>
    tpu.vector_store %arg31[%c0_224, %c0_225], %502 {strides = array<i32>} : memref<16x1024xf32, #tpu.memory_space<vmem>>, vector<16x1024xf32>,
    %504 = arith.truncf %497 : vector<16x32xf32> to vector<16x32xbf16>
    %c2 = arith.constant 2 : index
    %c0_226 = arith.constant 0 : index
    %c0_227 = arith.constant 0 : index
    %505 = vector.load %arg8[%c2, %c0_226, %c0_227] : memref<4x32x32xbf16, #tpu.memory_space<vmem>>, vector<1x32x32xbf16>
    %506 = vector.shape_cast %505 : vector<1x32x32xbf16> to vector<32x32xbf16>
    %cst_228 = arith.constant dense<0.000000e+00> : vector<16x32xf32>
    %507 = tpu.matmul %504, %506, %cst_228 {dimension_numbers = #tpu.dot_dimension_numbers<[1], [0], [0], [1], [0, 0, 1, 1], [], []>} : vector<16x32xbf16>, vector<32x32xbf16>, vector<16x32xf32> -> vector<16x32xf32>
    %c2_229 = arith.constant 2 : index
    %c0_230 = arith.constant 0 : index
    %c0_231 = arith.constant 0 : index
    %508 = vector.load %arg9[%c2_229, %c0_230, %c0_231] : memref<4x1x32xf32, #tpu.memory_space<vmem>>, vector<1x1x32xf32>
    %509 = vector.shape_cast %508 : vector<1x1x32xf32> to vector<1x32xf32>
    %510 = vector.broadcast %509 : vector<1x32xf32> to vector<16x32xf32>
    %511 = arith.addf %507, %510 : vector<16x32xf32>
    %c2_232 = arith.constant 2 : index
    %c0_233 = arith.constant 0 : index
    %c0_234 = arith.constant 0 : index
    %512 = vector.load %arg10[%c2_232, %c0_233, %c0_234] : memref<4x32x32xbf16, #tpu.memory_space<vmem>>, vector<1x32x32xbf16>
    %513 = vector.shape_cast %512 : vector<1x32x32xbf16> to vector<32x32xbf16>
    %cst_235 = arith.constant dense<0.000000e+00> : vector<16x32xf32>
    %514 = tpu.matmul %504, %513, %cst_235 {dimension_numbers = #tpu.dot_dimension_numbers<[1], [0], [0], [1], [0, 0, 1, 1], [], []>} : vector<16x32xbf16>, vector<32x32xbf16>, vector<16x32xf32> -> vector<16x32xf32>
    %c2_236 = arith.constant 2 : index
    %c0_237 = arith.constant 0 : index
    %c0_238 = arith.constant 0 : index
    %515 = vector.load %arg11[%c2_236, %c0_237, %c0_238] : memref<4x1x32xf32, #tpu.memory_space<vmem>>, vector<1x1x32xf32>
    %516 = vector.shape_cast %515 : vector<1x1x32xf32> to vector<1x32xf32>
    %517 = vector.broadcast %516 : vector<1x32xf32> to vector<16x32xf32>
    %518 = arith.addf %514, %517 : vector<16x32xf32>
    %c2_239 = arith.constant 2 : index
    %c0_240 = arith.constant 0 : index
    %c0_241 = arith.constant 0 : index
    %519 = vector.load %arg12[%c2_239, %c0_240, %c0_241] : memref<4x32x32xbf16, #tpu.memory_space<vmem>>, vector<1x32x32xbf16>
    %520 = vector.shape_cast %519 : vector<1x32x32xbf16> to vector<32x32xbf16>
    %cst_242 = arith.constant dense<0.000000e+00> : vector<16x32xf32>
    %521 = tpu.matmul %504, %520, %cst_242 {dimension_numbers = #tpu.dot_dimension_numbers<[1], [0], [0], [1], [0, 0, 1, 1], [], []>} : vector<16x32xbf16>, vector<32x32xbf16>, vector<16x32xf32> -> vector<16x32xf32>
    %c2_243 = arith.constant 2 : index
    %c0_244 = arith.constant 0 : index
    %c0_245 = arith.constant 0 : index
    %522 = vector.load %arg13[%c2_243, %c0_244, %c0_245] : memref<4x1x32xf32, #tpu.memory_space<vmem>>, vector<1x1x32xf32>
    %523 = vector.shape_cast %522 : vector<1x1x32xf32> to vector<1x32xf32>
    %524 = vector.broadcast %523 : vector<1x32xf32> to vector<16x32xf32>
    %525 = arith.addf %521, %524 : vector<16x32xf32>
    %cst_246 = arith.constant 0.000000e+00 : f32
    %526 = vector.broadcast %cst_246 : f32 to vector<16x32xf32>
    %c0_i32_247 = arith.constant 0 : i32
    %527 = vector.broadcast %c0_i32_247 : i32 to vector<1x32xi32>
    %528 = arith.cmpi sge, %43, %527 : vector<1x32xi32>
    %c8_i32_248 = arith.constant 8 : i32
    %529 = vector.broadcast %c8_i32_248 : i32 to vector<1x32xi32>
    %530 = arith.cmpi slt, %43, %529 : vector<1x32xi32>
    %531 = arith.andi %528, %530 : vector<1x32xi1>
    %532 = arith.extui %531 : vector<1x32xi1> to vector<1x32xi32>
    %533 = arith.sitofp %532 : vector<1x32xi32> to vector<1x32xf32>
    %534 = vector.broadcast %533 : vector<1x32xf32> to vector<16x32xf32>
    %535 = arith.mulf %511, %534 : vector<16x32xf32>
    %cst_249 = arith.constant dense<0.000000e+00> : vector<16x16xf32>
    %536 = tpu.matmul %535, %518, %cst_249 {dimension_numbers = #tpu.dot_dimension_numbers<[1], [1], [0], [0], [0, 0, 1, 0], [], []>} : vector<16x32xf32>, vector<16x32xf32>, vector<16x16xf32> -> vector<16x16xf32>
    %cst_250 = arith.constant 0.353553385 : f32
    %537 = vector.broadcast %cst_250 : f32 to vector<16x16xf32>
    %538 = arith.mulf %536, %537 : vector<16x16xf32>
    %539 = arith.addf %538, %42 : vector<16x16xf32>
    %cst_251 = arith.constant dense<0xFF800000> : vector<16xf32>
    %540 = vector.multi_reduction <maximumf>, %539, %cst_251 [1] : vector<16x16xf32> to vector<16xf32>
    %541 = vector.shape_cast %540 : vector<16xf32> to vector<16x1xf32>
    %542 = vector.broadcast %541 : vector<16x1xf32> to vector<16x16xf32>
    %543 = arith.subf %539, %542 : vector<16x16xf32>
    %544 = math.exp %543 : vector<16x16xf32>
    %cst_252 = arith.constant dense<0.000000e+00> : vector<16xf32>
    %545 = vector.multi_reduction <add>, %544, %cst_252 [1] : vector<16x16xf32> to vector<16xf32>
    %546 = vector.shape_cast %545 : vector<16xf32> to vector<16x1xf32>
    %547 = tpu.reciprocal %546 {approx = true} : vector<16x1xf32> -> vector<16x1xf32>
    %548 = vector.broadcast %547 : vector<16x1xf32> to vector<16x16xf32>
    %549 = arith.mulf %544, %548 : vector<16x16xf32>
    %550 = vector.broadcast %533 : vector<1x32xf32> to vector<16x32xf32>
    %551 = arith.mulf %525, %550 : vector<16x32xf32>
    %cst_253 = arith.constant dense<0.000000e+00> : vector<16x32xf32>
    %552 = tpu.matmul %549, %551, %cst_253 {dimension_numbers = #tpu.dot_dimension_numbers<[1], [0], [0], [1], [0, 0, 1, 1], [], []>} : vector<16x16xf32>, vector<16x32xf32>, vector<16x32xf32> -> vector<16x32xf32>
    %553 = arith.addf %526, %552 : vector<16x32xf32>
    %c8_i32_254 = arith.constant 8 : i32
    %554 = vector.broadcast %c8_i32_254 : i32 to vector<1x32xi32>
    %555 = arith.cmpi sge, %43, %554 : vector<1x32xi32>
    %c16_i32_255 = arith.constant 16 : i32
    %556 = vector.broadcast %c16_i32_255 : i32 to vector<1x32xi32>
    %557 = arith.cmpi slt, %43, %556 : vector<1x32xi32>
    %558 = arith.andi %555, %557 : vector<1x32xi1>
    %559 = arith.extui %558 : vector<1x32xi1> to vector<1x32xi32>
    %560 = arith.sitofp %559 : vector<1x32xi32> to vector<1x32xf32>
    %561 = vector.broadcast %560 : vector<1x32xf32> to vector<16x32xf32>
    %562 = arith.mulf %511, %561 : vector<16x32xf32>
    %cst_256 = arith.constant dense<0.000000e+00> : vector<16x16xf32>
    %563 = tpu.matmul %562, %518, %cst_256 {dimension_numbers = #tpu.dot_dimension_numbers<[1], [1], [0], [0], [0, 0, 1, 0], [], []>} : vector<16x32xf32>, vector<16x32xf32>, vector<16x16xf32> -> vector<16x16xf32>
    %cst_257 = arith.constant 0.353553385 : f32
    %564 = vector.broadcast %cst_257 : f32 to vector<16x16xf32>
    %565 = arith.mulf %563, %564 : vector<16x16xf32>
    %566 = arith.addf %565, %42 : vector<16x16xf32>
    %cst_258 = arith.constant dense<0xFF800000> : vector<16xf32>
    %567 = vector.multi_reduction <maximumf>, %566, %cst_258 [1] : vector<16x16xf32> to vector<16xf32>
    %568 = vector.shape_cast %567 : vector<16xf32> to vector<16x1xf32>
    %569 = vector.broadcast %568 : vector<16x1xf32> to vector<16x16xf32>
    %570 = arith.subf %566, %569 : vector<16x16xf32>
    %571 = math.exp %570 : vector<16x16xf32>
    %cst_259 = arith.constant dense<0.000000e+00> : vector<16xf32>
    %572 = vector.multi_reduction <add>, %571, %cst_259 [1] : vector<16x16xf32> to vector<16xf32>
    %573 = vector.shape_cast %572 : vector<16xf32> to vector<16x1xf32>
    %574 = tpu.reciprocal %573 {approx = true} : vector<16x1xf32> -> vector<16x1xf32>
    %575 = vector.broadcast %574 : vector<16x1xf32> to vector<16x16xf32>
    %576 = arith.mulf %571, %575 : vector<16x16xf32>
    %577 = vector.broadcast %560 : vector<1x32xf32> to vector<16x32xf32>
    %578 = arith.mulf %525, %577 : vector<16x32xf32>
    %cst_260 = arith.constant dense<0.000000e+00> : vector<16x32xf32>
    %579 = tpu.matmul %576, %578, %cst_260 {dimension_numbers = #tpu.dot_dimension_numbers<[1], [0], [0], [1], [0, 0, 1, 1], [], []>} : vector<16x16xf32>, vector<16x32xf32>, vector<16x32xf32> -> vector<16x32xf32>
    %580 = arith.addf %553, %579 : vector<16x32xf32>
    %c16_i32_261 = arith.constant 16 : i32
    %581 = vector.broadcast %c16_i32_261 : i32 to vector<1x32xi32>
    %582 = arith.cmpi sge, %43, %581 : vector<1x32xi32>
    %c24_i32_262 = arith.constant 24 : i32
    %583 = vector.broadcast %c24_i32_262 : i32 to vector<1x32xi32>
    %584 = arith.cmpi slt, %43, %583 : vector<1x32xi32>
    %585 = arith.andi %582, %584 : vector<1x32xi1>
    %586 = arith.extui %585 : vector<1x32xi1> to vector<1x32xi32>
    %587 = arith.sitofp %586 : vector<1x32xi32> to vector<1x32xf32>
    %588 = vector.broadcast %587 : vector<1x32xf32> to vector<16x32xf32>
    %589 = arith.mulf %511, %588 : vector<16x32xf32>
    %cst_263 = arith.constant dense<0.000000e+00> : vector<16x16xf32>
    %590 = tpu.matmul %589, %518, %cst_263 {dimension_numbers = #tpu.dot_dimension_numbers<[1], [1], [0], [0], [0, 0, 1, 0], [], []>} : vector<16x32xf32>, vector<16x32xf32>, vector<16x16xf32> -> vector<16x16xf32>
    %cst_264 = arith.constant 0.353553385 : f32
    %591 = vector.broadcast %cst_264 : f32 to vector<16x16xf32>
    %592 = arith.mulf %590, %591 : vector<16x16xf32>
    %593 = arith.addf %592, %42 : vector<16x16xf32>
    %cst_265 = arith.constant dense<0xFF800000> : vector<16xf32>
    %594 = vector.multi_reduction <maximumf>, %593, %cst_265 [1] : vector<16x16xf32> to vector<16xf32>
    %595 = vector.shape_cast %594 : vector<16xf32> to vector<16x1xf32>
    %596 = vector.broadcast %595 : vector<16x1xf32> to vector<16x16xf32>
    %597 = arith.subf %593, %596 : vector<16x16xf32>
    %598 = math.exp %597 : vector<16x16xf32>
    %cst_266 = arith.constant dense<0.000000e+00> : vector<16xf32>
    %599 = vector.multi_reduction <add>, %598, %cst_266 [1] : vector<16x16xf32> to vector<16xf32>
    %600 = vector.shape_cast %599 : vector<16xf32> to vector<16x1xf32>
    %601 = tpu.reciprocal %600 {approx = true} : vector<16x1xf32> -> vector<16x1xf32>
    %602 = vector.broadcast %601 : vector<16x1xf32> to vector<16x16xf32>
    %603 = arith.mulf %598, %602 : vector<16x16xf32>
    %604 = vector.broadcast %587 : vector<1x32xf32> to vector<16x32xf32>
    %605 = arith.mulf %525, %604 : vector<16x32xf32>
    %cst_267 = arith.constant dense<0.000000e+00> : vector<16x32xf32>
    %606 = tpu.matmul %603, %605, %cst_267 {dimension_numbers = #tpu.dot_dimension_numbers<[1], [0], [0], [1], [0, 0, 1, 1], [], []>} : vector<16x16xf32>, vector<16x32xf32>, vector<16x32xf32> -> vector<16x32xf32>
    %607 = arith.addf %580, %606 : vector<16x32xf32>
    %c24_i32_268 = arith.constant 24 : i32
    %608 = vector.broadcast %c24_i32_268 : i32 to vector<1x32xi32>
    %609 = arith.cmpi sge, %43, %608 : vector<1x32xi32>
    %c32_i32_269 = arith.constant 32 : i32
    %610 = vector.broadcast %c32_i32_269 : i32 to vector<1x32xi32>
    %611 = arith.cmpi slt, %43, %610 : vector<1x32xi32>
    %612 = arith.andi %609, %611 : vector<1x32xi1>
    %613 = arith.extui %612 : vector<1x32xi1> to vector<1x32xi32>
    %614 = arith.sitofp %613 : vector<1x32xi32> to vector<1x32xf32>
    %615 = vector.broadcast %614 : vector<1x32xf32> to vector<16x32xf32>
    %616 = arith.mulf %511, %615 : vector<16x32xf32>
    %cst_270 = arith.constant dense<0.000000e+00> : vector<16x16xf32>
    %617 = tpu.matmul %616, %518, %cst_270 {dimension_numbers = #tpu.dot_dimension_numbers<[1], [1], [0], [0], [0, 0, 1, 0], [], []>} : vector<16x32xf32>, vector<16x32xf32>, vector<16x16xf32> -> vector<16x16xf32>
    %cst_271 = arith.constant 0.353553385 : f32
    %618 = vector.broadcast %cst_271 : f32 to vector<16x16xf32>
    %619 = arith.mulf %617, %618 : vector<16x16xf32>
    %620 = arith.addf %619, %42 : vector<16x16xf32>
    %cst_272 = arith.constant dense<0xFF800000> : vector<16xf32>
    %621 = vector.multi_reduction <maximumf>, %620, %cst_272 [1] : vector<16x16xf32> to vector<16xf32>
    %622 = vector.shape_cast %621 : vector<16xf32> to vector<16x1xf32>
    %623 = vector.broadcast %622 : vector<16x1xf32> to vector<16x16xf32>
    %624 = arith.subf %620, %623 : vector<16x16xf32>
    %625 = math.exp %624 : vector<16x16xf32>
    %cst_273 = arith.constant dense<0.000000e+00> : vector<16xf32>
    %626 = vector.multi_reduction <add>, %625, %cst_273 [1] : vector<16x16xf32> to vector<16xf32>
    %627 = vector.shape_cast %626 : vector<16xf32> to vector<16x1xf32>
    %628 = tpu.reciprocal %627 {approx = true} : vector<16x1xf32> -> vector<16x1xf32>
    %629 = vector.broadcast %628 : vector<16x1xf32> to vector<16x16xf32>
    %630 = arith.mulf %625, %629 : vector<16x16xf32>
    %631 = vector.broadcast %614 : vector<1x32xf32> to vector<16x32xf32>
    %632 = arith.mulf %525, %631 : vector<16x32xf32>
    %cst_274 = arith.constant dense<0.000000e+00> : vector<16x32xf32>
    %633 = tpu.matmul %630, %632, %cst_274 {dimension_numbers = #tpu.dot_dimension_numbers<[1], [0], [0], [1], [0, 0, 1, 1], [], []>} : vector<16x16xf32>, vector<16x32xf32>, vector<16x32xf32> -> vector<16x32xf32>
    %634 = arith.addf %607, %633 : vector<16x32xf32>
    %635 = arith.truncf %634 : vector<16x32xf32> to vector<16x32xbf16>
    %c2_275 = arith.constant 2 : index
    %c0_276 = arith.constant 0 : index
    %c0_277 = arith.constant 0 : index
    %636 = vector.load %arg14[%c2_275, %c0_276, %c0_277] : memref<4x32x32xbf16, #tpu.memory_space<vmem>>, vector<1x32x32xbf16>
    %637 = vector.shape_cast %636 : vector<1x32x32xbf16> to vector<32x32xbf16>
    %cst_278 = arith.constant dense<0.000000e+00> : vector<16x32xf32>
    %638 = tpu.matmul %635, %637, %cst_278 {dimension_numbers = #tpu.dot_dimension_numbers<[1], [0], [0], [1], [0, 0, 1, 1], [], []>} : vector<16x32xbf16>, vector<32x32xbf16>, vector<16x32xf32> -> vector<16x32xf32>
    %c2_279 = arith.constant 2 : index
    %c0_280 = arith.constant 0 : index
    %c0_281 = arith.constant 0 : index
    %639 = vector.load %arg15[%c2_279, %c0_280, %c0_281] : memref<4x1x32xf32, #tpu.memory_space<vmem>>, vector<1x1x32xf32>
    %640 = vector.shape_cast %639 : vector<1x1x32xf32> to vector<1x32xf32>
    %641 = vector.broadcast %640 : vector<1x32xf32> to vector<16x32xf32>
    %642 = arith.addf %638, %641 : vector<16x32xf32>
    %643 = arith.addf %497, %642 : vector<16x32xf32>
    %c2_282 = arith.constant 2 : index
    %c0_283 = arith.constant 0 : index
    %c0_284 = arith.constant 0 : index
    %644 = vector.load %arg20[%c2_282, %c0_283, %c0_284] : memref<4x1x32xf32, #tpu.memory_space<vmem>>, vector<1x1x32xf32>
    %645 = vector.shape_cast %644 : vector<1x1x32xf32> to vector<1x32xf32>
    %c2_285 = arith.constant 2 : index
    %c0_286 = arith.constant 0 : index
    %c0_287 = arith.constant 0 : index
    %646 = vector.load %arg21[%c2_285, %c0_286, %c0_287] : memref<4x1x32xf32, #tpu.memory_space<vmem>>, vector<1x1x32xf32>
    %647 = vector.shape_cast %646 : vector<1x1x32xf32> to vector<1x32xf32>
    %cst_288 = arith.constant dense<0.000000e+00> : vector<16xf32>
    %648 = vector.multi_reduction <add>, %643, %cst_288 [1] : vector<16x32xf32> to vector<16xf32>
    %649 = vector.shape_cast %648 : vector<16xf32> to vector<16x1xf32>
    %cst_289 = arith.constant 3.200000e+01 : f32
    %650 = vector.broadcast %cst_289 : f32 to vector<16x1xf32>
    %651 = arith.divf %649, %650 : vector<16x1xf32>
    %652 = vector.broadcast %651 : vector<16x1xf32> to vector<16x32xf32>
    %653 = arith.subf %643, %652 : vector<16x32xf32>
    %654 = arith.mulf %653, %653 : vector<16x32xf32>
    %cst_290 = arith.constant dense<0.000000e+00> : vector<16xf32>
    %655 = vector.multi_reduction <add>, %654, %cst_290 [1] : vector<16x32xf32> to vector<16xf32>
    %656 = vector.shape_cast %655 : vector<16xf32> to vector<16x1xf32>
    %cst_291 = arith.constant 3.200000e+01 : f32
    %657 = vector.broadcast %cst_291 : f32 to vector<16x1xf32>
    %658 = arith.divf %656, %657 : vector<16x1xf32>
    %659 = vector.broadcast %651 : vector<16x1xf32> to vector<16x32xf32>
    %660 = arith.subf %643, %659 : vector<16x32xf32>
    %cst_292 = arith.constant 9.99999996E-13 : f32
    %661 = vector.broadcast %cst_292 : f32 to vector<16x1xf32>
    %662 = arith.addf %658, %661 : vector<16x1xf32>
    %663 = math.rsqrt %662 : vector<16x1xf32>
    %664 = vector.broadcast %663 : vector<16x1xf32> to vector<16x32xf32>
    %665 = arith.mulf %660, %664 : vector<16x32xf32>
    %666 = vector.broadcast %645 : vector<1x32xf32> to vector<16x32xf32>
    %667 = arith.mulf %665, %666 : vector<16x32xf32>
    %668 = vector.broadcast %647 : vector<1x32xf32> to vector<16x32xf32>
    %669 = arith.addf %667, %668 : vector<16x32xf32>
    %670 = arith.truncf %669 : vector<16x32xf32> to vector<16x32xbf16>
    %c2_293 = arith.constant 2 : index
    %c0_294 = arith.constant 0 : index
    %c0_295 = arith.constant 0 : index
    %671 = vector.load %arg16[%c2_293, %c0_294, %c0_295] : memref<4x32x64xbf16, #tpu.memory_space<vmem>>, vector<1x32x64xbf16>
    %672 = vector.shape_cast %671 : vector<1x32x64xbf16> to vector<32x64xbf16>
    %cst_296 = arith.constant dense<0.000000e+00> : vector<16x64xf32>
    %673 = tpu.matmul %670, %672, %cst_296 {dimension_numbers = #tpu.dot_dimension_numbers<[1], [0], [0], [1], [0, 0, 1, 1], [], []>} : vector<16x32xbf16>, vector<32x64xbf16>, vector<16x64xf32> -> vector<16x64xf32>
    %c2_297 = arith.constant 2 : index
    %c0_298 = arith.constant 0 : index
    %c0_299 = arith.constant 0 : index
    %674 = vector.load %arg17[%c2_297, %c0_298, %c0_299] : memref<4x1x64xf32, #tpu.memory_space<vmem>>, vector<1x1x64xf32>
    %675 = vector.shape_cast %674 : vector<1x1x64xf32> to vector<1x64xf32>
    %676 = vector.broadcast %675 : vector<1x64xf32> to vector<16x64xf32>
    %677 = arith.addf %673, %676 : vector<16x64xf32>
    %cst_300 = arith.constant 5.000000e-01 : f32
    %678 = vector.broadcast %cst_300 : f32 to vector<16x64xf32>
    %679 = arith.mulf %678, %677 : vector<16x64xf32>
    %cst_301 = arith.constant 4.471500e-02 : f32
    %680 = vector.broadcast %cst_301 : f32 to vector<16x64xf32>
    %681 = arith.mulf %680, %677 : vector<16x64xf32>
    %682 = arith.mulf %681, %677 : vector<16x64xf32>
    %683 = arith.mulf %682, %677 : vector<16x64xf32>
    %684 = arith.addf %677, %683 : vector<16x64xf32>
    %cst_302 = arith.constant 0.797884583 : f32
    %685 = vector.broadcast %cst_302 : f32 to vector<16x64xf32>
    %686 = arith.mulf %685, %684 : vector<16x64xf32>
    %687 = math.tanh %686 : vector<16x64xf32>
    %cst_303 = arith.constant 1.000000e+00 : f32
    %688 = vector.broadcast %cst_303 : f32 to vector<16x64xf32>
    %689 = arith.addf %688, %687 : vector<16x64xf32>
    %690 = arith.mulf %679, %689 : vector<16x64xf32>
    %691 = arith.truncf %690 : vector<16x64xf32> to vector<16x64xbf16>
    %c2_304 = arith.constant 2 : index
    %c0_305 = arith.constant 0 : index
    %c0_306 = arith.constant 0 : index
    %692 = vector.load %arg18[%c2_304, %c0_305, %c0_306] : memref<4x64x32xbf16, #tpu.memory_space<vmem>>, vector<1x64x32xbf16>
    %693 = vector.shape_cast %692 : vector<1x64x32xbf16> to vector<64x32xbf16>
    %cst_307 = arith.constant dense<0.000000e+00> : vector<16x32xf32>
    %694 = tpu.matmul %691, %693, %cst_307 {dimension_numbers = #tpu.dot_dimension_numbers<[1], [0], [0], [1], [0, 0, 1, 1], [], []>} : vector<16x64xbf16>, vector<64x32xbf16>, vector<16x32xf32> -> vector<16x32xf32>
    %c2_308 = arith.constant 2 : index
    %c0_309 = arith.constant 0 : index
    %c0_310 = arith.constant 0 : index
    %695 = vector.load %arg19[%c2_308, %c0_309, %c0_310] : memref<4x1x32xf32, #tpu.memory_space<vmem>>, vector<1x1x32xf32>
    %696 = vector.shape_cast %695 : vector<1x1x32xf32> to vector<1x32xf32>
    %697 = vector.broadcast %696 : vector<1x32xf32> to vector<16x32xf32>
    %698 = arith.addf %694, %697 : vector<16x32xf32>
    %699 = arith.addf %669, %698 : vector<16x32xf32>
    %c2_311 = arith.constant 2 : index
    %c0_312 = arith.constant 0 : index
    %c0_313 = arith.constant 0 : index
    %700 = vector.load %arg22[%c2_311, %c0_312, %c0_313] : memref<4x1x32xf32, #tpu.memory_space<vmem>>, vector<1x1x32xf32>
    %701 = vector.shape_cast %700 : vector<1x1x32xf32> to vector<1x32xf32>
    %c2_314 = arith.constant 2 : index
    %c0_315 = arith.constant 0 : index
    %c0_316 = arith.constant 0 : index
    %702 = vector.load %arg23[%c2_314, %c0_315, %c0_316] : memref<4x1x32xf32, #tpu.memory_space<vmem>>, vector<1x1x32xf32>
    %703 = vector.shape_cast %702 : vector<1x1x32xf32> to vector<1x32xf32>
    %cst_317 = arith.constant dense<0.000000e+00> : vector<16xf32>
    %704 = vector.multi_reduction <add>, %699, %cst_317 [1] : vector<16x32xf32> to vector<16xf32>
    %705 = vector.shape_cast %704 : vector<16xf32> to vector<16x1xf32>
    %cst_318 = arith.constant 3.200000e+01 : f32
    %706 = vector.broadcast %cst_318 : f32 to vector<16x1xf32>
    %707 = arith.divf %705, %706 : vector<16x1xf32>
    %708 = vector.broadcast %707 : vector<16x1xf32> to vector<16x32xf32>
    %709 = arith.subf %699, %708 : vector<16x32xf32>
    %710 = arith.mulf %709, %709 : vector<16x32xf32>
    %cst_319 = arith.constant dense<0.000000e+00> : vector<16xf32>
    %711 = vector.multi_reduction <add>, %710, %cst_319 [1] : vector<16x32xf32> to vector<16xf32>
    %712 = vector.shape_cast %711 : vector<16xf32> to vector<16x1xf32>
    %cst_320 = arith.constant 3.200000e+01 : f32
    %713 = vector.broadcast %cst_320 : f32 to vector<16x1xf32>
    %714 = arith.divf %712, %713 : vector<16x1xf32>
    %715 = vector.broadcast %707 : vector<16x1xf32> to vector<16x32xf32>
    %716 = arith.subf %699, %715 : vector<16x32xf32>
    %cst_321 = arith.constant 9.99999996E-13 : f32
    %717 = vector.broadcast %cst_321 : f32 to vector<16x1xf32>
    %718 = arith.addf %714, %717 : vector<16x1xf32>
    %719 = math.rsqrt %718 : vector<16x1xf32>
    %720 = vector.broadcast %719 : vector<16x1xf32> to vector<16x32xf32>
    %721 = arith.mulf %716, %720 : vector<16x32xf32>
    %722 = vector.broadcast %701 : vector<1x32xf32> to vector<16x32xf32>
    %723 = arith.mulf %721, %722 : vector<16x32xf32>
    %724 = vector.broadcast %703 : vector<1x32xf32> to vector<16x32xf32>
    %725 = arith.addf %723, %724 : vector<16x32xf32>
    %c0_322 = arith.constant 0 : index
    %c0_323 = arith.constant 0 : index
    %726 = vector.load %arg31[%c0_322, %c0_323] : memref<16x1024xf32, #tpu.memory_space<vmem>>, vector<16x1024xf32>
    %727 = arith.truncf %725 : vector<16x32xf32> to vector<16x32xbf16>
    %c96 = arith.constant 96 : index
    %c0_324 = arith.constant 0 : index
    %728 = vector.load %arg24[%c96, %c0_324] : memref<160x1024xbf16, #tpu.memory_space<vmem>>, vector<32x1024xbf16>
    %cst_325 = arith.constant dense<0.000000e+00> : vector<16x1024xf32>
    %729 = tpu.matmul %727, %728, %cst_325 {dimension_numbers = #tpu.dot_dimension_numbers<[1], [0], [0], [1], [0, 0, 1, 1], [], []>} : vector<16x32xbf16>, vector<32x1024xbf16>, vector<16x1024xf32> -> vector<16x1024xf32>
    %730 = arith.addf %726, %729 : vector<16x1024xf32>
    %c0_326 = arith.constant 0 : index
    %c0_327 = arith.constant 0 : index
    %731 = vector.load %arg31[%c0_326, %c0_327] : memref<16x1024xf32, #tpu.memory_space<vmem>>, vector<16x1024xf32>
    tpu.vector_store %arg31[%c0_326, %c0_327], %730 {strides = array<i32>} : memref<16x1024xf32, #tpu.memory_space<vmem>>, vector<16x1024xf32>,
    %732 = arith.truncf %725 : vector<16x32xf32> to vector<16x32xbf16>
    %c3 = arith.constant 3 : index
    %c0_328 = arith.constant 0 : index
    %c0_329 = arith.constant 0 : index
    %733 = vector.load %arg8[%c3, %c0_328, %c0_329] : memref<4x32x32xbf16, #tpu.memory_space<vmem>>, vector<1x32x32xbf16>
    %734 = vector.shape_cast %733 : vector<1x32x32xbf16> to vector<32x32xbf16>
    %cst_330 = arith.constant dense<0.000000e+00> : vector<16x32xf32>
    %735 = tpu.matmul %732, %734, %cst_330 {dimension_numbers = #tpu.dot_dimension_numbers<[1], [0], [0], [1], [0, 0, 1, 1], [], []>} : vector<16x32xbf16>, vector<32x32xbf16>, vector<16x32xf32> -> vector<16x32xf32>
    %c3_331 = arith.constant 3 : index
    %c0_332 = arith.constant 0 : index
    %c0_333 = arith.constant 0 : index
    %736 = vector.load %arg9[%c3_331, %c0_332, %c0_333] : memref<4x1x32xf32, #tpu.memory_space<vmem>>, vector<1x1x32xf32>
    %737 = vector.shape_cast %736 : vector<1x1x32xf32> to vector<1x32xf32>
    %738 = vector.broadcast %737 : vector<1x32xf32> to vector<16x32xf32>
    %739 = arith.addf %735, %738 : vector<16x32xf32>
    %c3_334 = arith.constant 3 : index
    %c0_335 = arith.constant 0 : index
    %c0_336 = arith.constant 0 : index
    %740 = vector.load %arg10[%c3_334, %c0_335, %c0_336] : memref<4x32x32xbf16, #tpu.memory_space<vmem>>, vector<1x32x32xbf16>
    %741 = vector.shape_cast %740 : vector<1x32x32xbf16> to vector<32x32xbf16>
    %cst_337 = arith.constant dense<0.000000e+00> : vector<16x32xf32>
    %742 = tpu.matmul %732, %741, %cst_337 {dimension_numbers = #tpu.dot_dimension_numbers<[1], [0], [0], [1], [0, 0, 1, 1], [], []>} : vector<16x32xbf16>, vector<32x32xbf16>, vector<16x32xf32> -> vector<16x32xf32>
    %c3_338 = arith.constant 3 : index
    %c0_339 = arith.constant 0 : index
    %c0_340 = arith.constant 0 : index
    %743 = vector.load %arg11[%c3_338, %c0_339, %c0_340] : memref<4x1x32xf32, #tpu.memory_space<vmem>>, vector<1x1x32xf32>
    %744 = vector.shape_cast %743 : vector<1x1x32xf32> to vector<1x32xf32>
    %745 = vector.broadcast %744 : vector<1x32xf32> to vector<16x32xf32>
    %746 = arith.addf %742, %745 : vector<16x32xf32>
    %c3_341 = arith.constant 3 : index
    %c0_342 = arith.constant 0 : index
    %c0_343 = arith.constant 0 : index
    %747 = vector.load %arg12[%c3_341, %c0_342, %c0_343] : memref<4x32x32xbf16, #tpu.memory_space<vmem>>, vector<1x32x32xbf16>
    %748 = vector.shape_cast %747 : vector<1x32x32xbf16> to vector<32x32xbf16>
    %cst_344 = arith.constant dense<0.000000e+00> : vector<16x32xf32>
    %749 = tpu.matmul %732, %748, %cst_344 {dimension_numbers = #tpu.dot_dimension_numbers<[1], [0], [0], [1], [0, 0, 1, 1], [], []>} : vector<16x32xbf16>, vector<32x32xbf16>, vector<16x32xf32> -> vector<16x32xf32>
    %c3_345 = arith.constant 3 : index
    %c0_346 = arith.constant 0 : index
    %c0_347 = arith.constant 0 : index
    %750 = vector.load %arg13[%c3_345, %c0_346, %c0_347] : memref<4x1x32xf32, #tpu.memory_space<vmem>>, vector<1x1x32xf32>
    %751 = vector.shape_cast %750 : vector<1x1x32xf32> to vector<1x32xf32>
    %752 = vector.broadcast %751 : vector<1x32xf32> to vector<16x32xf32>
    %753 = arith.addf %749, %752 : vector<16x32xf32>
    %cst_348 = arith.constant 0.000000e+00 : f32
    %754 = vector.broadcast %cst_348 : f32 to vector<16x32xf32>
    %c0_i32_349 = arith.constant 0 : i32
    %755 = vector.broadcast %c0_i32_349 : i32 to vector<1x32xi32>
    %756 = arith.cmpi sge, %43, %755 : vector<1x32xi32>
    %c8_i32_350 = arith.constant 8 : i32
    %757 = vector.broadcast %c8_i32_350 : i32 to vector<1x32xi32>
    %758 = arith.cmpi slt, %43, %757 : vector<1x32xi32>
    %759 = arith.andi %756, %758 : vector<1x32xi1>
    %760 = arith.extui %759 : vector<1x32xi1> to vector<1x32xi32>
    %761 = arith.sitofp %760 : vector<1x32xi32> to vector<1x32xf32>
    %762 = vector.broadcast %761 : vector<1x32xf32> to vector<16x32xf32>
    %763 = arith.mulf %739, %762 : vector<16x32xf32>
    %cst_351 = arith.constant dense<0.000000e+00> : vector<16x16xf32>
    %764 = tpu.matmul %763, %746, %cst_351 {dimension_numbers = #tpu.dot_dimension_numbers<[1], [1], [0], [0], [0, 0, 1, 0], [], []>} : vector<16x32xf32>, vector<16x32xf32>, vector<16x16xf32> -> vector<16x16xf32>
    %cst_352 = arith.constant 0.353553385 : f32
    %765 = vector.broadcast %cst_352 : f32 to vector<16x16xf32>
    %766 = arith.mulf %764, %765 : vector<16x16xf32>
    %767 = arith.addf %766, %42 : vector<16x16xf32>
    %cst_353 = arith.constant dense<0xFF800000> : vector<16xf32>
    %768 = vector.multi_reduction <maximumf>, %767, %cst_353 [1] : vector<16x16xf32> to vector<16xf32>
    %769 = vector.shape_cast %768 : vector<16xf32> to vector<16x1xf32>
    %770 = vector.broadcast %769 : vector<16x1xf32> to vector<16x16xf32>
    %771 = arith.subf %767, %770 : vector<16x16xf32>
    %772 = math.exp %771 : vector<16x16xf32>
    %cst_354 = arith.constant dense<0.000000e+00> : vector<16xf32>
    %773 = vector.multi_reduction <add>, %772, %cst_354 [1] : vector<16x16xf32> to vector<16xf32>
    %774 = vector.shape_cast %773 : vector<16xf32> to vector<16x1xf32>
    %775 = tpu.reciprocal %774 {approx = true} : vector<16x1xf32> -> vector<16x1xf32>
    %776 = vector.broadcast %775 : vector<16x1xf32> to vector<16x16xf32>
    %777 = arith.mulf %772, %776 : vector<16x16xf32>
    %778 = vector.broadcast %761 : vector<1x32xf32> to vector<16x32xf32>
    %779 = arith.mulf %753, %778 : vector<16x32xf32>
    %cst_355 = arith.constant dense<0.000000e+00> : vector<16x32xf32>
    %780 = tpu.matmul %777, %779, %cst_355 {dimension_numbers = #tpu.dot_dimension_numbers<[1], [0], [0], [1], [0, 0, 1, 1], [], []>} : vector<16x16xf32>, vector<16x32xf32>, vector<16x32xf32> -> vector<16x32xf32>
    %781 = arith.addf %754, %780 : vector<16x32xf32>
    %c8_i32_356 = arith.constant 8 : i32
    %782 = vector.broadcast %c8_i32_356 : i32 to vector<1x32xi32>
    %783 = arith.cmpi sge, %43, %782 : vector<1x32xi32>
    %c16_i32_357 = arith.constant 16 : i32
    %784 = vector.broadcast %c16_i32_357 : i32 to vector<1x32xi32>
    %785 = arith.cmpi slt, %43, %784 : vector<1x32xi32>
    %786 = arith.andi %783, %785 : vector<1x32xi1>
    %787 = arith.extui %786 : vector<1x32xi1> to vector<1x32xi32>
    %788 = arith.sitofp %787 : vector<1x32xi32> to vector<1x32xf32>
    %789 = vector.broadcast %788 : vector<1x32xf32> to vector<16x32xf32>
    %790 = arith.mulf %739, %789 : vector<16x32xf32>
    %cst_358 = arith.constant dense<0.000000e+00> : vector<16x16xf32>
    %791 = tpu.matmul %790, %746, %cst_358 {dimension_numbers = #tpu.dot_dimension_numbers<[1], [1], [0], [0], [0, 0, 1, 0], [], []>} : vector<16x32xf32>, vector<16x32xf32>, vector<16x16xf32> -> vector<16x16xf32>
    %cst_359 = arith.constant 0.353553385 : f32
    %792 = vector.broadcast %cst_359 : f32 to vector<16x16xf32>
    %793 = arith.mulf %791, %792 : vector<16x16xf32>
    %794 = arith.addf %793, %42 : vector<16x16xf32>
    %cst_360 = arith.constant dense<0xFF800000> : vector<16xf32>
    %795 = vector.multi_reduction <maximumf>, %794, %cst_360 [1] : vector<16x16xf32> to vector<16xf32>
    %796 = vector.shape_cast %795 : vector<16xf32> to vector<16x1xf32>
    %797 = vector.broadcast %796 : vector<16x1xf32> to vector<16x16xf32>
    %798 = arith.subf %794, %797 : vector<16x16xf32>
    %799 = math.exp %798 : vector<16x16xf32>
    %cst_361 = arith.constant dense<0.000000e+00> : vector<16xf32>
    %800 = vector.multi_reduction <add>, %799, %cst_361 [1] : vector<16x16xf32> to vector<16xf32>
    %801 = vector.shape_cast %800 : vector<16xf32> to vector<16x1xf32>
    %802 = tpu.reciprocal %801 {approx = true} : vector<16x1xf32> -> vector<16x1xf32>
    %803 = vector.broadcast %802 : vector<16x1xf32> to vector<16x16xf32>
    %804 = arith.mulf %799, %803 : vector<16x16xf32>
    %805 = vector.broadcast %788 : vector<1x32xf32> to vector<16x32xf32>
    %806 = arith.mulf %753, %805 : vector<16x32xf32>
    %cst_362 = arith.constant dense<0.000000e+00> : vector<16x32xf32>
    %807 = tpu.matmul %804, %806, %cst_362 {dimension_numbers = #tpu.dot_dimension_numbers<[1], [0], [0], [1], [0, 0, 1, 1], [], []>} : vector<16x16xf32>, vector<16x32xf32>, vector<16x32xf32> -> vector<16x32xf32>
    %808 = arith.addf %781, %807 : vector<16x32xf32>
    %c16_i32_363 = arith.constant 16 : i32
    %809 = vector.broadcast %c16_i32_363 : i32 to vector<1x32xi32>
    %810 = arith.cmpi sge, %43, %809 : vector<1x32xi32>
    %c24_i32_364 = arith.constant 24 : i32
    %811 = vector.broadcast %c24_i32_364 : i32 to vector<1x32xi32>
    %812 = arith.cmpi slt, %43, %811 : vector<1x32xi32>
    %813 = arith.andi %810, %812 : vector<1x32xi1>
    %814 = arith.extui %813 : vector<1x32xi1> to vector<1x32xi32>
    %815 = arith.sitofp %814 : vector<1x32xi32> to vector<1x32xf32>
    %816 = vector.broadcast %815 : vector<1x32xf32> to vector<16x32xf32>
    %817 = arith.mulf %739, %816 : vector<16x32xf32>
    %cst_365 = arith.constant dense<0.000000e+00> : vector<16x16xf32>
    %818 = tpu.matmul %817, %746, %cst_365 {dimension_numbers = #tpu.dot_dimension_numbers<[1], [1], [0], [0], [0, 0, 1, 0], [], []>} : vector<16x32xf32>, vector<16x32xf32>, vector<16x16xf32> -> vector<16x16xf32>
    %cst_366 = arith.constant 0.353553385 : f32
    %819 = vector.broadcast %cst_366 : f32 to vector<16x16xf32>
    %820 = arith.mulf %818, %819 : vector<16x16xf32>
    %821 = arith.addf %820, %42 : vector<16x16xf32>
    %cst_367 = arith.constant dense<0xFF800000> : vector<16xf32>
    %822 = vector.multi_reduction <maximumf>, %821, %cst_367 [1] : vector<16x16xf32> to vector<16xf32>
    %823 = vector.shape_cast %822 : vector<16xf32> to vector<16x1xf32>
    %824 = vector.broadcast %823 : vector<16x1xf32> to vector<16x16xf32>
    %825 = arith.subf %821, %824 : vector<16x16xf32>
    %826 = math.exp %825 : vector<16x16xf32>
    %cst_368 = arith.constant dense<0.000000e+00> : vector<16xf32>
    %827 = vector.multi_reduction <add>, %826, %cst_368 [1] : vector<16x16xf32> to vector<16xf32>
    %828 = vector.shape_cast %827 : vector<16xf32> to vector<16x1xf32>
    %829 = tpu.reciprocal %828 {approx = true} : vector<16x1xf32> -> vector<16x1xf32>
    %830 = vector.broadcast %829 : vector<16x1xf32> to vector<16x16xf32>
    %831 = arith.mulf %826, %830 : vector<16x16xf32>
    %832 = vector.broadcast %815 : vector<1x32xf32> to vector<16x32xf32>
    %833 = arith.mulf %753, %832 : vector<16x32xf32>
    %cst_369 = arith.constant dense<0.000000e+00> : vector<16x32xf32>
    %834 = tpu.matmul %831, %833, %cst_369 {dimension_numbers = #tpu.dot_dimension_numbers<[1], [0], [0], [1], [0, 0, 1, 1], [], []>} : vector<16x16xf32>, vector<16x32xf32>, vector<16x32xf32> -> vector<16x32xf32>
    %835 = arith.addf %808, %834 : vector<16x32xf32>
    %c24_i32_370 = arith.constant 24 : i32
    %836 = vector.broadcast %c24_i32_370 : i32 to vector<1x32xi32>
    %837 = arith.cmpi sge, %43, %836 : vector<1x32xi32>
    %c32_i32_371 = arith.constant 32 : i32
    %838 = vector.broadcast %c32_i32_371 : i32 to vector<1x32xi32>
    %839 = arith.cmpi slt, %43, %838 : vector<1x32xi32>
    %840 = arith.andi %837, %839 : vector<1x32xi1>
    %841 = arith.extui %840 : vector<1x32xi1> to vector<1x32xi32>
    %842 = arith.sitofp %841 : vector<1x32xi32> to vector<1x32xf32>
    %843 = vector.broadcast %842 : vector<1x32xf32> to vector<16x32xf32>
    %844 = arith.mulf %739, %843 : vector<16x32xf32>
    %cst_372 = arith.constant dense<0.000000e+00> : vector<16x16xf32>
    %845 = tpu.matmul %844, %746, %cst_372 {dimension_numbers = #tpu.dot_dimension_numbers<[1], [1], [0], [0], [0, 0, 1, 0], [], []>} : vector<16x32xf32>, vector<16x32xf32>, vector<16x16xf32> -> vector<16x16xf32>
    %cst_373 = arith.constant 0.353553385 : f32
    %846 = vector.broadcast %cst_373 : f32 to vector<16x16xf32>
    %847 = arith.mulf %845, %846 : vector<16x16xf32>
    %848 = arith.addf %847, %42 : vector<16x16xf32>
    %cst_374 = arith.constant dense<0xFF800000> : vector<16xf32>
    %849 = vector.multi_reduction <maximumf>, %848, %cst_374 [1] : vector<16x16xf32> to vector<16xf32>
    %850 = vector.shape_cast %849 : vector<16xf32> to vector<16x1xf32>
    %851 = vector.broadcast %850 : vector<16x1xf32> to vector<16x16xf32>
    %852 = arith.subf %848, %851 : vector<16x16xf32>
    %853 = math.exp %852 : vector<16x16xf32>
    %cst_375 = arith.constant dense<0.000000e+00> : vector<16xf32>
    %854 = vector.multi_reduction <add>, %853, %cst_375 [1] : vector<16x16xf32> to vector<16xf32>
    %855 = vector.shape_cast %854 : vector<16xf32> to vector<16x1xf32>
    %856 = tpu.reciprocal %855 {approx = true} : vector<16x1xf32> -> vector<16x1xf32>
    %857 = vector.broadcast %856 : vector<16x1xf32> to vector<16x16xf32>
    %858 = arith.mulf %853, %857 : vector<16x16xf32>
    %859 = vector.broadcast %842 : vector<1x32xf32> to vector<16x32xf32>
    %860 = arith.mulf %753, %859 : vector<16x32xf32>
    %cst_376 = arith.constant dense<0.000000e+00> : vector<16x32xf32>
    %861 = tpu.matmul %858, %860, %cst_376 {dimension_numbers = #tpu.dot_dimension_numbers<[1], [0], [0], [1], [0, 0, 1, 1], [], []>} : vector<16x16xf32>, vector<16x32xf32>, vector<16x32xf32> -> vector<16x32xf32>
    %862 = arith.addf %835, %861 : vector<16x32xf32>
    %863 = arith.truncf %862 : vector<16x32xf32> to vector<16x32xbf16>
    %c3_377 = arith.constant 3 : index
    %c0_378 = arith.constant 0 : index
    %c0_379 = arith.constant 0 : index
    %864 = vector.load %arg14[%c3_377, %c0_378, %c0_379] : memref<4x32x32xbf16, #tpu.memory_space<vmem>>, vector<1x32x32xbf16>
    %865 = vector.shape_cast %864 : vector<1x32x32xbf16> to vector<32x32xbf16>
    %cst_380 = arith.constant dense<0.000000e+00> : vector<16x32xf32>
    %866 = tpu.matmul %863, %865, %cst_380 {dimension_numbers = #tpu.dot_dimension_numbers<[1], [0], [0], [1], [0, 0, 1, 1], [], []>} : vector<16x32xbf16>, vector<32x32xbf16>, vector<16x32xf32> -> vector<16x32xf32>
    %c3_381 = arith.constant 3 : index
    %c0_382 = arith.constant 0 : index
    %c0_383 = arith.constant 0 : index
    %867 = vector.load %arg15[%c3_381, %c0_382, %c0_383] : memref<4x1x32xf32, #tpu.memory_space<vmem>>, vector<1x1x32xf32>
    %868 = vector.shape_cast %867 : vector<1x1x32xf32> to vector<1x32xf32>
    %869 = vector.broadcast %868 : vector<1x32xf32> to vector<16x32xf32>
    %870 = arith.addf %866, %869 : vector<16x32xf32>
    %871 = arith.addf %725, %870 : vector<16x32xf32>
    %c3_384 = arith.constant 3 : index
    %c0_385 = arith.constant 0 : index
    %c0_386 = arith.constant 0 : index
    %872 = vector.load %arg20[%c3_384, %c0_385, %c0_386] : memref<4x1x32xf32, #tpu.memory_space<vmem>>, vector<1x1x32xf32>
    %873 = vector.shape_cast %872 : vector<1x1x32xf32> to vector<1x32xf32>
    %c3_387 = arith.constant 3 : index
    %c0_388 = arith.constant 0 : index
    %c0_389 = arith.constant 0 : index
    %874 = vector.load %arg21[%c3_387, %c0_388, %c0_389] : memref<4x1x32xf32, #tpu.memory_space<vmem>>, vector<1x1x32xf32>
    %875 = vector.shape_cast %874 : vector<1x1x32xf32> to vector<1x32xf32>
    %cst_390 = arith.constant dense<0.000000e+00> : vector<16xf32>
    %876 = vector.multi_reduction <add>, %871, %cst_390 [1] : vector<16x32xf32> to vector<16xf32>
    %877 = vector.shape_cast %876 : vector<16xf32> to vector<16x1xf32>
    %cst_391 = arith.constant 3.200000e+01 : f32
    %878 = vector.broadcast %cst_391 : f32 to vector<16x1xf32>
    %879 = arith.divf %877, %878 : vector<16x1xf32>
    %880 = vector.broadcast %879 : vector<16x1xf32> to vector<16x32xf32>
    %881 = arith.subf %871, %880 : vector<16x32xf32>
    %882 = arith.mulf %881, %881 : vector<16x32xf32>
    %cst_392 = arith.constant dense<0.000000e+00> : vector<16xf32>
    %883 = vector.multi_reduction <add>, %882, %cst_392 [1] : vector<16x32xf32> to vector<16xf32>
    %884 = vector.shape_cast %883 : vector<16xf32> to vector<16x1xf32>
    %cst_393 = arith.constant 3.200000e+01 : f32
    %885 = vector.broadcast %cst_393 : f32 to vector<16x1xf32>
    %886 = arith.divf %884, %885 : vector<16x1xf32>
    %887 = vector.broadcast %879 : vector<16x1xf32> to vector<16x32xf32>
    %888 = arith.subf %871, %887 : vector<16x32xf32>
    %cst_394 = arith.constant 9.99999996E-13 : f32
    %889 = vector.broadcast %cst_394 : f32 to vector<16x1xf32>
    %890 = arith.addf %886, %889 : vector<16x1xf32>
    %891 = math.rsqrt %890 : vector<16x1xf32>
    %892 = vector.broadcast %891 : vector<16x1xf32> to vector<16x32xf32>
    %893 = arith.mulf %888, %892 : vector<16x32xf32>
    %894 = vector.broadcast %873 : vector<1x32xf32> to vector<16x32xf32>
    %895 = arith.mulf %893, %894 : vector<16x32xf32>
    %896 = vector.broadcast %875 : vector<1x32xf32> to vector<16x32xf32>
    %897 = arith.addf %895, %896 : vector<16x32xf32>
    %898 = arith.truncf %897 : vector<16x32xf32> to vector<16x32xbf16>
    %c3_395 = arith.constant 3 : index
    %c0_396 = arith.constant 0 : index
    %c0_397 = arith.constant 0 : index
    %899 = vector.load %arg16[%c3_395, %c0_396, %c0_397] : memref<4x32x64xbf16, #tpu.memory_space<vmem>>, vector<1x32x64xbf16>
    %900 = vector.shape_cast %899 : vector<1x32x64xbf16> to vector<32x64xbf16>
    %cst_398 = arith.constant dense<0.000000e+00> : vector<16x64xf32>
    %901 = tpu.matmul %898, %900, %cst_398 {dimension_numbers = #tpu.dot_dimension_numbers<[1], [0], [0], [1], [0, 0, 1, 1], [], []>} : vector<16x32xbf16>, vector<32x64xbf16>, vector<16x64xf32> -> vector<16x64xf32>
    %c3_399 = arith.constant 3 : index
    %c0_400 = arith.constant 0 : index
    %c0_401 = arith.constant 0 : index
    %902 = vector.load %arg17[%c3_399, %c0_400, %c0_401] : memref<4x1x64xf32, #tpu.memory_space<vmem>>, vector<1x1x64xf32>
    %903 = vector.shape_cast %902 : vector<1x1x64xf32> to vector<1x64xf32>
    %904 = vector.broadcast %903 : vector<1x64xf32> to vector<16x64xf32>
    %905 = arith.addf %901, %904 : vector<16x64xf32>
    %cst_402 = arith.constant 5.000000e-01 : f32
    %906 = vector.broadcast %cst_402 : f32 to vector<16x64xf32>
    %907 = arith.mulf %906, %905 : vector<16x64xf32>
    %cst_403 = arith.constant 4.471500e-02 : f32
    %908 = vector.broadcast %cst_403 : f32 to vector<16x64xf32>
    %909 = arith.mulf %908, %905 : vector<16x64xf32>
    %910 = arith.mulf %909, %905 : vector<16x64xf32>
    %911 = arith.mulf %910, %905 : vector<16x64xf32>
    %912 = arith.addf %905, %911 : vector<16x64xf32>
    %cst_404 = arith.constant 0.797884583 : f32
    %913 = vector.broadcast %cst_404 : f32 to vector<16x64xf32>
    %914 = arith.mulf %913, %912 : vector<16x64xf32>
    %915 = math.tanh %914 : vector<16x64xf32>
    %cst_405 = arith.constant 1.000000e+00 : f32
    %916 = vector.broadcast %cst_405 : f32 to vector<16x64xf32>
    %917 = arith.addf %916, %915 : vector<16x64xf32>
    %918 = arith.mulf %907, %917 : vector<16x64xf32>
    %919 = arith.truncf %918 : vector<16x64xf32> to vector<16x64xbf16>
    %c3_406 = arith.constant 3 : index
    %c0_407 = arith.constant 0 : index
    %c0_408 = arith.constant 0 : index
    %920 = vector.load %arg18[%c3_406, %c0_407, %c0_408] : memref<4x64x32xbf16, #tpu.memory_space<vmem>>, vector<1x64x32xbf16>
    %921 = vector.shape_cast %920 : vector<1x64x32xbf16> to vector<64x32xbf16>
    %cst_409 = arith.constant dense<0.000000e+00> : vector<16x32xf32>
    %922 = tpu.matmul %919, %921, %cst_409 {dimension_numbers = #tpu.dot_dimension_numbers<[1], [0], [0], [1], [0, 0, 1, 1], [], []>} : vector<16x64xbf16>, vector<64x32xbf16>, vector<16x32xf32> -> vector<16x32xf32>
    %c3_410 = arith.constant 3 : index
    %c0_411 = arith.constant 0 : index
    %c0_412 = arith.constant 0 : index
    %923 = vector.load %arg19[%c3_410, %c0_411, %c0_412] : memref<4x1x32xf32, #tpu.memory_space<vmem>>, vector<1x1x32xf32>
    %924 = vector.shape_cast %923 : vector<1x1x32xf32> to vector<1x32xf32>
    %925 = vector.broadcast %924 : vector<1x32xf32> to vector<16x32xf32>
    %926 = arith.addf %922, %925 : vector<16x32xf32>
    %927 = arith.addf %897, %926 : vector<16x32xf32>
    %c3_413 = arith.constant 3 : index
    %c0_414 = arith.constant 0 : index
    %c0_415 = arith.constant 0 : index
    %928 = vector.load %arg22[%c3_413, %c0_414, %c0_415] : memref<4x1x32xf32, #tpu.memory_space<vmem>>, vector<1x1x32xf32>
    %929 = vector.shape_cast %928 : vector<1x1x32xf32> to vector<1x32xf32>
    %c3_416 = arith.constant 3 : index
    %c0_417 = arith.constant 0 : index
    %c0_418 = arith.constant 0 : index
    %930 = vector.load %arg23[%c3_416, %c0_417, %c0_418] : memref<4x1x32xf32, #tpu.memory_space<vmem>>, vector<1x1x32xf32>
    %931 = vector.shape_cast %930 : vector<1x1x32xf32> to vector<1x32xf32>
    %cst_419 = arith.constant dense<0.000000e+00> : vector<16xf32>
    %932 = vector.multi_reduction <add>, %927, %cst_419 [1] : vector<16x32xf32> to vector<16xf32>
    %933 = vector.shape_cast %932 : vector<16xf32> to vector<16x1xf32>
    %cst_420 = arith.constant 3.200000e+01 : f32
    %934 = vector.broadcast %cst_420 : f32 to vector<16x1xf32>
    %935 = arith.divf %933, %934 : vector<16x1xf32>
    %936 = vector.broadcast %935 : vector<16x1xf32> to vector<16x32xf32>
    %937 = arith.subf %927, %936 : vector<16x32xf32>
    %938 = arith.mulf %937, %937 : vector<16x32xf32>
    %cst_421 = arith.constant dense<0.000000e+00> : vector<16xf32>
    %939 = vector.multi_reduction <add>, %938, %cst_421 [1] : vector<16x32xf32> to vector<16xf32>
    %940 = vector.shape_cast %939 : vector<16xf32> to vector<16x1xf32>
    %cst_422 = arith.constant 3.200000e+01 : f32
    %941 = vector.broadcast %cst_422 : f32 to vector<16x1xf32>
    %942 = arith.divf %940, %941 : vector<16x1xf32>
    %943 = vector.broadcast %935 : vector<16x1xf32> to vector<16x32xf32>
    %944 = arith.subf %927, %943 : vector<16x32xf32>
    %cst_423 = arith.constant 9.99999996E-13 : f32
    %945 = vector.broadcast %cst_423 : f32 to vector<16x1xf32>
    %946 = arith.addf %942, %945 : vector<16x1xf32>
    %947 = math.rsqrt %946 : vector<16x1xf32>
    %948 = vector.broadcast %947 : vector<16x1xf32> to vector<16x32xf32>
    %949 = arith.mulf %944, %948 : vector<16x32xf32>
    %950 = vector.broadcast %929 : vector<1x32xf32> to vector<16x32xf32>
    %951 = arith.mulf %949, %950 : vector<16x32xf32>
    %952 = vector.broadcast %931 : vector<1x32xf32> to vector<16x32xf32>
    %953 = arith.addf %951, %952 : vector<16x32xf32>
    %c0_424 = arith.constant 0 : index
    %c0_425 = arith.constant 0 : index
    %954 = vector.load %arg31[%c0_424, %c0_425] : memref<16x1024xf32, #tpu.memory_space<vmem>>, vector<16x1024xf32>
    %955 = arith.truncf %953 : vector<16x32xf32> to vector<16x32xbf16>
    %c128 = arith.constant 128 : index
    %c0_426 = arith.constant 0 : index
    %956 = vector.load %arg24[%c128, %c0_426] : memref<160x1024xbf16, #tpu.memory_space<vmem>>, vector<32x1024xbf16>
    %cst_427 = arith.constant dense<0.000000e+00> : vector<16x1024xf32>
    %957 = tpu.matmul %955, %956, %cst_427 {dimension_numbers = #tpu.dot_dimension_numbers<[1], [0], [0], [1], [0, 0, 1, 1], [], []>} : vector<16x32xbf16>, vector<32x1024xbf16>, vector<16x1024xf32> -> vector<16x1024xf32>
    %958 = arith.addf %954, %957 : vector<16x1024xf32>
    %c0_428 = arith.constant 0 : index
    %c0_429 = arith.constant 0 : index
    %959 = vector.load %arg31[%c0_428, %c0_429] : memref<16x1024xf32, #tpu.memory_space<vmem>>, vector<16x1024xf32>
    tpu.vector_store %arg31[%c0_428, %c0_429], %958 {strides = array<i32>} : memref<16x1024xf32, #tpu.memory_space<vmem>>, vector<16x1024xf32>,
    %c0_430 = arith.constant 0 : index
    %c0_431 = arith.constant 0 : index
    %960 = vector.load %arg31[%c0_430, %c0_431] : memref<16x1024xf32, #tpu.memory_space<vmem>>, vector<16x1024xf32>
    %c0_432 = arith.constant 0 : index
    %c0_433 = arith.constant 0 : index
    %961 = vector.load %arg25[%c0_432, %c0_433] : memref<1x1024xf32, #tpu.memory_space<vmem>>, vector<1x1024xf32>
    %962 = vector.broadcast %961 : vector<1x1024xf32> to vector<16x1024xf32>
    %963 = arith.addf %960, %962 : vector<16x1024xf32>
    %cst_434 = arith.constant 0.000000e+00 : f32
    %964 = vector.broadcast %cst_434 : f32 to vector<16x1024xf32>
    %965 = arith.maximumf %963, %964 : vector<16x1024xf32>
    %966 = arith.truncf %965 : vector<16x1024xf32> to vector<16x1024xbf16>
    %c0_435 = arith.constant 0 : index
    %c0_436 = arith.constant 0 : index
    %967 = vector.load %arg26[%c0_435, %c0_436] : memref<1024x128xbf16, #tpu.memory_space<vmem>>, vector<1024x128xbf16>
    %cst_437 = arith.constant dense<0.000000e+00> : vector<16x128xf32>
    %968 = tpu.matmul %966, %967, %cst_437 {dimension_numbers = #tpu.dot_dimension_numbers<[1], [0], [0], [1], [0, 0, 1, 1], [], []>} : vector<16x1024xbf16>, vector<1024x128xbf16>, vector<16x128xf32> -> vector<16x128xf32>
    %c0_438 = arith.constant 0 : index
    %c0_439 = arith.constant 0 : index
    %969 = vector.load %arg27[%c0_438, %c0_439] : memref<1x128xf32, #tpu.memory_space<vmem>>, vector<1x128xf32>
    %970 = vector.broadcast %969 : vector<1x128xf32> to vector<16x128xf32>
    %971 = arith.addf %968, %970 : vector<16x128xf32>
    %cst_440 = arith.constant 0.000000e+00 : f32
    %972 = vector.broadcast %cst_440 : f32 to vector<16x128xf32>
    %973 = arith.maximumf %971, %972 : vector<16x128xf32>
    %c0_441 = arith.constant 0 : index
    %c0_442 = arith.constant 0 : index
    %974 = vector.load %arg28[%c0_441, %c0_442] : memref<1x128xf32, #tpu.memory_space<vmem>>, vector<1x128xf32>
    %975 = vector.broadcast %974 : vector<1x128xf32> to vector<16x128xf32>
    %976 = arith.mulf %973, %975 : vector<16x128xf32>
    %cst_443 = arith.constant dense<0.000000e+00> : vector<16xf32>
    %977 = vector.multi_reduction <add>, %976, %cst_443 [1] : vector<16x128xf32> to vector<16xf32>
    %978 = vector.shape_cast %977 : vector<16xf32> to vector<16x1xf32>
    %c0_444 = arith.constant 0 : index
    %c0_445 = arith.constant 0 : index
    %979 = vector.load %arg29[%c0_444, %c0_445] : memref<1x1xf32, #tpu.memory_space<vmem>>, vector<1x1xf32>
    %980 = vector.broadcast %979 : vector<1x1xf32> to vector<16x1xf32>
    %981 = arith.addf %978, %980 : vector<16x1xf32>
    %cst_446 = arith.constant 0.000000e+00 : f32
    %982 = vector.broadcast %cst_446 : f32 to vector<16x1xf32>
    %983 = arith.subf %982, %981 : vector<16x1xf32>
    %984 = math.exp %983 : vector<16x1xf32>
    %cst_447 = arith.constant 1.000000e+00 : f32
    %985 = vector.broadcast %cst_447 : f32 to vector<16x1xf32>
    %986 = arith.addf %985, %984 : vector<16x1xf32>
    %cst_448 = arith.constant 1.000000e+00 : f32
    %987 = vector.broadcast %cst_448 : f32 to vector<16x1xf32>
    %988 = arith.divf %987, %986 : vector<16x1xf32>
    %989 = vector.shape_cast %988 : vector<16x1xf32> to vector<16x1xf32>
    %990 = vector.broadcast %989 : vector<16x1xf32> to vector<16x128xf32>
    %c0_449 = arith.constant 0 : index
    %c0_450 = arith.constant 0 : index
    %991 = vector.load %arg30[%c0_449, %c0_450] : memref<16x128xf32, #tpu.memory_space<vmem>>, vector<16x128xf32>
    tpu.vector_store %arg30[%c0_449, %c0_450], %990 {strides = array<i32>} : memref<16x128xf32, #tpu.memory_space<vmem>>, vector<16x128xf32>,
    return
  }
  func.func @transform_0(%arg0: i32) -> (i32, i32) {
    %c0_i32 = arith.constant 0 : i32
    %c0_i32_0 = arith.constant 0 : i32
    return %arg0, %c0_i32 : i32, i32
  }
  func.func @transform_1(%arg0: i32) -> (i32, i32) {
    %c0_i32 = arith.constant 0 : i32
    %c0_i32_0 = arith.constant 0 : i32
    return %arg0, %c0_i32 : i32, i32
  }
  func.func @transform_2(%arg0: i32) -> (i32, i32, i32) {
    %c0_i32 = arith.constant 0 : i32
    %c0_i32_0 = arith.constant 0 : i32
    %c0_i32_1 = arith.constant 0 : i32
    return %arg0, %c0_i32, %c0_i32_0 : i32, i32, i32
  }
  func.func @transform_3(%arg0: i32) -> (i32, i32) {
    %c0_i32 = arith.constant 0 : i32
    %c0_i32_0 = arith.constant 0 : i32
    %c0_i32_1 = arith.constant 0 : i32
    return %c0_i32, %c0_i32_0 : i32, i32
  }
  func.func @transform_4(%arg0: i32) -> (i32, i32) {
    %c0_i32 = arith.constant 0 : i32
    %c0_i32_0 = arith.constant 0 : i32
    %c0_i32_1 = arith.constant 0 : i32
    return %c0_i32, %c0_i32_0 : i32, i32
  }
  func.func @transform_5(%arg0: i32) -> (i32, i32) {
    %c0_i32 = arith.constant 0 : i32
    %c0_i32_0 = arith.constant 0 : i32
    %c0_i32_1 = arith.constant 0 : i32
    return %c0_i32, %c0_i32_0 : i32, i32
  }
  func.func @transform_6(%arg0: i32) -> (i32, i32) {
    %c0_i32 = arith.constant 0 : i32
    %c0_i32_0 = arith.constant 0 : i32
    %c0_i32_1 = arith.constant 0 : i32
    return %c0_i32, %c0_i32_0 : i32, i32
  }
  func.func @transform_7(%arg0: i32) -> (i32, i32, i32) {
    %c0_i32 = arith.constant 0 : i32
    %c0_i32_0 = arith.constant 0 : i32
    %c0_i32_1 = arith.constant 0 : i32
    %c0_i32_2 = arith.constant 0 : i32
    return %c0_i32, %c0_i32_0, %c0_i32_1 : i32, i32, i32
  }
  func.func @transform_8(%arg0: i32) -> (i32, i32, i32) {
    %c0_i32 = arith.constant 0 : i32
    %c0_i32_0 = arith.constant 0 : i32
    %c0_i32_1 = arith.constant 0 : i32
    %c0_i32_2 = arith.constant 0 : i32
    return %c0_i32, %c0_i32_0, %c0_i32_1 : i32, i32, i32
  }
  func.func @transform_9(%arg0: i32) -> (i32, i32, i32) {
    %c0_i32 = arith.constant 0 : i32
    %c0_i32_0 = arith.constant 0 : i32
    %c0_i32_1 = arith.constant 0 : i32
    %c0_i32_2 = arith.constant 0 : i32
    return %c0_i32, %c0_i32_0, %c0_i32_1 : i32, i32, i32
  }
  func.func @transform_10(%arg0: i32) -> (i32, i32, i32) {
    %c0_i32 = arith.constant 0 : i32
    %c0_i32_0 = arith.constant 0 : i32
    %c0_i32_1 = arith.constant 0 : i32
    %c0_i32_2 = arith.constant 0 : i32
    return %c0_i32, %c0_i32_0, %c0_i32_1 : i32, i32, i32
  }
  func.func @transform_11(%arg0: i32) -> (i32, i32, i32) {
    %c0_i32 = arith.constant 0 : i32
    %c0_i32_0 = arith.constant 0 : i32
    %c0_i32_1 = arith.constant 0 : i32
    %c0_i32_2 = arith.constant 0 : i32
    return %c0_i32, %c0_i32_0, %c0_i32_1 : i32, i32, i32
  }
  func.func @transform_12(%arg0: i32) -> (i32, i32, i32) {
    %c0_i32 = arith.constant 0 : i32
    %c0_i32_0 = arith.constant 0 : i32
    %c0_i32_1 = arith.constant 0 : i32
    %c0_i32_2 = arith.constant 0 : i32
    return %c0_i32, %c0_i32_0, %c0_i32_1 : i32, i32, i32
  }
  func.func @transform_13(%arg0: i32) -> (i32, i32, i32) {
    %c0_i32 = arith.constant 0 : i32
    %c0_i32_0 = arith.constant 0 : i32
    %c0_i32_1 = arith.constant 0 : i32
    %c0_i32_2 = arith.constant 0 : i32
    return %c0_i32, %c0_i32_0, %c0_i32_1 : i32, i32, i32
  }
  func.func @transform_14(%arg0: i32) -> (i32, i32, i32) {
    %c0_i32 = arith.constant 0 : i32
    %c0_i32_0 = arith.constant 0 : i32
    %c0_i32_1 = arith.constant 0 : i32
    %c0_i32_2 = arith.constant 0 : i32
    return %c0_i32, %c0_i32_0, %c0_i32_1 : i32, i32, i32
  }
  func.func @transform_15(%arg0: i32) -> (i32, i32, i32) {
    %c0_i32 = arith.constant 0 : i32
    %c0_i32_0 = arith.constant 0 : i32
    %c0_i32_1 = arith.constant 0 : i32
    %c0_i32_2 = arith.constant 0 : i32
    return %c0_i32, %c0_i32_0, %c0_i32_1 : i32, i32, i32
  }
  func.func @transform_16(%arg0: i32) -> (i32, i32, i32) {
    %c0_i32 = arith.constant 0 : i32
    %c0_i32_0 = arith.constant 0 : i32
    %c0_i32_1 = arith.constant 0 : i32
    %c0_i32_2 = arith.constant 0 : i32
    return %c0_i32, %c0_i32_0, %c0_i32_1 : i32, i32, i32
  }
  func.func @transform_17(%arg0: i32) -> (i32, i32, i32) {
    %c0_i32 = arith.constant 0 : i32
    %c0_i32_0 = arith.constant 0 : i32
    %c0_i32_1 = arith.constant 0 : i32
    %c0_i32_2 = arith.constant 0 : i32
    return %c0_i32, %c0_i32_0, %c0_i32_1 : i32, i32, i32
  }
  func.func @transform_18(%arg0: i32) -> (i32, i32, i32) {
    %c0_i32 = arith.constant 0 : i32
    %c0_i32_0 = arith.constant 0 : i32
    %c0_i32_1 = arith.constant 0 : i32
    %c0_i32_2 = arith.constant 0 : i32
    return %c0_i32, %c0_i32_0, %c0_i32_1 : i32, i32, i32
  }
  func.func @transform_19(%arg0: i32) -> (i32, i32, i32) {
    %c0_i32 = arith.constant 0 : i32
    %c0_i32_0 = arith.constant 0 : i32
    %c0_i32_1 = arith.constant 0 : i32
    %c0_i32_2 = arith.constant 0 : i32
    return %c0_i32, %c0_i32_0, %c0_i32_1 : i32, i32, i32
  }
  func.func @transform_20(%arg0: i32) -> (i32, i32, i32) {
    %c0_i32 = arith.constant 0 : i32
    %c0_i32_0 = arith.constant 0 : i32
    %c0_i32_1 = arith.constant 0 : i32
    %c0_i32_2 = arith.constant 0 : i32
    return %c0_i32, %c0_i32_0, %c0_i32_1 : i32, i32, i32
  }
  func.func @transform_21(%arg0: i32) -> (i32, i32, i32) {
    %c0_i32 = arith.constant 0 : i32
    %c0_i32_0 = arith.constant 0 : i32
    %c0_i32_1 = arith.constant 0 : i32
    %c0_i32_2 = arith.constant 0 : i32
    return %c0_i32, %c0_i32_0, %c0_i32_1 : i32, i32, i32
  }
  func.func @transform_22(%arg0: i32) -> (i32, i32, i32) {
    %c0_i32 = arith.constant 0 : i32
    %c0_i32_0 = arith.constant 0 : i32
    %c0_i32_1 = arith.constant 0 : i32
    %c0_i32_2 = arith.constant 0 : i32
    return %c0_i32, %c0_i32_0, %c0_i32_1 : i32, i32, i32
  }
  func.func @transform_23(%arg0: i32) -> (i32, i32) {
    %c0_i32 = arith.constant 0 : i32
    %c0_i32_0 = arith.constant 0 : i32
    %c0_i32_1 = arith.constant 0 : i32
    return %c0_i32, %c0_i32_0 : i32, i32
  }
  func.func @transform_24(%arg0: i32) -> (i32, i32) {
    %c0_i32 = arith.constant 0 : i32
    %c0_i32_0 = arith.constant 0 : i32
    %c0_i32_1 = arith.constant 0 : i32
    return %c0_i32, %c0_i32_0 : i32, i32
  }
  func.func @transform_25(%arg0: i32) -> (i32, i32) {
    %c0_i32 = arith.constant 0 : i32
    %c0_i32_0 = arith.constant 0 : i32
    %c0_i32_1 = arith.constant 0 : i32
    return %c0_i32, %c0_i32_0 : i32, i32
  }
  func.func @transform_26(%arg0: i32) -> (i32, i32) {
    %c0_i32 = arith.constant 0 : i32
    %c0_i32_0 = arith.constant 0 : i32
    %c0_i32_1 = arith.constant 0 : i32
    return %c0_i32, %c0_i32_0 : i32, i32
  }
  func.func @transform_27(%arg0: i32) -> (i32, i32) {
    %c0_i32 = arith.constant 0 : i32
    %c0_i32_0 = arith.constant 0 : i32
    %c0_i32_1 = arith.constant 0 : i32
    return %c0_i32, %c0_i32_0 : i32, i32
  }
  func.func @transform_28(%arg0: i32) -> (i32, i32) {
    %c0_i32 = arith.constant 0 : i32
    %c0_i32_0 = arith.constant 0 : i32
    %c0_i32_1 = arith.constant 0 : i32
    return %c0_i32, %c0_i32_0 : i32, i32
  }
  func.func @transform_29(%arg0: i32) -> (i32, i32) {
    %c0_i32 = arith.constant 0 : i32
    %c0_i32_0 = arith.constant 0 : i32
    return %arg0, %c0_i32 : i32, i32
  }
}

</mosaic_0001>

<llo_original>
// kernel: squeeze.1
$region0: #{squeeze.1}
  %s0 = inlined_call_operand.vmem [shape: f32[16], index: 0, kind: input, shape index: {}]
  %s1 = inlined_call_operand.vmem [shape: f32[2,8], index: 1, kind: output, shape index: {}]
  $region1: #{squeeze.1} parent=0
    #allocation0 [shape = 'u8[4096]{0}', space=vmem, size = 0x1000, scoped, tag = 'scoped mem for output reshape']
    #allocation1 [shape = 'u8[4096]{0}', space=vmem, size = 0x1000, scoped, tag = 'scoped mem for input reshape']
    %s3 = sshll.u32 1, 1
    %s4 = ssub.s32 %s3, 1
    %v5 = vld [vmem:[%s0] sm:%s4]
    %6 = vst [vmem:[#allocation1] sm:%s4] %v5
    %v7 = vld [vmem:[#allocation1] sm:$0x1]
    %vm8 = vcmask 64512
    %9 = vst.msk [vmem:[#allocation0] sm:$0x1] %vm8, %v7
    %v10 = vld [vmem:[#allocation1] sm:$0x1]
    %11 = vrot.lane.b32.xlu0 %v10, 120
    %v12 = vpop.permute.xlu0 %11
    %vm13 = vcmask 64512
    %s14 = scalar_lea.vmem [#allocation0], 1
    %15 = vst.msk [vmem:[%s14] sm:$0x1] %vm13, %v12
    %s17 = sshll.u32 1, 2
    %s18 = ssub.s32 %s17, 1
    %v20 = vld [vmem:[#allocation0] sm:%s18]
    %s21 = sshll.u32 1, 2
    %s22 = ssub.s32 %s21, 1
    %23 = vst [vmem:[%s1] sm:%s22] %v20

// kernel: transformer_model_forward.1
$region0: #{transformer_model_forward.1}
  #allocation0 [shape = 'u32[]', space=smem, size = 0x4, offset = 0x4, fixed_abs, tag = 'smem constant byte address 0x4 - core index']
  #allocation1 [shape = 'u32[144,128]{1,0:T(1,128)}', space=vmem, size = 0x12000, scoped, tag = 'internal scratch']
  #allocation2 [shape = 'f32[16,1024]{1,0:T(8,128)}', space=vmem, size = 0x10000, scoped, tag = 'scratch operand']
  #allocation3 [shape = 'f32[1,1]{1,0:T(1,128)S(1)}', space=vmem, size = 0x200, scoped, tag = 'scoped memory for transformer_model_forward.1']
  %s0 = inlined_call_operand.smem [shape: u32[30], index: -1, kind: input, shape index: {}]
  %s1 = sld [smem:[%s0]]
  %s2 = scalar_lea.smem %s0, 1
  %s3 = sld [smem:[%s2]]
  %s4 = scalar_lea.smem %s0, 2
  %s5 = sld [smem:[%s4]]
  %s6 = scalar_lea.smem %s0, 3
  %s7 = sld [smem:[%s6]]
  %s8 = scalar_lea.smem %s0, 4
  %s9 = sld [smem:[%s8]]
  %s10 = scalar_lea.smem %s0, 5
  %s11 = sld [smem:[%s10]]
  %s12 = scalar_lea.smem %s0, 6
  %s13 = sld [smem:[%s12]]
  %s14 = scalar_lea.smem %s0, 7
  %s15 = sld [smem:[%s14]]
  %s16 = scalar_lea.smem %s0, 8
  %s17 = sld [smem:[%s16]]
  %s18 = scalar_lea.smem %s0, 9
  %s19 = sld [smem:[%s18]]
  %s20 = scalar_lea.smem %s0, 10
  %s21 = sld [smem:[%s20]]
  %s22 = scalar_lea.smem %s0, 11
  %s23 = sld [smem:[%s22]]
  %s24 = scalar_lea.smem %s0, 12
  %s25 = sld [smem:[%s24]]
  %s26 = scalar_lea.smem %s0, 13
  %s27 = sld [smem:[%s26]]
  %s28 = scalar_lea.smem %s0, 14
  %s29 = sld [smem:[%s28]]
  %s30 = scalar_lea.smem %s0, 15
  %s31 = sld [smem:[%s30]]
  %s32 = scalar_lea.smem %s0, 16
  %s33 = sld [smem:[%s32]]
  %s34 = scalar_lea.smem %s0, 17
  %s35 = sld [smem:[%s34]]
  %s36 = scalar_lea.smem %s0, 18
  %s37 = sld [smem:[%s36]]
  %s38 = scalar_lea.smem %s0, 19
  %s39 = sld [smem:[%s38]]
  %s40 = scalar_lea.smem %s0, 20
  %s41 = sld [smem:[%s40]]
  %s42 = scalar_lea.smem %s0, 21
  %s43 = sld [smem:[%s42]]
  %s44 = scalar_lea.smem %s0, 22
  %s45 = sld [smem:[%s44]]
  %s46 = scalar_lea.smem %s0, 23
  %s47 = sld [smem:[%s46]]
  %s48 = scalar_lea.smem %s0, 24
  %s49 = sld [smem:[%s48]]
  %s50 = scalar_lea.smem %s0, 25
  %s51 = sld [smem:[%s50]]
  %s52 = scalar_lea.smem %s0, 26
  %s53 = sld [smem:[%s52]]
  %s54 = scalar_lea.smem %s0, 27
  %s55 = sld [smem:[%s54]]
  %s56 = scalar_lea.smem %s0, 28
  %s57 = sld [smem:[%s56]]
  %s58 = scalar_lea.smem %s0, 29
  %s59 = sld [smem:[%s58]]
  %s60 = sld [smem:[#allocation0]]
  $region158: #{transformer_model_forward.1} parent=0
    _
  %s62 = ssub.s32 1, %s60
  %s63 = scalar_select 0, %s62, %s60
  %v64 = vstv %s57
  %65 = vst [vmem:[#allocation3] sm:$0x1] %v64
  $region1: #{transformer_model_forward.1} parent=0
    #allocation4 [shape = 'u8[2048]{0}', space=vmem, size = 0x800, scoped, tag = 'input window, operand 19, single buffered']
    #allocation5 [shape = 's32[1]{0}', space=sflag, size = 0x4, scoped, tag = 'scoped memory for transformer_model_forward.1']
    #allocation6 [shape = 'u8[2048]{0}', space=vmem, size = 0x800, scoped, tag = 'input window, operand 20, single buffered']
    #allocation7 [shape = 's32[1]{0}', space=sflag, size = 0x4, scoped, tag = 'scoped memory for transformer_model_forward.1']
    #allocation8 [shape = 'u8[2048]{0}', space=vmem, size = 0x800, scoped, tag = 'input window, operand 21, single buffered']
    #allocation9 [shape = 'u8[2048]{0}', space=vmem, size = 0x800, scoped, tag = 'input window, operand 22, single buffered']
    #allocation10 [shape = 's32[1]{0}', space=sflag, size = 0x4, scoped, tag = 'scoped memory for transformer_model_forward.1']
    #allocation11 [shape = 'u8[327680]{0}', space=vmem, size = 0x50000, scoped, tag = 'input window, operand 23, single buffered']
    #allocation12 [shape = 'u8[262144]{0}', space=vmem, size = 0x40000, scoped, tag = 'input window, operand 25, single buffered']
    #allocation13 [shape = 's32[1]{0}', space=sflag, size = 0x4, scoped, tag = 'scoped memory for transformer_model_forward.1']
    #allocation14 [shape = 'u8[512]{0}', space=vmem, size = 0x400, scoped, tag = 'input window, operand 26, single buffered']
    #allocation15 [shape = 'u8[512]{0}', space=vmem, size = 0x400, scoped, tag = 'input window, operand 27, single buffered']
    #allocation16 [shape = 's32[1]{0}', space=sflag, size = 0x4, scoped, tag = 'scoped memory for transformer_model_forward.1']
    %66 = vsyncpa [#allocation5], 0
    %67 = vsyncpa [#allocation7], 0
    %68 = vsyncpa [#allocation10], 0
    %69 = vsyncpa [#allocation13], 0
    %70 = vsyncpa [#allocation16], 0
    // Predicated region
    $region2: #{transformer_model_forward.1} parent=1 // pred_check
      _
    $region3: #{transformer_model_forward.1} parent=1 // pred_check_branch
      %72 = sbr.rel (0) target = $region5
    $region4: #{transformer_model_forward.1} parent=1 // pred_region
      _
    $region5: #{transformer_model_forward.1} parent=1 // pred_fallthru
      _
    // Predicated region
    $region6: #{transformer_model_forward.1} parent=1 // pred_check
      _
    $region7: #{transformer_model_forward.1} parent=1 // pred_check_branch
      %74 = sbr.rel (0) target = $region9
    $region8: #{transformer_model_forward.1} parent=1 // pred_region
      _
    $region9: #{transformer_model_forward.1} parent=1 // pred_fallthru
      _
    // Predicated region
    $region10: #{transformer_model_forward.1} parent=1 // pred_check
      _
    $region11: #{transformer_model_forward.1} parent=1 // pred_check_branch
      %76 = sbr.rel (0) target = $region13
    $region12: #{transformer_model_forward.1} parent=1 // pred_region
      _
    $region13: #{transformer_model_forward.1} parent=1 // pred_fallthru
      _
    // Predicated region
    $region14: #{transformer_model_forward.1} parent=1 // pred_check
      _
    $region15: #{transformer_model_forward.1} parent=1 // pred_check_branch
      %78 = sbr.rel (0) target = $region17
    $region16: #{transformer_model_forward.1} parent=1 // pred_region
      _
    $region17: #{transformer_model_forward.1} parent=1 // pred_fallthru
      _
    // Predicated region
    $region18: #{transformer_model_forward.1} parent=1 // pred_check
      _
    $region19: #{transformer_model_forward.1} parent=1 // pred_check_branch
      %80 = sbr.rel (0) target = $region21
    $region20: #{transformer_model_forward.1} parent=1 // pred_region
      _
    $region21: #{transformer_model_forward.1} parent=1 // pred_fallthru
      _
    // Predicated region
    $region22: #{transformer_model_forward.1} parent=1 // pred_check
      _
    $region23: #{transformer_model_forward.1} parent=1 // pred_check_branch
      %82 = sbr.rel (0) target = $region25
    $region24: #{transformer_model_forward.1} parent=1 // pred_region
      _
    $region25: #{transformer_model_forward.1} parent=1 // pred_fallthru
      _
    // Predicated region
    $region26: #{transformer_model_forward.1} parent=1 // pred_check
      _
    $region27: #{transformer_model_forward.1} parent=1 // pred_check_branch
      %84 = sbr.rel (0) target = $region29
    $region28: #{transformer_model_forward.1} parent=1 // pred_region
      _
    $region29: #{transformer_model_forward.1} parent=1 // pred_fallthru
      _
    // Predicated region
    $region30: #{transformer_model_forward.1} parent=1 // pred_check
      _
    $region31: #{transformer_model_forward.1} parent=1 // pred_check_branch
      %86 = sbr.rel (0) target = $region33
    $region32: #{transformer_model_forward.1} parent=1 // pred_region
      _
    $region33: #{transformer_model_forward.1} parent=1 // pred_fallthru
      _
    // Predicated region
    $region34: #{transformer_model_forward.1} parent=1 // pred_check
      _
    $region35: #{transformer_model_forward.1} parent=1 // pred_check_branch
      %88 = sbr.rel (0) target = $region37
    $region36: #{transformer_model_forward.1} parent=1 // pred_region
      _
    $region37: #{transformer_model_forward.1} parent=1 // pred_fallthru
      _
    // Predicated region
    $region38: #{transformer_model_forward.1} parent=1 // pred_check
      _
    $region39: #{transformer_model_forward.1} parent=1 // pred_check_branch
      %90 = sbr.rel (0) target = $region41
    $region40: #{transformer_model_forward.1} parent=1 // pred_region
      _
    $region41: #{transformer_model_forward.1} parent=1 // pred_fallthru
      _
    // Predicated region
    $region42: #{transformer_model_forward.1} parent=1 // pred_check
      _
    $region43: #{transformer_model_forward.1} parent=1 // pred_check_branch
      %92 = sbr.rel (0) target = $region45
    $region44: #{transformer_model_forward.1} parent=1 // pred_region
      _
    $region45: #{transformer_model_forward.1} parent=1 // pred_fallthru
      _
    // Predicated region
    $region46: #{transformer_model_forward.1} parent=1 // pred_check
      _
    $region47: #{transformer_model_forward.1} parent=1 // pred_check_branch
      %94 = sbr.rel (0) target = $region49
    $region48: #{transformer_model_forward.1} parent=1 // pred_region
      _
    $region49: #{transformer_model_forward.1} parent=1 // pred_fallthru
      _
    // Predicated region
    $region50: #{transformer_model_forward.1} parent=1 // pred_check
      _
    $region51: #{transformer_model_forward.1} parent=1 // pred_check_branch
      %96 = sbr.rel (0) target = $region53
    $region52: #{transformer_model_forward.1} parent=1 // pred_region
      _
    $region53: #{transformer_model_forward.1} parent=1 // pred_fallthru
      _
    // Predicated region
    $region54: #{transformer_model_forward.1} parent=1 // pred_check
      _
    $region55: #{transformer_model_forward.1} parent=1 // pred_check_branch
      %98 = sbr.rel (0) target = $region57
    $region56: #{transformer_model_forward.1} parent=1 // pred_region
      _
    $region57: #{transformer_model_forward.1} parent=1 // pred_fallthru
      _
    // Predicated region
    $region58: #{transformer_model_forward.1} parent=1 // pred_check
      _
    $region59: #{transformer_model_forward.1} parent=1 // pred_check_branch
      %100 = sbr.rel (0) target = $region61
    $region60: #{transformer_model_forward.1} parent=1 // pred_region
      _
    $region61: #{transformer_model_forward.1} parent=1 // pred_fallthru
      _
    // Predicated region
    $region62: #{transformer_model_forward.1} parent=1 // pred_check
      _
    $region63: #{transformer_model_forward.1} parent=1 // pred_check_branch
      %102 = sbr.rel (0) target = $region65
    $region64: #{transformer_model_forward.1} parent=1 // pred_region
      _
    $region65: #{transformer_model_forward.1} parent=1 // pred_fallthru
      _
    // Predicated region
    $region66: #{transformer_model_forward.1} parent=1 // pred_check
      _
    $region67: #{transformer_model_forward.1} parent=1 // pred_check_branch
      %104 = sbr.rel (0) target = $region69
    $region68: #{transformer_model_forward.1} parent=1 // pred_region
      _
    $region69: #{transformer_model_forward.1} parent=1 // pred_fallthru
      _
    // Predicated region
    $region70: #{transformer_model_forward.1} parent=1 // pred_check
      _
    $region71: #{transformer_model_forward.1} parent=1 // pred_check_branch
      %106 = sbr.rel (0) target = $region73
    $region72: #{transformer_model_forward.1} parent=1 // pred_region
      _
    $region73: #{transformer_model_forward.1} parent=1 // pred_fallthru
      _
    // Predicated region
    $region74: #{transformer_model_forward.1} parent=1 // pred_check
      _
    $region75: #{transformer_model_forward.1} parent=1 // pred_check_branch
      %108 = sbr.rel (0) target = $region77
    $region76: #{transformer_model_forward.1} parent=1 // pred_region
      _
    $region77: #{transformer_model_forward.1} parent=1 // pred_fallthru
      _
    // Predicated region
    $region78: #{transformer_model_forward.1} parent=1 // pred_check
      _
    $region79: #{transformer_model_forward.1} parent=1 // pred_check_branch
      %110 = sbr.rel (0) target = $region81
    $region80: #{transformer_model_forward.1} parent=1 // pred_region
      %s112 = ssub.s32 64, 64
      %113 = vsyncadd [#allocation5], %s112
      %s114 = sshll.u32 [#allocation4], 4
      %s115 = int_to_ptr.vmem [resolvable:$true] %s114
      %120 = dma.hbm_to_vmem [thread:$0]  %s39, 64, %s115, [#allocation5], 16, 16, 1
    $region81: #{transformer_model_forward.1} parent=1 // pred_fallthru
      _
    // Predicated region
    $region82: #{transformer_model_forward.1} parent=1 // pred_check
      _
    $region83: #{transformer_model_forward.1} parent=1 // pred_check_branch
      %122 = sbr.rel (0) target = $region85
    $region84: #{transformer_model_forward.1} parent=1 // pred_region
      %s124 = ssub.s32 64, 64
      %125 = vsyncadd [#allocation7], %s124
      %s126 = sshll.u32 [#allocation6], 4
      %s127 = int_to_ptr.vmem [resolvable:$true] %s126
      %132 = dma.hbm_to_vmem [thread:$0]  %s41, 64, %s127, [#allocation7], 16, 16, 1
    $region85: #{transformer_model_forward.1} parent=1 // pred_fallthru
      _
    // Predicated region
    $region86: #{transformer_model_forward.1} parent=1 // pred_check
      _
    $region87: #{transformer_model_forward.1} parent=1 // pred_check_branch
      %134 = sbr.rel (0) target = $region89
    $region88: #{transformer_model_forward.1} parent=1 // pred_region
      %s136 = ssub.s32 64, 64
      %137 = vsyncadd [#allocation7], %s136
      %s138 = sshll.u32 [#allocation8], 4
      %s139 = int_to_ptr.vmem [resolvable:$true] %s138
      %144 = dma.hbm_to_vmem [thread:$0]  %s43, 64, %s139, [#allocation7], 16, 16, 1
    $region89: #{transformer_model_forward.1} parent=1 // pred_fallthru
      _
    // Predicated region
    $region90: #{transformer_model_forward.1} parent=1 // pred_check
      _
    $region91: #{transformer_model_forward.1} parent=1 // pred_check_branch
      %146 = sbr.rel (0) target = $region93
    $region92: #{transformer_model_forward.1} parent=1 // pred_region
      %s148 = ssub.s32 64, 64
      %149 = vsyncadd [#allocation10], %s148
      %s150 = sshll.u32 [#allocation9], 4
      %s151 = int_to_ptr.vmem [resolvable:$true] %s150
      %156 = dma.hbm_to_vmem [thread:$0]  %s45, 64, %s151, [#allocation10], 16, 16, 1
    $region93: #{transformer_model_forward.1} parent=1 // pred_fallthru
      _
    // Predicated region
    $region94: #{transformer_model_forward.1} parent=1 // pred_check
      _
    $region95: #{transformer_model_forward.1} parent=1 // pred_check_branch
      %158 = sbr.rel (0) target = $region97
    $region96: #{transformer_model_forward.1} parent=1 // pred_region
      %s160 = ssub.s32 10240, 10240
      %161 = vsyncadd [#allocation10], %s160
      %s162 = sshll.u32 [#allocation11], 4
      %s163 = int_to_ptr.vmem [resolvable:$true] %s162
      %168 = dma.hbm_to_vmem [thread:$0]  %s47, 10240, %s163, [#allocation10], 512, 512, 32
    $region97: #{transformer_model_forward.1} parent=1 // pred_fallthru
      _
    // Predicated region
    $region98: #{transformer_model_forward.1} parent=1 // pred_check
      _
    $region99: #{transformer_model_forward.1} parent=1 // pred_check_branch
      %170 = sbr.rel (0) target = $region101
    $region100: #{transformer_model_forward.1} parent=1 // pred_region
      _
    $region101: #{transformer_model_forward.1} parent=1 // pred_fallthru
      _
    // Predicated region
    $region102: #{transformer_model_forward.1} parent=1 // pred_check
      _
    $region103: #{transformer_model_forward.1} parent=1 // pred_check_branch
      %172 = sbr.rel (0) target = $region105
    $region104: #{transformer_model_forward.1} parent=1 // pred_region
      %s174 = ssub.s32 8192, 8192
      %175 = vsyncadd [#allocation13], %s174
      %s176 = sshll.u32 [#allocation12], 4
      %s177 = int_to_ptr.vmem [resolvable:$true] %s176
      %182 = dma.hbm_to_vmem [thread:$0]  %s51, 8192, %s177, [#allocation13], 64, 64, 4
    $region105: #{transformer_model_forward.1} parent=1 // pred_fallthru
      _
    // Predicated region
    $region106: #{transformer_model_forward.1} parent=1 // pred_check
      _
    $region107: #{transformer_model_forward.1} parent=1 // pred_check_branch
      %184 = sbr.rel (0) target = $region109
    $region108: #{transformer_model_forward.1} parent=1 // pred_region
      %s186 = ssub.s32 16, 16
      %187 = vsyncadd [#allocation13], %s186
      %s189 = sshll.u32 [#allocation14], 4
      %s190 = int_to_ptr.vmem [resolvable:$true] %s189
      %192 = dma.hbm_to_vmem [thread:$0]  %s53, 16, %s190, [#allocation13]
    $region109: #{transformer_model_forward.1} parent=1 // pred_fallthru
      _
    // Predicated region
    $region110: #{transformer_model_forward.1} parent=1 // pred_check
      _
    $region111: #{transformer_model_forward.1} parent=1 // pred_check_branch
      %194 = sbr.rel (0) target = $region113
    $region112: #{transformer_model_forward.1} parent=1 // pred_region
      %s196 = ssub.s32 16, 16
      %197 = vsyncadd [#allocation16], %s196
      %s199 = sshll.u32 [#allocation15], 4
      %s200 = int_to_ptr.vmem [resolvable:$true] %s199
      %202 = dma.hbm_to_vmem [thread:$0]  %s55, 16, %s200, [#allocation16]
    $region113: #{transformer_model_forward.1} parent=1 // pred_fallthru
      _
    // Predicated region
    $region114: #{transformer_model_forward.1} parent=1 // pred_check
      _
    $region115: #{transformer_model_forward.1} parent=1 // pred_check_branch
      %204 = sbr.rel (0) target = $region117
    $region116: #{transformer_model_forward.1} parent=1 // pred_region
      _
    $region117: #{transformer_model_forward.1} parent=1 // pred_fallthru
      _
    // Predicated region
    $region118: #{transformer_model_forward.1} parent=1 // pred_check
      _
    $region119: #{transformer_model_forward.1} parent=1 // pred_check_branch
      %206 = sbr.rel (0) target = $region121
    $region120: #{transformer_model_forward.1} parent=1 // pred_region
      %207 = dma.done [#allocation5], 64
    $region121: #{transformer_model_forward.1} parent=1 // pred_fallthru
      _
    // Predicated region
    $region122: #{transformer_model_forward.1} parent=1 // pred_check
      _
    $region123: #{transformer_model_forward.1} parent=1 // pred_check_branch
      %209 = sbr.rel (0) target = $region125
    $region124: #{transformer_model_forward.1} parent=1 // pred_region
      %210 = dma.done [#allocation7], 64
    $region125: #{transformer_model_forward.1} parent=1 // pred_fallthru
      _
    // Predicated region
    $region126: #{transformer_model_forward.1} parent=1 // pred_check
      _
    $region127: #{transformer_model_forward.1} parent=1 // pred_check_branch
      %212 = sbr.rel (0) target = $region129
    $region128: #{transformer_model_forward.1} parent=1 // pred_region
      %213 = dma.done [#allocation7], 64
    $region129: #{transformer_model_forward.1} parent=1 // pred_fallthru
      _
    // Predicated region
    $region130: #{transformer_model_forward.1} parent=1 // pred_check
      _
    $region131: #{transformer_model_forward.1} parent=1 // pred_check_branch
      %215 = sbr.rel (0) target = $region133
    $region132: #{transformer_model_forward.1} parent=1 // pred_region
      %216 = dma.done [#allocation10], 64
    $region133: #{transformer_model_forward.1} parent=1 // pred_fallthru
      _
    // Predicated region
    $region134: #{transformer_model_forward.1} parent=1 // pred_check
      _
    $region135: #{transformer_model_forward.1} parent=1 // pred_check_branch
      %218 = sbr.rel (0) target = $region137
    $region136: #{transformer_model_forward.1} parent=1 // pred_region
      %219 = dma.done [#allocation10], 10240
    $region137: #{transformer_model_forward.1} parent=1 // pred_fallthru
      _
    // Predicated region
    $region138: #{transformer_model_forward.1} parent=1 // pred_check
      _
    $region139: #{transformer_model_forward.1} parent=1 // pred_check_branch
      %221 = sbr.rel (0) target = $region141
    $region140: #{transformer_model_forward.1} parent=1 // pred_region
      %222 = dma.done [#allocation13], 8192
    $region141: #{transformer_model_forward.1} parent=1 // pred_fallthru
      _
    // Predicated region
    $region142: #{transformer_model_forward.1} parent=1 // pred_check
      _
    $region143: #{transformer_model_forward.1} parent=1 // pred_check_branch
      %224 = sbr.rel (0) target = $region145
    $region144: #{transformer_model_forward.1} parent=1 // pred_region
      %225 = dma.done [#allocation13], 16
    $region145: #{transformer_model_forward.1} parent=1 // pred_fallthru
      _
    // Predicated region
    $region146: #{transformer_model_forward.1} parent=1 // pred_check
      _
    $region147: #{transformer_model_forward.1} parent=1 // pred_check_branch
      %227 = sbr.rel (0) target = $region149
    $region148: #{transformer_model_forward.1} parent=1 // pred_region
      %228 = dma.done [#allocation16], 16
    $region149: #{transformer_model_forward.1} parent=1 // pred_fallthru
      _
    %v230 = vld [vmem:[%s1] sm:$0xff]
    %v231 = vld [vmem:[%s1 + $0x8] sm:$0xff]
    %v232 = vlaneseq
    %v233 = vand.u32 %v232, 127
    %234 = vset.pattern.permute.xlu0 0
    %235 = vperm.xlu0 %234, %v230
    %v236 = vpop.permute.xlu0 %235
    %237 = vset.pattern.permute.xlu0 0
    %238 = vperm.xlu0 %237, %v231
    %v239 = vpop.permute.xlu0 %238
    %vm240 = vcmp.eq.s32.totalorder %v233, %v236
    %vm241 = vcmp.eq.s32.totalorder %v233, %v239
    %v242 = vsel %vm240, 1, 0
    %v243 = vsel %vm241, 1, 0
    %v244 = vcvt.s32.f32 %v242
    %v245 = vcvt.s32.f32 %v243
    %v246 = vld [vmem:[%s9] sm:$0xff]
    %v247 = vld [vmem:[%s9 + $0x8] sm:$0xff]
    %v248 = vld [vmem:[%s9 + $0x10] sm:$0xff]
    %v249 = vld [vmem:[%s9 + $0x18] sm:$0xff]
    %v250 = vld [vmem:[%s9 + $0x20] sm:$0xff]
    %v251 = vld [vmem:[%s9 + $0x28] sm:$0xff]
    %v252 = vld [vmem:[%s9 + $0x30] sm:$0xff]
    %v253 = vld [vmem:[%s9 + $0x38] sm:$0xff]
    %v254 = vld [vmem:[%s7] sm:$0xff]
    %v255 = vld [vmem:[%s7 + $0x8] sm:$0xff]
    %vm256 = vcmask 523264
    %v258 = vsel %vm256, %v244, 0
    %v261 = vsel %vm256, %v245, 0
    %263 = vmatprep.subr.mxu0 0.0
    %264 = vmatpush1.msra.mxu0 0.0
    %265 = vmatprep.subr.mxu0 0.0
    %266 = vmatpush1.msra.mxu0 0.0
    %267 = vmatprep.subr.mxu0 0.0
    %268 = vmatpush1.msra.mxu0 0.0
    %269 = vmatprep.subr.mxu0 0.0
    %270 = vmatpush1.msra.mxu0 0.0
    %271 = vmatprep.subr.mxu0 0.0
    %272 = vmatpush1.msra.mxu0 0.0
    %273 = vmatprep.subr.mxu0 0.0
    %274 = vmatpush1.msra.mxu0 0.0
    %275 = vmatprep.subr.mxu0 0.0
    %276 = vmatpush1.msra.mxu0 0.0
    %277 = vmatprep.subr.mxu0 0.0
    %278 = vmatpush1.msra.mxu0 0.0
    %279 = vmatprep.subr.mxu0 0.0
    %280 = vmatpush1.msra.mxu0 %v253
    %281 = vmatprep.subr.mxu0 0.0
    %282 = vmatpush1.msra.mxu0 %v252
    %283 = vmatprep.subr.mxu0 0.0
    %284 = vmatpush1.msra.mxu0 %v251
    %285 = vmatprep.subr.mxu0 0.0
    %286 = vmatpush1.msra.mxu0 %v250
    %287 = vmatprep.subr.mxu0 0.0
    %288 = vmatpush1.msra.mxu0 %v249
    %289 = vmatprep.subr.mxu0 0.0
    %290 = vmatpush1.msra.mxu0 %v248
    %291 = vmatprep.subr.mxu0 0.0
    %292 = vmatpush1.msra.mxu0 %v247
    %293 = vmatprep.subr.mxu0 0.0
    %294 = vmatpush1.msra.mxu0 %v246
    %295 = vmatprep.subr.mxu0 0.0
    %296 = vmatpush2.msra.mxu0 0.0
    %297 = vmatprep.subr.mxu0 0.0
    %298 = vmatpush2.msra.mxu0 0.0
    %299 = vmatprep.subr.mxu0 0.0
    %300 = vmatpush2.msra.mxu0 0.0
    %301 = vmatprep.subr.mxu0 0.0
    %302 = vmatpush2.msra.mxu0 0.0
    %303 = vmatprep.subr.mxu0 0.0
    %304 = vmatpush2.msra.mxu0 0.0
    %305 = vmatprep.subr.mxu0 0.0
    %306 = vmatpush2.msra.mxu0 0.0
    %307 = vmatprep.subr.mxu0 0.0
    %308 = vmatpush2.msra.mxu0 0.0
    %309 = vmatprep.subr.mxu0 0.0
    %310 = vmatpush2.msra.mxu0 0.0
    %311 = vmatprep.subr.mxu0 0.0
    %312 = vmatpush2.msra.mxu0 0.0
    %313 = vmatprep.subr.mxu0 0.0
    %314 = vmatpush2.msra.mxu0 0.0
    %315 = vmatprep.subr.mxu0 0.0
    %316 = vmatpush2.msra.mxu0 0.0
    %317 = vmatprep.subr.mxu0 0.0
    %318 = vmatpush2.msra.mxu0 0.0
    %319 = vmatprep.subr.mxu0 0.0
    %320 = vmatpush2.msra.mxu0 0.0
    %321 = vmatprep.subr.mxu0 0.0
    %322 = vmatpush2.msra.mxu0 0.0
    %323 = vmatprep.subr.mxu0 0.0
    %324 = vmatpush2.msra.mxu0 0.0
    %325 = vmatprep.subr.mxu0 0.0
    %326 = vmatpush2.msra.mxu0 0.0
    %327 = vmatprep.mubr.f32.mxu0 0.0
    %328 = vmatmul.mubr.f32.gmra.mxu0 %v258
    %v329 = vpop.f32.mrf.mxu0
    %v330 = vadd.f32 %v254, %v329
    %v331 = vpop.f32.mrf.mxu0
    %332 = vmatprep.mubr.f32.mxu0 0.0
    %333 = vmatmul.mubr.f32.gmra.mxu0 %v261
    %v334 = vpop.f32.mrf.mxu0
    %v335 = vadd.f32 %v255, %v334
    %v336 = vpop.f32.mrf.mxu0
    %337 = vdwg.mxu0
    %v338 = vld [vmem:[%s11] sm:$0x1]
    %v339 = vld [vmem:[%s13] sm:$0x1]
    %vm340 = vcmask 261120
    %v341 = vsel %vm340, %v330, 0.0
    %342 = vadd.xlane.f32.xlu0 %v341
    %v343 = vpop.xlane.xlu0 %342
    %v344 = vsel %vm340, %v335, 0.0
    %345 = vadd.xlane.f32.xlu0 %v344
    %v346 = vpop.xlane.xlu0 %345
    %v347 = vrcp.pop 32.0
    %v348 = vmul.f32 %v343, %v347
    %v349 = vmul.f32 %v346, %v347
    %v350 = vsub.f32 %v330, %v348
    %v351 = vsub.f32 %v335, %v349
    %v352 = vmul.f32 %v350, %v350
    %v353 = vmul.f32 %v351, %v351
    %v354 = vsel %vm340, %v352, 0.0
    %355 = vadd.xlane.f32.xlu0 %v354
    %v356 = vpop.xlane.xlu0 %355
    %v357 = vsel %vm340, %v353, 0.0
    %358 = vadd.xlane.f32.xlu0 %v357
    %v359 = vpop.xlane.xlu0 %358
    %v360 = vmul.f32 %v356, %v347
    %v361 = vmul.f32 %v359, %v347
    %v362 = vadd.f32 %v360, 1e-12
    %v363 = vadd.f32 %v361, 1e-12
    %v364 = vrsqrt.pop %v362
    %v365 = vrsqrt.pop %v363
    %v366 = vmul.f32 %v350, %v364
    %v367 = vmul.f32 %v351, %v365
    %v369 = vlaneseq
    %v370 = vshrl.u32 %v369, 7
    %v371 = vsub.s32 0, %v370
    %v372 = vrot.slane %v338, %v371
    %v374 = vmul.f32 %v366, %v372
    %v375 = vmul.f32 %v367, %v372
    %v377 = vlaneseq
    %v378 = vshrl.u32 %v377, 7
    %v379 = vsub.s32 0, %v378
    %v380 = vrot.slane %v339, %v379
    %v382 = vadd.f32 %v374, %v380
    %v383 = vadd.f32 %v375, %v380
    %v384 = vld [vmem:[%s3] sm:$0xff]
    %v385 = vld [vmem:[%s3 + $0x8] sm:$0xff]
    %v386 = vld [vmem:[%s5] sm:$0x1]
    %387 = vset.pattern.permute.xlu0 0
    %388 = vperm.xlu0 %387, %v384
    %v389 = vpop.permute.xlu0 %388
    %390 = vset.pattern.permute.xlu0 0
    %391 = vperm.xlu0 %390, %v385
    %v392 = vpop.permute.xlu0 %391
    %v393 = vlaneseq
    %v394 = vshrl.u32 %v393, 7
    %v395 = vsub.s32 0, %v394
    %v396 = vrot.slane %v386, %v395
    %vm397 = vcmp.eq.s32.totalorder %v389, %v396
    %vm398 = vcmp.eq.s32.totalorder %v392, %v396
    %v399 = vsel %vm397, 0.0, -1e+09
    %v400 = vsel %vm398, 0.0, -1e+09
    %v401 = vpack.c.bf16 %v383, %v382
    %v402 = vld [vmem:[#allocation11] sm:$0xff]
    %v403 = vld [vmem:[#allocation11 + $0x8] sm:$0xff]
    %v404 = vld [vmem:[#allocation11 + $0x10] sm:$0xff]
    %v405 = vld [vmem:[#allocation11 + $0x18] sm:$0xff]
    %v406 = vld [vmem:[#allocation11 + $0x20] sm:$0xff]
    %v407 = vld [vmem:[#allocation11 + $0x28] sm:$0xff]
    %v408 = vld [vmem:[#allocation11 + $0x30] sm:$0xff]
    %v409 = vld [vmem:[#allocation11 + $0x38] sm:$0xff]
    %v410 = vld [vmem:[#allocation11 + $0x40] sm:$0xff]
    %v411 = vld [vmem:[#allocation11 + $0x48] sm:$0xff]
    %v412 = vld [vmem:[#allocation11 + $0x50] sm:$0xff]
    %v413 = vld [vmem:[#allocation11 + $0x58] sm:$0xff]
    %v414 = vld [vmem:[#allocation11 + $0x60] sm:$0xff]
    %v415 = vld [vmem:[#allocation11 + $0x68] sm:$0xff]
    %v416 = vld [vmem:[#allocation11 + $0x70] sm:$0xff]
    %v417 = vld [vmem:[#allocation11 + $0x78] sm:$0xff]
    %v434 = vunpack.c.l.b16 %v402
    %v435 = vunpack.c.h.b16 %v402
    %v436 = vunpack.c.l.b16 %v403
    %v437 = vunpack.c.h.b16 %v403
    %v438 = vunpack.c.l.b16 %v404
    %v439 = vunpack.c.h.b16 %v404
    %v440 = vunpack.c.l.b16 %v405
    %v441 = vunpack.c.h.b16 %v405
    %v442 = vunpack.c.l.b16 %v406
    %v443 = vunpack.c.h.b16 %v406
    %v444 = vunpack.c.l.b16 %v407
    %v445 = vunpack.c.h.b16 %v407
    %v446 = vunpack.c.l.b16 %v408
    %v447 = vunpack.c.h.b16 %v408
    %v448 = vunpack.c.l.b16 %v409
    %v449 = vunpack.c.h.b16 %v409
    %v450 = vunpack.c.l.b16 %v410
    %v451 = vunpack.c.h.b16 %v410
    %v452 = vunpack.c.l.b16 %v411
    %v453 = vunpack.c.h.b16 %v411
    %v454 = vunpack.c.l.b16 %v412
    %v455 = vunpack.c.h.b16 %v412
    %v456 = vunpack.c.l.b16 %v413
    %v457 = vunpack.c.h.b16 %v413
    %v458 = vunpack.c.l.b16 %v414
    %v459 = vunpack.c.h.b16 %v414
    %v460 = vunpack.c.l.b16 %v415
    %v461 = vunpack.c.h.b16 %v415
    %v462 = vunpack.c.l.b16 %v416
    %v463 = vunpack.c.h.b16 %v416
    %v464 = vunpack.c.l.b16 %v417
    %v465 = vunpack.c.h.b16 %v417
    %v466 = vpack.c.b16 %v442, %v434
    %v467 = vpack.c.b16 %v443, %v435
    %v468 = vpack.c.b16 %v444, %v436
    %v469 = vpack.c.b16 %v445, %v437
    %v470 = vpack.c.b16 %v446, %v438
    %v471 = vpack.c.b16 %v447, %v439
    %v472 = vpack.c.b16 %v448, %v440
    %v473 = vpack.c.b16 %v449, %v441
    %v474 = vpack.c.b16 %v458, %v450
    %v475 = vpack.c.b16 %v459, %v451
    %v476 = vpack.c.b16 %v460, %v452
    %v477 = vpack.c.b16 %v461, %v453
    %v478 = vpack.c.b16 %v462, %v454
    %v479 = vpack.c.b16 %v463, %v455
    %v480 = vpack.c.b16 %v464, %v456
    %v481 = vpack.c.b16 %v465, %v457
    %v499 = vsel %vm340, %v401, 0
    %501 = vmatprep.subr.bf16.mxu0 0
    %502 = vmatpush1.bf16.msra.mxu0 0
    %503 = vmatprep.subr.bf16.mxu0 0
    %504 = vmatpush1.bf16.msra.mxu0 0
    %505 = vmatprep.subr.bf16.mxu0 0
    %506 = vmatpush1.bf16.msra.mxu0 0
    %507 = vmatprep.subr.bf16.mxu0 0
    %508 = vmatpush1.bf16.msra.mxu0 0
    %509 = vmatprep.subr.bf16.mxu0 0
    %510 = vmatpush1.bf16.msra.mxu0 0
    %511 = vmatprep.subr.bf16.mxu0 0
    %512 = vmatpush1.bf16.msra.mxu0 0
    %513 = vmatprep.subr.bf16.mxu0 %v475
    %514 = vmatpush1.bf16.msra.mxu0 %v474
    %515 = vmatprep.subr.bf16.mxu0 %v467
    %516 = vmatpush1.bf16.msra.mxu0 %v466
    %517 = vmatprep.subr.bf16.mxu0 0
    %518 = vmatpush2.bf16.msra.mxu0 0
    %519 = vmatprep.subr.bf16.mxu0 0
    %520 = vmatpush2.bf16.msra.mxu0 0
    %521 = vmatprep.subr.bf16.mxu0 0
    %522 = vmatpush2.bf16.msra.mxu0 0
    %523 = vmatprep.subr.bf16.mxu0 0
    %524 = vmatpush2.bf16.msra.mxu0 0
    %525 = vmatprep.subr.bf16.mxu0 0
    %526 = vmatpush2.bf16.msra.mxu0 0
    %527 = vmatprep.subr.bf16.mxu0 0
    %528 = vmatpush2.bf16.msra.mxu0 0
    %529 = vmatprep.subr.bf16.mxu0 0
    %530 = vmatpush2.bf16.msra.mxu0 0
    %531 = vmatprep.subr.bf16.mxu0 0
    %532 = vmatpush2.bf16.msra.mxu0 0
    %533 = vmatprep.mubr.bf16.mxu0 0
    %534 = vmatmul.mubr.bf16.gmra.mxu0 %v499
    %v535 = vpop.f32.mrf.mxu0
    %v536 = vadd.f32 0.0, %v535
    %v537 = vpop.f32.mrf.mxu0
    %v538 = vadd.f32 0.0, %v537
    %v539 = vpop.f32.mrf.mxu0
    %v540 = vadd.f32 0.0, %v539
    %v541 = vpop.f32.mrf.mxu0
    %v542 = vadd.f32 0.0, %v541
    %543 = vdwg.mxu0
    %544 = vmatprep.subr.bf16.mxu0 0
    %545 = vmatpush1.bf16.msra.mxu0 0
    %546 = vmatprep.subr.bf16.mxu0 0
    %547 = vmatpush1.bf16.msra.mxu0 0
    %548 = vmatprep.subr.bf16.mxu0 0
    %549 = vmatpush1.bf16.msra.mxu0 0
    %550 = vmatprep.subr.bf16.mxu0 0
    %551 = vmatpush1.bf16.msra.mxu0 0
    %552 = vmatprep.subr.bf16.mxu0 0
    %553 = vmatpush1.bf16.msra.mxu0 0
    %554 = vmatprep.subr.bf16.mxu0 0
    %555 = vmatpush1.bf16.msra.mxu0 0
    %556 = vmatprep.subr.bf16.mxu0 %v477
    %557 = vmatpush1.bf16.msra.mxu0 %v476
    %558 = vmatprep.subr.bf16.mxu0 %v469
    %559 = vmatpush1.bf16.msra.mxu0 %v468
    %560 = vmatprep.subr.bf16.mxu0 0
    %561 = vmatpush2.bf16.msra.mxu0 0
    %562 = vmatprep.subr.bf16.mxu0 0
    %563 = vmatpush2.bf16.msra.mxu0 0
    %564 = vmatprep.subr.bf16.mxu0 0
    %565 = vmatpush2.bf16.msra.mxu0 0
    %566 = vmatprep.subr.bf16.mxu0 0
    %567 = vmatpush2.bf16.msra.mxu0 0
    %568 = vmatprep.subr.bf16.mxu0 0
    %569 = vmatpush2.bf16.msra.mxu0 0
    %570 = vmatprep.subr.bf16.mxu0 0
    %571 = vmatpush2.bf16.msra.mxu0 0
    %572 = vmatprep.subr.bf16.mxu0 0
    %573 = vmatpush2.bf16.msra.mxu0 0
    %574 = vmatprep.subr.bf16.mxu0 0
    %575 = vmatpush2.bf16.msra.mxu0 0
    %576 = vmatprep.mubr.bf16.mxu0 0
    %577 = vmatmul.mubr.bf16.gmra.mxu0 %v499
    %v578 = vpop.f32.mrf.mxu0
    %v579 = vadd.f32 0.0, %v578
    %v580 = vpop.f32.mrf.mxu0
    %v581 = vadd.f32 0.0, %v580
    %v582 = vpop.f32.mrf.mxu0
    %v583 = vadd.f32 0.0, %v582
    %v584 = vpop.f32.mrf.mxu0
    %v585 = vadd.f32 0.0, %v584
    %586 = vdwg.mxu0
    %587 = vmatprep.subr.bf16.mxu0 0
    %588 = vmatpush1.bf16.msra.mxu0 0
    %589 = vmatprep.subr.bf16.mxu0 0
    %590 = vmatpush1.bf16.msra.mxu0 0
    %591 = vmatprep.subr.bf16.mxu0 0
    %592 = vmatpush1.bf16.msra.mxu0 0
    %593 = vmatprep.subr.bf16.mxu0 0
    %594 = vmatpush1.bf16.msra.mxu0 0
    %595 = vmatprep.subr.bf16.mxu0 0
    %596 = vmatpush1.bf16.msra.mxu0 0
    %597 = vmatprep.subr.bf16.mxu0 0
    %598 = vmatpush1.bf16.msra.mxu0 0
    %599 = vmatprep.subr.bf16.mxu0 %v479
    %600 = vmatpush1.bf16.msra.mxu0 %v478
    %601 = vmatprep.subr.bf16.mxu0 %v471
    %602 = vmatpush1.bf16.msra.mxu0 %v470
    %603 = vmatprep.subr.bf16.mxu0 0
    %604 = vmatpush2.bf16.msra.mxu0 0
    %605 = vmatprep.subr.bf16.mxu0 0
    %606 = vmatpush2.bf16.msra.mxu0 0
    %607 = vmatprep.subr.bf16.mxu0 0
    %608 = vmatpush2.bf16.msra.mxu0 0
    %609 = vmatprep.subr.bf16.mxu0 0
    %610 = vmatpush2.bf16.msra.mxu0 0
    %611 = vmatprep.subr.bf16.mxu0 0
    %612 = vmatpush2.bf16.msra.mxu0 0
    %613 = vmatprep.subr.bf16.mxu0 0
    %614 = vmatpush2.bf16.msra.mxu0 0
    %615 = vmatprep.subr.bf16.mxu0 0
    %616 = vmatpush2.bf16.msra.mxu0 0
    %617 = vmatprep.subr.bf16.mxu0 0
    %618 = vmatpush2.bf16.msra.mxu0 0
    %619 = vmatprep.mubr.bf16.mxu0 0
    %620 = vmatmul.mubr.bf16.gmra.mxu0 %v499
    %v621 = vpop.f32.mrf.mxu0
    %v622 = vadd.f32 0.0, %v621
    %v623 = vpop.f32.mrf.mxu0
    %v624 = vadd.f32 0.0, %v623
    %v625 = vpop.f32.mrf.mxu0
    %v626 = vadd.f32 0.0, %v625
    %v627 = vpop.f32.mrf.mxu0
    %v628 = vadd.f32 0.0, %v627
    %629 = vdwg.mxu0
    %630 = vmatprep.subr.bf16.mxu0 0
    %631 = vmatpush1.bf16.msra.mxu0 0
    %632 = vmatprep.subr.bf16.mxu0 0
    %633 = vmatpush1.bf16.msra.mxu0 0
    %634 = vmatprep.subr.bf16.mxu0 0
    %635 = vmatpush1.bf16.msra.mxu0 0
    %636 = vmatprep.subr.bf16.mxu0 0
    %637 = vmatpush1.bf16.msra.mxu0 0
    %638 = vmatprep.subr.bf16.mxu0 0
    %639 = vmatpush1.bf16.msra.mxu0 0
    %640 = vmatprep.subr.bf16.mxu0 0
    %641 = vmatpush1.bf16.msra.mxu0 0
    %642 = vmatprep.subr.bf16.mxu0 %v481
    %643 = vmatpush1.bf16.msra.mxu0 %v480
    %644 = vmatprep.subr.bf16.mxu0 %v473
    %645 = vmatpush1.bf16.msra.mxu0 %v472
    %646 = vmatprep.subr.bf16.mxu0 0
    %647 = vmatpush2.bf16.msra.mxu0 0
    %648 = vmatprep.subr.bf16.mxu0 0
    %649 = vmatpush2.bf16.msra.mxu0 0
    %650 = vmatprep.subr.bf16.mxu0 0
    %651 = vmatpush2.bf16.msra.mxu0 0
    %652 = vmatprep.subr.bf16.mxu0 0
    %653 = vmatpush2.bf16.msra.mxu0 0
    %654 = vmatprep.subr.bf16.mxu0 0
    %655 = vmatpush2.bf16.msra.mxu0 0
    %656 = vmatprep.subr.bf16.mxu0 0
    %657 = vmatpush2.bf16.msra.mxu0 0
    %658 = vmatprep.subr.bf16.mxu0 0
    %659 = vmatpush2.bf16.msra.mxu0 0
    %660 = vmatprep.subr.bf16.mxu0 0
    %661 = vmatpush2.bf16.msra.mxu0 0
    %662 = vmatprep.mubr.bf16.mxu0 0
    %663 = vmatmul.mubr.bf16.gmra.mxu0 %v499
    %v664 = vpop.f32.mrf.mxu0
    %v665 = vadd.f32 0.0, %v664
    %v666 = vpop.f32.mrf.mxu0
    %v667 = vadd.f32 0.0, %v666
    %v668 = vpop.f32.mrf.mxu0
    %v669 = vadd.f32 0.0, %v668
    %v670 = vpop.f32.mrf.mxu0
    %v671 = vadd.f32 0.0, %v670
    %672 = vdwg.mxu0
    %673 = vst [vmem:[#allocation2] sm:$0xff] %v536
    %674 = vst [vmem:[#allocation2 + $0x8] sm:$0xff] %v538
    %675 = vst [vmem:[#allocation2 + $0x10] sm:$0xff] %v579
    %676 = vst [vmem:[#allocation2 + $0x18] sm:$0xff] %v581
    %677 = vst [vmem:[#allocation2 + $0x20] sm:$0xff] %v622
    %678 = vst [vmem:[#allocation2 + $0x28] sm:$0xff] %v624
    %679 = vst [vmem:[#allocation2 + $0x30] sm:$0xff] %v665
    %680 = vst [vmem:[#allocation2 + $0x38] sm:$0xff] %v667
    %681 = vst [vmem:[#allocation2 + $0x40] sm:$0xff] %v540
    %682 = vst [vmem:[#allocation2 + $0x48] sm:$0xff] %v542
    %683 = vst [vmem:[#allocation2 + $0x50] sm:$0xff] %v583
    %684 = vst [vmem:[#allocation2 + $0x58] sm:$0xff] %v585
    %685 = vst [vmem:[#allocation2 + $0x60] sm:$0xff] %v626
    %686 = vst [vmem:[#allocation2 + $0x68] sm:$0xff] %v628
    %687 = vst [vmem:[#allocation2 + $0x70] sm:$0xff] %v669
    %688 = vst [vmem:[#allocation2 + $0x78] sm:$0xff] %v671
    %v689 = vld [vmem:[%s15] sm:$0xf]
    %v690 = vld [vmem:[%s15 + $0x4] sm:$0xf]
    %v691 = vld [vmem:[%s15 + $0x8] sm:$0xf]
    %v692 = vld [vmem:[%s15 + $0xc] sm:$0xf]
    %v693 = vld [vmem:[%s17] sm:$0x1]
    %v695 = vlaneseq
    %v696 = vshrl.u32 %v695, 7
    %v697 = vsub.s32 0, %v696
    %v698 = vrot.slane %v693, %v697
    %v704 = vunpack.c.l.b16 %v689
    %v705 = vunpack.c.l.b16 %v690
    %v706 = vunpack.c.l.b16 %v691
    %v707 = vunpack.c.l.b16 %v692
    %v708 = vpack.c.b16 %v705, %v704
    %v709 = vpack.c.b16 %v707, %v706
    %712 = vmatprep.subr.bf16.mxu0 0
    %713 = vmatpush1.bf16.msra.mxu0 0
    %714 = vmatprep.subr.bf16.mxu0 0
    %715 = vmatpush1.bf16.msra.mxu0 0
    %716 = vmatprep.subr.bf16.mxu0 0
    %717 = vmatpush1.bf16.msra.mxu0 0
    %718 = vmatprep.subr.bf16.mxu0 0
    %719 = vmatpush1.bf16.msra.mxu0 0
    %720 = vmatprep.subr.bf16.mxu0 0
    %721 = vmatpush1.bf16.msra.mxu0 0
    %722 = vmatprep.subr.bf16.mxu0 0
    %723 = vmatpush1.bf16.msra.mxu0 0
    %724 = vmatprep.subr.bf16.mxu0 0
    %725 = vmatpush1.bf16.msra.mxu0 %v709
    %726 = vmatprep.subr.bf16.mxu0 0
    %727 = vmatpush1.bf16.msra.mxu0 %v708
    %728 = vmatprep.subr.bf16.mxu0 0
    %729 = vmatpush2.bf16.msra.mxu0 0
    %730 = vmatprep.subr.bf16.mxu0 0
    %731 = vmatpush2.bf16.msra.mxu0 0
    %732 = vmatprep.subr.bf16.mxu0 0
    %733 = vmatpush2.bf16.msra.mxu0 0
    %734 = vmatprep.subr.bf16.mxu0 0
    %735 = vmatpush2.bf16.msra.mxu0 0
    %736 = vmatprep.subr.bf16.mxu0 0
    %737 = vmatpush2.bf16.msra.mxu0 0
    %738 = vmatprep.subr.bf16.mxu0 0
    %739 = vmatpush2.bf16.msra.mxu0 0
    %740 = vmatprep.subr.bf16.mxu0 0
    %741 = vmatpush2.bf16.msra.mxu0 0
    %742 = vmatprep.subr.bf16.mxu0 0
    %743 = vmatpush2.bf16.msra.mxu0 0
    %744 = vmatprep.mubr.bf16.mxu0 0
    %745 = vmatmul.mubr.bf16.gmra.mxu0 %v499
    %v746 = vpop.f32.mrf.mxu0
    %v747 = vadd.f32 %v698, %v746
    %v748 = vpop.f32.mrf.mxu0
    %v749 = vpop.f32.mrf.mxu0
    %v750 = vadd.f32 %v698, %v749
    %v751 = vpop.f32.mrf.mxu0
    %752 = vdwg.mxu0
    %v753 = vld [vmem:[%s19] sm:$0xf]
    %v754 = vld [vmem:[%s19 + $0x4] sm:$0xf]
    %v755 = vld [vmem:[%s19 + $0x8] sm:$0xf]
    %v756 = vld [vmem:[%s19 + $0xc] sm:$0xf]
    %v757 = vld [vmem:[%s21] sm:$0x1]
    %v759 = vlaneseq
    %v760 = vshrl.u32 %v759, 7
    %v761 = vsub.s32 0, %v760
    %v762 = vrot.slane %v757, %v761
    %v768 = vunpack.c.l.b16 %v753
    %v769 = vunpack.c.l.b16 %v754
    %v770 = vunpack.c.l.b16 %v755
    %v771 = vunpack.c.l.b16 %v756
    %v772 = vpack.c.b16 %v769, %v768
    %v773 = vpack.c.b16 %v771, %v770
    %776 = vmatprep.subr.bf16.mxu0 0
    %777 = vmatpush1.bf16.msra.mxu0 0
    %778 = vmatprep.subr.bf16.mxu0 0
    %779 = vmatpush1.bf16.msra.mxu0 0
    %780 = vmatprep.subr.bf16.mxu0 0
    %781 = vmatpush1.bf16.msra.mxu0 0
    %782 = vmatprep.subr.bf16.mxu0 0
    %783 = vmatpush1.bf16.msra.mxu0 0
    %784 = vmatprep.subr.bf16.mxu0 0
    %785 = vmatpush1.bf16.msra.mxu0 0
    %786 = vmatprep.subr.bf16.mxu0 0
    %787 = vmatpush1.bf16.msra.mxu0 0
    %788 = vmatprep.subr.bf16.mxu0 0
    %789 = vmatpush1.bf16.msra.mxu0 %v773
    %790 = vmatprep.subr.bf16.mxu0 0
    %791 = vmatpush1.bf16.msra.mxu0 %v772
    %792 = vmatprep.subr.bf16.mxu0 0
    %793 = vmatpush2.bf16.msra.mxu0 0
    %794 = vmatprep.subr.bf16.mxu0 0
    %795 = vmatpush2.bf16.msra.mxu0 0
    %796 = vmatprep.subr.bf16.mxu0 0
    %797 = vmatpush2.bf16.msra.mxu0 0
    %798 = vmatprep.subr.bf16.mxu0 0
    %799 = vmatpush2.bf16.msra.mxu0 0
    %800 = vmatprep.subr.bf16.mxu0 0
    %801 = vmatpush2.bf16.msra.mxu0 0
    %802 = vmatprep.subr.bf16.mxu0 0
    %803 = vmatpush2.bf16.msra.mxu0 0
    %804 = vmatprep.subr.bf16.mxu0 0
    %805 = vmatpush2.bf16.msra.mxu0 0
    %806 = vmatprep.subr.bf16.mxu0 0
    %807 = vmatpush2.bf16.msra.mxu0 0
    %808 = vmatprep.mubr.bf16.mxu0 0
    %809 = vmatmul.mubr.bf16.gmra.mxu0 %v499
    %v810 = vpop.f32.mrf.mxu0
    %v811 = vadd.f32 %v762, %v810
    %v812 = vpop.f32.mrf.mxu0
    %v813 = vpop.f32.mrf.mxu0
    %v814 = vadd.f32 %v762, %v813
    %v815 = vpop.f32.mrf.mxu0
    %816 = vdwg.mxu0
    %v817 = vld [vmem:[%s23] sm:$0xf]
    %v818 = vld [vmem:[%s23 + $0x4] sm:$0xf]
    %v819 = vld [vmem:[%s23 + $0x8] sm:$0xf]
    %v820 = vld [vmem:[%s23 + $0xc] sm:$0xf]
    %v821 = vld [vmem:[%s25] sm:$0x1]
    %v823 = vlaneseq
    %v824 = vshrl.u32 %v823, 7
    %v825 = vsub.s32 0, %v824
    %v826 = vrot.slane %v821, %v825
    %v832 = vunpack.c.l.b16 %v817
    %v833 = vunpack.c.l.b16 %v818
    %v834 = vunpack.c.l.b16 %v819
    %v835 = vunpack.c.l.b16 %v820
    %v836 = vpack.c.b16 %v833, %v832
    %v837 = vpack.c.b16 %v835, %v834
    %840 = vmatprep.subr.bf16.mxu0 0
    %841 = vmatpush1.bf16.msra.mxu0 0
    %842 = vmatprep.subr.bf16.mxu0 0
    %843 = vmatpush1.bf16.msra.mxu0 0
    %844 = vmatprep.subr.bf16.mxu0 0
    %845 = vmatpush1.bf16.msra.mxu0 0
    %846 = vmatprep.subr.bf16.mxu0 0
    %847 = vmatpush1.bf16.msra.mxu0 0
    %848 = vmatprep.subr.bf16.mxu0 0
    %849 = vmatpush1.bf16.msra.mxu0 0
    %850 = vmatprep.subr.bf16.mxu0 0
    %851 = vmatpush1.bf16.msra.mxu0 0
    %852 = vmatprep.subr.bf16.mxu0 0
    %853 = vmatpush1.bf16.msra.mxu0 %v837
    %854 = vmatprep.subr.bf16.mxu0 0
    %855 = vmatpush1.bf16.msra.mxu0 %v836
    %856 = vmatprep.subr.bf16.mxu0 0
    %857 = vmatpush2.bf16.msra.mxu0 0
    %858 = vmatprep.subr.bf16.mxu0 0
    %859 = vmatpush2.bf16.msra.mxu0 0
    %860 = vmatprep.subr.bf16.mxu0 0
    %861 = vmatpush2.bf16.msra.mxu0 0
    %862 = vmatprep.subr.bf16.mxu0 0
    %863 = vmatpush2.bf16.msra.mxu0 0
    %864 = vmatprep.subr.bf16.mxu0 0
    %865 = vmatpush2.bf16.msra.mxu0 0
    %866 = vmatprep.subr.bf16.mxu0 0
    %867 = vmatpush2.bf16.msra.mxu0 0
    %868 = vmatprep.subr.bf16.mxu0 0
    %869 = vmatpush2.bf16.msra.mxu0 0
    %870 = vmatprep.subr.bf16.mxu0 0
    %871 = vmatpush2.bf16.msra.mxu0 0
    %872 = vmatprep.mubr.bf16.mxu0 0
    %873 = vmatmul.mubr.bf16.gmra.mxu0 %v499
    %v874 = vpop.f32.mrf.mxu0
    %v875 = vadd.f32 %v826, %v874
    %v876 = vpop.f32.mrf.mxu0
    %v877 = vpop.f32.mrf.mxu0
    %v878 = vadd.f32 %v826, %v877
    %v879 = vpop.f32.mrf.mxu0
    %880 = vdwg.mxu0
    %vm881 = vcmp.ge.s32.totalorder %v233, 0
    %vm882 = vcmp.lt.s32.totalorder %v233, 8
    %vm883 = vmand %vm881, %vm882
    %v884 = vsel %vm883, 1, 0
    %v885 = vcvt.s32.f32 %v884
    %v886 = vmul.f32 %v747, %v885
    %v887 = vmul.f32 %v750, %v885
    %v889 = vsel %vm340, %v886, 0
    %v892 = vsel %vm340, %v887, 0
    %v895 = vsel %vm340, %v811, 0
    %v898 = vsel %vm340, %v814, 0
    %900 = vmatprep.subr.mxu0 0.0
    %901 = vmatpush1.xpose.msra.mxu0 0.0
    %902 = vmatprep.subr.mxu0 0.0
    %903 = vmatpush1.xpose.msra.mxu0 0.0
    %904 = vmatprep.subr.mxu0 0.0
    %905 = vmatpush1.xpose.msra.mxu0 0.0
    %906 = vmatprep.subr.mxu0 0.0
    %907 = vmatpush1.xpose.msra.mxu0 0.0
    %908 = vmatprep.subr.mxu0 0.0
    %909 = vmatpush1.xpose.msra.mxu0 0.0
    %910 = vmatprep.subr.mxu0 0.0
    %911 = vmatpush1.xpose.msra.mxu0 0.0
    %912 = vmatprep.subr.mxu0 0.0
    %913 = vmatpush1.xpose.msra.mxu0 0.0
    %914 = vmatprep.subr.mxu0 0.0
    %915 = vmatpush1.xpose.msra.mxu0 0.0
    %916 = vmatprep.subr.mxu0 0.0
    %917 = vmatpush1.xpose.msra.mxu0 0.0
    %918 = vmatprep.subr.mxu0 0.0
    %919 = vmatpush1.xpose.msra.mxu0 0.0
    %920 = vmatprep.subr.mxu0 0.0
    %921 = vmatpush1.xpose.msra.mxu0 0.0
    %922 = vmatprep.subr.mxu0 0.0
    %923 = vmatpush1.xpose.msra.mxu0 0.0
    %924 = vmatprep.subr.mxu0 0.0
    %925 = vmatpush1.xpose.msra.mxu0 0.0
    %926 = vmatprep.subr.mxu0 0.0
    %927 = vmatpush1.xpose.msra.mxu0 0.0
    %928 = vmatprep.subr.mxu0 0.0
    %929 = vmatpush1.xpose.msra.mxu0 %v898
    %930 = vmatprep.subr.mxu0 0.0
    %931 = vmatpush1.xpose.msra.mxu0 %v895
    %932 = vmatprep.subr.mxu0 0.0
    %933 = vmatpush2.xpose.msra.mxu0 0.0
    %934 = vmatprep.subr.mxu0 0.0
    %935 = vmatpush2.xpose.msra.mxu0 0.0
    %936 = vmatprep.subr.mxu0 0.0
    %937 = vmatpush2.xpose.msra.mxu0 0.0
    %938 = vmatprep.subr.mxu0 0.0
    %939 = vmatpush2.xpose.msra.mxu0 0.0
    %940 = vmatprep.subr.mxu0 0.0
    %941 = vmatpush2.xpose.msra.mxu0 0.0
    %942 = vmatprep.subr.mxu0 0.0
    %943 = vmatpush2.xpose.msra.mxu0 0.0
    %944 = vmatprep.subr.mxu0 0.0
    %945 = vmatpush2.xpose.msra.mxu0 0.0
    %946 = vmatprep.subr.mxu0 0.0
    %947 = vmatpush2.xpose.msra.mxu0 0.0
    %948 = vmatprep.subr.mxu0 0.0
    %949 = vmatpush2.xpose.msra.mxu0 0.0
    %950 = vmatprep.subr.mxu0 0.0
    %951 = vmatpush2.xpose.msra.mxu0 0.0
    %952 = vmatprep.subr.mxu0 0.0
    %953 = vmatpush2.xpose.msra.mxu0 0.0
    %954 = vmatprep.subr.mxu0 0.0
    %955 = vmatpush2.xpose.msra.mxu0 0.0
    %956 = vmatprep.subr.mxu0 0.0
    %957 = vmatpush2.xpose.msra.mxu0 0.0
    %958 = vmatprep.subr.mxu0 0.0
    %959 = vmatpush2.xpose.msra.mxu0 0.0
    %960 = vmatprep.subr.mxu0 0.0
    %961 = vmatpush2.xpose.msra.mxu0 0.0
    %962 = vmatprep.subr.mxu0 0.0
    %963 = vmatpush2.xpose.msra.mxu0 0.0
    %964 = vmatprep.mubr.f32.mxu0 0.0
    %965 = vmatmul.mubr.f32.gmra.mxu0 %v889
    %v966 = vpop.f32.mrf.mxu0
    %v967 = vadd.f32 0.0, %v966
    %v968 = vpop.f32.mrf.mxu0
    %969 = vmatprep.mubr.f32.mxu0 0.0
    %970 = vmatmul.mubr.f32.gmra.mxu0 %v892
    %v971 = vpop.f32.mrf.mxu0
    %v972 = vadd.f32 0.0, %v971
    %v973 = vpop.f32.mrf.mxu0
    %974 = vdwg.mxu0
    %v975 = vmul.f32 %v967, 0.35355338
    %v976 = vmul.f32 %v972, 0.35355338
    %v977 = vadd.f32 %v975, %v399
    %v978 = vadd.f32 %v976, %v400
    %vm979 = vcmask 130048
    %v980 = vsel %vm979, %v977, -inf
    %981 = vmax.xlane.f32.xlu0 %v980
    %v982 = vpop.xlane.xlu0 %981
    %v983 = vsel %vm979, %v978, -inf
    %984 = vmax.xlane.f32.xlu0 %v983
    %v985 = vpop.xlane.xlu0 %984
    %v986 = vsub.f32 %v977, %v982
    %v987 = vsub.f32 %v978, %v985
    %v988 = vmul.f32 %v986, 1.442695
    %v989 = vpow.pop %v988
    %v990 = vmul.f32 %v987, 1.442695
    %v991 = vpow.pop %v990
    %v992 = vsel %vm979, %v989, 0.0
    %993 = vadd.xlane.f32.xlu0 %v992
    %v994 = vpop.xlane.xlu0 %993
    %v995 = vsel %vm979, %v991, 0.0
    %996 = vadd.xlane.f32.xlu0 %v995
    %v997 = vpop.xlane.xlu0 %996
    %v998 = vrcp.pop %v994
    %v999 = vrcp.pop %v997
    %v1000 = vmul.f32 %v989, %v998
    %v1001 = vmul.f32 %v991, %v999
    %v1002 = vmul.f32 %v875, %v885
    %v1003 = vmul.f32 %v878, %v885
    %vm1004 = vcmp.ge.s32.totalorder %v233, 8
    %vm1005 = vcmp.lt.s32.totalorder %v233, 16
    %vm1006 = vmand %vm1004, %vm1005
    %v1007 = vsel %vm1006, 1, 0
    %v1008 = vcvt.s32.f32 %v1007
    %v1009 = vmul.f32 %v747, %v1008
    %v1010 = vmul.f32 %v750, %v1008
    %v1012 = vsel %vm340, %v1009, 0
    %v1015 = vsel %vm340, %v1010, 0
    %1017 = vmatprep.subr.mxu0 0.0
    %1018 = vmatpush1.xpose.msra.mxu0 0.0
    %1019 = vmatprep.subr.mxu0 0.0
    %1020 = vmatpush1.xpose.msra.mxu0 0.0
    %1021 = vmatprep.subr.mxu0 0.0
    %1022 = vmatpush1.xpose.msra.mxu0 0.0
    %1023 = vmatprep.subr.mxu0 0.0
    %1024 = vmatpush1.xpose.msra.mxu0 0.0
    %1025 = vmatprep.subr.mxu0 0.0
    %1026 = vmatpush1.xpose.msra.mxu0 0.0
    %1027 = vmatprep.subr.mxu0 0.0
    %1028 = vmatpush1.xpose.msra.mxu0 0.0
    %1029 = vmatprep.subr.mxu0 0.0
    %1030 = vmatpush1.xpose.msra.mxu0 0.0
    %1031 = vmatprep.subr.mxu0 0.0
    %1032 = vmatpush1.xpose.msra.mxu0 0.0
    %1033 = vmatprep.subr.mxu0 0.0
    %1034 = vmatpush1.xpose.msra.mxu0 0.0
    %1035 = vmatprep.subr.mxu0 0.0
    %1036 = vmatpush1.xpose.msra.mxu0 0.0
    %1037 = vmatprep.subr.mxu0 0.0
    %1038 = vmatpush1.xpose.msra.mxu0 0.0
    %1039 = vmatprep.subr.mxu0 0.0
    %1040 = vmatpush1.xpose.msra.mxu0 0.0
    %1041 = vmatprep.subr.mxu0 0.0
    %1042 = vmatpush1.xpose.msra.mxu0 0.0
    %1043 = vmatprep.subr.mxu0 0.0
    %1044 = vmatpush1.xpose.msra.mxu0 0.0
    %1045 = vmatprep.subr.mxu0 0.0
    %1046 = vmatpush1.xpose.msra.mxu0 %v898
    %1047 = vmatprep.subr.mxu0 0.0
    %1048 = vmatpush1.xpose.msra.mxu0 %v895
    %1049 = vmatprep.subr.mxu0 0.0
    %1050 = vmatpush2.xpose.msra.mxu0 0.0
    %1051 = vmatprep.subr.mxu0 0.0
    %1052 = vmatpush2.xpose.msra.mxu0 0.0
    %1053 = vmatprep.subr.mxu0 0.0
    %1054 = vmatpush2.xpose.msra.mxu0 0.0
    %1055 = vmatprep.subr.mxu0 0.0
    %1056 = vmatpush2.xpose.msra.mxu0 0.0
    %1057 = vmatprep.subr.mxu0 0.0
    %1058 = vmatpush2.xpose.msra.mxu0 0.0
    %1059 = vmatprep.subr.mxu0 0.0
    %1060 = vmatpush2.xpose.msra.mxu0 0.0
    %1061 = vmatprep.subr.mxu0 0.0
    %1062 = vmatpush2.xpose.msra.mxu0 0.0
    %1063 = vmatprep.subr.mxu0 0.0
    %1064 = vmatpush2.xpose.msra.mxu0 0.0
    %1065 = vmatprep.subr.mxu0 0.0
    %1066 = vmatpush2.xpose.msra.mxu0 0.0
    %1067 = vmatprep.subr.mxu0 0.0
    %1068 = vmatpush2.xpose.msra.mxu0 0.0
    %1069 = vmatprep.subr.mxu0 0.0
    %1070 = vmatpush2.xpose.msra.mxu0 0.0
    %1071 = vmatprep.subr.mxu0 0.0
    %1072 = vmatpush2.xpose.msra.mxu0 0.0
    %1073 = vmatprep.subr.mxu0 0.0
    %1074 = vmatpush2.xpose.msra.mxu0 0.0
    %1075 = vmatprep.subr.mxu0 0.0
    %1076 = vmatpush2.xpose.msra.mxu0 0.0
    %1077 = vmatprep.subr.mxu0 0.0
    %1078 = vmatpush2.xpose.msra.mxu0 0.0
    %1079 = vmatprep.subr.mxu0 0.0
    %1080 = vmatpush2.xpose.msra.mxu0 0.0
    %1081 = vmatprep.mubr.f32.mxu0 0.0
    %1082 = vmatmul.mubr.f32.gmra.mxu0 %v1012
    %v1083 = vpop.f32.mrf.mxu0
    %v1084 = vadd.f32 0.0, %v1083
    %v1085 = vpop.f32.mrf.mxu0
    %1086 = vmatprep.mubr.f32.mxu0 0.0
    %1087 = vmatmul.mubr.f32.gmra.mxu0 %v1015
    %v1088 = vpop.f32.mrf.mxu0
    %v1089 = vadd.f32 0.0, %v1088
    %v1090 = vpop.f32.mrf.mxu0
    %1091 = vdwg.mxu0
    %v1092 = vmul.f32 %v1084, 0.35355338
    %v1093 = vmul.f32 %v1089, 0.35355338
    %v1094 = vadd.f32 %v1092, %v399
    %v1095 = vadd.f32 %v1093, %v400
    %v1096 = vsel %vm979, %v1094, -inf
    %1097 = vmax.xlane.f32.xlu0 %v1096
    %v1098 = vpop.xlane.xlu0 %1097
    %v1099 = vsel %vm979, %v1095, -inf
    %1100 = vmax.xlane.f32.xlu0 %v1099
    %v1101 = vpop.xlane.xlu0 %1100
    %v1102 = vsub.f32 %v1094, %v1098
    %v1103 = vsub.f32 %v1095, %v1101
    %v1104 = vmul.f32 %v1102, 1.442695
    %v1105 = vpow.pop %v1104
    %v1106 = vmul.f32 %v1103, 1.442695
    %v1107 = vpow.pop %v1106
    %v1108 = vsel %vm979, %v1105, 0.0
    %1109 = vadd.xlane.f32.xlu0 %v1108
    %v1110 = vpop.xlane.xlu0 %1109
    %v1111 = vsel %vm979, %v1107, 0.0
    %1112 = vadd.xlane.f32.xlu0 %v1111
    %v1113 = vpop.xlane.xlu0 %1112
    %v1114 = vrcp.pop %v1110
    %v1115 = vrcp.pop %v1113
    %v1116 = vmul.f32 %v1105, %v1114
    %v1117 = vmul.f32 %v1107, %v1115
    %v1118 = vmul.f32 %v875, %v1008
    %v1119 = vmul.f32 %v878, %v1008
    %v1121 = vsel %vm979, %v1116, 0
    %v1124 = vsel %vm979, %v1117, 0
    %1126 = vmatprep.subr.mxu0 0.0
    %1127 = vmatpush1.msra.mxu0 0.0
    %1128 = vmatprep.subr.mxu0 0.0
    %1129 = vmatpush1.msra.mxu0 0.0
    %1130 = vmatprep.subr.mxu0 0.0
    %1131 = vmatpush1.msra.mxu0 0.0
    %1132 = vmatprep.subr.mxu0 0.0
    %1133 = vmatpush1.msra.mxu0 0.0
    %1134 = vmatprep.subr.mxu0 0.0
    %1135 = vmatpush1.msra.mxu0 0.0
    %1136 = vmatprep.subr.mxu0 0.0
    %1137 = vmatpush1.msra.mxu0 0.0
    %1138 = vmatprep.subr.mxu0 0.0
    %1139 = vmatpush1.msra.mxu0 0.0
    %1140 = vmatprep.subr.mxu0 0.0
    %1141 = vmatpush1.msra.mxu0 0.0
    %1142 = vmatprep.subr.mxu0 0.0
    %1143 = vmatpush1.msra.mxu0 0.0
    %1144 = vmatprep.subr.mxu0 0.0
    %1145 = vmatpush1.msra.mxu0 0.0
    %1146 = vmatprep.subr.mxu0 0.0
    %1147 = vmatpush1.msra.mxu0 0.0
    %1148 = vmatprep.subr.mxu0 0.0
    %1149 = vmatpush1.msra.mxu0 0.0
    %1150 = vmatprep.subr.mxu0 0.0
    %1151 = vmatpush1.msra.mxu0 0.0
    %1152 = vmatprep.subr.mxu0 0.0
    %1153 = vmatpush1.msra.mxu0 0.0
    %1154 = vmatprep.subr.mxu0 0.0
    %1155 = vmatpush1.msra.mxu0 %v1119
    %1156 = vmatprep.subr.mxu0 0.0
    %1157 = vmatpush1.msra.mxu0 %v1118
    %1158 = vmatprep.subr.mxu0 0.0
    %1159 = vmatpush2.msra.mxu0 0.0
    %1160 = vmatprep.subr.mxu0 0.0
    %1161 = vmatpush2.msra.mxu0 0.0
    %1162 = vmatprep.subr.mxu0 0.0
    %1163 = vmatpush2.msra.mxu0 0.0
    %1164 = vmatprep.subr.mxu0 0.0
    %1165 = vmatpush2.msra.mxu0 0.0
    %1166 = vmatprep.subr.mxu0 0.0
    %1167 = vmatpush2.msra.mxu0 0.0
    %1168 = vmatprep.subr.mxu0 0.0
    %1169 = vmatpush2.msra.mxu0 0.0
    %1170 = vmatprep.subr.mxu0 0.0
    %1171 = vmatpush2.msra.mxu0 0.0
    %1172 = vmatprep.subr.mxu0 0.0
    %1173 = vmatpush2.msra.mxu0 0.0
    %1174 = vmatprep.subr.mxu0 0.0
    %1175 = vmatpush2.msra.mxu0 0.0
    %1176 = vmatprep.subr.mxu0 0.0
    %1177 = vmatpush2.msra.mxu0 0.0
    %1178 = vmatprep.subr.mxu0 0.0
    %1179 = vmatpush2.msra.mxu0 0.0
    %1180 = vmatprep.subr.mxu0 0.0
    %1181 = vmatpush2.msra.mxu0 0.0
    %1182 = vmatprep.subr.mxu0 0.0
    %1183 = vmatpush2.msra.mxu0 0.0
    %1184 = vmatprep.subr.mxu0 0.0
    %1185 = vmatpush2.msra.mxu0 0.0
    %1186 = vmatprep.subr.mxu0 0.0
    %1187 = vmatpush2.msra.mxu0 0.0
    %1188 = vmatprep.subr.mxu0 0.0
    %1189 = vmatpush2.msra.mxu0 0.0
    %1190 = vmatprep.mubr.f32.mxu0 0.0
    %1191 = vmatmul.mubr.f32.gmra.mxu0 %v1121
    %v1192 = vpop.f32.mrf.mxu0
    %v1193 = vadd.f32 0.0, %v1192
    %v1194 = vpop.f32.mrf.mxu0
    %1195 = vmatprep.mubr.f32.mxu0 0.0
    %1196 = vmatmul.mubr.f32.gmra.mxu0 %v1124
    %v1197 = vpop.f32.mrf.mxu0
    %v1198 = vadd.f32 0.0, %v1197
    %v1199 = vpop.f32.mrf.mxu0
    %1200 = vdwg.mxu0
    %v1202 = vsel %vm979, %v1000, 0
    %v1205 = vsel %vm979, %v1001, 0
    %1207 = vmatprep.subr.mxu0 0.0
    %1208 = vmatpush1.msra.mxu0 0.0
    %1209 = vmatprep.subr.mxu0 0.0
    %1210 = vmatpush1.msra.mxu0 0.0
    %1211 = vmatprep.subr.mxu0 0.0
    %1212 = vmatpush1.msra.mxu0 0.0
    %1213 = vmatprep.subr.mxu0 0.0
    %1214 = vmatpush1.msra.mxu0 0.0
    %1215 = vmatprep.subr.mxu0 0.0
    %1216 = vmatpush1.msra.mxu0 0.0
    %1217 = vmatprep.subr.mxu0 0.0
    %1218 = vmatpush1.msra.mxu0 0.0
    %1219 = vmatprep.subr.mxu0 0.0
    %1220 = vmatpush1.msra.mxu0 0.0
    %1221 = vmatprep.subr.mxu0 0.0
    %1222 = vmatpush1.msra.mxu0 0.0
    %1223 = vmatprep.subr.mxu0 0.0
    %1224 = vmatpush1.msra.mxu0 0.0
    %1225 = vmatprep.subr.mxu0 0.0
    %1226 = vmatpush1.msra.mxu0 0.0
    %1227 = vmatprep.subr.mxu0 0.0
    %1228 = vmatpush1.msra.mxu0 0.0
    %1229 = vmatprep.subr.mxu0 0.0
    %1230 = vmatpush1.msra.mxu0 0.0
    %1231 = vmatprep.subr.mxu0 0.0
    %1232 = vmatpush1.msra.mxu0 0.0
    %1233 = vmatprep.subr.mxu0 0.0
    %1234 = vmatpush1.msra.mxu0 0.0
    %1235 = vmatprep.subr.mxu0 0.0
    %1236 = vmatpush1.msra.mxu0 %v1003
    %1237 = vmatprep.subr.mxu0 0.0
    %1238 = vmatpush1.msra.mxu0 %v1002
    %1239 = vmatprep.subr.mxu0 0.0
    %1240 = vmatpush2.msra.mxu0 0.0
    %1241 = vmatprep.subr.mxu0 0.0
    %1242 = vmatpush2.msra.mxu0 0.0
    %1243 = vmatprep.subr.mxu0 0.0
    %1244 = vmatpush2.msra.mxu0 0.0
    %1245 = vmatprep.subr.mxu0 0.0
    %1246 = vmatpush2.msra.mxu0 0.0
    %1247 = vmatprep.subr.mxu0 0.0
    %1248 = vmatpush2.msra.mxu0 0.0
    %1249 = vmatprep.subr.mxu0 0.0
    %1250 = vmatpush2.msra.mxu0 0.0
    %1251 = vmatprep.subr.mxu0 0.0
    %1252 = vmatpush2.msra.mxu0 0.0
    %1253 = vmatprep.subr.mxu0 0.0
    %1254 = vmatpush2.msra.mxu0 0.0
    %1255 = vmatprep.subr.mxu0 0.0
    %1256 = vmatpush2.msra.mxu0 0.0
    %1257 = vmatprep.subr.mxu0 0.0
    %1258 = vmatpush2.msra.mxu0 0.0
    %1259 = vmatprep.subr.mxu0 0.0
    %1260 = vmatpush2.msra.mxu0 0.0
    %1261 = vmatprep.subr.mxu0 0.0
    %1262 = vmatpush2.msra.mxu0 0.0
    %1263 = vmatprep.subr.mxu0 0.0
    %1264 = vmatpush2.msra.mxu0 0.0
    %1265 = vmatprep.subr.mxu0 0.0
    %1266 = vmatpush2.msra.mxu0 0.0
    %1267 = vmatprep.subr.mxu0 0.0
    %1268 = vmatpush2.msra.mxu0 0.0
    %1269 = vmatprep.subr.mxu0 0.0
    %1270 = vmatpush2.msra.mxu0 0.0
    %1271 = vmatprep.mubr.f32.mxu0 0.0
    %1272 = vmatmul.mubr.f32.gmra.mxu0 %v1202
    %v1273 = vpop.f32.mrf.mxu0
    %v1274 = vadd.f32 %v1193, %v1273
    %v1275 = vpop.f32.mrf.mxu0
    %1276 = vmatprep.mubr.f32.mxu0 0.0
    %1277 = vmatmul.mubr.f32.gmra.mxu0 %v1205
    %v1278 = vpop.f32.mrf.mxu0
    %v1279 = vadd.f32 %v1198, %v1278
    %v1280 = vpop.f32.mrf.mxu0
    %1281 = vdwg.mxu0
    %vm1282 = vcmp.ge.s32.totalorder %v233, 16
    %vm1283 = vcmp.lt.s32.totalorder %v233, 24
    %vm1284 = vmand %vm1282, %vm1283
    %v1285 = vsel %vm1284, 1, 0
    %v1286 = vcvt.s32.f32 %v1285
    %v1287 = vmul.f32 %v747, %v1286
    %v1288 = vmul.f32 %v750, %v1286
    %v1290 = vsel %vm340, %v1287, 0
    %v1293 = vsel %vm340, %v1288, 0
    %1295 = vmatprep.subr.mxu0 0.0
    %1296 = vmatpush1.xpose.msra.mxu0 0.0
    %1297 = vmatprep.subr.mxu0 0.0
    %1298 = vmatpush1.xpose.msra.mxu0 0.0
    %1299 = vmatprep.subr.mxu0 0.0
    %1300 = vmatpush1.xpose.msra.mxu0 0.0
    %1301 = vmatprep.subr.mxu0 0.0
    %1302 = vmatpush1.xpose.msra.mxu0 0.0
    %1303 = vmatprep.subr.mxu0 0.0
    %1304 = vmatpush1.xpose.msra.mxu0 0.0
    %1305 = vmatprep.subr.mxu0 0.0
    %1306 = vmatpush1.xpose.msra.mxu0 0.0
    %1307 = vmatprep.subr.mxu0 0.0
    %1308 = vmatpush1.xpose.msra.mxu0 0.0
    %1309 = vmatprep.subr.mxu0 0.0
    %1310 = vmatpush1.xpose.msra.mxu0 0.0
    %1311 = vmatprep.subr.mxu0 0.0
    %1312 = vmatpush1.xpose.msra.mxu0 0.0
    %1313 = vmatprep.subr.mxu0 0.0
    %1314 = vmatpush1.xpose.msra.mxu0 0.0
    %1315 = vmatprep.subr.mxu0 0.0
    %1316 = vmatpush1.xpose.msra.mxu0 0.0
    %1317 = vmatprep.subr.mxu0 0.0
    %1318 = vmatpush1.xpose.msra.mxu0 0.0
    %1319 = vmatprep.subr.mxu0 0.0
    %1320 = vmatpush1.xpose.msra.mxu0 0.0
    %1321 = vmatprep.subr.mxu0 0.0
    %1322 = vmatpush1.xpose.msra.mxu0 0.0
    %1323 = vmatprep.subr.mxu0 0.0
    %1324 = vmatpush1.xpose.msra.mxu0 %v898
    %1325 = vmatprep.subr.mxu0 0.0
    %1326 = vmatpush1.xpose.msra.mxu0 %v895
    %1327 = vmatprep.subr.mxu0 0.0
    %1328 = vmatpush2.xpose.msra.mxu0 0.0
    %1329 = vmatprep.subr.mxu0 0.0
    %1330 = vmatpush2.xpose.msra.mxu0 0.0
    %1331 = vmatprep.subr.mxu0 0.0
    %1332 = vmatpush2.xpose.msra.mxu0 0.0
    %1333 = vmatprep.subr.mxu0 0.0
    %1334 = vmatpush2.xpose.msra.mxu0 0.0
    %1335 = vmatprep.subr.mxu0 0.0
    %1336 = vmatpush2.xpose.msra.mxu0 0.0
    %1337 = vmatprep.subr.mxu0 0.0
    %1338 = vmatpush2.xpose.msra.mxu0 0.0
    %1339 = vmatprep.subr.mxu0 0.0
    %1340 = vmatpush2.xpose.msra.mxu0 0.0
    %1341 = vmatprep.subr.mxu0 0.0
    %1342 = vmatpush2.xpose.msra.mxu0 0.0
    %1343 = vmatprep.subr.mxu0 0.0
    %1344 = vmatpush2.xpose.msra.mxu0 0.0
    %1345 = vmatprep.subr.mxu0 0.0
    %1346 = vmatpush2.xpose.msra.mxu0 0.0
    %1347 = vmatprep.subr.mxu0 0.0
    %1348 = vmatpush2.xpose.msra.mxu0 0.0
    %1349 = vmatprep.subr.mxu0 0.0
    %1350 = vmatpush2.xpose.msra.mxu0 0.0
    %1351 = vmatprep.subr.mxu0 0.0
    %1352 = vmatpush2.xpose.msra.mxu0 0.0
    %1353 = vmatprep.subr.mxu0 0.0
    %1354 = vmatpush2.xpose.msra.mxu0 0.0
    %1355 = vmatprep.subr.mxu0 0.0
    %1356 = vmatpush2.xpose.msra.mxu0 0.0
    %1357 = vmatprep.subr.mxu0 0.0
    %1358 = vmatpush2.xpose.msra.mxu0 0.0
    %1359 = vmatprep.mubr.f32.mxu0 0.0
    %1360 = vmatmul.mubr.f32.gmra.mxu0 %v1290
    %v1361 = vpop.f32.mrf.mxu0
    %v1362 = vadd.f32 0.0, %v1361
    %v1363 = vpop.f32.mrf.mxu0
    %1364 = vmatprep.mubr.f32.mxu0 0.0
    %1365 = vmatmul.mubr.f32.gmra.mxu0 %v1293
    %v1366 = vpop.f32.mrf.mxu0
    %v1367 = vadd.f32 0.0, %v1366
    %v1368 = vpop.f32.mrf.mxu0
    %1369 = vdwg.mxu0
    %v1370 = vmul.f32 %v1362, 0.35355338
    %v1371 = vmul.f32 %v1367, 0.35355338
    %v1372 = vadd.f32 %v1370, %v399
    %v1373 = vadd.f32 %v1371, %v400
    %v1374 = vsel %vm979, %v1372, -inf
    %1375 = vmax.xlane.f32.xlu0 %v1374
    %v1376 = vpop.xlane.xlu0 %1375
    %v1377 = vsel %vm979, %v1373, -inf
    %1378 = vmax.xlane.f32.xlu0 %v1377
    %v1379 = vpop.xlane.xlu0 %1378
    %v1380 = vsub.f32 %v1372, %v1376
    %v1381 = vsub.f32 %v1373, %v1379
    %v1382 = vmul.f32 %v1380, 1.442695
    %v1383 = vpow.pop %v1382
    %v1384 = vmul.f32 %v1381, 1.442695
    %v1385 = vpow.pop %v1384
    %v1386 = vsel %vm979, %v1383, 0.0
    %1387 = vadd.xlane.f32.xlu0 %v1386
    %v1388 = vpop.xlane.xlu0 %1387
    %v1389 = vsel %vm979, %v1385, 0.0
    %1390 = vadd.xlane.f32.xlu0 %v1389
    %v1391 = vpop.xlane.xlu0 %1390
    %v1392 = vrcp.pop %v1388
    %v1393 = vrcp.pop %v1391
    %v1394 = vmul.f32 %v1383, %v1392
    %v1395 = vmul.f32 %v1385, %v1393
    %v1396 = vmul.f32 %v875, %v1286
    %v1397 = vmul.f32 %v878, %v1286
    %v1399 = vsel %vm979, %v1394, 0
    %v1402 = vsel %vm979, %v1395, 0
    %1404 = vmatprep.subr.mxu0 0.0
    %1405 = vmatpush1.msra.mxu0 0.0
    %1406 = vmatprep.subr.mxu0 0.0
    %1407 = vmatpush1.msra.mxu0 0.0
    %1408 = vmatprep.subr.mxu0 0.0
    %1409 = vmatpush1.msra.mxu0 0.0
    %1410 = vmatprep.subr.mxu0 0.0
    %1411 = vmatpush1.msra.mxu0 0.0
    %1412 = vmatprep.subr.mxu0 0.0
    %1413 = vmatpush1.msra.mxu0 0.0
    %1414 = vmatprep.subr.mxu0 0.0
    %1415 = vmatpush1.msra.mxu0 0.0
    %1416 = vmatprep.subr.mxu0 0.0
    %1417 = vmatpush1.msra.mxu0 0.0
    %1418 = vmatprep.subr.mxu0 0.0
    %1419 = vmatpush1.msra.mxu0 0.0
    %1420 = vmatprep.subr.mxu0 0.0
    %1421 = vmatpush1.msra.mxu0 0.0
    %1422 = vmatprep.subr.mxu0 0.0
    %1423 = vmatpush1.msra.mxu0 0.0
    %1424 = vmatprep.subr.mxu0 0.0
    %1425 = vmatpush1.msra.mxu0 0.0
    %1426 = vmatprep.subr.mxu0 0.0
    %1427 = vmatpush1.msra.mxu0 0.0
    %1428 = vmatprep.subr.mxu0 0.0
    %1429 = vmatpush1.msra.mxu0 0.0
    %1430 = vmatprep.subr.mxu0 0.0
    %1431 = vmatpush1.msra.mxu0 0.0
    %1432 = vmatprep.subr.mxu0 0.0
    %1433 = vmatpush1.msra.mxu0 %v1397
    %1434 = vmatprep.subr.mxu0 0.0
    %1435 = vmatpush1.msra.mxu0 %v1396
    %1436 = vmatprep.subr.mxu0 0.0
    %1437 = vmatpush2.msra.mxu0 0.0
    %1438 = vmatprep.subr.mxu0 0.0
    %1439 = vmatpush2.msra.mxu0 0.0
    %1440 = vmatprep.subr.mxu0 0.0
    %1441 = vmatpush2.msra.mxu0 0.0
    %1442 = vmatprep.subr.mxu0 0.0
    %1443 = vmatpush2.msra.mxu0 0.0
    %1444 = vmatprep.subr.mxu0 0.0
    %1445 = vmatpush2.msra.mxu0 0.0
    %1446 = vmatprep.subr.mxu0 0.0
    %1447 = vmatpush2.msra.mxu0 0.0
    %1448 = vmatprep.subr.mxu0 0.0
    %1449 = vmatpush2.msra.mxu0 0.0
    %1450 = vmatprep.subr.mxu0 0.0
    %1451 = vmatpush2.msra.mxu0 0.0
    %1452 = vmatprep.subr.mxu0 0.0
    %1453 = vmatpush2.msra.mxu0 0.0
    %1454 = vmatprep.subr.mxu0 0.0
    %1455 = vmatpush2.msra.mxu0 0.0
    %1456 = vmatprep.subr.mxu0 0.0
    %1457 = vmatpush2.msra.mxu0 0.0
    %1458 = vmatprep.subr.mxu0 0.0
    %1459 = vmatpush2.msra.mxu0 0.0
    %1460 = vmatprep.subr.mxu0 0.0
    %1461 = vmatpush2.msra.mxu0 0.0
    %1462 = vmatprep.subr.mxu0 0.0
    %1463 = vmatpush2.msra.mxu0 0.0
    %1464 = vmatprep.subr.mxu0 0.0
    %1465 = vmatpush2.msra.mxu0 0.0
    %1466 = vmatprep.subr.mxu0 0.0
    %1467 = vmatpush2.msra.mxu0 0.0
    %1468 = vmatprep.mubr.f32.mxu0 0.0
    %1469 = vmatmul.mubr.f32.gmra.mxu0 %v1399
    %v1470 = vpop.f32.mrf.mxu0
    %v1471 = vadd.f32 0.0, %v1470
    %v1472 = vpop.f32.mrf.mxu0
    %1473 = vmatprep.mubr.f32.mxu0 0.0
    %1474 = vmatmul.mubr.f32.gmra.mxu0 %v1402
    %v1475 = vpop.f32.mrf.mxu0
    %v1476 = vadd.f32 0.0, %v1475
    %v1477 = vpop.f32.mrf.mxu0
    %1478 = vdwg.mxu0
    %v1479 = vadd.f32 %v1274, %v1471
    %v1480 = vadd.f32 %v1279, %v1476
    %vm1481 = vcmp.ge.s32.totalorder %v233, 24
    %vm1482 = vcmp.lt.s32.totalorder %v233, 32
    %vm1483 = vmand %vm1481, %vm1482
    %v1484 = vsel %vm1483, 1, 0
    %v1485 = vcvt.s32.f32 %v1484
    %v1486 = vmul.f32 %v747, %v1485
    %v1487 = vmul.f32 %v750, %v1485
    %v1489 = vsel %vm340, %v1486, 0
    %v1492 = vsel %vm340, %v1487, 0
    %1494 = vmatprep.subr.mxu0 0.0
    %1495 = vmatpush1.xpose.msra.mxu0 0.0
    %1496 = vmatprep.subr.mxu0 0.0
    %1497 = vmatpush1.xpose.msra.mxu0 0.0
    %1498 = vmatprep.subr.mxu0 0.0
    %1499 = vmatpush1.xpose.msra.mxu0 0.0
    %1500 = vmatprep.subr.mxu0 0.0
    %1501 = vmatpush1.xpose.msra.mxu0 0.0
    %1502 = vmatprep.subr.mxu0 0.0
    %1503 = vmatpush1.xpose.msra.mxu0 0.0
    %1504 = vmatprep.subr.mxu0 0.0
    %1505 = vmatpush1.xpose.msra.mxu0 0.0
    %1506 = vmatprep.subr.mxu0 0.0
    %1507 = vmatpush1.xpose.msra.mxu0 0.0
    %1508 = vmatprep.subr.mxu0 0.0
    %1509 = vmatpush1.xpose.msra.mxu0 0.0
    %1510 = vmatprep.subr.mxu0 0.0
    %1511 = vmatpush1.xpose.msra.mxu0 0.0
    %1512 = vmatprep.subr.mxu0 0.0
    %1513 = vmatpush1.xpose.msra.mxu0 0.0
    %1514 = vmatprep.subr.mxu0 0.0
    %1515 = vmatpush1.xpose.msra.mxu0 0.0
    %1516 = vmatprep.subr.mxu0 0.0
    %1517 = vmatpush1.xpose.msra.mxu0 0.0
    %1518 = vmatprep.subr.mxu0 0.0
    %1519 = vmatpush1.xpose.msra.mxu0 0.0
    %1520 = vmatprep.subr.mxu0 0.0
    %1521 = vmatpush1.xpose.msra.mxu0 0.0
    %1522 = vmatprep.subr.mxu0 0.0
    %1523 = vmatpush1.xpose.msra.mxu0 %v898
    %1524 = vmatprep.subr.mxu0 0.0
    %1525 = vmatpush1.xpose.msra.mxu0 %v895
    %1526 = vmatprep.subr.mxu0 0.0
    %1527 = vmatpush2.xpose.msra.mxu0 0.0
    %1528 = vmatprep.subr.mxu0 0.0
    %1529 = vmatpush2.xpose.msra.mxu0 0.0
    %1530 = vmatprep.subr.mxu0 0.0
    %1531 = vmatpush2.xpose.msra.mxu0 0.0
    %1532 = vmatprep.subr.mxu0 0.0
    %1533 = vmatpush2.xpose.msra.mxu0 0.0
    %1534 = vmatprep.subr.mxu0 0.0
    %1535 = vmatpush2.xpose.msra.mxu0 0.0
    %1536 = vmatprep.subr.mxu0 0.0
    %1537 = vmatpush2.xpose.msra.mxu0 0.0
    %1538 = vmatprep.subr.mxu0 0.0
    %1539 = vmatpush2.xpose.msra.mxu0 0.0
    %1540 = vmatprep.subr.mxu0 0.0
    %1541 = vmatpush2.xpose.msra.mxu0 0.0
    %1542 = vmatprep.subr.mxu0 0.0
    %1543 = vmatpush2.xpose.msra.mxu0 0.0
    %1544 = vmatprep.subr.mxu0 0.0
    %1545 = vmatpush2.xpose.msra.mxu0 0.0
    %1546 = vmatprep.subr.mxu0 0.0
    %1547 = vmatpush2.xpose.msra.mxu0 0.0
    %1548 = vmatprep.subr.mxu0 0.0
    %1549 = vmatpush2.xpose.msra.mxu0 0.0
    %1550 = vmatprep.subr.mxu0 0.0
    %1551 = vmatpush2.xpose.msra.mxu0 0.0
    %1552 = vmatprep.subr.mxu0 0.0
    %1553 = vmatpush2.xpose.msra.mxu0 0.0
    %1554 = vmatprep.subr.mxu0 0.0
    %1555 = vmatpush2.xpose.msra.mxu0 0.0
    %1556 = vmatprep.subr.mxu0 0.0
    %1557 = vmatpush2.xpose.msra.mxu0 0.0
    %1558 = vmatprep.mubr.f32.mxu0 0.0
    %1559 = vmatmul.mubr.f32.gmra.mxu0 %v1489
    %v1560 = vpop.f32.mrf.mxu0
    %v1561 = vadd.f32 0.0, %v1560
    %v1562 = vpop.f32.mrf.mxu0
    %1563 = vmatprep.mubr.f32.mxu0 0.0
    %1564 = vmatmul.mubr.f32.gmra.mxu0 %v1492
    %v1565 = vpop.f32.mrf.mxu0
    %v1566 = vadd.f32 0.0, %v1565
    %v1567 = vpop.f32.mrf.mxu0
    %1568 = vdwg.mxu0
    %v1569 = vmul.f32 %v1561, 0.35355338
    %v1570 = vmul.f32 %v1566, 0.35355338
    %v1571 = vadd.f32 %v1569, %v399
    %v1572 = vadd.f32 %v1570, %v400
    %v1573 = vsel %vm979, %v1571, -inf
    %1574 = vmax.xlane.f32.xlu0 %v1573
    %v1575 = vpop.xlane.xlu0 %1574
    %v1576 = vsel %vm979, %v1572, -inf
    %1577 = vmax.xlane.f32.xlu0 %v1576
    %v1578 = vpop.xlane.xlu0 %1577
    %v1579 = vsub.f32 %v1571, %v1575
    %v1580 = vsub.f32 %v1572, %v1578
    %v1581 = vmul.f32 %v1579, 1.442695
    %v1582 = vpow.pop %v1581
    %v1583 = vmul.f32 %v1580, 1.442695
    %v1584 = vpow.pop %v1583
    %v1585 = vsel %vm979, %v1582, 0.0
    %1586 = vadd.xlane.f32.xlu0 %v1585
    %v1587 = vpop.xlane.xlu0 %1586
    %v1588 = vsel %vm979, %v1584, 0.0
    %1589 = vadd.xlane.f32.xlu0 %v1588
    %v1590 = vpop.xlane.xlu0 %1589
    %v1591 = vrcp.pop %v1587
    %v1592 = vrcp.pop %v1590
    %v1593 = vmul.f32 %v1582, %v1591
    %v1594 = vmul.f32 %v1584, %v1592
    %v1595 = vmul.f32 %v875, %v1485
    %v1596 = vmul.f32 %v878, %v1485
    %v1598 = vsel %vm979, %v1593, 0
    %v1601 = vsel %vm979, %v1594, 0
    %1603 = vmatprep.subr.mxu0 0.0
    %1604 = vmatpush1.msra.mxu0 0.0
    %1605 = vmatprep.subr.mxu0 0.0
    %1606 = vmatpush1.msra.mxu0 0.0
    %1607 = vmatprep.subr.mxu0 0.0
    %1608 = vmatpush1.msra.mxu0 0.0
    %1609 = vmatprep.subr.mxu0 0.0
    %1610 = vmatpush1.msra.mxu0 0.0
    %1611 = vmatprep.subr.mxu0 0.0
    %1612 = vmatpush1.msra.mxu0 0.0
    %1613 = vmatprep.subr.mxu0 0.0
    %1614 = vmatpush1.msra.mxu0 0.0
    %1615 = vmatprep.subr.mxu0 0.0
    %1616 = vmatpush1.msra.mxu0 0.0
    %1617 = vmatprep.subr.mxu0 0.0
    %1618 = vmatpush1.msra.mxu0 0.0
    %1619 = vmatprep.subr.mxu0 0.0
    %1620 = vmatpush1.msra.mxu0 0.0
    %1621 = vmatprep.subr.mxu0 0.0
    %1622 = vmatpush1.msra.mxu0 0.0
    %1623 = vmatprep.subr.mxu0 0.0
    %1624 = vmatpush1.msra.mxu0 0.0
    %1625 = vmatprep.subr.mxu0 0.0
    %1626 = vmatpush1.msra.mxu0 0.0
    %1627 = vmatprep.subr.mxu0 0.0
    %1628 = vmatpush1.msra.mxu0 0.0
    %1629 = vmatprep.subr.mxu0 0.0
    %1630 = vmatpush1.msra.mxu0 0.0
    %1631 = vmatprep.subr.mxu0 0.0
    %1632 = vmatpush1.msra.mxu0 %v1596
    %1633 = vmatprep.subr.mxu0 0.0
    %1634 = vmatpush1.msra.mxu0 %v1595
    %1635 = vmatprep.subr.mxu0 0.0
    %1636 = vmatpush2.msra.mxu0 0.0
    %1637 = vmatprep.subr.mxu0 0.0
    %1638 = vmatpush2.msra.mxu0 0.0
    %1639 = vmatprep.subr.mxu0 0.0
    %1640 = vmatpush2.msra.mxu0 0.0
    %1641 = vmatprep.subr.mxu0 0.0
    %1642 = vmatpush2.msra.mxu0 0.0
    %1643 = vmatprep.subr.mxu0 0.0
    %1644 = vmatpush2.msra.mxu0 0.0
    %1645 = vmatprep.subr.mxu0 0.0
    %1646 = vmatpush2.msra.mxu0 0.0
    %1647 = vmatprep.subr.mxu0 0.0
    %1648 = vmatpush2.msra.mxu0 0.0
    %1649 = vmatprep.subr.mxu0 0.0
    %1650 = vmatpush2.msra.mxu0 0.0
    %1651 = vmatprep.subr.mxu0 0.0
    %1652 = vmatpush2.msra.mxu0 0.0
    %1653 = vmatprep.subr.mxu0 0.0
    %1654 = vmatpush2.msra.mxu0 0.0
    %1655 = vmatprep.subr.mxu0 0.0
    %1656 = vmatpush2.msra.mxu0 0.0
    %1657 = vmatprep.subr.mxu0 0.0
    %1658 = vmatpush2.msra.mxu0 0.0
    %1659 = vmatprep.subr.mxu0 0.0
    %1660 = vmatpush2.msra.mxu0 0.0
    %1661 = vmatprep.subr.mxu0 0.0
    %1662 = vmatpush2.msra.mxu0 0.0
    %1663 = vmatprep.subr.mxu0 0.0
    %1664 = vmatpush2.msra.mxu0 0.0
    %1665 = vmatprep.subr.mxu0 0.0
    %1666 = vmatpush2.msra.mxu0 0.0
    %1667 = vmatprep.mubr.f32.mxu0 0.0
    %1668 = vmatmul.mubr.f32.gmra.mxu0 %v1598
    %v1669 = vpop.f32.mrf.mxu0
    %v1670 = vadd.f32 0.0, %v1669
    %v1671 = vpop.f32.mrf.mxu0
    %1672 = vmatprep.mubr.f32.mxu0 0.0
    %1673 = vmatmul.mubr.f32.gmra.mxu0 %v1601
    %v1674 = vpop.f32.mrf.mxu0
    %v1675 = vadd.f32 0.0, %v1674
    %v1676 = vpop.f32.mrf.mxu0
    %1677 = vdwg.mxu0
    %v1678 = vadd.f32 %v1479, %v1670
    %v1679 = vadd.f32 %v1480, %v1675
    %v1680 = vpack.c.bf16 %v1679, %v1678
    %v1681 = vld [vmem:[%s27] sm:$0xf]
    %v1682 = vld [vmem:[%s27 + $0x4] sm:$0xf]
    %v1683 = vld [vmem:[%s27 + $0x8] sm:$0xf]
    %v1684 = vld [vmem:[%s27 + $0xc] sm:$0xf]
    %v1685 = vld [vmem:[%s29] sm:$0x1]
    %v1687 = vlaneseq
    %v1688 = vshrl.u32 %v1687, 7
    %v1689 = vsub.s32 0, %v1688
    %v1690 = vrot.slane %v1685, %v1689
    %v1696 = vunpack.c.l.b16 %v1681
    %v1697 = vunpack.c.l.b16 %v1682
    %v1698 = vunpack.c.l.b16 %v1683
    %v1699 = vunpack.c.l.b16 %v1684
    %v1700 = vpack.c.b16 %v1697, %v1696
    %v1701 = vpack.c.b16 %v1699, %v1698
    %v1705 = vsel %vm340, %v1680, 0
    %1707 = vmatprep.subr.bf16.mxu0 0
    %1708 = vmatpush1.bf16.msra.mxu0 0
    %1709 = vmatprep.subr.bf16.mxu0 0
    %1710 = vmatpush1.bf16.msra.mxu0 0
    %1711 = vmatprep.subr.bf16.mxu0 0
    %1712 = vmatpush1.bf16.msra.mxu0 0
    %1713 = vmatprep.subr.bf16.mxu0 0
    %1714 = vmatpush1.bf16.msra.mxu0 0
    %1715 = vmatprep.subr.bf16.mxu0 0
    %1716 = vmatpush1.bf16.msra.mxu0 0
    %1717 = vmatprep.subr.bf16.mxu0 0
    %1718 = vmatpush1.bf16.msra.mxu0 0
    %1719 = vmatprep.subr.bf16.mxu0 0
    %1720 = vmatpush1.bf16.msra.mxu0 %v1701
    %1721 = vmatprep.subr.bf16.mxu0 0
    %1722 = vmatpush1.bf16.msra.mxu0 %v1700
    %1723 = vmatprep.subr.bf16.mxu0 0
    %1724 = vmatpush2.bf16.msra.mxu0 0
    %1725 = vmatprep.subr.bf16.mxu0 0
    %1726 = vmatpush2.bf16.msra.mxu0 0
    %1727 = vmatprep.subr.bf16.mxu0 0
    %1728 = vmatpush2.bf16.msra.mxu0 0
    %1729 = vmatprep.subr.bf16.mxu0 0
    %1730 = vmatpush2.bf16.msra.mxu0 0
    %1731 = vmatprep.subr.bf16.mxu0 0
    %1732 = vmatpush2.bf16.msra.mxu0 0
    %1733 = vmatprep.subr.bf16.mxu0 0
    %1734 = vmatpush2.bf16.msra.mxu0 0
    %1735 = vmatprep.subr.bf16.mxu0 0
    %1736 = vmatpush2.bf16.msra.mxu0 0
    %1737 = vmatprep.subr.bf16.mxu0 0
    %1738 = vmatpush2.bf16.msra.mxu0 0
    %1739 = vmatprep.mubr.bf16.mxu0 0
    %1740 = vmatmul.mubr.bf16.gmra.mxu0 %v1705
    %v1741 = vpop.f32.mrf.mxu0
    %v1742 = vadd.f32 %v1690, %v1741
    %v1743 = vpop.f32.mrf.mxu0
    %v1744 = vpop.f32.mrf.mxu0
    %v1745 = vadd.f32 %v1690, %v1744
    %v1746 = vpop.f32.mrf.mxu0
    %1747 = vdwg.mxu0
    %v1748 = vadd.f32 %v382, %v1742
    %v1749 = vadd.f32 %v383, %v1745
    %v1750 = vld [vmem:[#allocation4] sm:$0x1]
    %v1751 = vld [vmem:[#allocation6] sm:$0x1]
    %v1752 = vsel %vm340, %v1748, 0.0
    %1753 = vadd.xlane.f32.xlu0 %v1752
    %v1754 = vpop.xlane.xlu0 %1753
    %v1755 = vsel %vm340, %v1749, 0.0
    %1756 = vadd.xlane.f32.xlu0 %v1755
    %v1757 = vpop.xlane.xlu0 %1756
    %v1758 = vmul.f32 %v1754, %v347
    %v1759 = vmul.f32 %v1757, %v347
    %v1760 = vsub.f32 %v1748, %v1758
    %v1761 = vsub.f32 %v1749, %v1759
    %v1762 = vmul.f32 %v1760, %v1760
    %v1763 = vmul.f32 %v1761, %v1761
    %v1764 = vsel %vm340, %v1762, 0.0
    %1765 = vadd.xlane.f32.xlu0 %v1764
    %v1766 = vpop.xlane.xlu0 %1765
    %v1767 = vsel %vm340, %v1763, 0.0
    %1768 = vadd.xlane.f32.xlu0 %v1767
    %v1769 = vpop.xlane.xlu0 %1768
    %v1770 = vmul.f32 %v1766, %v347
    %v1771 = vmul.f32 %v1769, %v347
    %v1772 = vadd.f32 %v1770, 1e-12
    %v1773 = vadd.f32 %v1771, 1e-12
    %v1774 = vrsqrt.pop %v1772
    %v1775 = vrsqrt.pop %v1773
    %v1776 = vmul.f32 %v1760, %v1774
    %v1777 = vmul.f32 %v1761, %v1775
    %v1779 = vlaneseq
    %v1780 = vshrl.u32 %v1779, 7
    %v1781 = vsub.s32 0, %v1780
    %v1782 = vrot.slane %v1750, %v1781
    %v1784 = vmul.f32 %v1776, %v1782
    %v1785 = vmul.f32 %v1777, %v1782
    %v1787 = vlaneseq
    %v1788 = vshrl.u32 %v1787, 7
    %v1789 = vsub.s32 0, %v1788
    %v1790 = vrot.slane %v1751, %v1789
    %v1792 = vadd.f32 %v1784, %v1790
    %v1793 = vadd.f32 %v1785, %v1790
    %v1794 = vpack.c.bf16 %v1793, %v1792
    %v1795 = vld [vmem:[%s31] sm:$0xf]
    %v1796 = vld [vmem:[%s31 + $0x4] sm:$0xf]
    %v1797 = vld [vmem:[%s31 + $0x8] sm:$0xf]
    %v1798 = vld [vmem:[%s31 + $0xc] sm:$0xf]
    %v1799 = vld [vmem:[%s33] sm:$0x1]
    %v1801 = vlaneseq
    %v1802 = vshrl.u32 %v1801, 7
    %v1803 = vsub.s32 0, %v1802
    %v1804 = vrot.slane %v1799, %v1803
    %v1810 = vunpack.c.l.b16 %v1795
    %v1811 = vunpack.c.l.b16 %v1796
    %v1812 = vunpack.c.l.b16 %v1797
    %v1813 = vunpack.c.l.b16 %v1798
    %v1814 = vpack.c.b16 %v1811, %v1810
    %v1815 = vpack.c.b16 %v1813, %v1812
    %v1819 = vsel %vm340, %v1794, 0
    %1821 = vmatprep.subr.bf16.mxu0 0
    %1822 = vmatpush1.bf16.msra.mxu0 0
    %1823 = vmatprep.subr.bf16.mxu0 0
    %1824 = vmatpush1.bf16.msra.mxu0 0
    %1825 = vmatprep.subr.bf16.mxu0 0
    %1826 = vmatpush1.bf16.msra.mxu0 0
    %1827 = vmatprep.subr.bf16.mxu0 0
    %1828 = vmatpush1.bf16.msra.mxu0 0
    %1829 = vmatprep.subr.bf16.mxu0 0
    %1830 = vmatpush1.bf16.msra.mxu0 0
    %1831 = vmatprep.subr.bf16.mxu0 0
    %1832 = vmatpush1.bf16.msra.mxu0 0
    %1833 = vmatprep.subr.bf16.mxu0 0
    %1834 = vmatpush1.bf16.msra.mxu0 %v1815
    %1835 = vmatprep.subr.bf16.mxu0 0
    %1836 = vmatpush1.bf16.msra.mxu0 %v1814
    %1837 = vmatprep.subr.bf16.mxu0 0
    %1838 = vmatpush2.bf16.msra.mxu0 0
    %1839 = vmatprep.subr.bf16.mxu0 0
    %1840 = vmatpush2.bf16.msra.mxu0 0
    %1841 = vmatprep.subr.bf16.mxu0 0
    %1842 = vmatpush2.bf16.msra.mxu0 0
    %1843 = vmatprep.subr.bf16.mxu0 0
    %1844 = vmatpush2.bf16.msra.mxu0 0
    %1845 = vmatprep.subr.bf16.mxu0 0
    %1846 = vmatpush2.bf16.msra.mxu0 0
    %1847 = vmatprep.subr.bf16.mxu0 0
    %1848 = vmatpush2.bf16.msra.mxu0 0
    %1849 = vmatprep.subr.bf16.mxu0 0
    %1850 = vmatpush2.bf16.msra.mxu0 0
    %1851 = vmatprep.subr.bf16.mxu0 0
    %1852 = vmatpush2.bf16.msra.mxu0 0
    %1853 = vmatprep.mubr.bf16.mxu0 0
    %1854 = vmatmul.mubr.bf16.gmra.mxu0 %v1819
    %v1855 = vpop.f32.mrf.mxu0
    %v1856 = vadd.f32 %v1804, %v1855
    %v1857 = vpop.f32.mrf.mxu0
    %v1858 = vpop.f32.mrf.mxu0
    %v1859 = vadd.f32 %v1804, %v1858
    %v1860 = vpop.f32.mrf.mxu0
    %1861 = vdwg.mxu0
    %v1862 = vmul.f32 %v1856, 0.5
    %v1863 = vmul.f32 %v1859, 0.5
    %v1864 = vmul.f32 %v1856, 0.044715
    %v1865 = vmul.f32 %v1859, 0.044715
    %v1866 = vmul.f32 %v1864, %v1856
    %v1867 = vmul.f32 %v1865, %v1859
    %v1868 = vmul.f32 %v1866, %v1856
    %v1869 = vmul.f32 %v1867, %v1859
    %v1870 = vadd.f32 %v1856, %v1868
    %v1871 = vadd.f32 %v1859, %v1869
    %v1872 = vmul.f32 %v1870, 0.7978846
    %v1873 = vmul.f32 %v1871, 0.7978846
    %v1874 = vtanh.pop %v1872
    %v1875 = vtanh.pop %v1873
    %v1876 = vadd.f32 %v1874, 1.0
    %v1877 = vadd.f32 %v1875, 1.0
    %v1878 = vmul.f32 %v1862, %v1876
    %v1879 = vmul.f32 %v1863, %v1877
    %v1880 = vpack.c.bf16 %v1879, %v1878
    %v1881 = vld [vmem:[%s35] sm:$0xf]
    %v1882 = vld [vmem:[%s35 + $0x4] sm:$0xf]
    %v1883 = vld [vmem:[%s35 + $0x8] sm:$0xf]
    %v1884 = vld [vmem:[%s35 + $0xc] sm:$0xf]
    %v1885 = vld [vmem:[%s35 + $0x10] sm:$0xf]
    %v1886 = vld [vmem:[%s35 + $0x14] sm:$0xf]
    %v1887 = vld [vmem:[%s35 + $0x18] sm:$0xf]
    %v1888 = vld [vmem:[%s35 + $0x1c] sm:$0xf]
    %v1889 = vld [vmem:[%s37] sm:$0x1]
    %v1891 = vlaneseq
    %v1892 = vshrl.u32 %v1891, 7
    %v1893 = vsub.s32 0, %v1892
    %v1894 = vrot.slane %v1889, %v1893
    %v1904 = vunpack.c.l.b16 %v1881
    %v1905 = vunpack.c.l.b16 %v1882
    %v1906 = vunpack.c.l.b16 %v1883
    %v1907 = vunpack.c.l.b16 %v1884
    %v1908 = vunpack.c.l.b16 %v1885
    %v1909 = vunpack.c.l.b16 %v1886
    %v1910 = vunpack.c.l.b16 %v1887
    %v1911 = vunpack.c.l.b16 %v1888
    %v1912 = vpack.c.b16 %v1905, %v1904
    %v1913 = vpack.c.b16 %v1907, %v1906
    %v1914 = vpack.c.b16 %v1909, %v1908
    %v1915 = vpack.c.b16 %v1911, %v1910
    %v1921 = vsel %vm256, %v1880, 0
    %1923 = vmatprep.subr.bf16.mxu0 0
    %1924 = vmatpush1.bf16.msra.mxu0 0
    %1925 = vmatprep.subr.bf16.mxu0 0
    %1926 = vmatpush1.bf16.msra.mxu0 0
    %1927 = vmatprep.subr.bf16.mxu0 0
    %1928 = vmatpush1.bf16.msra.mxu0 0
    %1929 = vmatprep.subr.bf16.mxu0 0
    %1930 = vmatpush1.bf16.msra.mxu0 0
    %1931 = vmatprep.subr.bf16.mxu0 0
    %1932 = vmatpush1.bf16.msra.mxu0 %v1915
    %1933 = vmatprep.subr.bf16.mxu0 0
    %1934 = vmatpush1.bf16.msra.mxu0 %v1914
    %1935 = vmatprep.subr.bf16.mxu0 0
    %1936 = vmatpush1.bf16.msra.mxu0 %v1913
    %1937 = vmatprep.subr.bf16.mxu0 0
    %1938 = vmatpush1.bf16.msra.mxu0 %v1912
    %1939 = vmatprep.subr.bf16.mxu0 0
    %1940 = vmatpush2.bf16.msra.mxu0 0
    %1941 = vmatprep.subr.bf16.mxu0 0
    %1942 = vmatpush2.bf16.msra.mxu0 0
    %1943 = vmatprep.subr.bf16.mxu0 0
    %1944 = vmatpush2.bf16.msra.mxu0 0
    %1945 = vmatprep.subr.bf16.mxu0 0
    %1946 = vmatpush2.bf16.msra.mxu0 0
    %1947 = vmatprep.subr.bf16.mxu0 0
    %1948 = vmatpush2.bf16.msra.mxu0 0
    %1949 = vmatprep.subr.bf16.mxu0 0
    %1950 = vmatpush2.bf16.msra.mxu0 0
    %1951 = vmatprep.subr.bf16.mxu0 0
    %1952 = vmatpush2.bf16.msra.mxu0 0
    %1953 = vmatprep.subr.bf16.mxu0 0
    %1954 = vmatpush2.bf16.msra.mxu0 0
    %1955 = vmatprep.mubr.bf16.mxu0 0
    %1956 = vmatmul.mubr.bf16.gmra.mxu0 %v1921
    %v1957 = vpop.f32.mrf.mxu0
    %v1958 = vadd.f32 %v1894, %v1957
    %v1959 = vpop.f32.mrf.mxu0
    %v1960 = vpop.f32.mrf.mxu0
    %v1961 = vadd.f32 %v1894, %v1960
    %v1962 = vpop.f32.mrf.mxu0
    %1963 = vdwg.mxu0
    %v1964 = vadd.f32 %v1792, %v1958
    %v1965 = vadd.f32 %v1793, %v1961
    %v1966 = vld [vmem:[#allocation8] sm:$0x1]
    %v1967 = vld [vmem:[#allocation9] sm:$0x1]
    %v1968 = vsel %vm340, %v1964, 0.0
    %1969 = vadd.xlane.f32.xlu0 %v1968
    %v1970 = vpop.xlane.xlu0 %1969
    %v1971 = vsel %vm340, %v1965, 0.0
    %1972 = vadd.xlane.f32.xlu0 %v1971
    %v1973 = vpop.xlane.xlu0 %1972
    %v1974 = vmul.f32 %v1970, %v347
    %v1975 = vmul.f32 %v1973, %v347
    %v1976 = vsub.f32 %v1964, %v1974
    %v1977 = vsub.f32 %v1965, %v1975
    %v1978 = vmul.f32 %v1976, %v1976
    %v1979 = vmul.f32 %v1977, %v1977
    %v1980 = vsel %vm340, %v1978, 0.0
    %1981 = vadd.xlane.f32.xlu0 %v1980
    %v1982 = vpop.xlane.xlu0 %1981
    %v1983 = vsel %vm340, %v1979, 0.0
    %1984 = vadd.xlane.f32.xlu0 %v1983
    %v1985 = vpop.xlane.xlu0 %1984
    %v1986 = vmul.f32 %v1982, %v347
    %v1987 = vmul.f32 %v1985, %v347
    %v1988 = vadd.f32 %v1986, 1e-12
    %v1989 = vadd.f32 %v1987, 1e-12
    %v1990 = vrsqrt.pop %v1988
    %v1991 = vrsqrt.pop %v1989
    %v1992 = vmul.f32 %v1976, %v1990
    %v1993 = vmul.f32 %v1977, %v1991
    %v1995 = vlaneseq
    %v1996 = vshrl.u32 %v1995, 7
    %v1997 = vsub.s32 0, %v1996
    %v1998 = vrot.slane %v1966, %v1997
    %v2000 = vmul.f32 %v1992, %v1998
    %v2001 = vmul.f32 %v1993, %v1998
    %v2003 = vlaneseq
    %v2004 = vshrl.u32 %v2003, 7
    %v2005 = vsub.s32 0, %v2004
    %v2006 = vrot.slane %v1967, %v2005
    %v2008 = vadd.f32 %v2000, %v2006
    %v2009 = vadd.f32 %v2001, %v2006
    %v2010 = vld [vmem:[#allocation2] sm:$0xff]
    %v2011 = vld [vmem:[#allocation2 + $0x8] sm:$0xff]
    %v2012 = vld [vmem:[#allocation2 + $0x10] sm:$0xff]
    %v2013 = vld [vmem:[#allocation2 + $0x18] sm:$0xff]
    %v2014 = vld [vmem:[#allocation2 + $0x20] sm:$0xff]
    %v2015 = vld [vmem:[#allocation2 + $0x28] sm:$0xff]
    %v2016 = vld [vmem:[#allocation2 + $0x30] sm:$0xff]
    %v2017 = vld [vmem:[#allocation2 + $0x38] sm:$0xff]
    %v2018 = vld [vmem:[#allocation2 + $0x40] sm:$0xff]
    %v2019 = vld [vmem:[#allocation2 + $0x48] sm:$0xff]
    %v2020 = vld [vmem:[#allocation2 + $0x50] sm:$0xff]
    %v2021 = vld [vmem:[#allocation2 + $0x58] sm:$0xff]
    %v2022 = vld [vmem:[#allocation2 + $0x60] sm:$0xff]
    %v2023 = vld [vmem:[#allocation2 + $0x68] sm:$0xff]
    %v2024 = vld [vmem:[#allocation2 + $0x70] sm:$0xff]
    %v2025 = vld [vmem:[#allocation2 + $0x78] sm:$0xff]
    %v2026 = vpack.c.bf16 %v2009, %v2008
    %v2027 = vld [vmem:[#allocation11 + $0x80] sm:$0xff]
    %v2028 = vld [vmem:[#allocation11 + $0x88] sm:$0xff]
    %v2029 = vld [vmem:[#allocation11 + $0x90] sm:$0xff]
    %v2030 = vld [vmem:[#allocation11 + $0x98] sm:$0xff]
    %v2031 = vld [vmem:[#allocation11 + $0xa0] sm:$0xff]
    %v2032 = vld [vmem:[#allocation11 + $0xa8] sm:$0xff]
    %v2033 = vld [vmem:[#allocation11 + $0xb0] sm:$0xff]
    %v2034 = vld [vmem:[#allocation11 + $0xb8] sm:$0xff]
    %v2035 = vld [vmem:[#allocation11 + $0xc0] sm:$0xff]
    %v2036 = vld [vmem:[#allocation11 + $0xc8] sm:$0xff]
    %v2037 = vld [vmem:[#allocation11 + $0xd0] sm:$0xff]
    %v2038 = vld [vmem:[#allocation11 + $0xd8] sm:$0xff]
    %v2039 = vld [vmem:[#allocation11 + $0xe0] sm:$0xff]
    %v2040 = vld [vmem:[#allocation11 + $0xe8] sm:$0xff]
    %v2041 = vld [vmem:[#allocation11 + $0xf0] sm:$0xff]
    %v2042 = vld [vmem:[#allocation11 + $0xf8] sm:$0xff]
    %v2059 = vunpack.c.l.b16 %v2027
    %v2060 = vunpack.c.h.b16 %v2027
    %v2061 = vunpack.c.l.b16 %v2028
    %v2062 = vunpack.c.h.b16 %v2028
    %v2063 = vunpack.c.l.b16 %v2029
    %v2064 = vunpack.c.h.b16 %v2029
    %v2065 = vunpack.c.l.b16 %v2030
    %v2066 = vunpack.c.h.b16 %v2030
    %v2067 = vunpack.c.l.b16 %v2031
    %v2068 = vunpack.c.h.b16 %v2031
    %v2069 = vunpack.c.l.b16 %v2032
    %v2070 = vunpack.c.h.b16 %v2032
    %v2071 = vunpack.c.l.b16 %v2033
    %v2072 = vunpack.c.h.b16 %v2033
    %v2073 = vunpack.c.l.b16 %v2034
    %v2074 = vunpack.c.h.b16 %v2034
    %v2075 = vunpack.c.l.b16 %v2035
    %v2076 = vunpack.c.h.b16 %v2035
    %v2077 = vunpack.c.l.b16 %v2036
    %v2078 = vunpack.c.h.b16 %v2036
    %v2079 = vunpack.c.l.b16 %v2037
    %v2080 = vunpack.c.h.b16 %v2037
    %v2081 = vunpack.c.l.b16 %v2038
    %v2082 = vunpack.c.h.b16 %v2038
    %v2083 = vunpack.c.l.b16 %v2039
    %v2084 = vunpack.c.h.b16 %v2039
    %v2085 = vunpack.c.l.b16 %v2040
    %v2086 = vunpack.c.h.b16 %v2040
    %v2087 = vunpack.c.l.b16 %v2041
    %v2088 = vunpack.c.h.b16 %v2041
    %v2089 = vunpack.c.l.b16 %v2042
    %v2090 = vunpack.c.h.b16 %v2042
    %v2091 = vpack.c.b16 %v2067, %v2059
    %v2092 = vpack.c.b16 %v2068, %v2060
    %v2093 = vpack.c.b16 %v2069, %v2061
    %v2094 = vpack.c.b16 %v2070, %v2062
    %v2095 = vpack.c.b16 %v2071, %v2063
    %v2096 = vpack.c.b16 %v2072, %v2064
    %v2097 = vpack.c.b16 %v2073, %v2065
    %v2098 = vpack.c.b16 %v2074, %v2066
    %v2099 = vpack.c.b16 %v2083, %v2075
    %v2100 = vpack.c.b16 %v2084, %v2076
    %v2101 = vpack.c.b16 %v2085, %v2077
    %v2102 = vpack.c.b16 %v2086, %v2078
    %v2103 = vpack.c.b16 %v2087, %v2079
    %v2104 = vpack.c.b16 %v2088, %v2080
    %v2105 = vpack.c.b16 %v2089, %v2081
    %v2106 = vpack.c.b16 %v2090, %v2082
    %v2124 = vsel %vm340, %v2026, 0
    %2126 = vmatprep.subr.bf16.mxu0 0
    %2127 = vmatpush1.bf16.msra.mxu0 0
    %2128 = vmatprep.subr.bf16.mxu0 0
    %2129 = vmatpush1.bf16.msra.mxu0 0
    %2130 = vmatprep.subr.bf16.mxu0 0
    %2131 = vmatpush1.bf16.msra.mxu0 0
    %2132 = vmatprep.subr.bf16.mxu0 0
    %2133 = vmatpush1.bf16.msra.mxu0 0
    %2134 = vmatprep.subr.bf16.mxu0 0
    %2135 = vmatpush1.bf16.msra.mxu0 0
    %2136 = vmatprep.subr.bf16.mxu0 0
    %2137 = vmatpush1.bf16.msra.mxu0 0
    %2138 = vmatprep.subr.bf16.mxu0 %v2100
    %2139 = vmatpush1.bf16.msra.mxu0 %v2099
    %2140 = vmatprep.subr.bf16.mxu0 %v2092
    %2141 = vmatpush1.bf16.msra.mxu0 %v2091
    %2142 = vmatprep.subr.bf16.mxu0 0
    %2143 = vmatpush2.bf16.msra.mxu0 0
    %2144 = vmatprep.subr.bf16.mxu0 0
    %2145 = vmatpush2.bf16.msra.mxu0 0
    %2146 = vmatprep.subr.bf16.mxu0 0
    %2147 = vmatpush2.bf16.msra.mxu0 0
    %2148 = vmatprep.subr.bf16.mxu0 0
    %2149 = vmatpush2.bf16.msra.mxu0 0
    %2150 = vmatprep.subr.bf16.mxu0 0
    %2151 = vmatpush2.bf16.msra.mxu0 0
    %2152 = vmatprep.subr.bf16.mxu0 0
    %2153 = vmatpush2.bf16.msra.mxu0 0
    %2154 = vmatprep.subr.bf16.mxu0 0
    %2155 = vmatpush2.bf16.msra.mxu0 0
    %2156 = vmatprep.subr.bf16.mxu0 0
    %2157 = vmatpush2.bf16.msra.mxu0 0
    %2158 = vmatprep.mubr.bf16.mxu0 0
    %2159 = vmatmul.mubr.bf16.gmra.mxu0 %v2124
    %v2160 = vpop.f32.mrf.mxu0
    %v2161 = vadd.f32 0.0, %v2160
    %v2162 = vpop.f32.mrf.mxu0
    %v2163 = vadd.f32 0.0, %v2162
    %v2164 = vpop.f32.mrf.mxu0
    %v2165 = vadd.f32 0.0, %v2164
    %v2166 = vpop.f32.mrf.mxu0
    %v2167 = vadd.f32 0.0, %v2166
    %2168 = vdwg.mxu0
    %2169 = vmatprep.subr.bf16.mxu0 0
    %2170 = vmatpush1.bf16.msra.mxu0 0
    %2171 = vmatprep.subr.bf16.mxu0 0
    %2172 = vmatpush1.bf16.msra.mxu0 0
    %2173 = vmatprep.subr.bf16.mxu0 0
    %2174 = vmatpush1.bf16.msra.mxu0 0
    %2175 = vmatprep.subr.bf16.mxu0 0
    %2176 = vmatpush1.bf16.msra.mxu0 0
    %2177 = vmatprep.subr.bf16.mxu0 0
    %2178 = vmatpush1.bf16.msra.mxu0 0
    %2179 = vmatprep.subr.bf16.mxu0 0
    %2180 = vmatpush1.bf16.msra.mxu0 0
    %2181 = vmatprep.subr.bf16.mxu0 %v2102
    %2182 = vmatpush1.bf16.msra.mxu0 %v2101
    %2183 = vmatprep.subr.bf16.mxu0 %v2094
    %2184 = vmatpush1.bf16.msra.mxu0 %v2093
    %2185 = vmatprep.subr.bf16.mxu0 0
    %2186 = vmatpush2.bf16.msra.mxu0 0
    %2187 = vmatprep.subr.bf16.mxu0 0
    %2188 = vmatpush2.bf16.msra.mxu0 0
    %2189 = vmatprep.subr.bf16.mxu0 0
    %2190 = vmatpush2.bf16.msra.mxu0 0
    %2191 = vmatprep.subr.bf16.mxu0 0
    %2192 = vmatpush2.bf16.msra.mxu0 0
    %2193 = vmatprep.subr.bf16.mxu0 0
    %2194 = vmatpush2.bf16.msra.mxu0 0
    %2195 = vmatprep.subr.bf16.mxu0 0
    %2196 = vmatpush2.bf16.msra.mxu0 0
    %2197 = vmatprep.subr.bf16.mxu0 0
    %2198 = vmatpush2.bf16.msra.mxu0 0
    %2199 = vmatprep.subr.bf16.mxu0 0
    %2200 = vmatpush2.bf16.msra.mxu0 0
    %2201 = vmatprep.mubr.bf16.mxu0 0
    %2202 = vmatmul.mubr.bf16.gmra.mxu0 %v2124
    %v2203 = vpop.f32.mrf.mxu0
    %v2204 = vadd.f32 0.0, %v2203
    %v2205 = vpop.f32.mrf.mxu0
    %v2206 = vadd.f32 0.0, %v2205
    %v2207 = vpop.f32.mrf.mxu0
    %v2208 = vadd.f32 0.0, %v2207
    %v2209 = vpop.f32.mrf.mxu0
    %v2210 = vadd.f32 0.0, %v2209
    %2211 = vdwg.mxu0
    %2212 = vmatprep.subr.bf16.mxu0 0
    %2213 = vmatpush1.bf16.msra.mxu0 0
    %2214 = vmatprep.subr.bf16.mxu0 0
    %2215 = vmatpush1.bf16.msra.mxu0 0
    %2216 = vmatprep.subr.bf16.mxu0 0
    %2217 = vmatpush1.bf16.msra.mxu0 0
    %2218 = vmatprep.subr.bf16.mxu0 0
    %2219 = vmatpush1.bf16.msra.mxu0 0
    %2220 = vmatprep.subr.bf16.mxu0 0
    %2221 = vmatpush1.bf16.msra.mxu0 0
    %2222 = vmatprep.subr.bf16.mxu0 0
    %2223 = vmatpush1.bf16.msra.mxu0 0
    %2224 = vmatprep.subr.bf16.mxu0 %v2104
    %2225 = vmatpush1.bf16.msra.mxu0 %v2103
    %2226 = vmatprep.subr.bf16.mxu0 %v2096
    %2227 = vmatpush1.bf16.msra.mxu0 %v2095
    %2228 = vmatprep.subr.bf16.mxu0 0
    %2229 = vmatpush2.bf16.msra.mxu0 0
    %2230 = vmatprep.subr.bf16.mxu0 0
    %2231 = vmatpush2.bf16.msra.mxu0 0
    %2232 = vmatprep.subr.bf16.mxu0 0
    %2233 = vmatpush2.bf16.msra.mxu0 0
    %2234 = vmatprep.subr.bf16.mxu0 0
    %2235 = vmatpush2.bf16.msra.mxu0 0
    %2236 = vmatprep.subr.bf16.mxu0 0
    %2237 = vmatpush2.bf16.msra.mxu0 0
    %2238 = vmatprep.subr.bf16.mxu0 0
    %2239 = vmatpush2.bf16.msra.mxu0 0
    %2240 = vmatprep.subr.bf16.mxu0 0
    %2241 = vmatpush2.bf16.msra.mxu0 0
    %2242 = vmatprep.subr.bf16.mxu0 0
    %2243 = vmatpush2.bf16.msra.mxu0 0
    %2244 = vmatprep.mubr.bf16.mxu0 0
    %2245 = vmatmul.mubr.bf16.gmra.mxu0 %v2124
    %v2246 = vpop.f32.mrf.mxu0
    %v2247 = vadd.f32 0.0, %v2246
    %v2248 = vpop.f32.mrf.mxu0
    %v2249 = vadd.f32 0.0, %v2248
    %v2250 = vpop.f32.mrf.mxu0
    %v2251 = vadd.f32 0.0, %v2250
    %v2252 = vpop.f32.mrf.mxu0
    %v2253 = vadd.f32 0.0, %v2252
    %2254 = vdwg.mxu0
    %2255 = vmatprep.subr.bf16.mxu0 0
    %2256 = vmatpush1.bf16.msra.mxu0 0
    %2257 = vmatprep.subr.bf16.mxu0 0
    %2258 = vmatpush1.bf16.msra.mxu0 0
    %2259 = vmatprep.subr.bf16.mxu0 0
    %2260 = vmatpush1.bf16.msra.mxu0 0
    %2261 = vmatprep.subr.bf16.mxu0 0
    %2262 = vmatpush1.bf16.msra.mxu0 0
    %2263 = vmatprep.subr.bf16.mxu0 0
    %2264 = vmatpush1.bf16.msra.mxu0 0
    %2265 = vmatprep.subr.bf16.mxu0 0
    %2266 = vmatpush1.bf16.msra.mxu0 0
    %2267 = vmatprep.subr.bf16.mxu0 %v2106
    %2268 = vmatpush1.bf16.msra.mxu0 %v2105
    %2269 = vmatprep.subr.bf16.mxu0 %v2098
    %2270 = vmatpush1.bf16.msra.mxu0 %v2097
    %2271 = vmatprep.subr.bf16.mxu0 0
    %2272 = vmatpush2.bf16.msra.mxu0 0
    %2273 = vmatprep.subr.bf16.mxu0 0
    %2274 = vmatpush2.bf16.msra.mxu0 0
    %2275 = vmatprep.subr.bf16.mxu0 0
    %2276 = vmatpush2.bf16.msra.mxu0 0
    %2277 = vmatprep.subr.bf16.mxu0 0
    %2278 = vmatpush2.bf16.msra.mxu0 0
    %2279 = vmatprep.subr.bf16.mxu0 0
    %2280 = vmatpush2.bf16.msra.mxu0 0
    %2281 = vmatprep.subr.bf16.mxu0 0
    %2282 = vmatpush2.bf16.msra.mxu0 0
    %2283 = vmatprep.subr.bf16.mxu0 0
    %2284 = vmatpush2.bf16.msra.mxu0 0
    %2285 = vmatprep.subr.bf16.mxu0 0
    %2286 = vmatpush2.bf16.msra.mxu0 0
    %2287 = vmatprep.mubr.bf16.mxu0 0
    %2288 = vmatmul.mubr.bf16.gmra.mxu0 %v2124
    %v2289 = vpop.f32.mrf.mxu0
    %v2290 = vadd.f32 0.0, %v2289
    %v2291 = vpop.f32.mrf.mxu0
    %v2292 = vadd.f32 0.0, %v2291
    %v2293 = vpop.f32.mrf.mxu0
    %v2294 = vadd.f32 0.0, %v2293
    %v2295 = vpop.f32.mrf.mxu0
    %v2296 = vadd.f32 0.0, %v2295
    %2297 = vdwg.mxu0
    %v2298 = vadd.f32 %v2010, %v2161
    %v2299 = vadd.f32 %v2011, %v2163
    %v2300 = vadd.f32 %v2012, %v2204
    %v2301 = vadd.f32 %v2013, %v2206
    %v2302 = vadd.f32 %v2014, %v2247
    %v2303 = vadd.f32 %v2015, %v2249
    %v2304 = vadd.f32 %v2016, %v2290
    %v2305 = vadd.f32 %v2017, %v2292
    %v2306 = vadd.f32 %v2018, %v2165
    %v2307 = vadd.f32 %v2019, %v2167
    %v2308 = vadd.f32 %v2020, %v2208
    %v2309 = vadd.f32 %v2021, %v2210
    %v2310 = vadd.f32 %v2022, %v2251
    %v2311 = vadd.f32 %v2023, %v2253
    %v2312 = vadd.f32 %v2024, %v2294
    %v2313 = vadd.f32 %v2025, %v2296
    %2314 = vst [vmem:[#allocation2] sm:$0xff] %v2298
    %2315 = vst [vmem:[#allocation2 + $0x8] sm:$0xff] %v2299
    %2316 = vst [vmem:[#allocation2 + $0x10] sm:$0xff] %v2300
    %2317 = vst [vmem:[#allocation2 + $0x18] sm:$0xff] %v2301
    %2318 = vst [vmem:[#allocation2 + $0x20] sm:$0xff] %v2302
    %2319 = vst [vmem:[#allocation2 + $0x28] sm:$0xff] %v2303
    %2320 = vst [vmem:[#allocation2 + $0x30] sm:$0xff] %v2304
    %2321 = vst [vmem:[#allocation2 + $0x38] sm:$0xff] %v2305
    %2322 = vst [vmem:[#allocation2 + $0x40] sm:$0xff] %v2306
    %2323 = vst [vmem:[#allocation2 + $0x48] sm:$0xff] %v2307
    %2324 = vst [vmem:[#allocation2 + $0x50] sm:$0xff] %v2308
    %2325 = vst [vmem:[#allocation2 + $0x58] sm:$0xff] %v2309
    %2326 = vst [vmem:[#allocation2 + $0x60] sm:$0xff] %v2310
    %2327 = vst [vmem:[#allocation2 + $0x68] sm:$0xff] %v2311
    %2328 = vst [vmem:[#allocation2 + $0x70] sm:$0xff] %v2312
    %2329 = vst [vmem:[#allocation2 + $0x78] sm:$0xff] %v2313
    %s2330 = scalar_lea.vmem %s15, 16
    %v2331 = vld [vmem:[%s2330] sm:$0xf]
    %v2332 = vld [vmem:[%s2330 + $0x4] sm:$0xf]
    %v2333 = vld [vmem:[%s2330 + $0x8] sm:$0xf]
    %v2334 = vld [vmem:[%s2330 + $0xc] sm:$0xf]
    %s2335 = scalar_lea.vmem %s17, 1
    %v2336 = vld [vmem:[%s2335] sm:$0x1]
    %v2338 = vlaneseq
    %v2339 = vshrl.u32 %v2338, 7
    %v2340 = vsub.s32 0, %v2339
    %v2341 = vrot.slane %v2336, %v2340
    %v2347 = vunpack.c.l.b16 %v2331
    %v2348 = vunpack.c.l.b16 %v2332
    %v2349 = vunpack.c.l.b16 %v2333
    %v2350 = vunpack.c.l.b16 %v2334
    %v2351 = vpack.c.b16 %v2348, %v2347
    %v2352 = vpack.c.b16 %v2350, %v2349
    %2355 = vmatprep.subr.bf16.mxu0 0
    %2356 = vmatpush1.bf16.msra.mxu0 0
    %2357 = vmatprep.subr.bf16.mxu0 0
    %2358 = vmatpush1.bf16.msra.mxu0 0
    %2359 = vmatprep.subr.bf16.mxu0 0
    %2360 = vmatpush1.bf16.msra.mxu0 0
    %2361 = vmatprep.subr.bf16.mxu0 0
    %2362 = vmatpush1.bf16.msra.mxu0 0
    %2363 = vmatprep.subr.bf16.mxu0 0
    %2364 = vmatpush1.bf16.msra.mxu0 0
    %2365 = vmatprep.subr.bf16.mxu0 0
    %2366 = vmatpush1.bf16.msra.mxu0 0
    %2367 = vmatprep.subr.bf16.mxu0 0
    %2368 = vmatpush1.bf16.msra.mxu0 %v2352
    %2369 = vmatprep.subr.bf16.mxu0 0
    %2370 = vmatpush1.bf16.msra.mxu0 %v2351
    %2371 = vmatprep.subr.bf16.mxu0 0
    %2372 = vmatpush2.bf16.msra.mxu0 0
    %2373 = vmatprep.subr.bf16.mxu0 0
    %2374 = vmatpush2.bf16.msra.mxu0 0
    %2375 = vmatprep.subr.bf16.mxu0 0
    %2376 = vmatpush2.bf16.msra.mxu0 0
    %2377 = vmatprep.subr.bf16.mxu0 0
    %2378 = vmatpush2.bf16.msra.mxu0 0
    %2379 = vmatprep.subr.bf16.mxu0 0
    %2380 = vmatpush2.bf16.msra.mxu0 0
    %2381 = vmatprep.subr.bf16.mxu0 0
    %2382 = vmatpush2.bf16.msra.mxu0 0
    %2383 = vmatprep.subr.bf16.mxu0 0
    %2384 = vmatpush2.bf16.msra.mxu0 0
    %2385 = vmatprep.subr.bf16.mxu0 0
    %2386 = vmatpush2.bf16.msra.mxu0 0
    %2387 = vmatprep.mubr.bf16.mxu0 0
    %2388 = vmatmul.mubr.bf16.gmra.mxu0 %v2124
    %v2389 = vpop.f32.mrf.mxu0
    %v2390 = vadd.f32 %v2341, %v2389
    %v2391 = vpop.f32.mrf.mxu0
    %v2392 = vpop.f32.mrf.mxu0
    %v2393 = vadd.f32 %v2341, %v2392
    %v2394 = vpop.f32.mrf.mxu0
    %2395 = vdwg.mxu0
    %s2396 = scalar_lea.vmem %s19, 16
    %v2397 = vld [vmem:[%s2396] sm:$0xf]
    %v2398 = vld [vmem:[%s2396 + $0x4] sm:$0xf]
    %v2399 = vld [vmem:[%s2396 + $0x8] sm:$0xf]
    %v2400 = vld [vmem:[%s2396 + $0xc] sm:$0xf]
    %s2401 = scalar_lea.vmem %s21, 1
    %v2402 = vld [vmem:[%s2401] sm:$0x1]
    %v2404 = vlaneseq
    %v2405 = vshrl.u32 %v2404, 7
    %v2406 = vsub.s32 0, %v2405
    %v2407 = vrot.slane %v2402, %v2406
    %v2413 = vunpack.c.l.b16 %v2397
    %v2414 = vunpack.c.l.b16 %v2398
    %v2415 = vunpack.c.l.b16 %v2399
    %v2416 = vunpack.c.l.b16 %v2400
    %v2417 = vpack.c.b16 %v2414, %v2413
    %v2418 = vpack.c.b16 %v2416, %v2415
    %2421 = vmatprep.subr.bf16.mxu0 0
    %2422 = vmatpush1.bf16.msra.mxu0 0
    %2423 = vmatprep.subr.bf16.mxu0 0
    %2424 = vmatpush1.bf16.msra.mxu0 0
    %2425 = vmatprep.subr.bf16.mxu0 0
    %2426 = vmatpush1.bf16.msra.mxu0 0
    %2427 = vmatprep.subr.bf16.mxu0 0
    %2428 = vmatpush1.bf16.msra.mxu0 0
    %2429 = vmatprep.subr.bf16.mxu0 0
    %2430 = vmatpush1.bf16.msra.mxu0 0
    %2431 = vmatprep.subr.bf16.mxu0 0
    %2432 = vmatpush1.bf16.msra.mxu0 0
    %2433 = vmatprep.subr.bf16.mxu0 0
    %2434 = vmatpush1.bf16.msra.mxu0 %v2418
    %2435 = vmatprep.subr.bf16.mxu0 0
    %2436 = vmatpush1.bf16.msra.mxu0 %v2417
    %2437 = vmatprep.subr.bf16.mxu0 0
    %2438 = vmatpush2.bf16.msra.mxu0 0
    %2439 = vmatprep.subr.bf16.mxu0 0
    %2440 = vmatpush2.bf16.msra.mxu0 0
    %2441 = vmatprep.subr.bf16.mxu0 0
    %2442 = vmatpush2.bf16.msra.mxu0 0
    %2443 = vmatprep.subr.bf16.mxu0 0
    %2444 = vmatpush2.bf16.msra.mxu0 0
    %2445 = vmatprep.subr.bf16.mxu0 0
    %2446 = vmatpush2.bf16.msra.mxu0 0
    %2447 = vmatprep.subr.bf16.mxu0 0
    %2448 = vmatpush2.bf16.msra.mxu0 0
    %2449 = vmatprep.subr.bf16.mxu0 0
    %2450 = vmatpush2.bf16.msra.mxu0 0
    %2451 = vmatprep.subr.bf16.mxu0 0
    %2452 = vmatpush2.bf16.msra.mxu0 0
    %2453 = vmatprep.mubr.bf16.mxu0 0
    %2454 = vmatmul.mubr.bf16.gmra.mxu0 %v2124
    %v2455 = vpop.f32.mrf.mxu0
    %v2456 = vadd.f32 %v2407, %v2455
    %v2457 = vpop.f32.mrf.mxu0
    %v2458 = vpop.f32.mrf.mxu0
    %v2459 = vadd.f32 %v2407, %v2458
    %v2460 = vpop.f32.mrf.mxu0
    %2461 = vdwg.mxu0
    %s2462 = scalar_lea.vmem %s23, 16
    %v2463 = vld [vmem:[%s2462] sm:$0xf]
    %v2464 = vld [vmem:[%s2462 + $0x4] sm:$0xf]
    %v2465 = vld [vmem:[%s2462 + $0x8] sm:$0xf]
    %v2466 = vld [vmem:[%s2462 + $0xc] sm:$0xf]
    %s2467 = scalar_lea.vmem %s25, 1
    %v2468 = vld [vmem:[%s2467] sm:$0x1]
    %v2470 = vlaneseq
    %v2471 = vshrl.u32 %v2470, 7
    %v2472 = vsub.s32 0, %v2471
    %v2473 = vrot.slane %v2468, %v2472
    %v2479 = vunpack.c.l.b16 %v2463
    %v2480 = vunpack.c.l.b16 %v2464
    %v2481 = vunpack.c.l.b16 %v2465
    %v2482 = vunpack.c.l.b16 %v2466
    %v2483 = vpack.c.b16 %v2480, %v2479
    %v2484 = vpack.c.b16 %v2482, %v2481
    %2487 = vmatprep.subr.bf16.mxu0 0
    %2488 = vmatpush1.bf16.msra.mxu0 0
    %2489 = vmatprep.subr.bf16.mxu0 0
    %2490 = vmatpush1.bf16.msra.mxu0 0
    %2491 = vmatprep.subr.bf16.mxu0 0
    %2492 = vmatpush1.bf16.msra.mxu0 0
    %2493 = vmatprep.subr.bf16.mxu0 0
    %2494 = vmatpush1.bf16.msra.mxu0 0
    %2495 = vmatprep.subr.bf16.mxu0 0
    %2496 = vmatpush1.bf16.msra.mxu0 0
    %2497 = vmatprep.subr.bf16.mxu0 0
    %2498 = vmatpush1.bf16.msra.mxu0 0
    %2499 = vmatprep.subr.bf16.mxu0 0
    %2500 = vmatpush1.bf16.msra.mxu0 %v2484
    %2501 = vmatprep.subr.bf16.mxu0 0
    %2502 = vmatpush1.bf16.msra.mxu0 %v2483
    %2503 = vmatprep.subr.bf16.mxu0 0
    %2504 = vmatpush2.bf16.msra.mxu0 0
    %2505 = vmatprep.subr.bf16.mxu0 0
    %2506 = vmatpush2.bf16.msra.mxu0 0
    %2507 = vmatprep.subr.bf16.mxu0 0
    %2508 = vmatpush2.bf16.msra.mxu0 0
    %2509 = vmatprep.subr.bf16.mxu0 0
    %2510 = vmatpush2.bf16.msra.mxu0 0
    %2511 = vmatprep.subr.bf16.mxu0 0
    %2512 = vmatpush2.bf16.msra.mxu0 0
    %2513 = vmatprep.subr.bf16.mxu0 0
    %2514 = vmatpush2.bf16.msra.mxu0 0
    %2515 = vmatprep.subr.bf16.mxu0 0
    %2516 = vmatpush2.bf16.msra.mxu0 0
    %2517 = vmatprep.subr.bf16.mxu0 0
    %2518 = vmatpush2.bf16.msra.mxu0 0
    %2519 = vmatprep.mubr.bf16.mxu0 0
    %2520 = vmatmul.mubr.bf16.gmra.mxu0 %v2124
    %v2521 = vpop.f32.mrf.mxu0
    %v2522 = vadd.f32 %v2473, %v2521
    %v2523 = vpop.f32.mrf.mxu0
    %v2524 = vpop.f32.mrf.mxu0
    %v2525 = vadd.f32 %v2473, %v2524
    %v2526 = vpop.f32.mrf.mxu0
    %2527 = vdwg.mxu0
    %v2528 = vmul.f32 %v2390, %v885
    %v2529 = vmul.f32 %v2393, %v885
    %v2531 = vsel %vm340, %v2528, 0
    %v2534 = vsel %vm340, %v2529, 0
    %v2537 = vsel %vm340, %v2456, 0
    %v2540 = vsel %vm340, %v2459, 0
    %2542 = vmatprep.subr.mxu0 0.0
    %2543 = vmatpush1.xpose.msra.mxu0 0.0
    %2544 = vmatprep.subr.mxu0 0.0
    %2545 = vmatpush1.xpose.msra.mxu0 0.0
    %2546 = vmatprep.subr.mxu0 0.0
    %2547 = vmatpush1.xpose.msra.mxu0 0.0
    %2548 = vmatprep.subr.mxu0 0.0
    %2549 = vmatpush1.xpose.msra.mxu0 0.0
    %2550 = vmatprep.subr.mxu0 0.0
    %2551 = vmatpush1.xpose.msra.mxu0 0.0
    %2552 = vmatprep.subr.mxu0 0.0
    %2553 = vmatpush1.xpose.msra.mxu0 0.0
    %2554 = vmatprep.subr.mxu0 0.0
    %2555 = vmatpush1.xpose.msra.mxu0 0.0
    %2556 = vmatprep.subr.mxu0 0.0
    %2557 = vmatpush1.xpose.msra.mxu0 0.0
    %2558 = vmatprep.subr.mxu0 0.0
    %2559 = vmatpush1.xpose.msra.mxu0 0.0
    %2560 = vmatprep.subr.mxu0 0.0
    %2561 = vmatpush1.xpose.msra.mxu0 0.0
    %2562 = vmatprep.subr.mxu0 0.0
    %2563 = vmatpush1.xpose.msra.mxu0 0.0
    %2564 = vmatprep.subr.mxu0 0.0
    %2565 = vmatpush1.xpose.msra.mxu0 0.0
    %2566 = vmatprep.subr.mxu0 0.0
    %2567 = vmatpush1.xpose.msra.mxu0 0.0
    %2568 = vmatprep.subr.mxu0 0.0
    %2569 = vmatpush1.xpose.msra.mxu0 0.0
    %2570 = vmatprep.subr.mxu0 0.0
    %2571 = vmatpush1.xpose.msra.mxu0 %v2540
    %2572 = vmatprep.subr.mxu0 0.0
    %2573 = vmatpush1.xpose.msra.mxu0 %v2537
    %2574 = vmatprep.subr.mxu0 0.0
    %2575 = vmatpush2.xpose.msra.mxu0 0.0
    %2576 = vmatprep.subr.mxu0 0.0
    %2577 = vmatpush2.xpose.msra.mxu0 0.0
    %2578 = vmatprep.subr.mxu0 0.0
    %2579 = vmatpush2.xpose.msra.mxu0 0.0
    %2580 = vmatprep.subr.mxu0 0.0
    %2581 = vmatpush2.xpose.msra.mxu0 0.0
    %2582 = vmatprep.subr.mxu0 0.0
    %2583 = vmatpush2.xpose.msra.mxu0 0.0
    %2584 = vmatprep.subr.mxu0 0.0
    %2585 = vmatpush2.xpose.msra.mxu0 0.0
    %2586 = vmatprep.subr.mxu0 0.0
    %2587 = vmatpush2.xpose.msra.mxu0 0.0
    %2588 = vmatprep.subr.mxu0 0.0
    %2589 = vmatpush2.xpose.msra.mxu0 0.0
    %2590 = vmatprep.subr.mxu0 0.0
    %2591 = vmatpush2.xpose.msra.mxu0 0.0
    %2592 = vmatprep.subr.mxu0 0.0
    %2593 = vmatpush2.xpose.msra.mxu0 0.0
    %2594 = vmatprep.subr.mxu0 0.0
    %2595 = vmatpush2.xpose.msra.mxu0 0.0
    %2596 = vmatprep.subr.mxu0 0.0
    %2597 = vmatpush2.xpose.msra.mxu0 0.0
    %2598 = vmatprep.subr.mxu0 0.0
    %2599 = vmatpush2.xpose.msra.mxu0 0.0
    %2600 = vmatprep.subr.mxu0 0.0
    %2601 = vmatpush2.xpose.msra.mxu0 0.0
    %2602 = vmatprep.subr.mxu0 0.0
    %2603 = vmatpush2.xpose.msra.mxu0 0.0
    %2604 = vmatprep.subr.mxu0 0.0
    %2605 = vmatpush2.xpose.msra.mxu0 0.0
    %2606 = vmatprep.mubr.f32.mxu0 0.0
    %2607 = vmatmul.mubr.f32.gmra.mxu0 %v2531
    %v2608 = vpop.f32.mrf.mxu0
    %v2609 = vadd.f32 0.0, %v2608
    %v2610 = vpop.f32.mrf.mxu0
    %2611 = vmatprep.mubr.f32.mxu0 0.0
    %2612 = vmatmul.mubr.f32.gmra.mxu0 %v2534
    %v2613 = vpop.f32.mrf.mxu0
    %v2614 = vadd.f32 0.0, %v2613
    %v2615 = vpop.f32.mrf.mxu0
    %2616 = vdwg.mxu0
    %v2617 = vmul.f32 %v2609, 0.35355338
    %v2618 = vmul.f32 %v2614, 0.35355338
    %v2619 = vadd.f32 %v2617, %v399
    %v2620 = vadd.f32 %v2618, %v400
    %v2621 = vsel %vm979, %v2619, -inf
    %2622 = vmax.xlane.f32.xlu0 %v2621
    %v2623 = vpop.xlane.xlu0 %2622
    %v2624 = vsel %vm979, %v2620, -inf
    %2625 = vmax.xlane.f32.xlu0 %v2624
    %v2626 = vpop.xlane.xlu0 %2625
    %v2627 = vsub.f32 %v2619, %v2623
    %v2628 = vsub.f32 %v2620, %v2626
    %v2629 = vmul.f32 %v2627, 1.442695
    %v2630 = vpow.pop %v2629
    %v2631 = vmul.f32 %v2628, 1.442695
    %v2632 = vpow.pop %v2631
    %v2633 = vsel %vm979, %v2630, 0.0
    %2634 = vadd.xlane.f32.xlu0 %v2633
    %v2635 = vpop.xlane.xlu0 %2634
    %v2636 = vsel %vm979, %v2632, 0.0
    %2637 = vadd.xlane.f32.xlu0 %v2636
    %v2638 = vpop.xlane.xlu0 %2637
    %v2639 = vrcp.pop %v2635
    %v2640 = vrcp.pop %v2638
    %v2641 = vmul.f32 %v2630, %v2639
    %v2642 = vmul.f32 %v2632, %v2640
    %v2643 = vmul.f32 %v2522, %v885
    %v2644 = vmul.f32 %v2525, %v885
    %v2645 = vmul.f32 %v2390, %v1008
    %v2646 = vmul.f32 %v2393, %v1008
    %v2648 = vsel %vm340, %v2645, 0
    %v2651 = vsel %vm340, %v2646, 0
    %2653 = vmatprep.subr.mxu0 0.0
    %2654 = vmatpush1.xpose.msra.mxu0 0.0
    %2655 = vmatprep.subr.mxu0 0.0
    %2656 = vmatpush1.xpose.msra.mxu0 0.0
    %2657 = vmatprep.subr.mxu0 0.0
    %2658 = vmatpush1.xpose.msra.mxu0 0.0
    %2659 = vmatprep.subr.mxu0 0.0
    %2660 = vmatpush1.xpose.msra.mxu0 0.0
    %2661 = vmatprep.subr.mxu0 0.0
    %2662 = vmatpush1.xpose.msra.mxu0 0.0
    %2663 = vmatprep.subr.mxu0 0.0
    %2664 = vmatpush1.xpose.msra.mxu0 0.0
    %2665 = vmatprep.subr.mxu0 0.0
    %2666 = vmatpush1.xpose.msra.mxu0 0.0
    %2667 = vmatprep.subr.mxu0 0.0
    %2668 = vmatpush1.xpose.msra.mxu0 0.0
    %2669 = vmatprep.subr.mxu0 0.0
    %2670 = vmatpush1.xpose.msra.mxu0 0.0
    %2671 = vmatprep.subr.mxu0 0.0
    %2672 = vmatpush1.xpose.msra.mxu0 0.0
    %2673 = vmatprep.subr.mxu0 0.0
    %2674 = vmatpush1.xpose.msra.mxu0 0.0
    %2675 = vmatprep.subr.mxu0 0.0
    %2676 = vmatpush1.xpose.msra.mxu0 0.0
    %2677 = vmatprep.subr.mxu0 0.0
    %2678 = vmatpush1.xpose.msra.mxu0 0.0
    %2679 = vmatprep.subr.mxu0 0.0
    %2680 = vmatpush1.xpose.msra.mxu0 0.0
    %2681 = vmatprep.subr.mxu0 0.0
    %2682 = vmatpush1.xpose.msra.mxu0 %v2540
    %2683 = vmatprep.subr.mxu0 0.0
    %2684 = vmatpush1.xpose.msra.mxu0 %v2537
    %2685 = vmatprep.subr.mxu0 0.0
    %2686 = vmatpush2.xpose.msra.mxu0 0.0
    %2687 = vmatprep.subr.mxu0 0.0
    %2688 = vmatpush2.xpose.msra.mxu0 0.0
    %2689 = vmatprep.subr.mxu0 0.0
    %2690 = vmatpush2.xpose.msra.mxu0 0.0
    %2691 = vmatprep.subr.mxu0 0.0
    %2692 = vmatpush2.xpose.msra.mxu0 0.0
    %2693 = vmatprep.subr.mxu0 0.0
    %2694 = vmatpush2.xpose.msra.mxu0 0.0
    %2695 = vmatprep.subr.mxu0 0.0
    %2696 = vmatpush2.xpose.msra.mxu0 0.0
    %2697 = vmatprep.subr.mxu0 0.0
    %2698 = vmatpush2.xpose.msra.mxu0 0.0
    %2699 = vmatprep.subr.mxu0 0.0
    %2700 = vmatpush2.xpose.msra.mxu0 0.0
    %2701 = vmatprep.subr.mxu0 0.0
    %2702 = vmatpush2.xpose.msra.mxu0 0.0
    %2703 = vmatprep.subr.mxu0 0.0
    %2704 = vmatpush2.xpose.msra.mxu0 0.0
    %2705 = vmatprep.subr.mxu0 0.0
    %2706 = vmatpush2.xpose.msra.mxu0 0.0
    %2707 = vmatprep.subr.mxu0 0.0
    %2708 = vmatpush2.xpose.msra.mxu0 0.0
    %2709 = vmatprep.subr.mxu0 0.0
    %2710 = vmatpush2.xpose.msra.mxu0 0.0
    %2711 = vmatprep.subr.mxu0 0.0
    %2712 = vmatpush2.xpose.msra.mxu0 0.0
    %2713 = vmatprep.subr.mxu0 0.0
    %2714 = vmatpush2.xpose.msra.mxu0 0.0
    %2715 = vmatprep.subr.mxu0 0.0
    %2716 = vmatpush2.xpose.msra.mxu0 0.0
    %2717 = vmatprep.mubr.f32.mxu0 0.0
    %2718 = vmatmul.mubr.f32.gmra.mxu0 %v2648
    %v2719 = vpop.f32.mrf.mxu0
    %v2720 = vadd.f32 0.0, %v2719
    %v2721 = vpop.f32.mrf.mxu0
    %2722 = vmatprep.mubr.f32.mxu0 0.0
    %2723 = vmatmul.mubr.f32.gmra.mxu0 %v2651
    %v2724 = vpop.f32.mrf.mxu0
    %v2725 = vadd.f32 0.0, %v2724
    %v2726 = vpop.f32.mrf.mxu0
    %2727 = vdwg.mxu0
    %v2728 = vmul.f32 %v2720, 0.35355338
    %v2729 = vmul.f32 %v2725, 0.35355338
    %v2730 = vadd.f32 %v2728, %v399
    %v2731 = vadd.f32 %v2729, %v400
    %v2732 = vsel %vm979, %v2730, -inf
    %2733 = vmax.xlane.f32.xlu0 %v2732
    %v2734 = vpop.xlane.xlu0 %2733
    %v2735 = vsel %vm979, %v2731, -inf
    %2736 = vmax.xlane.f32.xlu0 %v2735
    %v2737 = vpop.xlane.xlu0 %2736
    %v2738 = vsub.f32 %v2730, %v2734
    %v2739 = vsub.f32 %v2731, %v2737
    %v2740 = vmul.f32 %v2738, 1.442695
    %v2741 = vpow.pop %v2740
    %v2742 = vmul.f32 %v2739, 1.442695
    %v2743 = vpow.pop %v2742
    %v2744 = vsel %vm979, %v2741, 0.0
    %2745 = vadd.xlane.f32.xlu0 %v2744
    %v2746 = vpop.xlane.xlu0 %2745
    %v2747 = vsel %vm979, %v2743, 0.0
    %2748 = vadd.xlane.f32.xlu0 %v2747
    %v2749 = vpop.xlane.xlu0 %2748
    %v2750 = vrcp.pop %v2746
    %v2751 = vrcp.pop %v2749
    %v2752 = vmul.f32 %v2741, %v2750
    %v2753 = vmul.f32 %v2743, %v2751
    %v2754 = vmul.f32 %v2522, %v1008
    %v2755 = vmul.f32 %v2525, %v1008
    %v2757 = vsel %vm979, %v2752, 0
    %v2760 = vsel %vm979, %v2753, 0
    %2762 = vmatprep.subr.mxu0 0.0
    %2763 = vmatpush1.msra.mxu0 0.0
    %2764 = vmatprep.subr.mxu0 0.0
    %2765 = vmatpush1.msra.mxu0 0.0
    %2766 = vmatprep.subr.mxu0 0.0
    %2767 = vmatpush1.msra.mxu0 0.0
    %2768 = vmatprep.subr.mxu0 0.0
    %2769 = vmatpush1.msra.mxu0 0.0
    %2770 = vmatprep.subr.mxu0 0.0
    %2771 = vmatpush1.msra.mxu0 0.0
    %2772 = vmatprep.subr.mxu0 0.0
    %2773 = vmatpush1.msra.mxu0 0.0
    %2774 = vmatprep.subr.mxu0 0.0
    %2775 = vmatpush1.msra.mxu0 0.0
    %2776 = vmatprep.subr.mxu0 0.0
    %2777 = vmatpush1.msra.mxu0 0.0
    %2778 = vmatprep.subr.mxu0 0.0
    %2779 = vmatpush1.msra.mxu0 0.0
    %2780 = vmatprep.subr.mxu0 0.0
    %2781 = vmatpush1.msra.mxu0 0.0
    %2782 = vmatprep.subr.mxu0 0.0
    %2783 = vmatpush1.msra.mxu0 0.0
    %2784 = vmatprep.subr.mxu0 0.0
    %2785 = vmatpush1.msra.mxu0 0.0
    %2786 = vmatprep.subr.mxu0 0.0
    %2787 = vmatpush1.msra.mxu0 0.0
    %2788 = vmatprep.subr.mxu0 0.0
    %2789 = vmatpush1.msra.mxu0 0.0
    %2790 = vmatprep.subr.mxu0 0.0
    %2791 = vmatpush1.msra.mxu0 %v2755
    %2792 = vmatprep.subr.mxu0 0.0
    %2793 = vmatpush1.msra.mxu0 %v2754
    %2794 = vmatprep.subr.mxu0 0.0
    %2795 = vmatpush2.msra.mxu0 0.0
    %2796 = vmatprep.subr.mxu0 0.0
    %2797 = vmatpush2.msra.mxu0 0.0
    %2798 = vmatprep.subr.mxu0 0.0
    %2799 = vmatpush2.msra.mxu0 0.0
    %2800 = vmatprep.subr.mxu0 0.0
    %2801 = vmatpush2.msra.mxu0 0.0
    %2802 = vmatprep.subr.mxu0 0.0
    %2803 = vmatpush2.msra.mxu0 0.0
    %2804 = vmatprep.subr.mxu0 0.0
    %2805 = vmatpush2.msra.mxu0 0.0
    %2806 = vmatprep.subr.mxu0 0.0
    %2807 = vmatpush2.msra.mxu0 0.0
    %2808 = vmatprep.subr.mxu0 0.0
    %2809 = vmatpush2.msra.mxu0 0.0
    %2810 = vmatprep.subr.mxu0 0.0
    %2811 = vmatpush2.msra.mxu0 0.0
    %2812 = vmatprep.subr.mxu0 0.0
    %2813 = vmatpush2.msra.mxu0 0.0
    %2814 = vmatprep.subr.mxu0 0.0
    %2815 = vmatpush2.msra.mxu0 0.0
    %2816 = vmatprep.subr.mxu0 0.0
    %2817 = vmatpush2.msra.mxu0 0.0
    %2818 = vmatprep.subr.mxu0 0.0
    %2819 = vmatpush2.msra.mxu0 0.0
    %2820 = vmatprep.subr.mxu0 0.0
    %2821 = vmatpush2.msra.mxu0 0.0
    %2822 = vmatprep.subr.mxu0 0.0
    %2823 = vmatpush2.msra.mxu0 0.0
    %2824 = vmatprep.subr.mxu0 0.0
    %2825 = vmatpush2.msra.mxu0 0.0
    %2826 = vmatprep.mubr.f32.mxu0 0.0
    %2827 = vmatmul.mubr.f32.gmra.mxu0 %v2757
    %v2828 = vpop.f32.mrf.mxu0
    %v2829 = vadd.f32 0.0, %v2828
    %v2830 = vpop.f32.mrf.mxu0
    %2831 = vmatprep.mubr.f32.mxu0 0.0
    %2832 = vmatmul.mubr.f32.gmra.mxu0 %v2760
    %v2833 = vpop.f32.mrf.mxu0
    %v2834 = vadd.f32 0.0, %v2833
    %v2835 = vpop.f32.mrf.mxu0
    %2836 = vdwg.mxu0
    %v2838 = vsel %vm979, %v2641, 0
    %v2841 = vsel %vm979, %v2642, 0
    %2843 = vmatprep.subr.mxu0 0.0
    %2844 = vmatpush1.msra.mxu0 0.0
    %2845 = vmatprep.subr.mxu0 0.0
    %2846 = vmatpush1.msra.mxu0 0.0
    %2847 = vmatprep.subr.mxu0 0.0
    %2848 = vmatpush1.msra.mxu0 0.0
    %2849 = vmatprep.subr.mxu0 0.0
    %2850 = vmatpush1.msra.mxu0 0.0
    %2851 = vmatprep.subr.mxu0 0.0
    %2852 = vmatpush1.msra.mxu0 0.0
    %2853 = vmatprep.subr.mxu0 0.0
    %2854 = vmatpush1.msra.mxu0 0.0
    %2855 = vmatprep.subr.mxu0 0.0
    %2856 = vmatpush1.msra.mxu0 0.0
    %2857 = vmatprep.subr.mxu0 0.0
    %2858 = vmatpush1.msra.mxu0 0.0
    %2859 = vmatprep.subr.mxu0 0.0
    %2860 = vmatpush1.msra.mxu0 0.0
    %2861 = vmatprep.subr.mxu0 0.0
    %2862 = vmatpush1.msra.mxu0 0.0
    %2863 = vmatprep.subr.mxu0 0.0
    %2864 = vmatpush1.msra.mxu0 0.0
    %2865 = vmatprep.subr.mxu0 0.0
    %2866 = vmatpush1.msra.mxu0 0.0
    %2867 = vmatprep.subr.mxu0 0.0
    %2868 = vmatpush1.msra.mxu0 0.0
    %2869 = vmatprep.subr.mxu0 0.0
    %2870 = vmatpush1.msra.mxu0 0.0
    %2871 = vmatprep.subr.mxu0 0.0
    %2872 = vmatpush1.msra.mxu0 %v2644
    %2873 = vmatprep.subr.mxu0 0.0
    %2874 = vmatpush1.msra.mxu0 %v2643
    %2875 = vmatprep.subr.mxu0 0.0
    %2876 = vmatpush2.msra.mxu0 0.0
    %2877 = vmatprep.subr.mxu0 0.0
    %2878 = vmatpush2.msra.mxu0 0.0
    %2879 = vmatprep.subr.mxu0 0.0
    %2880 = vmatpush2.msra.mxu0 0.0
    %2881 = vmatprep.subr.mxu0 0.0
    %2882 = vmatpush2.msra.mxu0 0.0
    %2883 = vmatprep.subr.mxu0 0.0
    %2884 = vmatpush2.msra.mxu0 0.0
    %2885 = vmatprep.subr.mxu0 0.0
    %2886 = vmatpush2.msra.mxu0 0.0
    %2887 = vmatprep.subr.mxu0 0.0
    %2888 = vmatpush2.msra.mxu0 0.0
    %2889 = vmatprep.subr.mxu0 0.0
    %2890 = vmatpush2.msra.mxu0 0.0
    %2891 = vmatprep.subr.mxu0 0.0
    %2892 = vmatpush2.msra.mxu0 0.0
    %2893 = vmatprep.subr.mxu0 0.0
    %2894 = vmatpush2.msra.mxu0 0.0
    %2895 = vmatprep.subr.mxu0 0.0
    %2896 = vmatpush2.msra.mxu0 0.0
    %2897 = vmatprep.subr.mxu0 0.0
    %2898 = vmatpush2.msra.mxu0 0.0
    %2899 = vmatprep.subr.mxu0 0.0
    %2900 = vmatpush2.msra.mxu0 0.0
    %2901 = vmatprep.subr.mxu0 0.0
    %2902 = vmatpush2.msra.mxu0 0.0
    %2903 = vmatprep.subr.mxu0 0.0
    %2904 = vmatpush2.msra.mxu0 0.0
    %2905 = vmatprep.subr.mxu0 0.0
    %2906 = vmatpush2.msra.mxu0 0.0
    %2907 = vmatprep.mubr.f32.mxu0 0.0
    %2908 = vmatmul.mubr.f32.gmra.mxu0 %v2838
    %v2909 = vpop.f32.mrf.mxu0
    %v2910 = vadd.f32 %v2829, %v2909
    %v2911 = vpop.f32.mrf.mxu0
    %2912 = vmatprep.mubr.f32.mxu0 0.0
    %2913 = vmatmul.mubr.f32.gmra.mxu0 %v2841
    %v2914 = vpop.f32.mrf.mxu0
    %v2915 = vadd.f32 %v2834, %v2914
    %v2916 = vpop.f32.mrf.mxu0
    %2917 = vdwg.mxu0
    %v2918 = vmul.f32 %v2390, %v1286
    %v2919 = vmul.f32 %v2393, %v1286
    %v2921 = vsel %vm340, %v2918, 0
    %v2924 = vsel %vm340, %v2919, 0
    %2926 = vmatprep.subr.mxu0 0.0
    %2927 = vmatpush1.xpose.msra.mxu0 0.0
    %2928 = vmatprep.subr.mxu0 0.0
    %2929 = vmatpush1.xpose.msra.mxu0 0.0
    %2930 = vmatprep.subr.mxu0 0.0
    %2931 = vmatpush1.xpose.msra.mxu0 0.0
    %2932 = vmatprep.subr.mxu0 0.0
    %2933 = vmatpush1.xpose.msra.mxu0 0.0
    %2934 = vmatprep.subr.mxu0 0.0
    %2935 = vmatpush1.xpose.msra.mxu0 0.0
    %2936 = vmatprep.subr.mxu0 0.0
    %2937 = vmatpush1.xpose.msra.mxu0 0.0
    %2938 = vmatprep.subr.mxu0 0.0
    %2939 = vmatpush1.xpose.msra.mxu0 0.0
    %2940 = vmatprep.subr.mxu0 0.0
    %2941 = vmatpush1.xpose.msra.mxu0 0.0
    %2942 = vmatprep.subr.mxu0 0.0
    %2943 = vmatpush1.xpose.msra.mxu0 0.0
    %2944 = vmatprep.subr.mxu0 0.0
    %2945 = vmatpush1.xpose.msra.mxu0 0.0
    %2946 = vmatprep.subr.mxu0 0.0
    %2947 = vmatpush1.xpose.msra.mxu0 0.0
    %2948 = vmatprep.subr.mxu0 0.0
    %2949 = vmatpush1.xpose.msra.mxu0 0.0
    %2950 = vmatprep.subr.mxu0 0.0
    %2951 = vmatpush1.xpose.msra.mxu0 0.0
    %2952 = vmatprep.subr.mxu0 0.0
    %2953 = vmatpush1.xpose.msra.mxu0 0.0
    %2954 = vmatprep.subr.mxu0 0.0
    %2955 = vmatpush1.xpose.msra.mxu0 %v2540
    %2956 = vmatprep.subr.mxu0 0.0
    %2957 = vmatpush1.xpose.msra.mxu0 %v2537
    %2958 = vmatprep.subr.mxu0 0.0
    %2959 = vmatpush2.xpose.msra.mxu0 0.0
    %2960 = vmatprep.subr.mxu0 0.0
    %2961 = vmatpush2.xpose.msra.mxu0 0.0
    %2962 = vmatprep.subr.mxu0 0.0
    %2963 = vmatpush2.xpose.msra.mxu0 0.0
    %2964 = vmatprep.subr.mxu0 0.0
    %2965 = vmatpush2.xpose.msra.mxu0 0.0
    %2966 = vmatprep.subr.mxu0 0.0
    %2967 = vmatpush2.xpose.msra.mxu0 0.0
    %2968 = vmatprep.subr.mxu0 0.0
    %2969 = vmatpush2.xpose.msra.mxu0 0.0
    %2970 = vmatprep.subr.mxu0 0.0
    %2971 = vmatpush2.xpose.msra.mxu0 0.0
    %2972 = vmatprep.subr.mxu0 0.0
    %2973 = vmatpush2.xpose.msra.mxu0 0.0
    %2974 = vmatprep.subr.mxu0 0.0
    %2975 = vmatpush2.xpose.msra.mxu0 0.0
    %2976 = vmatprep.subr.mxu0 0.0
    %2977 = vmatpush2.xpose.msra.mxu0 0.0
    %2978 = vmatprep.subr.mxu0 0.0
    %2979 = vmatpush2.xpose.msra.mxu0 0.0
    %2980 = vmatprep.subr.mxu0 0.0
    %2981 = vmatpush2.xpose.msra.mxu0 0.0
    %2982 = vmatprep.subr.mxu0 0.0
    %2983 = vmatpush2.xpose.msra.mxu0 0.0
    %2984 = vmatprep.subr.mxu0 0.0
    %2985 = vmatpush2.xpose.msra.mxu0 0.0
    %2986 = vmatprep.subr.mxu0 0.0
    %2987 = vmatpush2.xpose.msra.mxu0 0.0
    %2988 = vmatprep.subr.mxu0 0.0
    %2989 = vmatpush2.xpose.msra.mxu0 0.0
    %2990 = vmatprep.mubr.f32.mxu0 0.0
    %2991 = vmatmul.mubr.f32.gmra.mxu0 %v2921
    %v2992 = vpop.f32.mrf.mxu0
    %v2993 = vadd.f32 0.0, %v2992
    %v2994 = vpop.f32.mrf.mxu0
    %2995 = vmatprep.mubr.f32.mxu0 0.0
    %2996 = vmatmul.mubr.f32.gmra.mxu0 %v2924
    %v2997 = vpop.f32.mrf.mxu0
    %v2998 = vadd.f32 0.0, %v2997
    %v2999 = vpop.f32.mrf.mxu0
    %3000 = vdwg.mxu0
    %v3001 = vmul.f32 %v2993, 0.35355338
    %v3002 = vmul.f32 %v2998, 0.35355338
    %v3003 = vadd.f32 %v3001, %v399
    %v3004 = vadd.f32 %v3002, %v400
    %v3005 = vsel %vm979, %v3003, -inf
    %3006 = vmax.xlane.f32.xlu0 %v3005
    %v3007 = vpop.xlane.xlu0 %3006
    %v3008 = vsel %vm979, %v3004, -inf
    %3009 = vmax.xlane.f32.xlu0 %v3008
    %v3010 = vpop.xlane.xlu0 %3009
    %v3011 = vsub.f32 %v3003, %v3007
    %v3012 = vsub.f32 %v3004, %v3010
    %v3013 = vmul.f32 %v3011, 1.442695
    %v3014 = vpow.pop %v3013
    %v3015 = vmul.f32 %v3012, 1.442695
    %v3016 = vpow.pop %v3015
    %v3017 = vsel %vm979, %v3014, 0.0
    %3018 = vadd.xlane.f32.xlu0 %v3017
    %v3019 = vpop.xlane.xlu0 %3018
    %v3020 = vsel %vm979, %v3016, 0.0
    %3021 = vadd.xlane.f32.xlu0 %v3020
    %v3022 = vpop.xlane.xlu0 %3021
    %v3023 = vrcp.pop %v3019
    %v3024 = vrcp.pop %v3022
    %v3025 = vmul.f32 %v3014, %v3023
    %v3026 = vmul.f32 %v3016, %v3024
    %v3027 = vmul.f32 %v2522, %v1286
    %v3028 = vmul.f32 %v2525, %v1286
    %v3030 = vsel %vm979, %v3025, 0
    %v3033 = vsel %vm979, %v3026, 0
    %3035 = vmatprep.subr.mxu0 0.0
    %3036 = vmatpush1.msra.mxu0 0.0
    %3037 = vmatprep.subr.mxu0 0.0
    %3038 = vmatpush1.msra.mxu0 0.0
    %3039 = vmatprep.subr.mxu0 0.0
    %3040 = vmatpush1.msra.mxu0 0.0
    %3041 = vmatprep.subr.mxu0 0.0
    %3042 = vmatpush1.msra.mxu0 0.0
    %3043 = vmatprep.subr.mxu0 0.0
    %3044 = vmatpush1.msra.mxu0 0.0
    %3045 = vmatprep.subr.mxu0 0.0
    %3046 = vmatpush1.msra.mxu0 0.0
    %3047 = vmatprep.subr.mxu0 0.0
    %3048 = vmatpush1.msra.mxu0 0.0
    %3049 = vmatprep.subr.mxu0 0.0
    %3050 = vmatpush1.msra.mxu0 0.0
    %3051 = vmatprep.subr.mxu0 0.0
    %3052 = vmatpush1.msra.mxu0 0.0
    %3053 = vmatprep.subr.mxu0 0.0
    %3054 = vmatpush1.msra.mxu0 0.0
    %3055 = vmatprep.subr.mxu0 0.0
    %3056 = vmatpush1.msra.mxu0 0.0
    %3057 = vmatprep.subr.mxu0 0.0
    %3058 = vmatpush1.msra.mxu0 0.0
    %3059 = vmatprep.subr.mxu0 0.0
    %3060 = vmatpush1.msra.mxu0 0.0
    %3061 = vmatprep.subr.mxu0 0.0
    %3062 = vmatpush1.msra.mxu0 0.0
    %3063 = vmatprep.subr.mxu0 0.0
    %3064 = vmatpush1.msra.mxu0 %v3028
    %3065 = vmatprep.subr.mxu0 0.0
    %3066 = vmatpush1.msra.mxu0 %v3027
    %3067 = vmatprep.subr.mxu0 0.0
    %3068 = vmatpush2.msra.mxu0 0.0
    %3069 = vmatprep.subr.mxu0 0.0
    %3070 = vmatpush2.msra.mxu0 0.0
    %3071 = vmatprep.subr.mxu0 0.0
    %3072 = vmatpush2.msra.mxu0 0.0
    %3073 = vmatprep.subr.mxu0 0.0
    %3074 = vmatpush2.msra.mxu0 0.0
    %3075 = vmatprep.subr.mxu0 0.0
    %3076 = vmatpush2.msra.mxu0 0.0
    %3077 = vmatprep.subr.mxu0 0.0
    %3078 = vmatpush2.msra.mxu0 0.0
    %3079 = vmatprep.subr.mxu0 0.0
    %3080 = vmatpush2.msra.mxu0 0.0
    %3081 = vmatprep.subr.mxu0 0.0
    %3082 = vmatpush2.msra.mxu0 0.0
    %3083 = vmatprep.subr.mxu0 0.0
    %3084 = vmatpush2.msra.mxu0 0.0
    %3085 = vmatprep.subr.mxu0 0.0
    %3086 = vmatpush2.msra.mxu0 0.0
    %3087 = vmatprep.subr.mxu0 0.0
    %3088 = vmatpush2.msra.mxu0 0.0
    %3089 = vmatprep.subr.mxu0 0.0
    %3090 = vmatpush2.msra.mxu0 0.0
    %3091 = vmatprep.subr.mxu0 0.0
    %3092 = vmatpush2.msra.mxu0 0.0
    %3093 = vmatprep.subr.mxu0 0.0
    %3094 = vmatpush2.msra.mxu0 0.0
    %3095 = vmatprep.subr.mxu0 0.0
    %3096 = vmatpush2.msra.mxu0 0.0
    %3097 = vmatprep.subr.mxu0 0.0
    %3098 = vmatpush2.msra.mxu0 0.0
    %3099 = vmatprep.mubr.f32.mxu0 0.0
    %3100 = vmatmul.mubr.f32.gmra.mxu0 %v3030
    %v3101 = vpop.f32.mrf.mxu0
    %v3102 = vadd.f32 0.0, %v3101
    %v3103 = vpop.f32.mrf.mxu0
    %3104 = vmatprep.mubr.f32.mxu0 0.0
    %3105 = vmatmul.mubr.f32.gmra.mxu0 %v3033
    %v3106 = vpop.f32.mrf.mxu0
    %v3107 = vadd.f32 0.0, %v3106
    %v3108 = vpop.f32.mrf.mxu0
    %3109 = vdwg.mxu0
    %v3110 = vadd.f32 %v2910, %v3102
    %v3111 = vadd.f32 %v2915, %v3107
    %v3112 = vmul.f32 %v2390, %v1485
    %v3113 = vmul.f32 %v2393, %v1485
    %v3115 = vsel %vm340, %v3112, 0
    %v3118 = vsel %vm340, %v3113, 0
    %3120 = vmatprep.subr.mxu0 0.0
    %3121 = vmatpush1.xpose.msra.mxu0 0.0
    %3122 = vmatprep.subr.mxu0 0.0
    %3123 = vmatpush1.xpose.msra.mxu0 0.0
    %3124 = vmatprep.subr.mxu0 0.0
    %3125 = vmatpush1.xpose.msra.mxu0 0.0
    %3126 = vmatprep.subr.mxu0 0.0
    %3127 = vmatpush1.xpose.msra.mxu0 0.0
    %3128 = vmatprep.subr.mxu0 0.0
    %3129 = vmatpush1.xpose.msra.mxu0 0.0
    %3130 = vmatprep.subr.mxu0 0.0
    %3131 = vmatpush1.xpose.msra.mxu0 0.0
    %3132 = vmatprep.subr.mxu0 0.0
    %3133 = vmatpush1.xpose.msra.mxu0 0.0
    %3134 = vmatprep.subr.mxu0 0.0
    %3135 = vmatpush1.xpose.msra.mxu0 0.0
    %3136 = vmatprep.subr.mxu0 0.0
    %3137 = vmatpush1.xpose.msra.mxu0 0.0
    %3138 = vmatprep.subr.mxu0 0.0
    %3139 = vmatpush1.xpose.msra.mxu0 0.0
    %3140 = vmatprep.subr.mxu0 0.0
    %3141 = vmatpush1.xpose.msra.mxu0 0.0
    %3142 = vmatprep.subr.mxu0 0.0
    %3143 = vmatpush1.xpose.msra.mxu0 0.0
    %3144 = vmatprep.subr.mxu0 0.0
    %3145 = vmatpush1.xpose.msra.mxu0 0.0
    %3146 = vmatprep.subr.mxu0 0.0
    %3147 = vmatpush1.xpose.msra.mxu0 0.0
    %3148 = vmatprep.subr.mxu0 0.0
    %3149 = vmatpush1.xpose.msra.mxu0 %v2540
    %3150 = vmatprep.subr.mxu0 0.0
    %3151 = vmatpush1.xpose.msra.mxu0 %v2537
    %3152 = vmatprep.subr.mxu0 0.0
    %3153 = vmatpush2.xpose.msra.mxu0 0.0
    %3154 = vmatprep.subr.mxu0 0.0
    %3155 = vmatpush2.xpose.msra.mxu0 0.0
    %3156 = vmatprep.subr.mxu0 0.0
    %3157 = vmatpush2.xpose.msra.mxu0 0.0
    %3158 = vmatprep.subr.mxu0 0.0
    %3159 = vmatpush2.xpose.msra.mxu0 0.0
    %3160 = vmatprep.subr.mxu0 0.0
    %3161 = vmatpush2.xpose.msra.mxu0 0.0
    %3162 = vmatprep.subr.mxu0 0.0
    %3163 = vmatpush2.xpose.msra.mxu0 0.0
    %3164 = vmatprep.subr.mxu0 0.0
    %3165 = vmatpush2.xpose.msra.mxu0 0.0
    %3166 = vmatprep.subr.mxu0 0.0
    %3167 = vmatpush2.xpose.msra.mxu0 0.0
    %3168 = vmatprep.subr.mxu0 0.0
    %3169 = vmatpush2.xpose.msra.mxu0 0.0
    %3170 = vmatprep.subr.mxu0 0.0
    %3171 = vmatpush2.xpose.msra.mxu0 0.0
    %3172 = vmatprep.subr.mxu0 0.0
    %3173 = vmatpush2.xpose.msra.mxu0 0.0
    %3174 = vmatprep.subr.mxu0 0.0
    %3175 = vmatpush2.xpose.msra.mxu0 0.0
    %3176 = vmatprep.subr.mxu0 0.0
    %3177 = vmatpush2.xpose.msra.mxu0 0.0
    %3178 = vmatprep.subr.mxu0 0.0
    %3179 = vmatpush2.xpose.msra.mxu0 0.0
    %3180 = vmatprep.subr.mxu0 0.0
    %3181 = vmatpush2.xpose.msra.mxu0 0.0
    %3182 = vmatprep.subr.mxu0 0.0
    %3183 = vmatpush2.xpose.msra.mxu0 0.0
    %3184 = vmatprep.mubr.f32.mxu0 0.0
    %3185 = vmatmul.mubr.f32.gmra.mxu0 %v3115
    %v3186 = vpop.f32.mrf.mxu0
    %v3187 = vadd.f32 0.0, %v3186
    %v3188 = vpop.f32.mrf.mxu0
    %3189 = vmatprep.mubr.f32.mxu0 0.0
    %3190 = vmatmul.mubr.f32.gmra.mxu0 %v3118
    %v3191 = vpop.f32.mrf.mxu0
    %v3192 = vadd.f32 0.0, %v3191
    %v3193 = vpop.f32.mrf.mxu0
    %3194 = vdwg.mxu0
    %v3195 = vmul.f32 %v3187, 0.35355338
    %v3196 = vmul.f32 %v3192, 0.35355338
    %v3197 = vadd.f32 %v3195, %v399
    %v3198 = vadd.f32 %v3196, %v400
    %v3199 = vsel %vm979, %v3197, -inf
    %3200 = vmax.xlane.f32.xlu0 %v3199
    %v3201 = vpop.xlane.xlu0 %3200
    %v3202 = vsel %vm979, %v3198, -inf
    %3203 = vmax.xlane.f32.xlu0 %v3202
    %v3204 = vpop.xlane.xlu0 %3203
    %v3205 = vsub.f32 %v3197, %v3201
    %v3206 = vsub.f32 %v3198, %v3204
    %v3207 = vmul.f32 %v3205, 1.442695
    %v3208 = vpow.pop %v3207
    %v3209 = vmul.f32 %v3206, 1.442695
    %v3210 = vpow.pop %v3209
    %v3211 = vsel %vm979, %v3208, 0.0
    %3212 = vadd.xlane.f32.xlu0 %v3211
    %v3213 = vpop.xlane.xlu0 %3212
    %v3214 = vsel %vm979, %v3210, 0.0
    %3215 = vadd.xlane.f32.xlu0 %v3214
    %v3216 = vpop.xlane.xlu0 %3215
    %v3217 = vrcp.pop %v3213
    %v3218 = vrcp.pop %v3216
    %v3219 = vmul.f32 %v3208, %v3217
    %v3220 = vmul.f32 %v3210, %v3218
    %v3221 = vmul.f32 %v2522, %v1485
    %v3222 = vmul.f32 %v2525, %v1485
    %v3224 = vsel %vm979, %v3219, 0
    %v3227 = vsel %vm979, %v3220, 0
    %3229 = vmatprep.subr.mxu0 0.0
    %3230 = vmatpush1.msra.mxu0 0.0
    %3231 = vmatprep.subr.mxu0 0.0
    %3232 = vmatpush1.msra.mxu0 0.0
    %3233 = vmatprep.subr.mxu0 0.0
    %3234 = vmatpush1.msra.mxu0 0.0
    %3235 = vmatprep.subr.mxu0 0.0
    %3236 = vmatpush1.msra.mxu0 0.0
    %3237 = vmatprep.subr.mxu0 0.0
    %3238 = vmatpush1.msra.mxu0 0.0
    %3239 = vmatprep.subr.mxu0 0.0
    %3240 = vmatpush1.msra.mxu0 0.0
    %3241 = vmatprep.subr.mxu0 0.0
    %3242 = vmatpush1.msra.mxu0 0.0
    %3243 = vmatprep.subr.mxu0 0.0
    %3244 = vmatpush1.msra.mxu0 0.0
    %3245 = vmatprep.subr.mxu0 0.0
    %3246 = vmatpush1.msra.mxu0 0.0
    %3247 = vmatprep.subr.mxu0 0.0
    %3248 = vmatpush1.msra.mxu0 0.0
    %3249 = vmatprep.subr.mxu0 0.0
    %3250 = vmatpush1.msra.mxu0 0.0
    %3251 = vmatprep.subr.mxu0 0.0
    %3252 = vmatpush1.msra.mxu0 0.0
    %3253 = vmatprep.subr.mxu0 0.0
    %3254 = vmatpush1.msra.mxu0 0.0
    %3255 = vmatprep.subr.mxu0 0.0
    %3256 = vmatpush1.msra.mxu0 0.0
    %3257 = vmatprep.subr.mxu0 0.0
    %3258 = vmatpush1.msra.mxu0 %v3222
    %3259 = vmatprep.subr.mxu0 0.0
    %3260 = vmatpush1.msra.mxu0 %v3221
    %3261 = vmatprep.subr.mxu0 0.0
    %3262 = vmatpush2.msra.mxu0 0.0
    %3263 = vmatprep.subr.mxu0 0.0
    %3264 = vmatpush2.msra.mxu0 0.0
    %3265 = vmatprep.subr.mxu0 0.0
    %3266 = vmatpush2.msra.mxu0 0.0
    %3267 = vmatprep.subr.mxu0 0.0
    %3268 = vmatpush2.msra.mxu0 0.0
    %3269 = vmatprep.subr.mxu0 0.0
    %3270 = vmatpush2.msra.mxu0 0.0
    %3271 = vmatprep.subr.mxu0 0.0
    %3272 = vmatpush2.msra.mxu0 0.0
    %3273 = vmatprep.subr.mxu0 0.0
    %3274 = vmatpush2.msra.mxu0 0.0
    %3275 = vmatprep.subr.mxu0 0.0
    %3276 = vmatpush2.msra.mxu0 0.0
    %3277 = vmatprep.subr.mxu0 0.0
    %3278 = vmatpush2.msra.mxu0 0.0
    %3279 = vmatprep.subr.mxu0 0.0
    %3280 = vmatpush2.msra.mxu0 0.0
    %3281 = vmatprep.subr.mxu0 0.0
    %3282 = vmatpush2.msra.mxu0 0.0
    %3283 = vmatprep.subr.mxu0 0.0
    %3284 = vmatpush2.msra.mxu0 0.0
    %3285 = vmatprep.subr.mxu0 0.0
    %3286 = vmatpush2.msra.mxu0 0.0
    %3287 = vmatprep.subr.mxu0 0.0
    %3288 = vmatpush2.msra.mxu0 0.0
    %3289 = vmatprep.subr.mxu0 0.0
    %3290 = vmatpush2.msra.mxu0 0.0
    %3291 = vmatprep.subr.mxu0 0.0
    %3292 = vmatpush2.msra.mxu0 0.0
    %3293 = vmatprep.mubr.f32.mxu0 0.0
    %3294 = vmatmul.mubr.f32.gmra.mxu0 %v3224
    %v3295 = vpop.f32.mrf.mxu0
    %v3296 = vadd.f32 0.0, %v3295
    %v3297 = vpop.f32.mrf.mxu0
    %3298 = vmatprep.mubr.f32.mxu0 0.0
    %3299 = vmatmul.mubr.f32.gmra.mxu0 %v3227
    %v3300 = vpop.f32.mrf.mxu0
    %v3301 = vadd.f32 0.0, %v3300
    %v3302 = vpop.f32.mrf.mxu0
    %3303 = vdwg.mxu0
    %v3304 = vadd.f32 %v3110, %v3296
    %v3305 = vadd.f32 %v3111, %v3301
    %v3306 = vpack.c.bf16 %v3305, %v3304
    %s3307 = scalar_lea.vmem %s27, 16
    %v3308 = vld [vmem:[%s3307] sm:$0xf]
    %v3309 = vld [vmem:[%s3307 + $0x4] sm:$0xf]
    %v3310 = vld [vmem:[%s3307 + $0x8] sm:$0xf]
    %v3311 = vld [vmem:[%s3307 + $0xc] sm:$0xf]
    %s3312 = scalar_lea.vmem %s29, 1
    %v3313 = vld [vmem:[%s3312] sm:$0x1]
    %v3315 = vlaneseq
    %v3316 = vshrl.u32 %v3315, 7
    %v3317 = vsub.s32 0, %v3316
    %v3318 = vrot.slane %v3313, %v3317
    %v3324 = vunpack.c.l.b16 %v3308
    %v3325 = vunpack.c.l.b16 %v3309
    %v3326 = vunpack.c.l.b16 %v3310
    %v3327 = vunpack.c.l.b16 %v3311
    %v3328 = vpack.c.b16 %v3325, %v3324
    %v3329 = vpack.c.b16 %v3327, %v3326
    %v3333 = vsel %vm340, %v3306, 0
    %3335 = vmatprep.subr.bf16.mxu0 0
    %3336 = vmatpush1.bf16.msra.mxu0 0
    %3337 = vmatprep.subr.bf16.mxu0 0
    %3338 = vmatpush1.bf16.msra.mxu0 0
    %3339 = vmatprep.subr.bf16.mxu0 0
    %3340 = vmatpush1.bf16.msra.mxu0 0
    %3341 = vmatprep.subr.bf16.mxu0 0
    %3342 = vmatpush1.bf16.msra.mxu0 0
    %3343 = vmatprep.subr.bf16.mxu0 0
    %3344 = vmatpush1.bf16.msra.mxu0 0
    %3345 = vmatprep.subr.bf16.mxu0 0
    %3346 = vmatpush1.bf16.msra.mxu0 0
    %3347 = vmatprep.subr.bf16.mxu0 0
    %3348 = vmatpush1.bf16.msra.mxu0 %v3329
    %3349 = vmatprep.subr.bf16.mxu0 0
    %3350 = vmatpush1.bf16.msra.mxu0 %v3328
    %3351 = vmatprep.subr.bf16.mxu0 0
    %3352 = vmatpush2.bf16.msra.mxu0 0
    %3353 = vmatprep.subr.bf16.mxu0 0
    %3354 = vmatpush2.bf16.msra.mxu0 0
    %3355 = vmatprep.subr.bf16.mxu0 0
    %3356 = vmatpush2.bf16.msra.mxu0 0
    %3357 = vmatprep.subr.bf16.mxu0 0
    %3358 = vmatpush2.bf16.msra.mxu0 0
    %3359 = vmatprep.subr.bf16.mxu0 0
    %3360 = vmatpush2.bf16.msra.mxu0 0
    %3361 = vmatprep.subr.bf16.mxu0 0
    %3362 = vmatpush2.bf16.msra.mxu0 0
    %3363 = vmatprep.subr.bf16.mxu0 0
    %3364 = vmatpush2.bf16.msra.mxu0 0
    %3365 = vmatprep.subr.bf16.mxu0 0
    %3366 = vmatpush2.bf16.msra.mxu0 0
    %3367 = vmatprep.mubr.bf16.mxu0 0
    %3368 = vmatmul.mubr.bf16.gmra.mxu0 %v3333
    %v3369 = vpop.f32.mrf.mxu0
    %v3370 = vadd.f32 %v3318, %v3369
    %v3371 = vpop.f32.mrf.mxu0
    %v3372 = vpop.f32.mrf.mxu0
    %v3373 = vadd.f32 %v3318, %v3372
    %v3374 = vpop.f32.mrf.mxu0
    %3375 = vdwg.mxu0
    %v3376 = vadd.f32 %v2008, %v3370
    %v3377 = vadd.f32 %v2009, %v3373
    %s3378 = scalar_lea.vmem [#allocation4], 1
    %v3379 = vld [vmem:[%s3378] sm:$0x1]
    %s3380 = scalar_lea.vmem [#allocation6], 1
    %v3381 = vld [vmem:[%s3380] sm:$0x1]
    %v3382 = vsel %vm340, %v3376, 0.0
    %3383 = vadd.xlane.f32.xlu0 %v3382
    %v3384 = vpop.xlane.xlu0 %3383
    %v3385 = vsel %vm340, %v3377, 0.0
    %3386 = vadd.xlane.f32.xlu0 %v3385
    %v3387 = vpop.xlane.xlu0 %3386
    %v3388 = vmul.f32 %v3384, %v347
    %v3389 = vmul.f32 %v3387, %v347
    %v3390 = vsub.f32 %v3376, %v3388
    %v3391 = vsub.f32 %v3377, %v3389
    %v3392 = vmul.f32 %v3390, %v3390
    %v3393 = vmul.f32 %v3391, %v3391
    %v3394 = vsel %vm340, %v3392, 0.0
    %3395 = vadd.xlane.f32.xlu0 %v3394
    %v3396 = vpop.xlane.xlu0 %3395
    %v3397 = vsel %vm340, %v3393, 0.0
    %3398 = vadd.xlane.f32.xlu0 %v3397
    %v3399 = vpop.xlane.xlu0 %3398
    %v3400 = vmul.f32 %v3396, %v347
    %v3401 = vmul.f32 %v3399, %v347
    %v3402 = vadd.f32 %v3400, 1e-12
    %v3403 = vadd.f32 %v3401, 1e-12
    %v3404 = vrsqrt.pop %v3402
    %v3405 = vrsqrt.pop %v3403
    %v3406 = vmul.f32 %v3390, %v3404
    %v3407 = vmul.f32 %v3391, %v3405
    %v3409 = vlaneseq
    %v3410 = vshrl.u32 %v3409, 7
    %v3411 = vsub.s32 0, %v3410
    %v3412 = vrot.slane %v3379, %v3411
    %v3414 = vmul.f32 %v3406, %v3412
    %v3415 = vmul.f32 %v3407, %v3412
    %v3417 = vlaneseq
    %v3418 = vshrl.u32 %v3417, 7
    %v3419 = vsub.s32 0, %v3418
    %v3420 = vrot.slane %v3381, %v3419
    %v3422 = vadd.f32 %v3414, %v3420
    %v3423 = vadd.f32 %v3415, %v3420
    %v3424 = vpack.c.bf16 %v3423, %v3422
    %s3425 = scalar_lea.vmem %s31, 16
    %v3426 = vld [vmem:[%s3425] sm:$0xf]
    %v3427 = vld [vmem:[%s3425 + $0x4] sm:$0xf]
    %v3428 = vld [vmem:[%s3425 + $0x8] sm:$0xf]
    %v3429 = vld [vmem:[%s3425 + $0xc] sm:$0xf]
    %s3430 = scalar_lea.vmem %s33, 1
    %v3431 = vld [vmem:[%s3430] sm:$0x1]
    %v3433 = vlaneseq
    %v3434 = vshrl.u32 %v3433, 7
    %v3435 = vsub.s32 0, %v3434
    %v3436 = vrot.slane %v3431, %v3435
    %v3442 = vunpack.c.l.b16 %v3426
    %v3443 = vunpack.c.l.b16 %v3427
    %v3444 = vunpack.c.l.b16 %v3428
    %v3445 = vunpack.c.l.b16 %v3429
    %v3446 = vpack.c.b16 %v3443, %v3442
    %v3447 = vpack.c.b16 %v3445, %v3444
    %v3451 = vsel %vm340, %v3424, 0
    %3453 = vmatprep.subr.bf16.mxu0 0
    %3454 = vmatpush1.bf16.msra.mxu0 0
    %3455 = vmatprep.subr.bf16.mxu0 0
    %3456 = vmatpush1.bf16.msra.mxu0 0
    %3457 = vmatprep.subr.bf16.mxu0 0
    %3458 = vmatpush1.bf16.msra.mxu0 0
    %3459 = vmatprep.subr.bf16.mxu0 0
    %3460 = vmatpush1.bf16.msra.mxu0 0
    %3461 = vmatprep.subr.bf16.mxu0 0
    %3462 = vmatpush1.bf16.msra.mxu0 0
    %3463 = vmatprep.subr.bf16.mxu0 0
    %3464 = vmatpush1.bf16.msra.mxu0 0
    %3465 = vmatprep.subr.bf16.mxu0 0
    %3466 = vmatpush1.bf16.msra.mxu0 %v3447
    %3467 = vmatprep.subr.bf16.mxu0 0
    %3468 = vmatpush1.bf16.msra.mxu0 %v3446
    %3469 = vmatprep.subr.bf16.mxu0 0
    %3470 = vmatpush2.bf16.msra.mxu0 0
    %3471 = vmatprep.subr.bf16.mxu0 0
    %3472 = vmatpush2.bf16.msra.mxu0 0
    %3473 = vmatprep.subr.bf16.mxu0 0
    %3474 = vmatpush2.bf16.msra.mxu0 0
    %3475 = vmatprep.subr.bf16.mxu0 0
    %3476 = vmatpush2.bf16.msra.mxu0 0
    %3477 = vmatprep.subr.bf16.mxu0 0
    %3478 = vmatpush2.bf16.msra.mxu0 0
    %3479 = vmatprep.subr.bf16.mxu0 0
    %3480 = vmatpush2.bf16.msra.mxu0 0
    %3481 = vmatprep.subr.bf16.mxu0 0
    %3482 = vmatpush2.bf16.msra.mxu0 0
    %3483 = vmatprep.subr.bf16.mxu0 0
    %3484 = vmatpush2.bf16.msra.mxu0 0
    %3485 = vmatprep.mubr.bf16.mxu0 0
    %3486 = vmatmul.mubr.bf16.gmra.mxu0 %v3451
    %v3487 = vpop.f32.mrf.mxu0
    %v3488 = vadd.f32 %v3436, %v3487
    %v3489 = vpop.f32.mrf.mxu0
    %v3490 = vpop.f32.mrf.mxu0
    %v3491 = vadd.f32 %v3436, %v3490
    %v3492 = vpop.f32.mrf.mxu0
    %3493 = vdwg.mxu0
    %v3494 = vmul.f32 %v3488, 0.5
    %v3495 = vmul.f32 %v3491, 0.5
    %v3496 = vmul.f32 %v3488, 0.044715
    %v3497 = vmul.f32 %v3491, 0.044715
    %v3498 = vmul.f32 %v3496, %v3488
    %v3499 = vmul.f32 %v3497, %v3491
    %v3500 = vmul.f32 %v3498, %v3488
    %v3501 = vmul.f32 %v3499, %v3491
    %v3502 = vadd.f32 %v3488, %v3500
    %v3503 = vadd.f32 %v3491, %v3501
    %v3504 = vmul.f32 %v3502, 0.7978846
    %v3505 = vmul.f32 %v3503, 0.7978846
    %v3506 = vtanh.pop %v3504
    %v3507 = vtanh.pop %v3505
    %v3508 = vadd.f32 %v3506, 1.0
    %v3509 = vadd.f32 %v3507, 1.0
    %v3510 = vmul.f32 %v3494, %v3508
    %v3511 = vmul.f32 %v3495, %v3509
    %v3512 = vpack.c.bf16 %v3511, %v3510
    %s3513 = scalar_lea.vmem %s35, 32
    %v3514 = vld [vmem:[%s3513] sm:$0xf]
    %v3515 = vld [vmem:[%s3513 + $0x4] sm:$0xf]
    %v3516 = vld [vmem:[%s3513 + $0x8] sm:$0xf]
    %v3517 = vld [vmem:[%s3513 + $0xc] sm:$0xf]
    %v3518 = vld [vmem:[%s3513 + $0x10] sm:$0xf]
    %v3519 = vld [vmem:[%s3513 + $0x14] sm:$0xf]
    %v3520 = vld [vmem:[%s3513 + $0x18] sm:$0xf]
    %v3521 = vld [vmem:[%s3513 + $0x1c] sm:$0xf]
    %s3522 = scalar_lea.vmem %s37, 1
    %v3523 = vld [vmem:[%s3522] sm:$0x1]
    %v3525 = vlaneseq
    %v3526 = vshrl.u32 %v3525, 7
    %v3527 = vsub.s32 0, %v3526
    %v3528 = vrot.slane %v3523, %v3527
    %v3538 = vunpack.c.l.b16 %v3514
    %v3539 = vunpack.c.l.b16 %v3515
    %v3540 = vunpack.c.l.b16 %v3516
    %v3541 = vunpack.c.l.b16 %v3517
    %v3542 = vunpack.c.l.b16 %v3518
    %v3543 = vunpack.c.l.b16 %v3519
    %v3544 = vunpack.c.l.b16 %v3520
    %v3545 = vunpack.c.l.b16 %v3521
    %v3546 = vpack.c.b16 %v3539, %v3538
    %v3547 = vpack.c.b16 %v3541, %v3540
    %v3548 = vpack.c.b16 %v3543, %v3542
    %v3549 = vpack.c.b16 %v3545, %v3544
    %v3555 = vsel %vm256, %v3512, 0
    %3557 = vmatprep.subr.bf16.mxu0 0
    %3558 = vmatpush1.bf16.msra.mxu0 0
    %3559 = vmatprep.subr.bf16.mxu0 0
    %3560 = vmatpush1.bf16.msra.mxu0 0
    %3561 = vmatprep.subr.bf16.mxu0 0
    %3562 = vmatpush1.bf16.msra.mxu0 0
    %3563 = vmatprep.subr.bf16.mxu0 0
    %3564 = vmatpush1.bf16.msra.mxu0 0
    %3565 = vmatprep.subr.bf16.mxu0 0
    %3566 = vmatpush1.bf16.msra.mxu0 %v3549
    %3567 = vmatprep.subr.bf16.mxu0 0
    %3568 = vmatpush1.bf16.msra.mxu0 %v3548
    %3569 = vmatprep.subr.bf16.mxu0 0
    %3570 = vmatpush1.bf16.msra.mxu0 %v3547
    %3571 = vmatprep.subr.bf16.mxu0 0
    %3572 = vmatpush1.bf16.msra.mxu0 %v3546
    %3573 = vmatprep.subr.bf16.mxu0 0
    %3574 = vmatpush2.bf16.msra.mxu0 0
    %3575 = vmatprep.subr.bf16.mxu0 0
    %3576 = vmatpush2.bf16.msra.mxu0 0
    %3577 = vmatprep.subr.bf16.mxu0 0
    %3578 = vmatpush2.bf16.msra.mxu0 0
    %3579 = vmatprep.subr.bf16.mxu0 0
    %3580 = vmatpush2.bf16.msra.mxu0 0
    %3581 = vmatprep.subr.bf16.mxu0 0
    %3582 = vmatpush2.bf16.msra.mxu0 0
    %3583 = vmatprep.subr.bf16.mxu0 0
    %3584 = vmatpush2.bf16.msra.mxu0 0
    %3585 = vmatprep.subr.bf16.mxu0 0
    %3586 = vmatpush2.bf16.msra.mxu0 0
    %3587 = vmatprep.subr.bf16.mxu0 0
    %3588 = vmatpush2.bf16.msra.mxu0 0
    %3589 = vmatprep.mubr.bf16.mxu0 0
    %3590 = vmatmul.mubr.bf16.gmra.mxu0 %v3555
    %v3591 = vpop.f32.mrf.mxu0
    %v3592 = vadd.f32 %v3528, %v3591
    %v3593 = vpop.f32.mrf.mxu0
    %v3594 = vpop.f32.mrf.mxu0
    %v3595 = vadd.f32 %v3528, %v3594
    %v3596 = vpop.f32.mrf.mxu0
    %3597 = vdwg.mxu0
    %v3598 = vadd.f32 %v3422, %v3592
    %v3599 = vadd.f32 %v3423, %v3595
    %s3600 = scalar_lea.vmem [#allocation8], 1
    %v3601 = vld [vmem:[%s3600] sm:$0x1]
    %s3602 = scalar_lea.vmem [#allocation9], 1
    %v3603 = vld [vmem:[%s3602] sm:$0x1]
    %v3604 = vsel %vm340, %v3598, 0.0
    %3605 = vadd.xlane.f32.xlu0 %v3604
    %v3606 = vpop.xlane.xlu0 %3605
    %v3607 = vsel %vm340, %v3599, 0.0
    %3608 = vadd.xlane.f32.xlu0 %v3607
    %v3609 = vpop.xlane.xlu0 %3608
    %v3610 = vmul.f32 %v3606, %v347
    %v3611 = vmul.f32 %v3609, %v347
    %v3612 = vsub.f32 %v3598, %v3610
    %v3613 = vsub.f32 %v3599, %v3611
    %v3614 = vmul.f32 %v3612, %v3612
    %v3615 = vmul.f32 %v3613, %v3613
    %v3616 = vsel %vm340, %v3614, 0.0
    %3617 = vadd.xlane.f32.xlu0 %v3616
    %v3618 = vpop.xlane.xlu0 %3617
    %v3619 = vsel %vm340, %v3615, 0.0
    %3620 = vadd.xlane.f32.xlu0 %v3619
    %v3621 = vpop.xlane.xlu0 %3620
    %v3622 = vmul.f32 %v3618, %v347
    %v3623 = vmul.f32 %v3621, %v347
    %v3624 = vadd.f32 %v3622, 1e-12
    %v3625 = vadd.f32 %v3623, 1e-12
    %v3626 = vrsqrt.pop %v3624
    %v3627 = vrsqrt.pop %v3625
    %v3628 = vmul.f32 %v3612, %v3626
    %v3629 = vmul.f32 %v3613, %v3627
    %v3631 = vlaneseq
    %v3632 = vshrl.u32 %v3631, 7
    %v3633 = vsub.s32 0, %v3632
    %v3634 = vrot.slane %v3601, %v3633
    %v3636 = vmul.f32 %v3628, %v3634
    %v3637 = vmul.f32 %v3629, %v3634
    %v3639 = vlaneseq
    %v3640 = vshrl.u32 %v3639, 7
    %v3641 = vsub.s32 0, %v3640
    %v3642 = vrot.slane %v3603, %v3641
    %v3644 = vadd.f32 %v3636, %v3642
    %v3645 = vadd.f32 %v3637, %v3642
    %v3646 = vld [vmem:[#allocation2] sm:$0xff]
    %v3647 = vld [vmem:[#allocation2 + $0x8] sm:$0xff]
    %v3648 = vld [vmem:[#allocation2 + $0x10] sm:$0xff]
    %v3649 = vld [vmem:[#allocation2 + $0x18] sm:$0xff]
    %v3650 = vld [vmem:[#allocation2 + $0x20] sm:$0xff]
    %v3651 = vld [vmem:[#allocation2 + $0x28] sm:$0xff]
    %v3652 = vld [vmem:[#allocation2 + $0x30] sm:$0xff]
    %v3653 = vld [vmem:[#allocation2 + $0x38] sm:$0xff]
    %v3654 = vld [vmem:[#allocation2 + $0x40] sm:$0xff]
    %v3655 = vld [vmem:[#allocation2 + $0x48] sm:$0xff]
    %v3656 = vld [vmem:[#allocation2 + $0x50] sm:$0xff]
    %v3657 = vld [vmem:[#allocation2 + $0x58] sm:$0xff]
    %v3658 = vld [vmem:[#allocation2 + $0x60] sm:$0xff]
    %v3659 = vld [vmem:[#allocation2 + $0x68] sm:$0xff]
    %v3660 = vld [vmem:[#allocation2 + $0x70] sm:$0xff]
    %v3661 = vld [vmem:[#allocation2 + $0x78] sm:$0xff]
    %v3662 = vpack.c.bf16 %v3645, %v3644
    %v3663 = vld [vmem:[#allocation11 + $0x100] sm:$0xff]
    %v3664 = vld [vmem:[#allocation11 + $0x108] sm:$0xff]
    %v3665 = vld [vmem:[#allocation11 + $0x110] sm:$0xff]
    %v3666 = vld [vmem:[#allocation11 + $0x118] sm:$0xff]
    %v3667 = vld [vmem:[#allocation11 + $0x120] sm:$0xff]
    %v3668 = vld [vmem:[#allocation11 + $0x128] sm:$0xff]
    %v3669 = vld [vmem:[#allocation11 + $0x130] sm:$0xff]
    %v3670 = vld [vmem:[#allocation11 + $0x138] sm:$0xff]
    %v3671 = vld [vmem:[#allocation11 + $0x140] sm:$0xff]
    %v3672 = vld [vmem:[#allocation11 + $0x148] sm:$0xff]
    %v3673 = vld [vmem:[#allocation11 + $0x150] sm:$0xff]
    %v3674 = vld [vmem:[#allocation11 + $0x158] sm:$0xff]
    %v3675 = vld [vmem:[#allocation11 + $0x160] sm:$0xff]
    %v3676 = vld [vmem:[#allocation11 + $0x168] sm:$0xff]
    %v3677 = vld [vmem:[#allocation11 + $0x170] sm:$0xff]
    %v3678 = vld [vmem:[#allocation11 + $0x178] sm:$0xff]
    %v3695 = vunpack.c.l.b16 %v3663
    %v3696 = vunpack.c.h.b16 %v3663
    %v3697 = vunpack.c.l.b16 %v3664
    %v3698 = vunpack.c.h.b16 %v3664
    %v3699 = vunpack.c.l.b16 %v3665
    %v3700 = vunpack.c.h.b16 %v3665
    %v3701 = vunpack.c.l.b16 %v3666
    %v3702 = vunpack.c.h.b16 %v3666
    %v3703 = vunpack.c.l.b16 %v3667
    %v3704 = vunpack.c.h.b16 %v3667
    %v3705 = vunpack.c.l.b16 %v3668
    %v3706 = vunpack.c.h.b16 %v3668
    %v3707 = vunpack.c.l.b16 %v3669
    %v3708 = vunpack.c.h.b16 %v3669
    %v3709 = vunpack.c.l.b16 %v3670
    %v3710 = vunpack.c.h.b16 %v3670
    %v3711 = vunpack.c.l.b16 %v3671
    %v3712 = vunpack.c.h.b16 %v3671
    %v3713 = vunpack.c.l.b16 %v3672
    %v3714 = vunpack.c.h.b16 %v3672
    %v3715 = vunpack.c.l.b16 %v3673
    %v3716 = vunpack.c.h.b16 %v3673
    %v3717 = vunpack.c.l.b16 %v3674
    %v3718 = vunpack.c.h.b16 %v3674
    %v3719 = vunpack.c.l.b16 %v3675
    %v3720 = vunpack.c.h.b16 %v3675
    %v3721 = vunpack.c.l.b16 %v3676
    %v3722 = vunpack.c.h.b16 %v3676
    %v3723 = vunpack.c.l.b16 %v3677
    %v3724 = vunpack.c.h.b16 %v3677
    %v3725 = vunpack.c.l.b16 %v3678
    %v3726 = vunpack.c.h.b16 %v3678
    %v3727 = vpack.c.b16 %v3703, %v3695
    %v3728 = vpack.c.b16 %v3704, %v3696
    %v3729 = vpack.c.b16 %v3705, %v3697
    %v3730 = vpack.c.b16 %v3706, %v3698
    %v3731 = vpack.c.b16 %v3707, %v3699
    %v3732 = vpack.c.b16 %v3708, %v3700
    %v3733 = vpack.c.b16 %v3709, %v3701
    %v3734 = vpack.c.b16 %v3710, %v3702
    %v3735 = vpack.c.b16 %v3719, %v3711
    %v3736 = vpack.c.b16 %v3720, %v3712
    %v3737 = vpack.c.b16 %v3721, %v3713
    %v3738 = vpack.c.b16 %v3722, %v3714
    %v3739 = vpack.c.b16 %v3723, %v3715
    %v3740 = vpack.c.b16 %v3724, %v3716
    %v3741 = vpack.c.b16 %v3725, %v3717
    %v3742 = vpack.c.b16 %v3726, %v3718
    %v3760 = vsel %vm340, %v3662, 0
    %3762 = vmatprep.subr.bf16.mxu0 0
    %3763 = vmatpush1.bf16.msra.mxu0 0
    %3764 = vmatprep.subr.bf16.mxu0 0
    %3765 = vmatpush1.bf16.msra.mxu0 0
    %3766 = vmatprep.subr.bf16.mxu0 0
    %3767 = vmatpush1.bf16.msra.mxu0 0
    %3768 = vmatprep.subr.bf16.mxu0 0
    %3769 = vmatpush1.bf16.msra.mxu0 0
    %3770 = vmatprep.subr.bf16.mxu0 0
    %3771 = vmatpush1.bf16.msra.mxu0 0
    %3772 = vmatprep.subr.bf16.mxu0 0
    %3773 = vmatpush1.bf16.msra.mxu0 0
    %3774 = vmatprep.subr.bf16.mxu0 %v3736
    %3775 = vmatpush1.bf16.msra.mxu0 %v3735
    %3776 = vmatprep.subr.bf16.mxu0 %v3728
    %3777 = vmatpush1.bf16.msra.mxu0 %v3727
    %3778 = vmatprep.subr.bf16.mxu0 0
    %3779 = vmatpush2.bf16.msra.mxu0 0
    %3780 = vmatprep.subr.bf16.mxu0 0
    %3781 = vmatpush2.bf16.msra.mxu0 0
    %3782 = vmatprep.subr.bf16.mxu0 0
    %3783 = vmatpush2.bf16.msra.mxu0 0
    %3784 = vmatprep.subr.bf16.mxu0 0
    %3785 = vmatpush2.bf16.msra.mxu0 0
    %3786 = vmatprep.subr.bf16.mxu0 0
    %3787 = vmatpush2.bf16.msra.mxu0 0
    %3788 = vmatprep.subr.bf16.mxu0 0
    %3789 = vmatpush2.bf16.msra.mxu0 0
    %3790 = vmatprep.subr.bf16.mxu0 0
    %3791 = vmatpush2.bf16.msra.mxu0 0
    %3792 = vmatprep.subr.bf16.mxu0 0
    %3793 = vmatpush2.bf16.msra.mxu0 0
    %3794 = vmatprep.mubr.bf16.mxu0 0
    %3795 = vmatmul.mubr.bf16.gmra.mxu0 %v3760
    %v3796 = vpop.f32.mrf.mxu0
    %v3797 = vadd.f32 0.0, %v3796
    %v3798 = vpop.f32.mrf.mxu0
    %v3799 = vadd.f32 0.0, %v3798
    %v3800 = vpop.f32.mrf.mxu0
    %v3801 = vadd.f32 0.0, %v3800
    %v3802 = vpop.f32.mrf.mxu0
    %v3803 = vadd.f32 0.0, %v3802
    %3804 = vdwg.mxu0
    %3805 = vmatprep.subr.bf16.mxu0 0
    %3806 = vmatpush1.bf16.msra.mxu0 0
    %3807 = vmatprep.subr.bf16.mxu0 0
    %3808 = vmatpush1.bf16.msra.mxu0 0
    %3809 = vmatprep.subr.bf16.mxu0 0
    %3810 = vmatpush1.bf16.msra.mxu0 0
    %3811 = vmatprep.subr.bf16.mxu0 0
    %3812 = vmatpush1.bf16.msra.mxu0 0
    %3813 = vmatprep.subr.bf16.mxu0 0
    %3814 = vmatpush1.bf16.msra.mxu0 0
    %3815 = vmatprep.subr.bf16.mxu0 0
    %3816 = vmatpush1.bf16.msra.mxu0 0
    %3817 = vmatprep.subr.bf16.mxu0 %v3738
    %3818 = vmatpush1.bf16.msra.mxu0 %v3737
    %3819 = vmatprep.subr.bf16.mxu0 %v3730
    %3820 = vmatpush1.bf16.msra.mxu0 %v3729
    %3821 = vmatprep.subr.bf16.mxu0 0
    %3822 = vmatpush2.bf16.msra.mxu0 0
    %3823 = vmatprep.subr.bf16.mxu0 0
    %3824 = vmatpush2.bf16.msra.mxu0 0
    %3825 = vmatprep.subr.bf16.mxu0 0
    %3826 = vmatpush2.bf16.msra.mxu0 0
    %3827 = vmatprep.subr.bf16.mxu0 0
    %3828 = vmatpush2.bf16.msra.mxu0 0
    %3829 = vmatprep.subr.bf16.mxu0 0
    %3830 = vmatpush2.bf16.msra.mxu0 0
    %3831 = vmatprep.subr.bf16.mxu0 0
    %3832 = vmatpush2.bf16.msra.mxu0 0
    %3833 = vmatprep.subr.bf16.mxu0 0
    %3834 = vmatpush2.bf16.msra.mxu0 0
    %3835 = vmatprep.subr.bf16.mxu0 0
    %3836 = vmatpush2.bf16.msra.mxu0 0
    %3837 = vmatprep.mubr.bf16.mxu0 0
    %3838 = vmatmul.mubr.bf16.gmra.mxu0 %v3760
    %v3839 = vpop.f32.mrf.mxu0
    %v3840 = vadd.f32 0.0, %v3839
    %v3841 = vpop.f32.mrf.mxu0
    %v3842 = vadd.f32 0.0, %v3841
    %v3843 = vpop.f32.mrf.mxu0
    %v3844 = vadd.f32 0.0, %v3843
    %v3845 = vpop.f32.mrf.mxu0
    %v3846 = vadd.f32 0.0, %v3845
    %3847 = vdwg.mxu0
    %3848 = vmatprep.subr.bf16.mxu0 0
    %3849 = vmatpush1.bf16.msra.mxu0 0
    %3850 = vmatprep.subr.bf16.mxu0 0
    %3851 = vmatpush1.bf16.msra.mxu0 0
    %3852 = vmatprep.subr.bf16.mxu0 0
    %3853 = vmatpush1.bf16.msra.mxu0 0
    %3854 = vmatprep.subr.bf16.mxu0 0
    %3855 = vmatpush1.bf16.msra.mxu0 0
    %3856 = vmatprep.subr.bf16.mxu0 0
    %3857 = vmatpush1.bf16.msra.mxu0 0
    %3858 = vmatprep.subr.bf16.mxu0 0
    %3859 = vmatpush1.bf16.msra.mxu0 0
    %3860 = vmatprep.subr.bf16.mxu0 %v3740
    %3861 = vmatpush1.bf16.msra.mxu0 %v3739
    %3862 = vmatprep.subr.bf16.mxu0 %v3732
    %3863 = vmatpush1.bf16.msra.mxu0 %v3731
    %3864 = vmatprep.subr.bf16.mxu0 0
    %3865 = vmatpush2.bf16.msra.mxu0 0
    %3866 = vmatprep.subr.bf16.mxu0 0
    %3867 = vmatpush2.bf16.msra.mxu0 0
    %3868 = vmatprep.subr.bf16.mxu0 0
    %3869 = vmatpush2.bf16.msra.mxu0 0
    %3870 = vmatprep.subr.bf16.mxu0 0
    %3871 = vmatpush2.bf16.msra.mxu0 0
    %3872 = vmatprep.subr.bf16.mxu0 0
    %3873 = vmatpush2.bf16.msra.mxu0 0
    %3874 = vmatprep.subr.bf16.mxu0 0
    %3875 = vmatpush2.bf16.msra.mxu0 0
    %3876 = vmatprep.subr.bf16.mxu0 0
    %3877 = vmatpush2.bf16.msra.mxu0 0
    %3878 = vmatprep.subr.bf16.mxu0 0
    %3879 = vmatpush2.bf16.msra.mxu0 0
    %3880 = vmatprep.mubr.bf16.mxu0 0
    %3881 = vmatmul.mubr.bf16.gmra.mxu0 %v3760
    %v3882 = vpop.f32.mrf.mxu0
    %v3883 = vadd.f32 0.0, %v3882
    %v3884 = vpop.f32.mrf.mxu0
    %v3885 = vadd.f32 0.0, %v3884
    %v3886 = vpop.f32.mrf.mxu0
    %v3887 = vadd.f32 0.0, %v3886
    %v3888 = vpop.f32.mrf.mxu0
    %v3889 = vadd.f32 0.0, %v3888
    %3890 = vdwg.mxu0
    %3891 = vmatprep.subr.bf16.mxu0 0
    %3892 = vmatpush1.bf16.msra.mxu0 0
    %3893 = vmatprep.subr.bf16.mxu0 0
    %3894 = vmatpush1.bf16.msra.mxu0 0
    %3895 = vmatprep.subr.bf16.mxu0 0
    %3896 = vmatpush1.bf16.msra.mxu0 0
    %3897 = vmatprep.subr.bf16.mxu0 0
    %3898 = vmatpush1.bf16.msra.mxu0 0
    %3899 = vmatprep.subr.bf16.mxu0 0
    %3900 = vmatpush1.bf16.msra.mxu0 0
    %3901 = vmatprep.subr.bf16.mxu0 0
    %3902 = vmatpush1.bf16.msra.mxu0 0
    %3903 = vmatprep.subr.bf16.mxu0 %v3742
    %3904 = vmatpush1.bf16.msra.mxu0 %v3741
    %3905 = vmatprep.subr.bf16.mxu0 %v3734
    %3906 = vmatpush1.bf16.msra.mxu0 %v3733
    %3907 = vmatprep.subr.bf16.mxu0 0
    %3908 = vmatpush2.bf16.msra.mxu0 0
    %3909 = vmatprep.subr.bf16.mxu0 0
    %3910 = vmatpush2.bf16.msra.mxu0 0
    %3911 = vmatprep.subr.bf16.mxu0 0
    %3912 = vmatpush2.bf16.msra.mxu0 0
    %3913 = vmatprep.subr.bf16.mxu0 0
    %3914 = vmatpush2.bf16.msra.mxu0 0
    %3915 = vmatprep.subr.bf16.mxu0 0
    %3916 = vmatpush2.bf16.msra.mxu0 0
    %3917 = vmatprep.subr.bf16.mxu0 0
    %3918 = vmatpush2.bf16.msra.mxu0 0
    %3919 = vmatprep.subr.bf16.mxu0 0
    %3920 = vmatpush2.bf16.msra.mxu0 0
    %3921 = vmatprep.subr.bf16.mxu0 0
    %3922 = vmatpush2.bf16.msra.mxu0 0
    %3923 = vmatprep.mubr.bf16.mxu0 0
    %3924 = vmatmul.mubr.bf16.gmra.mxu0 %v3760
    %v3925 = vpop.f32.mrf.mxu0
    %v3926 = vadd.f32 0.0, %v3925
    %v3927 = vpop.f32.mrf.mxu0
    %v3928 = vadd.f32 0.0, %v3927
    %v3929 = vpop.f32.mrf.mxu0
    %v3930 = vadd.f32 0.0, %v3929
    %v3931 = vpop.f32.mrf.mxu0
    %v3932 = vadd.f32 0.0, %v3931
    %3933 = vdwg.mxu0
    %v3934 = vadd.f32 %v3646, %v3797
    %v3935 = vadd.f32 %v3647, %v3799
    %v3936 = vadd.f32 %v3648, %v3840
    %v3937 = vadd.f32 %v3649, %v3842
    %v3938 = vadd.f32 %v3650, %v3883
    %v3939 = vadd.f32 %v3651, %v3885
    %v3940 = vadd.f32 %v3652, %v3926
    %v3941 = vadd.f32 %v3653, %v3928
    %v3942 = vadd.f32 %v3654, %v3801
    %v3943 = vadd.f32 %v3655, %v3803
    %v3944 = vadd.f32 %v3656, %v3844
    %v3945 = vadd.f32 %v3657, %v3846
    %v3946 = vadd.f32 %v3658, %v3887
    %v3947 = vadd.f32 %v3659, %v3889
    %v3948 = vadd.f32 %v3660, %v3930
    %v3949 = vadd.f32 %v3661, %v3932
    %3950 = vst [vmem:[#allocation2] sm:$0xff] %v3934
    %3951 = vst [vmem:[#allocation2 + $0x8] sm:$0xff] %v3935
    %3952 = vst [vmem:[#allocation2 + $0x10] sm:$0xff] %v3936
    %3953 = vst [vmem:[#allocation2 + $0x18] sm:$0xff] %v3937
    %3954 = vst [vmem:[#allocation2 + $0x20] sm:$0xff] %v3938
    %3955 = vst [vmem:[#allocation2 + $0x28] sm:$0xff] %v3939
    %3956 = vst [vmem:[#allocation2 + $0x30] sm:$0xff] %v3940
    %3957 = vst [vmem:[#allocation2 + $0x38] sm:$0xff] %v3941
    %3958 = vst [vmem:[#allocation2 + $0x40] sm:$0xff] %v3942
    %3959 = vst [vmem:[#allocation2 + $0x48] sm:$0xff] %v3943
    %3960 = vst [vmem:[#allocation2 + $0x50] sm:$0xff] %v3944
    %3961 = vst [vmem:[#allocation2 + $0x58] sm:$0xff] %v3945
    %3962 = vst [vmem:[#allocation2 + $0x60] sm:$0xff] %v3946
    %3963 = vst [vmem:[#allocation2 + $0x68] sm:$0xff] %v3947
    %3964 = vst [vmem:[#allocation2 + $0x70] sm:$0xff] %v3948
    %3965 = vst [vmem:[#allocation2 + $0x78] sm:$0xff] %v3949
    %s3966 = scalar_lea.vmem %s15, 32
    %v3967 = vld [vmem:[%s3966] sm:$0xf]
    %v3968 = vld [vmem:[%s3966 + $0x4] sm:$0xf]
    %v3969 = vld [vmem:[%s3966 + $0x8] sm:$0xf]
    %v3970 = vld [vmem:[%s3966 + $0xc] sm:$0xf]
    %s3971 = scalar_lea.vmem %s17, 2
    %v3972 = vld [vmem:[%s3971] sm:$0x1]
    %v3974 = vlaneseq
    %v3975 = vshrl.u32 %v3974, 7
    %v3976 = vsub.s32 0, %v3975
    %v3977 = vrot.slane %v3972, %v3976
    %v3983 = vunpack.c.l.b16 %v3967
    %v3984 = vunpack.c.l.b16 %v3968
    %v3985 = vunpack.c.l.b16 %v3969
    %v3986 = vunpack.c.l.b16 %v3970
    %v3987 = vpack.c.b16 %v3984, %v3983
    %v3988 = vpack.c.b16 %v3986, %v3985
    %3991 = vmatprep.subr.bf16.mxu0 0
    %3992 = vmatpush1.bf16.msra.mxu0 0
    %3993 = vmatprep.subr.bf16.mxu0 0
    %3994 = vmatpush1.bf16.msra.mxu0 0
    %3995 = vmatprep.subr.bf16.mxu0 0
    %3996 = vmatpush1.bf16.msra.mxu0 0
    %3997 = vmatprep.subr.bf16.mxu0 0
    %3998 = vmatpush1.bf16.msra.mxu0 0
    %3999 = vmatprep.subr.bf16.mxu0 0
    %4000 = vmatpush1.bf16.msra.mxu0 0
    %4001 = vmatprep.subr.bf16.mxu0 0
    %4002 = vmatpush1.bf16.msra.mxu0 0
    %4003 = vmatprep.subr.bf16.mxu0 0
    %4004 = vmatpush1.bf16.msra.mxu0 %v3988
    %4005 = vmatprep.subr.bf16.mxu0 0
    %4006 = vmatpush1.bf16.msra.mxu0 %v3987
    %4007 = vmatprep.subr.bf16.mxu0 0
    %4008 = vmatpush2.bf16.msra.mxu0 0
    %4009 = vmatprep.subr.bf16.mxu0 0
    %4010 = vmatpush2.bf16.msra.mxu0 0
    %4011 = vmatprep.subr.bf16.mxu0 0
    %4012 = vmatpush2.bf16.msra.mxu0 0
    %4013 = vmatprep.subr.bf16.mxu0 0
    %4014 = vmatpush2.bf16.msra.mxu0 0
    %4015 = vmatprep.subr.bf16.mxu0 0
    %4016 = vmatpush2.bf16.msra.mxu0 0
    %4017 = vmatprep.subr.bf16.mxu0 0
    %4018 = vmatpush2.bf16.msra.mxu0 0
    %4019 = vmatprep.subr.bf16.mxu0 0
    %4020 = vmatpush2.bf16.msra.mxu0 0
    %4021 = vmatprep.subr.bf16.mxu0 0
    %4022 = vmatpush2.bf16.msra.mxu0 0
    %4023 = vmatprep.mubr.bf16.mxu0 0
    %4024 = vmatmul.mubr.bf16.gmra.mxu0 %v3760
    %v4025 = vpop.f32.mrf.mxu0
    %v4026 = vadd.f32 %v3977, %v4025
    %v4027 = vpop.f32.mrf.mxu0
    %v4028 = vpop.f32.mrf.mxu0
    %v4029 = vadd.f32 %v3977, %v4028
    %v4030 = vpop.f32.mrf.mxu0
    %4031 = vdwg.mxu0
    %s4032 = scalar_lea.vmem %s19, 32
    %v4033 = vld [vmem:[%s4032] sm:$0xf]
    %v4034 = vld [vmem:[%s4032 + $0x4] sm:$0xf]
    %v4035 = vld [vmem:[%s4032 + $0x8] sm:$0xf]
    %v4036 = vld [vmem:[%s4032 + $0xc] sm:$0xf]
    %s4037 = scalar_lea.vmem %s21, 2
    %v4038 = vld [vmem:[%s4037] sm:$0x1]
    %v4040 = vlaneseq
    %v4041 = vshrl.u32 %v4040, 7
    %v4042 = vsub.s32 0, %v4041
    %v4043 = vrot.slane %v4038, %v4042
    %v4049 = vunpack.c.l.b16 %v4033
    %v4050 = vunpack.c.l.b16 %v4034
    %v4051 = vunpack.c.l.b16 %v4035
    %v4052 = vunpack.c.l.b16 %v4036
    %v4053 = vpack.c.b16 %v4050, %v4049
    %v4054 = vpack.c.b16 %v4052, %v4051
    %4057 = vmatprep.subr.bf16.mxu0 0
    %4058 = vmatpush1.bf16.msra.mxu0 0
    %4059 = vmatprep.subr.bf16.mxu0 0
    %4060 = vmatpush1.bf16.msra.mxu0 0
    %4061 = vmatprep.subr.bf16.mxu0 0
    %4062 = vmatpush1.bf16.msra.mxu0 0
    %4063 = vmatprep.subr.bf16.mxu0 0
    %4064 = vmatpush1.bf16.msra.mxu0 0
    %4065 = vmatprep.subr.bf16.mxu0 0
    %4066 = vmatpush1.bf16.msra.mxu0 0
    %4067 = vmatprep.subr.bf16.mxu0 0
    %4068 = vmatpush1.bf16.msra.mxu0 0
    %4069 = vmatprep.subr.bf16.mxu0 0
    %4070 = vmatpush1.bf16.msra.mxu0 %v4054
    %4071 = vmatprep.subr.bf16.mxu0 0
    %4072 = vmatpush1.bf16.msra.mxu0 %v4053
    %4073 = vmatprep.subr.bf16.mxu0 0
    %4074 = vmatpush2.bf16.msra.mxu0 0
    %4075 = vmatprep.subr.bf16.mxu0 0
    %4076 = vmatpush2.bf16.msra.mxu0 0
    %4077 = vmatprep.subr.bf16.mxu0 0
    %4078 = vmatpush2.bf16.msra.mxu0 0
    %4079 = vmatprep.subr.bf16.mxu0 0
    %4080 = vmatpush2.bf16.msra.mxu0 0
    %4081 = vmatprep.subr.bf16.mxu0 0
    %4082 = vmatpush2.bf16.msra.mxu0 0
    %4083 = vmatprep.subr.bf16.mxu0 0
    %4084 = vmatpush2.bf16.msra.mxu0 0
    %4085 = vmatprep.subr.bf16.mxu0 0
    %4086 = vmatpush2.bf16.msra.mxu0 0
    %4087 = vmatprep.subr.bf16.mxu0 0
    %4088 = vmatpush2.bf16.msra.mxu0 0
    %4089 = vmatprep.mubr.bf16.mxu0 0
    %4090 = vmatmul.mubr.bf16.gmra.mxu0 %v3760
    %v4091 = vpop.f32.mrf.mxu0
    %v4092 = vadd.f32 %v4043, %v4091
    %v4093 = vpop.f32.mrf.mxu0
    %v4094 = vpop.f32.mrf.mxu0
    %v4095 = vadd.f32 %v4043, %v4094
    %v4096 = vpop.f32.mrf.mxu0
    %4097 = vdwg.mxu0
    %s4098 = scalar_lea.vmem %s23, 32
    %v4099 = vld [vmem:[%s4098] sm:$0xf]
    %v4100 = vld [vmem:[%s4098 + $0x4] sm:$0xf]
    %v4101 = vld [vmem:[%s4098 + $0x8] sm:$0xf]
    %v4102 = vld [vmem:[%s4098 + $0xc] sm:$0xf]
    %s4103 = scalar_lea.vmem %s25, 2
    %v4104 = vld [vmem:[%s4103] sm:$0x1]
    %v4106 = vlaneseq
    %v4107 = vshrl.u32 %v4106, 7
    %v4108 = vsub.s32 0, %v4107
    %v4109 = vrot.slane %v4104, %v4108
    %v4115 = vunpack.c.l.b16 %v4099
    %v4116 = vunpack.c.l.b16 %v4100
    %v4117 = vunpack.c.l.b16 %v4101
    %v4118 = vunpack.c.l.b16 %v4102
    %v4119 = vpack.c.b16 %v4116, %v4115
    %v4120 = vpack.c.b16 %v4118, %v4117
    %4123 = vmatprep.subr.bf16.mxu0 0
    %4124 = vmatpush1.bf16.msra.mxu0 0
    %4125 = vmatprep.subr.bf16.mxu0 0
    %4126 = vmatpush1.bf16.msra.mxu0 0
    %4127 = vmatprep.subr.bf16.mxu0 0
    %4128 = vmatpush1.bf16.msra.mxu0 0
    %4129 = vmatprep.subr.bf16.mxu0 0
    %4130 = vmatpush1.bf16.msra.mxu0 0
    %4131 = vmatprep.subr.bf16.mxu0 0
    %4132 = vmatpush1.bf16.msra.mxu0 0
    %4133 = vmatprep.subr.bf16.mxu0 0
    %4134 = vmatpush1.bf16.msra.mxu0 0
    %4135 = vmatprep.subr.bf16.mxu0 0
    %4136 = vmatpush1.bf16.msra.mxu0 %v4120
    %4137 = vmatprep.subr.bf16.mxu0 0
    %4138 = vmatpush1.bf16.msra.mxu0 %v4119
    %4139 = vmatprep.subr.bf16.mxu0 0
    %4140 = vmatpush2.bf16.msra.mxu0 0
    %4141 = vmatprep.subr.bf16.mxu0 0
    %4142 = vmatpush2.bf16.msra.mxu0 0
    %4143 = vmatprep.subr.bf16.mxu0 0
    %4144 = vmatpush2.bf16.msra.mxu0 0
    %4145 = vmatprep.subr.bf16.mxu0 0
    %4146 = vmatpush2.bf16.msra.mxu0 0
    %4147 = vmatprep.subr.bf16.mxu0 0
    %4148 = vmatpush2.bf16.msra.mxu0 0
    %4149 = vmatprep.subr.bf16.mxu0 0
    %4150 = vmatpush2.bf16.msra.mxu0 0
    %4151 = vmatprep.subr.bf16.mxu0 0
    %4152 = vmatpush2.bf16.msra.mxu0 0
    %4153 = vmatprep.subr.bf16.mxu0 0
    %4154 = vmatpush2.bf16.msra.mxu0 0
    %4155 = vmatprep.mubr.bf16.mxu0 0
    %4156 = vmatmul.mubr.bf16.gmra.mxu0 %v3760
    %v4157 = vpop.f32.mrf.mxu0
    %v4158 = vadd.f32 %v4109, %v4157
    %v4159 = vpop.f32.mrf.mxu0
    %v4160 = vpop.f32.mrf.mxu0
    %v4161 = vadd.f32 %v4109, %v4160
    %v4162 = vpop.f32.mrf.mxu0
    %4163 = vdwg.mxu0
    %v4164 = vmul.f32 %v4026, %v885
    %v4165 = vmul.f32 %v4029, %v885
    %v4167 = vsel %vm340, %v4164, 0
    %v4170 = vsel %vm340, %v4165, 0
    %v4173 = vsel %vm340, %v4092, 0
    %v4176 = vsel %vm340, %v4095, 0
    %4178 = vmatprep.subr.mxu0 0.0
    %4179 = vmatpush1.xpose.msra.mxu0 0.0
    %4180 = vmatprep.subr.mxu0 0.0
    %4181 = vmatpush1.xpose.msra.mxu0 0.0
    %4182 = vmatprep.subr.mxu0 0.0
    %4183 = vmatpush1.xpose.msra.mxu0 0.0
    %4184 = vmatprep.subr.mxu0 0.0
    %4185 = vmatpush1.xpose.msra.mxu0 0.0
    %4186 = vmatprep.subr.mxu0 0.0
    %4187 = vmatpush1.xpose.msra.mxu0 0.0
    %4188 = vmatprep.subr.mxu0 0.0
    %4189 = vmatpush1.xpose.msra.mxu0 0.0
    %4190 = vmatprep.subr.mxu0 0.0
    %4191 = vmatpush1.xpose.msra.mxu0 0.0
    %4192 = vmatprep.subr.mxu0 0.0
    %4193 = vmatpush1.xpose.msra.mxu0 0.0
    %4194 = vmatprep.subr.mxu0 0.0
    %4195 = vmatpush1.xpose.msra.mxu0 0.0
    %4196 = vmatprep.subr.mxu0 0.0
    %4197 = vmatpush1.xpose.msra.mxu0 0.0
    %4198 = vmatprep.subr.mxu0 0.0
    %4199 = vmatpush1.xpose.msra.mxu0 0.0
    %4200 = vmatprep.subr.mxu0 0.0
    %4201 = vmatpush1.xpose.msra.mxu0 0.0
    %4202 = vmatprep.subr.mxu0 0.0
    %4203 = vmatpush1.xpose.msra.mxu0 0.0
    %4204 = vmatprep.subr.mxu0 0.0
    %4205 = vmatpush1.xpose.msra.mxu0 0.0
    %4206 = vmatprep.subr.mxu0 0.0
    %4207 = vmatpush1.xpose.msra.mxu0 %v4176
    %4208 = vmatprep.subr.mxu0 0.0
    %4209 = vmatpush1.xpose.msra.mxu0 %v4173
    %4210 = vmatprep.subr.mxu0 0.0
    %4211 = vmatpush2.xpose.msra.mxu0 0.0
    %4212 = vmatprep.subr.mxu0 0.0
    %4213 = vmatpush2.xpose.msra.mxu0 0.0
    %4214 = vmatprep.subr.mxu0 0.0
    %4215 = vmatpush2.xpose.msra.mxu0 0.0
    %4216 = vmatprep.subr.mxu0 0.0
    %4217 = vmatpush2.xpose.msra.mxu0 0.0
    %4218 = vmatprep.subr.mxu0 0.0
    %4219 = vmatpush2.xpose.msra.mxu0 0.0
    %4220 = vmatprep.subr.mxu0 0.0
    %4221 = vmatpush2.xpose.msra.mxu0 0.0
    %4222 = vmatprep.subr.mxu0 0.0
    %4223 = vmatpush2.xpose.msra.mxu0 0.0
    %4224 = vmatprep.subr.mxu0 0.0
    %4225 = vmatpush2.xpose.msra.mxu0 0.0
    %4226 = vmatprep.subr.mxu0 0.0
    %4227 = vmatpush2.xpose.msra.mxu0 0.0
    %4228 = vmatprep.subr.mxu0 0.0
    %4229 = vmatpush2.xpose.msra.mxu0 0.0
    %4230 = vmatprep.subr.mxu0 0.0
    %4231 = vmatpush2.xpose.msra.mxu0 0.0
    %4232 = vmatprep.subr.mxu0 0.0
    %4233 = vmatpush2.xpose.msra.mxu0 0.0
    %4234 = vmatprep.subr.mxu0 0.0
    %4235 = vmatpush2.xpose.msra.mxu0 0.0
    %4236 = vmatprep.subr.mxu0 0.0
    %4237 = vmatpush2.xpose.msra.mxu0 0.0
    %4238 = vmatprep.subr.mxu0 0.0
    %4239 = vmatpush2.xpose.msra.mxu0 0.0
    %4240 = vmatprep.subr.mxu0 0.0
    %4241 = vmatpush2.xpose.msra.mxu0 0.0
    %4242 = vmatprep.mubr.f32.mxu0 0.0
    %4243 = vmatmul.mubr.f32.gmra.mxu0 %v4167
    %v4244 = vpop.f32.mrf.mxu0
    %v4245 = vadd.f32 0.0, %v4244
    %v4246 = vpop.f32.mrf.mxu0
    %4247 = vmatprep.mubr.f32.mxu0 0.0
    %4248 = vmatmul.mubr.f32.gmra.mxu0 %v4170
    %v4249 = vpop.f32.mrf.mxu0
    %v4250 = vadd.f32 0.0, %v4249
    %v4251 = vpop.f32.mrf.mxu0
    %4252 = vdwg.mxu0
    %v4253 = vmul.f32 %v4245, 0.35355338
    %v4254 = vmul.f32 %v4250, 0.35355338
    %v4255 = vadd.f32 %v4253, %v399
    %v4256 = vadd.f32 %v4254, %v400
    %v4257 = vsel %vm979, %v4255, -inf
    %4258 = vmax.xlane.f32.xlu0 %v4257
    %v4259 = vpop.xlane.xlu0 %4258
    %v4260 = vsel %vm979, %v4256, -inf
    %4261 = vmax.xlane.f32.xlu0 %v4260
    %v4262 = vpop.xlane.xlu0 %4261
    %v4263 = vsub.f32 %v4255, %v4259
    %v4264 = vsub.f32 %v4256, %v4262
    %v4265 = vmul.f32 %v4263, 1.442695
    %v4266 = vpow.pop %v4265
    %v4267 = vmul.f32 %v4264, 1.442695
    %v4268 = vpow.pop %v4267
    %v4269 = vsel %vm979, %v4266, 0.0
    %4270 = vadd.xlane.f32.xlu0 %v4269
    %v4271 = vpop.xlane.xlu0 %4270
    %v4272 = vsel %vm979, %v4268, 0.0
    %4273 = vadd.xlane.f32.xlu0 %v4272
    %v4274 = vpop.xlane.xlu0 %4273
    %v4275 = vrcp.pop %v4271
    %v4276 = vrcp.pop %v4274
    %v4277 = vmul.f32 %v4266, %v4275
    %v4278 = vmul.f32 %v4268, %v4276
    %v4279 = vmul.f32 %v4158, %v885
    %v4280 = vmul.f32 %v4161, %v885
    %v4281 = vmul.f32 %v4026, %v1008
    %v4282 = vmul.f32 %v4029, %v1008
    %v4284 = vsel %vm340, %v4281, 0
    %v4287 = vsel %vm340, %v4282, 0
    %4289 = vmatprep.subr.mxu0 0.0
    %4290 = vmatpush1.xpose.msra.mxu0 0.0
    %4291 = vmatprep.subr.mxu0 0.0
    %4292 = vmatpush1.xpose.msra.mxu0 0.0
    %4293 = vmatprep.subr.mxu0 0.0
    %4294 = vmatpush1.xpose.msra.mxu0 0.0
    %4295 = vmatprep.subr.mxu0 0.0
    %4296 = vmatpush1.xpose.msra.mxu0 0.0
    %4297 = vmatprep.subr.mxu0 0.0
    %4298 = vmatpush1.xpose.msra.mxu0 0.0
    %4299 = vmatprep.subr.mxu0 0.0
    %4300 = vmatpush1.xpose.msra.mxu0 0.0
    %4301 = vmatprep.subr.mxu0 0.0
    %4302 = vmatpush1.xpose.msra.mxu0 0.0
    %4303 = vmatprep.subr.mxu0 0.0
    %4304 = vmatpush1.xpose.msra.mxu0 0.0
    %4305 = vmatprep.subr.mxu0 0.0
    %4306 = vmatpush1.xpose.msra.mxu0 0.0
    %4307 = vmatprep.subr.mxu0 0.0
    %4308 = vmatpush1.xpose.msra.mxu0 0.0
    %4309 = vmatprep.subr.mxu0 0.0
    %4310 = vmatpush1.xpose.msra.mxu0 0.0
    %4311 = vmatprep.subr.mxu0 0.0
    %4312 = vmatpush1.xpose.msra.mxu0 0.0
    %4313 = vmatprep.subr.mxu0 0.0
    %4314 = vmatpush1.xpose.msra.mxu0 0.0
    %4315 = vmatprep.subr.mxu0 0.0
    %4316 = vmatpush1.xpose.msra.mxu0 0.0
    %4317 = vmatprep.subr.mxu0 0.0
    %4318 = vmatpush1.xpose.msra.mxu0 %v4176
    %4319 = vmatprep.subr.mxu0 0.0
    %4320 = vmatpush1.xpose.msra.mxu0 %v4173
    %4321 = vmatprep.subr.mxu0 0.0
    %4322 = vmatpush2.xpose.msra.mxu0 0.0
    %4323 = vmatprep.subr.mxu0 0.0
    %4324 = vmatpush2.xpose.msra.mxu0 0.0
    %4325 = vmatprep.subr.mxu0 0.0
    %4326 = vmatpush2.xpose.msra.mxu0 0.0
    %4327 = vmatprep.subr.mxu0 0.0
    %4328 = vmatpush2.xpose.msra.mxu0 0.0
    %4329 = vmatprep.subr.mxu0 0.0
    %4330 = vmatpush2.xpose.msra.mxu0 0.0
    %4331 = vmatprep.subr.mxu0 0.0
    %4332 = vmatpush2.xpose.msra.mxu0 0.0
    %4333 = vmatprep.subr.mxu0 0.0
    %4334 = vmatpush2.xpose.msra.mxu0 0.0
    %4335 = vmatprep.subr.mxu0 0.0
    %4336 = vmatpush2.xpose.msra.mxu0 0.0
    %4337 = vmatprep.subr.mxu0 0.0
    %4338 = vmatpush2.xpose.msra.mxu0 0.0
    %4339 = vmatprep.subr.mxu0 0.0
    %4340 = vmatpush2.xpose.msra.mxu0 0.0
    %4341 = vmatprep.subr.mxu0 0.0
    %4342 = vmatpush2.xpose.msra.mxu0 0.0
    %4343 = vmatprep.subr.mxu0 0.0
    %4344 = vmatpush2.xpose.msra.mxu0 0.0
    %4345 = vmatprep.subr.mxu0 0.0
    %4346 = vmatpush2.xpose.msra.mxu0 0.0
    %4347 = vmatprep.subr.mxu0 0.0
    %4348 = vmatpush2.xpose.msra.mxu0 0.0
    %4349 = vmatprep.subr.mxu0 0.0
    %4350 = vmatpush2.xpose.msra.mxu0 0.0
    %4351 = vmatprep.subr.mxu0 0.0
    %4352 = vmatpush2.xpose.msra.mxu0 0.0
    %4353 = vmatprep.mubr.f32.mxu0 0.0
    %4354 = vmatmul.mubr.f32.gmra.mxu0 %v4284
    %v4355 = vpop.f32.mrf.mxu0
    %v4356 = vadd.f32 0.0, %v4355
    %v4357 = vpop.f32.mrf.mxu0
    %4358 = vmatprep.mubr.f32.mxu0 0.0
    %4359 = vmatmul.mubr.f32.gmra.mxu0 %v4287
    %v4360 = vpop.f32.mrf.mxu0
    %v4361 = vadd.f32 0.0, %v4360
    %v4362 = vpop.f32.mrf.mxu0
    %4363 = vdwg.mxu0
    %v4364 = vmul.f32 %v4356, 0.35355338
    %v4365 = vmul.f32 %v4361, 0.35355338
    %v4366 = vadd.f32 %v4364, %v399
    %v4367 = vadd.f32 %v4365, %v400
    %v4368 = vsel %vm979, %v4366, -inf
    %4369 = vmax.xlane.f32.xlu0 %v4368
    %v4370 = vpop.xlane.xlu0 %4369
    %v4371 = vsel %vm979, %v4367, -inf
    %4372 = vmax.xlane.f32.xlu0 %v4371
    %v4373 = vpop.xlane.xlu0 %4372
    %v4374 = vsub.f32 %v4366, %v4370
    %v4375 = vsub.f32 %v4367, %v4373
    %v4376 = vmul.f32 %v4374, 1.442695
    %v4377 = vpow.pop %v4376
    %v4378 = vmul.f32 %v4375, 1.442695
    %v4379 = vpow.pop %v4378
    %v4380 = vsel %vm979, %v4377, 0.0
    %4381 = vadd.xlane.f32.xlu0 %v4380
    %v4382 = vpop.xlane.xlu0 %4381
    %v4383 = vsel %vm979, %v4379, 0.0
    %4384 = vadd.xlane.f32.xlu0 %v4383
    %v4385 = vpop.xlane.xlu0 %4384
    %v4386 = vrcp.pop %v4382
    %v4387 = vrcp.pop %v4385
    %v4388 = vmul.f32 %v4377, %v4386
    %v4389 = vmul.f32 %v4379, %v4387
    %v4390 = vmul.f32 %v4158, %v1008
    %v4391 = vmul.f32 %v4161, %v1008
    %v4393 = vsel %vm979, %v4388, 0
    %v4396 = vsel %vm979, %v4389, 0
    %4398 = vmatprep.subr.mxu0 0.0
    %4399 = vmatpush1.msra.mxu0 0.0
    %4400 = vmatprep.subr.mxu0 0.0
    %4401 = vmatpush1.msra.mxu0 0.0
    %4402 = vmatprep.subr.mxu0 0.0
    %4403 = vmatpush1.msra.mxu0 0.0
    %4404 = vmatprep.subr.mxu0 0.0
    %4405 = vmatpush1.msra.mxu0 0.0
    %4406 = vmatprep.subr.mxu0 0.0
    %4407 = vmatpush1.msra.mxu0 0.0
    %4408 = vmatprep.subr.mxu0 0.0
    %4409 = vmatpush1.msra.mxu0 0.0
    %4410 = vmatprep.subr.mxu0 0.0
    %4411 = vmatpush1.msra.mxu0 0.0
    %4412 = vmatprep.subr.mxu0 0.0
    %4413 = vmatpush1.msra.mxu0 0.0
    %4414 = vmatprep.subr.mxu0 0.0
    %4415 = vmatpush1.msra.mxu0 0.0
    %4416 = vmatprep.subr.mxu0 0.0
    %4417 = vmatpush1.msra.mxu0 0.0
    %4418 = vmatprep.subr.mxu0 0.0
    %4419 = vmatpush1.msra.mxu0 0.0
    %4420 = vmatprep.subr.mxu0 0.0
    %4421 = vmatpush1.msra.mxu0 0.0
    %4422 = vmatprep.subr.mxu0 0.0
    %4423 = vmatpush1.msra.mxu0 0.0
    %4424 = vmatprep.subr.mxu0 0.0
    %4425 = vmatpush1.msra.mxu0 0.0
    %4426 = vmatprep.subr.mxu0 0.0
    %4427 = vmatpush1.msra.mxu0 %v4391
    %4428 = vmatprep.subr.mxu0 0.0
    %4429 = vmatpush1.msra.mxu0 %v4390
    %4430 = vmatprep.subr.mxu0 0.0
    %4431 = vmatpush2.msra.mxu0 0.0
    %4432 = vmatprep.subr.mxu0 0.0
    %4433 = vmatpush2.msra.mxu0 0.0
    %4434 = vmatprep.subr.mxu0 0.0
    %4435 = vmatpush2.msra.mxu0 0.0
    %4436 = vmatprep.subr.mxu0 0.0
    %4437 = vmatpush2.msra.mxu0 0.0
    %4438 = vmatprep.subr.mxu0 0.0
    %4439 = vmatpush2.msra.mxu0 0.0
    %4440 = vmatprep.subr.mxu0 0.0
    %4441 = vmatpush2.msra.mxu0 0.0
    %4442 = vmatprep.subr.mxu0 0.0
    %4443 = vmatpush2.msra.mxu0 0.0
    %4444 = vmatprep.subr.mxu0 0.0
    %4445 = vmatpush2.msra.mxu0 0.0
    %4446 = vmatprep.subr.mxu0 0.0
    %4447 = vmatpush2.msra.mxu0 0.0
    %4448 = vmatprep.subr.mxu0 0.0
    %4449 = vmatpush2.msra.mxu0 0.0
    %4450 = vmatprep.subr.mxu0 0.0
    %4451 = vmatpush2.msra.mxu0 0.0
    %4452 = vmatprep.subr.mxu0 0.0
    %4453 = vmatpush2.msra.mxu0 0.0
    %4454 = vmatprep.subr.mxu0 0.0
    %4455 = vmatpush2.msra.mxu0 0.0
    %4456 = vmatprep.subr.mxu0 0.0
    %4457 = vmatpush2.msra.mxu0 0.0
    %4458 = vmatprep.subr.mxu0 0.0
    %4459 = vmatpush2.msra.mxu0 0.0
    %4460 = vmatprep.subr.mxu0 0.0
    %4461 = vmatpush2.msra.mxu0 0.0
    %4462 = vmatprep.mubr.f32.mxu0 0.0
    %4463 = vmatmul.mubr.f32.gmra.mxu0 %v4393
    %v4464 = vpop.f32.mrf.mxu0
    %v4465 = vadd.f32 0.0, %v4464
    %v4466 = vpop.f32.mrf.mxu0
    %4467 = vmatprep.mubr.f32.mxu0 0.0
    %4468 = vmatmul.mubr.f32.gmra.mxu0 %v4396
    %v4469 = vpop.f32.mrf.mxu0
    %v4470 = vadd.f32 0.0, %v4469
    %v4471 = vpop.f32.mrf.mxu0
    %4472 = vdwg.mxu0
    %v4474 = vsel %vm979, %v4277, 0
    %v4477 = vsel %vm979, %v4278, 0
    %4479 = vmatprep.subr.mxu0 0.0
    %4480 = vmatpush1.msra.mxu0 0.0
    %4481 = vmatprep.subr.mxu0 0.0
    %4482 = vmatpush1.msra.mxu0 0.0
    %4483 = vmatprep.subr.mxu0 0.0
    %4484 = vmatpush1.msra.mxu0 0.0
    %4485 = vmatprep.subr.mxu0 0.0
    %4486 = vmatpush1.msra.mxu0 0.0
    %4487 = vmatprep.subr.mxu0 0.0
    %4488 = vmatpush1.msra.mxu0 0.0
    %4489 = vmatprep.subr.mxu0 0.0
    %4490 = vmatpush1.msra.mxu0 0.0
    %4491 = vmatprep.subr.mxu0 0.0
    %4492 = vmatpush1.msra.mxu0 0.0
    %4493 = vmatprep.subr.mxu0 0.0
    %4494 = vmatpush1.msra.mxu0 0.0
    %4495 = vmatprep.subr.mxu0 0.0
    %4496 = vmatpush1.msra.mxu0 0.0
    %4497 = vmatprep.subr.mxu0 0.0
    %4498 = vmatpush1.msra.mxu0 0.0
    %4499 = vmatprep.subr.mxu0 0.0
    %4500 = vmatpush1.msra.mxu0 0.0
    %4501 = vmatprep.subr.mxu0 0.0
    %4502 = vmatpush1.msra.mxu0 0.0
    %4503 = vmatprep.subr.mxu0 0.0
    %4504 = vmatpush1.msra.mxu0 0.0
    %4505 = vmatprep.subr.mxu0 0.0
    %4506 = vmatpush1.msra.mxu0 0.0
    %4507 = vmatprep.subr.mxu0 0.0
    %4508 = vmatpush1.msra.mxu0 %v4280
    %4509 = vmatprep.subr.mxu0 0.0
    %4510 = vmatpush1.msra.mxu0 %v4279
    %4511 = vmatprep.subr.mxu0 0.0
    %4512 = vmatpush2.msra.mxu0 0.0
    %4513 = vmatprep.subr.mxu0 0.0
    %4514 = vmatpush2.msra.mxu0 0.0
    %4515 = vmatprep.subr.mxu0 0.0
    %4516 = vmatpush2.msra.mxu0 0.0
    %4517 = vmatprep.subr.mxu0 0.0
    %4518 = vmatpush2.msra.mxu0 0.0
    %4519 = vmatprep.subr.mxu0 0.0
    %4520 = vmatpush2.msra.mxu0 0.0
    %4521 = vmatprep.subr.mxu0 0.0
    %4522 = vmatpush2.msra.mxu0 0.0
    %4523 = vmatprep.subr.mxu0 0.0
    %4524 = vmatpush2.msra.mxu0 0.0
    %4525 = vmatprep.subr.mxu0 0.0
    %4526 = vmatpush2.msra.mxu0 0.0
    %4527 = vmatprep.subr.mxu0 0.0
    %4528 = vmatpush2.msra.mxu0 0.0
    %4529 = vmatprep.subr.mxu0 0.0
    %4530 = vmatpush2.msra.mxu0 0.0
    %4531 = vmatprep.subr.mxu0 0.0
    %4532 = vmatpush2.msra.mxu0 0.0
    %4533 = vmatprep.subr.mxu0 0.0
    %4534 = vmatpush2.msra.mxu0 0.0
    %4535 = vmatprep.subr.mxu0 0.0
    %4536 = vmatpush2.msra.mxu0 0.0
    %4537 = vmatprep.subr.mxu0 0.0
    %4538 = vmatpush2.msra.mxu0 0.0
    %4539 = vmatprep.subr.mxu0 0.0
    %4540 = vmatpush2.msra.mxu0 0.0
    %4541 = vmatprep.subr.mxu0 0.0
    %4542 = vmatpush2.msra.mxu0 0.0
    %4543 = vmatprep.mubr.f32.mxu0 0.0
    %4544 = vmatmul.mubr.f32.gmra.mxu0 %v4474
    %v4545 = vpop.f32.mrf.mxu0
    %v4546 = vadd.f32 %v4465, %v4545
    %v4547 = vpop.f32.mrf.mxu0
    %4548 = vmatprep.mubr.f32.mxu0 0.0
    %4549 = vmatmul.mubr.f32.gmra.mxu0 %v4477
    %v4550 = vpop.f32.mrf.mxu0
    %v4551 = vadd.f32 %v4470, %v4550
    %v4552 = vpop.f32.mrf.mxu0
    %4553 = vdwg.mxu0
    %v4554 = vmul.f32 %v4026, %v1286
    %v4555 = vmul.f32 %v4029, %v1286
    %v4557 = vsel %vm340, %v4554, 0
    %v4560 = vsel %vm340, %v4555, 0
    %4562 = vmatprep.subr.mxu0 0.0
    %4563 = vmatpush1.xpose.msra.mxu0 0.0
    %4564 = vmatprep.subr.mxu0 0.0
    %4565 = vmatpush1.xpose.msra.mxu0 0.0
    %4566 = vmatprep.subr.mxu0 0.0
    %4567 = vmatpush1.xpose.msra.mxu0 0.0
    %4568 = vmatprep.subr.mxu0 0.0
    %4569 = vmatpush1.xpose.msra.mxu0 0.0
    %4570 = vmatprep.subr.mxu0 0.0
    %4571 = vmatpush1.xpose.msra.mxu0 0.0
    %4572 = vmatprep.subr.mxu0 0.0
    %4573 = vmatpush1.xpose.msra.mxu0 0.0
    %4574 = vmatprep.subr.mxu0 0.0
    %4575 = vmatpush1.xpose.msra.mxu0 0.0
    %4576 = vmatprep.subr.mxu0 0.0
    %4577 = vmatpush1.xpose.msra.mxu0 0.0
    %4578 = vmatprep.subr.mxu0 0.0
    %4579 = vmatpush1.xpose.msra.mxu0 0.0
    %4580 = vmatprep.subr.mxu0 0.0
    %4581 = vmatpush1.xpose.msra.mxu0 0.0
    %4582 = vmatprep.subr.mxu0 0.0
    %4583 = vmatpush1.xpose.msra.mxu0 0.0
    %4584 = vmatprep.subr.mxu0 0.0
    %4585 = vmatpush1.xpose.msra.mxu0 0.0
    %4586 = vmatprep.subr.mxu0 0.0
    %4587 = vmatpush1.xpose.msra.mxu0 0.0
    %4588 = vmatprep.subr.mxu0 0.0
    %4589 = vmatpush1.xpose.msra.mxu0 0.0
    %4590 = vmatprep.subr.mxu0 0.0
    %4591 = vmatpush1.xpose.msra.mxu0 %v4176
    %4592 = vmatprep.subr.mxu0 0.0
    %4593 = vmatpush1.xpose.msra.mxu0 %v4173
    %4594 = vmatprep.subr.mxu0 0.0
    %4595 = vmatpush2.xpose.msra.mxu0 0.0
    %4596 = vmatprep.subr.mxu0 0.0
    %4597 = vmatpush2.xpose.msra.mxu0 0.0
    %4598 = vmatprep.subr.mxu0 0.0
    %4599 = vmatpush2.xpose.msra.mxu0 0.0
    %4600 = vmatprep.subr.mxu0 0.0
    %4601 = vmatpush2.xpose.msra.mxu0 0.0
    %4602 = vmatprep.subr.mxu0 0.0
    %4603 = vmatpush2.xpose.msra.mxu0 0.0
    %4604 = vmatprep.subr.mxu0 0.0
    %4605 = vmatpush2.xpose.msra.mxu0 0.0
    %4606 = vmatprep.subr.mxu0 0.0
    %4607 = vmatpush2.xpose.msra.mxu0 0.0
    %4608 = vmatprep.subr.mxu0 0.0
    %4609 = vmatpush2.xpose.msra.mxu0 0.0
    %4610 = vmatprep.subr.mxu0 0.0
    %4611 = vmatpush2.xpose.msra.mxu0 0.0
    %4612 = vmatprep.subr.mxu0 0.0
    %4613 = vmatpush2.xpose.msra.mxu0 0.0
    %4614 = vmatprep.subr.mxu0 0.0
    %4615 = vmatpush2.xpose.msra.mxu0 0.0
    %4616 = vmatprep.subr.mxu0 0.0
    %4617 = vmatpush2.xpose.msra.mxu0 0.0
    %4618 = vmatprep.subr.mxu0 0.0
    %4619 = vmatpush2.xpose.msra.mxu0 0.0
    %4620 = vmatprep.subr.mxu0 0.0
    %4621 = vmatpush2.xpose.msra.mxu0 0.0
    %4622 = vmatprep.subr.mxu0 0.0
    %4623 = vmatpush2.xpose.msra.mxu0 0.0
    %4624 = vmatprep.subr.mxu0 0.0
    %4625 = vmatpush2.xpose.msra.mxu0 0.0
    %4626 = vmatprep.mubr.f32.mxu0 0.0
    %4627 = vmatmul.mubr.f32.gmra.mxu0 %v4557
    %v4628 = vpop.f32.mrf.mxu0
    %v4629 = vadd.f32 0.0, %v4628
    %v4630 = vpop.f32.mrf.mxu0
    %4631 = vmatprep.mubr.f32.mxu0 0.0
    %4632 = vmatmul.mubr.f32.gmra.mxu0 %v4560
    %v4633 = vpop.f32.mrf.mxu0
    %v4634 = vadd.f32 0.0, %v4633
    %v4635 = vpop.f32.mrf.mxu0
    %4636 = vdwg.mxu0
    %v4637 = vmul.f32 %v4629, 0.35355338
    %v4638 = vmul.f32 %v4634, 0.35355338
    %v4639 = vadd.f32 %v4637, %v399
    %v4640 = vadd.f32 %v4638, %v400
    %v4641 = vsel %vm979, %v4639, -inf
    %4642 = vmax.xlane.f32.xlu0 %v4641
    %v4643 = vpop.xlane.xlu0 %4642
    %v4644 = vsel %vm979, %v4640, -inf
    %4645 = vmax.xlane.f32.xlu0 %v4644
    %v4646 = vpop.xlane.xlu0 %4645
    %v4647 = vsub.f32 %v4639, %v4643
    %v4648 = vsub.f32 %v4640, %v4646
    %v4649 = vmul.f32 %v4647, 1.442695
    %v4650 = vpow.pop %v4649
    %v4651 = vmul.f32 %v4648, 1.442695
    %v4652 = vpow.pop %v4651
    %v4653 = vsel %vm979, %v4650, 0.0
    %4654 = vadd.xlane.f32.xlu0 %v4653
    %v4655 = vpop.xlane.xlu0 %4654
    %v4656 = vsel %vm979, %v4652, 0.0
    %4657 = vadd.xlane.f32.xlu0 %v4656
    %v4658 = vpop.xlane.xlu0 %4657
    %v4659 = vrcp.pop %v4655
    %v4660 = vrcp.pop %v4658
    %v4661 = vmul.f32 %v4650, %v4659
    %v4662 = vmul.f32 %v4652, %v4660
    %v4663 = vmul.f32 %v4158, %v1286
    %v4664 = vmul.f32 %v4161, %v1286
    %v4666 = vsel %vm979, %v4661, 0
    %v4669 = vsel %vm979, %v4662, 0
    %4671 = vmatprep.subr.mxu0 0.0
    %4672 = vmatpush1.msra.mxu0 0.0
    %4673 = vmatprep.subr.mxu0 0.0
    %4674 = vmatpush1.msra.mxu0 0.0
    %4675 = vmatprep.subr.mxu0 0.0
    %4676 = vmatpush1.msra.mxu0 0.0
    %4677 = vmatprep.subr.mxu0 0.0
    %4678 = vmatpush1.msra.mxu0 0.0
    %4679 = vmatprep.subr.mxu0 0.0
    %4680 = vmatpush1.msra.mxu0 0.0
    %4681 = vmatprep.subr.mxu0 0.0
    %4682 = vmatpush1.msra.mxu0 0.0
    %4683 = vmatprep.subr.mxu0 0.0
    %4684 = vmatpush1.msra.mxu0 0.0
    %4685 = vmatprep.subr.mxu0 0.0
    %4686 = vmatpush1.msra.mxu0 0.0
    %4687 = vmatprep.subr.mxu0 0.0
    %4688 = vmatpush1.msra.mxu0 0.0
    %4689 = vmatprep.subr.mxu0 0.0
    %4690 = vmatpush1.msra.mxu0 0.0
    %4691 = vmatprep.subr.mxu0 0.0
    %4692 = vmatpush1.msra.mxu0 0.0
    %4693 = vmatprep.subr.mxu0 0.0
    %4694 = vmatpush1.msra.mxu0 0.0
    %4695 = vmatprep.subr.mxu0 0.0
    %4696 = vmatpush1.msra.mxu0 0.0
    %4697 = vmatprep.subr.mxu0 0.0
    %4698 = vmatpush1.msra.mxu0 0.0
    %4699 = vmatprep.subr.mxu0 0.0
    %4700 = vmatpush1.msra.mxu0 %v4664
    %4701 = vmatprep.subr.mxu0 0.0
    %4702 = vmatpush1.msra.mxu0 %v4663
    %4703 = vmatprep.subr.mxu0 0.0
    %4704 = vmatpush2.msra.mxu0 0.0
    %4705 = vmatprep.subr.mxu0 0.0
    %4706 = vmatpush2.msra.mxu0 0.0
    %4707 = vmatprep.subr.mxu0 0.0
    %4708 = vmatpush2.msra.mxu0 0.0
    %4709 = vmatprep.subr.mxu0 0.0
    %4710 = vmatpush2.msra.mxu0 0.0
    %4711 = vmatprep.subr.mxu0 0.0
    %4712 = vmatpush2.msra.mxu0 0.0
    %4713 = vmatprep.subr.mxu0 0.0
    %4714 = vmatpush2.msra.mxu0 0.0
    %4715 = vmatprep.subr.mxu0 0.0
    %4716 = vmatpush2.msra.mxu0 0.0
    %4717 = vmatprep.subr.mxu0 0.0
    %4718 = vmatpush2.msra.mxu0 0.0
    %4719 = vmatprep.subr.mxu0 0.0
    %4720 = vmatpush2.msra.mxu0 0.0
    %4721 = vmatprep.subr.mxu0 0.0
    %4722 = vmatpush2.msra.mxu0 0.0
    %4723 = vmatprep.subr.mxu0 0.0
    %4724 = vmatpush2.msra.mxu0 0.0
    %4725 = vmatprep.subr.mxu0 0.0
    %4726 = vmatpush2.msra.mxu0 0.0
    %4727 = vmatprep.subr.mxu0 0.0
    %4728 = vmatpush2.msra.mxu0 0.0
    %4729 = vmatprep.subr.mxu0 0.0
    %4730 = vmatpush2.msra.mxu0 0.0
    %4731 = vmatprep.subr.mxu0 0.0
    %4732 = vmatpush2.msra.mxu0 0.0
    %4733 = vmatprep.subr.mxu0 0.0
    %4734 = vmatpush2.msra.mxu0 0.0
    %4735 = vmatprep.mubr.f32.mxu0 0.0
    %4736 = vmatmul.mubr.f32.gmra.mxu0 %v4666
    %v4737 = vpop.f32.mrf.mxu0
    %v4738 = vadd.f32 0.0, %v4737
    %v4739 = vpop.f32.mrf.mxu0
    %4740 = vmatprep.mubr.f32.mxu0 0.0
    %4741 = vmatmul.mubr.f32.gmra.mxu0 %v4669
    %v4742 = vpop.f32.mrf.mxu0
    %v4743 = vadd.f32 0.0, %v4742
    %v4744 = vpop.f32.mrf.mxu0
    %4745 = vdwg.mxu0
    %v4746 = vadd.f32 %v4546, %v4738
    %v4747 = vadd.f32 %v4551, %v4743
    %v4748 = vmul.f32 %v4026, %v1485
    %v4749 = vmul.f32 %v4029, %v1485
    %v4751 = vsel %vm340, %v4748, 0
    %v4754 = vsel %vm340, %v4749, 0
    %4756 = vmatprep.subr.mxu0 0.0
    %4757 = vmatpush1.xpose.msra.mxu0 0.0
    %4758 = vmatprep.subr.mxu0 0.0
    %4759 = vmatpush1.xpose.msra.mxu0 0.0
    %4760 = vmatprep.subr.mxu0 0.0
    %4761 = vmatpush1.xpose.msra.mxu0 0.0
    %4762 = vmatprep.subr.mxu0 0.0
    %4763 = vmatpush1.xpose.msra.mxu0 0.0
    %4764 = vmatprep.subr.mxu0 0.0
    %4765 = vmatpush1.xpose.msra.mxu0 0.0
    %4766 = vmatprep.subr.mxu0 0.0
    %4767 = vmatpush1.xpose.msra.mxu0 0.0
    %4768 = vmatprep.subr.mxu0 0.0
    %4769 = vmatpush1.xpose.msra.mxu0 0.0
    %4770 = vmatprep.subr.mxu0 0.0
    %4771 = vmatpush1.xpose.msra.mxu0 0.0
    %4772 = vmatprep.subr.mxu0 0.0
    %4773 = vmatpush1.xpose.msra.mxu0 0.0
    %4774 = vmatprep.subr.mxu0 0.0
    %4775 = vmatpush1.xpose.msra.mxu0 0.0
    %4776 = vmatprep.subr.mxu0 0.0
    %4777 = vmatpush1.xpose.msra.mxu0 0.0
    %4778 = vmatprep.subr.mxu0 0.0
    %4779 = vmatpush1.xpose.msra.mxu0 0.0
    %4780 = vmatprep.subr.mxu0 0.0
    %4781 = vmatpush1.xpose.msra.mxu0 0.0
    %4782 = vmatprep.subr.mxu0 0.0
    %4783 = vmatpush1.xpose.msra.mxu0 0.0
    %4784 = vmatprep.subr.mxu0 0.0
    %4785 = vmatpush1.xpose.msra.mxu0 %v4176
    %4786 = vmatprep.subr.mxu0 0.0
    %4787 = vmatpush1.xpose.msra.mxu0 %v4173
    %4788 = vmatprep.subr.mxu0 0.0
    %4789 = vmatpush2.xpose.msra.mxu0 0.0
    %4790 = vmatprep.subr.mxu0 0.0
    %4791 = vmatpush2.xpose.msra.mxu0 0.0
    %4792 = vmatprep.subr.mxu0 0.0
    %4793 = vmatpush2.xpose.msra.mxu0 0.0
    %4794 = vmatprep.subr.mxu0 0.0
    %4795 = vmatpush2.xpose.msra.mxu0 0.0
    %4796 = vmatprep.subr.mxu0 0.0
    %4797 = vmatpush2.xpose.msra.mxu0 0.0
    %4798 = vmatprep.subr.mxu0 0.0
    %4799 = vmatpush2.xpose.msra.mxu0 0.0
    %4800 = vmatprep.subr.mxu0 0.0
    %4801 = vmatpush2.xpose.msra.mxu0 0.0
    %4802 = vmatprep.subr.mxu0 0.0
    %4803 = vmatpush2.xpose.msra.mxu0 0.0
    %4804 = vmatprep.subr.mxu0 0.0
    %4805 = vmatpush2.xpose.msra.mxu0 0.0
    %4806 = vmatprep.subr.mxu0 0.0
    %4807 = vmatpush2.xpose.msra.mxu0 0.0
    %4808 = vmatprep.subr.mxu0 0.0
    %4809 = vmatpush2.xpose.msra.mxu0 0.0
    %4810 = vmatprep.subr.mxu0 0.0
    %4811 = vmatpush2.xpose.msra.mxu0 0.0
    %4812 = vmatprep.subr.mxu0 0.0
    %4813 = vmatpush2.xpose.msra.mxu0 0.0
    %4814 = vmatprep.subr.mxu0 0.0
    %4815 = vmatpush2.xpose.msra.mxu0 0.0
    %4816 = vmatprep.subr.mxu0 0.0
    %4817 = vmatpush2.xpose.msra.mxu0 0.0
    %4818 = vmatprep.subr.mxu0 0.0
    %4819 = vmatpush2.xpose.msra.mxu0 0.0
    %4820 = vmatprep.mubr.f32.mxu0 0.0
    %4821 = vmatmul.mubr.f32.gmra.mxu0 %v4751
    %v4822 = vpop.f32.mrf.mxu0
    %v4823 = vadd.f32 0.0, %v4822
    %v4824 = vpop.f32.mrf.mxu0
    %4825 = vmatprep.mubr.f32.mxu0 0.0
    %4826 = vmatmul.mubr.f32.gmra.mxu0 %v4754
    %v4827 = vpop.f32.mrf.mxu0
    %v4828 = vadd.f32 0.0, %v4827
    %v4829 = vpop.f32.mrf.mxu0
    %4830 = vdwg.mxu0
    %v4831 = vmul.f32 %v4823, 0.35355338
    %v4832 = vmul.f32 %v4828, 0.35355338
    %v4833 = vadd.f32 %v4831, %v399
    %v4834 = vadd.f32 %v4832, %v400
    %v4835 = vsel %vm979, %v4833, -inf
    %4836 = vmax.xlane.f32.xlu0 %v4835
    %v4837 = vpop.xlane.xlu0 %4836
    %v4838 = vsel %vm979, %v4834, -inf
    %4839 = vmax.xlane.f32.xlu0 %v4838
    %v4840 = vpop.xlane.xlu0 %4839
    %v4841 = vsub.f32 %v4833, %v4837
    %v4842 = vsub.f32 %v4834, %v4840
    %v4843 = vmul.f32 %v4841, 1.442695
    %v4844 = vpow.pop %v4843
    %v4845 = vmul.f32 %v4842, 1.442695
    %v4846 = vpow.pop %v4845
    %v4847 = vsel %vm979, %v4844, 0.0
    %4848 = vadd.xlane.f32.xlu0 %v4847
    %v4849 = vpop.xlane.xlu0 %4848
    %v4850 = vsel %vm979, %v4846, 0.0
    %4851 = vadd.xlane.f32.xlu0 %v4850
    %v4852 = vpop.xlane.xlu0 %4851
    %v4853 = vrcp.pop %v4849
    %v4854 = vrcp.pop %v4852
    %v4855 = vmul.f32 %v4844, %v4853
    %v4856 = vmul.f32 %v4846, %v4854
    %v4857 = vmul.f32 %v4158, %v1485
    %v4858 = vmul.f32 %v4161, %v1485
    %v4860 = vsel %vm979, %v4855, 0
    %v4863 = vsel %vm979, %v4856, 0
    %4865 = vmatprep.subr.mxu0 0.0
    %4866 = vmatpush1.msra.mxu0 0.0
    %4867 = vmatprep.subr.mxu0 0.0
    %4868 = vmatpush1.msra.mxu0 0.0
    %4869 = vmatprep.subr.mxu0 0.0
    %4870 = vmatpush1.msra.mxu0 0.0
    %4871 = vmatprep.subr.mxu0 0.0
    %4872 = vmatpush1.msra.mxu0 0.0
    %4873 = vmatprep.subr.mxu0 0.0
    %4874 = vmatpush1.msra.mxu0 0.0
    %4875 = vmatprep.subr.mxu0 0.0
    %4876 = vmatpush1.msra.mxu0 0.0
    %4877 = vmatprep.subr.mxu0 0.0
    %4878 = vmatpush1.msra.mxu0 0.0
    %4879 = vmatprep.subr.mxu0 0.0
    %4880 = vmatpush1.msra.mxu0 0.0
    %4881 = vmatprep.subr.mxu0 0.0
    %4882 = vmatpush1.msra.mxu0 0.0
    %4883 = vmatprep.subr.mxu0 0.0
    %4884 = vmatpush1.msra.mxu0 0.0
    %4885 = vmatprep.subr.mxu0 0.0
    %4886 = vmatpush1.msra.mxu0 0.0
    %4887 = vmatprep.subr.mxu0 0.0
    %4888 = vmatpush1.msra.mxu0 0.0
    %4889 = vmatprep.subr.mxu0 0.0
    %4890 = vmatpush1.msra.mxu0 0.0
    %4891 = vmatprep.subr.mxu0 0.0
    %4892 = vmatpush1.msra.mxu0 0.0
    %4893 = vmatprep.subr.mxu0 0.0
    %4894 = vmatpush1.msra.mxu0 %v4858
    %4895 = vmatprep.subr.mxu0 0.0
    %4896 = vmatpush1.msra.mxu0 %v4857
    %4897 = vmatprep.subr.mxu0 0.0
    %4898 = vmatpush2.msra.mxu0 0.0
    %4899 = vmatprep.subr.mxu0 0.0
    %4900 = vmatpush2.msra.mxu0 0.0
    %4901 = vmatprep.subr.mxu0 0.0
    %4902 = vmatpush2.msra.mxu0 0.0
    %4903 = vmatprep.subr.mxu0 0.0
    %4904 = vmatpush2.msra.mxu0 0.0
    %4905 = vmatprep.subr.mxu0 0.0
    %4906 = vmatpush2.msra.mxu0 0.0
    %4907 = vmatprep.subr.mxu0 0.0
    %4908 = vmatpush2.msra.mxu0 0.0
    %4909 = vmatprep.subr.mxu0 0.0
    %4910 = vmatpush2.msra.mxu0 0.0
    %4911 = vmatprep.subr.mxu0 0.0
    %4912 = vmatpush2.msra.mxu0 0.0
    %4913 = vmatprep.subr.mxu0 0.0
    %4914 = vmatpush2.msra.mxu0 0.0
    %4915 = vmatprep.subr.mxu0 0.0
    %4916 = vmatpush2.msra.mxu0 0.0
    %4917 = vmatprep.subr.mxu0 0.0
    %4918 = vmatpush2.msra.mxu0 0.0
    %4919 = vmatprep.subr.mxu0 0.0
    %4920 = vmatpush2.msra.mxu0 0.0
    %4921 = vmatprep.subr.mxu0 0.0
    %4922 = vmatpush2.msra.mxu0 0.0
    %4923 = vmatprep.subr.mxu0 0.0
    %4924 = vmatpush2.msra.mxu0 0.0
    %4925 = vmatprep.subr.mxu0 0.0
    %4926 = vmatpush2.msra.mxu0 0.0
    %4927 = vmatprep.subr.mxu0 0.0
    %4928 = vmatpush2.msra.mxu0 0.0
    %4929 = vmatprep.mubr.f32.mxu0 0.0
    %4930 = vmatmul.mubr.f32.gmra.mxu0 %v4860
    %v4931 = vpop.f32.mrf.mxu0
    %v4932 = vadd.f32 0.0, %v4931
    %v4933 = vpop.f32.mrf.mxu0
    %4934 = vmatprep.mubr.f32.mxu0 0.0
    %4935 = vmatmul.mubr.f32.gmra.mxu0 %v4863
    %v4936 = vpop.f32.mrf.mxu0
    %v4937 = vadd.f32 0.0, %v4936
    %v4938 = vpop.f32.mrf.mxu0
    %4939 = vdwg.mxu0
    %v4940 = vadd.f32 %v4746, %v4932
    %v4941 = vadd.f32 %v4747, %v4937
    %v4942 = vpack.c.bf16 %v4941, %v4940
    %s4943 = scalar_lea.vmem %s27, 32
    %v4944 = vld [vmem:[%s4943] sm:$0xf]
    %v4945 = vld [vmem:[%s4943 + $0x4] sm:$0xf]
    %v4946 = vld [vmem:[%s4943 + $0x8] sm:$0xf]
    %v4947 = vld [vmem:[%s4943 + $0xc] sm:$0xf]
    %s4948 = scalar_lea.vmem %s29, 2
    %v4949 = vld [vmem:[%s4948] sm:$0x1]
    %v4951 = vlaneseq
    %v4952 = vshrl.u32 %v4951, 7
    %v4953 = vsub.s32 0, %v4952
    %v4954 = vrot.slane %v4949, %v4953
    %v4960 = vunpack.c.l.b16 %v4944
    %v4961 = vunpack.c.l.b16 %v4945
    %v4962 = vunpack.c.l.b16 %v4946
    %v4963 = vunpack.c.l.b16 %v4947
    %v4964 = vpack.c.b16 %v4961, %v4960
    %v4965 = vpack.c.b16 %v4963, %v4962
    %v4969 = vsel %vm340, %v4942, 0
    %4971 = vmatprep.subr.bf16.mxu0 0
    %4972 = vmatpush1.bf16.msra.mxu0 0
    %4973 = vmatprep.subr.bf16.mxu0 0
    %4974 = vmatpush1.bf16.msra.mxu0 0
    %4975 = vmatprep.subr.bf16.mxu0 0
    %4976 = vmatpush1.bf16.msra.mxu0 0
    %4977 = vmatprep.subr.bf16.mxu0 0
    %4978 = vmatpush1.bf16.msra.mxu0 0
    %4979 = vmatprep.subr.bf16.mxu0 0
    %4980 = vmatpush1.bf16.msra.mxu0 0
    %4981 = vmatprep.subr.bf16.mxu0 0
    %4982 = vmatpush1.bf16.msra.mxu0 0
    %4983 = vmatprep.subr.bf16.mxu0 0
    %4984 = vmatpush1.bf16.msra.mxu0 %v4965
    %4985 = vmatprep.subr.bf16.mxu0 0
    %4986 = vmatpush1.bf16.msra.mxu0 %v4964
    %4987 = vmatprep.subr.bf16.mxu0 0
    %4988 = vmatpush2.bf16.msra.mxu0 0
    %4989 = vmatprep.subr.bf16.mxu0 0
    %4990 = vmatpush2.bf16.msra.mxu0 0
    %4991 = vmatprep.subr.bf16.mxu0 0
    %4992 = vmatpush2.bf16.msra.mxu0 0
    %4993 = vmatprep.subr.bf16.mxu0 0
    %4994 = vmatpush2.bf16.msra.mxu0 0
    %4995 = vmatprep.subr.bf16.mxu0 0
    %4996 = vmatpush2.bf16.msra.mxu0 0
    %4997 = vmatprep.subr.bf16.mxu0 0
    %4998 = vmatpush2.bf16.msra.mxu0 0
    %4999 = vmatprep.subr.bf16.mxu0 0
    %5000 = vmatpush2.bf16.msra.mxu0 0
    %5001 = vmatprep.subr.bf16.mxu0 0
    %5002 = vmatpush2.bf16.msra.mxu0 0
    %5003 = vmatprep.mubr.bf16.mxu0 0
    %5004 = vmatmul.mubr.bf16.gmra.mxu0 %v4969
    %v5005 = vpop.f32.mrf.mxu0
    %v5006 = vadd.f32 %v4954, %v5005
    %v5007 = vpop.f32.mrf.mxu0
    %v5008 = vpop.f32.mrf.mxu0
    %v5009 = vadd.f32 %v4954, %v5008
    %v5010 = vpop.f32.mrf.mxu0
    %5011 = vdwg.mxu0
    %v5012 = vadd.f32 %v3644, %v5006
    %v5013 = vadd.f32 %v3645, %v5009
    %s5014 = scalar_lea.vmem [#allocation4], 2
    %v5015 = vld [vmem:[%s5014] sm:$0x1]
    %s5016 = scalar_lea.vmem [#allocation6], 2
    %v5017 = vld [vmem:[%s5016] sm:$0x1]
    %v5018 = vsel %vm340, %v5012, 0.0
    %5019 = vadd.xlane.f32.xlu0 %v5018
    %v5020 = vpop.xlane.xlu0 %5019
    %v5021 = vsel %vm340, %v5013, 0.0
    %5022 = vadd.xlane.f32.xlu0 %v5021
    %v5023 = vpop.xlane.xlu0 %5022
    %v5024 = vmul.f32 %v5020, %v347
    %v5025 = vmul.f32 %v5023, %v347
    %v5026 = vsub.f32 %v5012, %v5024
    %v5027 = vsub.f32 %v5013, %v5025
    %v5028 = vmul.f32 %v5026, %v5026
    %v5029 = vmul.f32 %v5027, %v5027
    %v5030 = vsel %vm340, %v5028, 0.0
    %5031 = vadd.xlane.f32.xlu0 %v5030
    %v5032 = vpop.xlane.xlu0 %5031
    %v5033 = vsel %vm340, %v5029, 0.0
    %5034 = vadd.xlane.f32.xlu0 %v5033
    %v5035 = vpop.xlane.xlu0 %5034
    %v5036 = vmul.f32 %v5032, %v347
    %v5037 = vmul.f32 %v5035, %v347
    %v5038 = vadd.f32 %v5036, 1e-12
    %v5039 = vadd.f32 %v5037, 1e-12
    %v5040 = vrsqrt.pop %v5038
    %v5041 = vrsqrt.pop %v5039
    %v5042 = vmul.f32 %v5026, %v5040
    %v5043 = vmul.f32 %v5027, %v5041
    %v5045 = vlaneseq
    %v5046 = vshrl.u32 %v5045, 7
    %v5047 = vsub.s32 0, %v5046
    %v5048 = vrot.slane %v5015, %v5047
    %v5050 = vmul.f32 %v5042, %v5048
    %v5051 = vmul.f32 %v5043, %v5048
    %v5053 = vlaneseq
    %v5054 = vshrl.u32 %v5053, 7
    %v5055 = vsub.s32 0, %v5054
    %v5056 = vrot.slane %v5017, %v5055
    %v5058 = vadd.f32 %v5050, %v5056
    %v5059 = vadd.f32 %v5051, %v5056
    %v5060 = vpack.c.bf16 %v5059, %v5058
    %s5061 = scalar_lea.vmem %s31, 32
    %v5062 = vld [vmem:[%s5061] sm:$0xf]
    %v5063 = vld [vmem:[%s5061 + $0x4] sm:$0xf]
    %v5064 = vld [vmem:[%s5061 + $0x8] sm:$0xf]
    %v5065 = vld [vmem:[%s5061 + $0xc] sm:$0xf]
    %s5066 = scalar_lea.vmem %s33, 2
    %v5067 = vld [vmem:[%s5066] sm:$0x1]
    %v5069 = vlaneseq
    %v5070 = vshrl.u32 %v5069, 7
    %v5071 = vsub.s32 0, %v5070
    %v5072 = vrot.slane %v5067, %v5071
    %v5078 = vunpack.c.l.b16 %v5062
    %v5079 = vunpack.c.l.b16 %v5063
    %v5080 = vunpack.c.l.b16 %v5064
    %v5081 = vunpack.c.l.b16 %v5065
    %v5082 = vpack.c.b16 %v5079, %v5078
    %v5083 = vpack.c.b16 %v5081, %v5080
    %v5087 = vsel %vm340, %v5060, 0
    %5089 = vmatprep.subr.bf16.mxu0 0
    %5090 = vmatpush1.bf16.msra.mxu0 0
    %5091 = vmatprep.subr.bf16.mxu0 0
    %5092 = vmatpush1.bf16.msra.mxu0 0
    %5093 = vmatprep.subr.bf16.mxu0 0
    %5094 = vmatpush1.bf16.msra.mxu0 0
    %5095 = vmatprep.subr.bf16.mxu0 0
    %5096 = vmatpush1.bf16.msra.mxu0 0
    %5097 = vmatprep.subr.bf16.mxu0 0
    %5098 = vmatpush1.bf16.msra.mxu0 0
    %5099 = vmatprep.subr.bf16.mxu0 0
    %5100 = vmatpush1.bf16.msra.mxu0 0
    %5101 = vmatprep.subr.bf16.mxu0 0
    %5102 = vmatpush1.bf16.msra.mxu0 %v5083
    %5103 = vmatprep.subr.bf16.mxu0 0
    %5104 = vmatpush1.bf16.msra.mxu0 %v5082
    %5105 = vmatprep.subr.bf16.mxu0 0
    %5106 = vmatpush2.bf16.msra.mxu0 0
    %5107 = vmatprep.subr.bf16.mxu0 0
    %5108 = vmatpush2.bf16.msra.mxu0 0
    %5109 = vmatprep.subr.bf16.mxu0 0
    %5110 = vmatpush2.bf16.msra.mxu0 0
    %5111 = vmatprep.subr.bf16.mxu0 0
    %5112 = vmatpush2.bf16.msra.mxu0 0
    %5113 = vmatprep.subr.bf16.mxu0 0
    %5114 = vmatpush2.bf16.msra.mxu0 0
    %5115 = vmatprep.subr.bf16.mxu0 0
    %5116 = vmatpush2.bf16.msra.mxu0 0
    %5117 = vmatprep.subr.bf16.mxu0 0
    %5118 = vmatpush2.bf16.msra.mxu0 0
    %5119 = vmatprep.subr.bf16.mxu0 0
    %5120 = vmatpush2.bf16.msra.mxu0 0
    %5121 = vmatprep.mubr.bf16.mxu0 0
    %5122 = vmatmul.mubr.bf16.gmra.mxu0 %v5087
    %v5123 = vpop.f32.mrf.mxu0
    %v5124 = vadd.f32 %v5072, %v5123
    %v5125 = vpop.f32.mrf.mxu0
    %v5126 = vpop.f32.mrf.mxu0
    %v5127 = vadd.f32 %v5072, %v5126
    %v5128 = vpop.f32.mrf.mxu0
    %5129 = vdwg.mxu0
    %v5130 = vmul.f32 %v5124, 0.5
    %v5131 = vmul.f32 %v5127, 0.5
    %v5132 = vmul.f32 %v5124, 0.044715
    %v5133 = vmul.f32 %v5127, 0.044715
    %v5134 = vmul.f32 %v5132, %v5124
    %v5135 = vmul.f32 %v5133, %v5127
    %v5136 = vmul.f32 %v5134, %v5124
    %v5137 = vmul.f32 %v5135, %v5127
    %v5138 = vadd.f32 %v5124, %v5136
    %v5139 = vadd.f32 %v5127, %v5137
    %v5140 = vmul.f32 %v5138, 0.7978846
    %v5141 = vmul.f32 %v5139, 0.7978846
    %v5142 = vtanh.pop %v5140
    %v5143 = vtanh.pop %v5141
    %v5144 = vadd.f32 %v5142, 1.0
    %v5145 = vadd.f32 %v5143, 1.0
    %v5146 = vmul.f32 %v5130, %v5144
    %v5147 = vmul.f32 %v5131, %v5145
    %v5148 = vpack.c.bf16 %v5147, %v5146
    %s5149 = scalar_lea.vmem %s35, 64
    %v5150 = vld [vmem:[%s5149] sm:$0xf]
    %v5151 = vld [vmem:[%s5149 + $0x4] sm:$0xf]
    %v5152 = vld [vmem:[%s5149 + $0x8] sm:$0xf]
    %v5153 = vld [vmem:[%s5149 + $0xc] sm:$0xf]
    %v5154 = vld [vmem:[%s5149 + $0x10] sm:$0xf]
    %v5155 = vld [vmem:[%s5149 + $0x14] sm:$0xf]
    %v5156 = vld [vmem:[%s5149 + $0x18] sm:$0xf]
    %v5157 = vld [vmem:[%s5149 + $0x1c] sm:$0xf]
    %s5158 = scalar_lea.vmem %s37, 2
    %v5159 = vld [vmem:[%s5158] sm:$0x1]
    %v5161 = vlaneseq
    %v5162 = vshrl.u32 %v5161, 7
    %v5163 = vsub.s32 0, %v5162
    %v5164 = vrot.slane %v5159, %v5163
    %v5174 = vunpack.c.l.b16 %v5150
    %v5175 = vunpack.c.l.b16 %v5151
    %v5176 = vunpack.c.l.b16 %v5152
    %v5177 = vunpack.c.l.b16 %v5153
    %v5178 = vunpack.c.l.b16 %v5154
    %v5179 = vunpack.c.l.b16 %v5155
    %v5180 = vunpack.c.l.b16 %v5156
    %v5181 = vunpack.c.l.b16 %v5157
    %v5182 = vpack.c.b16 %v5175, %v5174
    %v5183 = vpack.c.b16 %v5177, %v5176
    %v5184 = vpack.c.b16 %v5179, %v5178
    %v5185 = vpack.c.b16 %v5181, %v5180
    %v5191 = vsel %vm256, %v5148, 0
    %5193 = vmatprep.subr.bf16.mxu0 0
    %5194 = vmatpush1.bf16.msra.mxu0 0
    %5195 = vmatprep.subr.bf16.mxu0 0
    %5196 = vmatpush1.bf16.msra.mxu0 0
    %5197 = vmatprep.subr.bf16.mxu0 0
    %5198 = vmatpush1.bf16.msra.mxu0 0
    %5199 = vmatprep.subr.bf16.mxu0 0
    %5200 = vmatpush1.bf16.msra.mxu0 0
    %5201 = vmatprep.subr.bf16.mxu0 0
    %5202 = vmatpush1.bf16.msra.mxu0 %v5185
    %5203 = vmatprep.subr.bf16.mxu0 0
    %5204 = vmatpush1.bf16.msra.mxu0 %v5184
    %5205 = vmatprep.subr.bf16.mxu0 0
    %5206 = vmatpush1.bf16.msra.mxu0 %v5183
    %5207 = vmatprep.subr.bf16.mxu0 0
    %5208 = vmatpush1.bf16.msra.mxu0 %v5182
    %5209 = vmatprep.subr.bf16.mxu0 0
    %5210 = vmatpush2.bf16.msra.mxu0 0
    %5211 = vmatprep.subr.bf16.mxu0 0
    %5212 = vmatpush2.bf16.msra.mxu0 0
    %5213 = vmatprep.subr.bf16.mxu0 0
    %5214 = vmatpush2.bf16.msra.mxu0 0
    %5215 = vmatprep.subr.bf16.mxu0 0
    %5216 = vmatpush2.bf16.msra.mxu0 0
    %5217 = vmatprep.subr.bf16.mxu0 0
    %5218 = vmatpush2.bf16.msra.mxu0 0
    %5219 = vmatprep.subr.bf16.mxu0 0
    %5220 = vmatpush2.bf16.msra.mxu0 0
    %5221 = vmatprep.subr.bf16.mxu0 0
    %5222 = vmatpush2.bf16.msra.mxu0 0
    %5223 = vmatprep.subr.bf16.mxu0 0
    %5224 = vmatpush2.bf16.msra.mxu0 0
    %5225 = vmatprep.mubr.bf16.mxu0 0
    %5226 = vmatmul.mubr.bf16.gmra.mxu0 %v5191
    %v5227 = vpop.f32.mrf.mxu0
    %v5228 = vadd.f32 %v5164, %v5227
    %v5229 = vpop.f32.mrf.mxu0
    %v5230 = vpop.f32.mrf.mxu0
    %v5231 = vadd.f32 %v5164, %v5230
    %v5232 = vpop.f32.mrf.mxu0
    %5233 = vdwg.mxu0
    %v5234 = vadd.f32 %v5058, %v5228
    %v5235 = vadd.f32 %v5059, %v5231
    %s5236 = scalar_lea.vmem [#allocation8], 2
    %v5237 = vld [vmem:[%s5236] sm:$0x1]
    %s5238 = scalar_lea.vmem [#allocation9], 2
    %v5239 = vld [vmem:[%s5238] sm:$0x1]
    %v5240 = vsel %vm340, %v5234, 0.0
    %5241 = vadd.xlane.f32.xlu0 %v5240
    %v5242 = vpop.xlane.xlu0 %5241
    %v5243 = vsel %vm340, %v5235, 0.0
    %5244 = vadd.xlane.f32.xlu0 %v5243
    %v5245 = vpop.xlane.xlu0 %5244
    %v5246 = vmul.f32 %v5242, %v347
    %v5247 = vmul.f32 %v5245, %v347
    %v5248 = vsub.f32 %v5234, %v5246
    %v5249 = vsub.f32 %v5235, %v5247
    %v5250 = vmul.f32 %v5248, %v5248
    %v5251 = vmul.f32 %v5249, %v5249
    %v5252 = vsel %vm340, %v5250, 0.0
    %5253 = vadd.xlane.f32.xlu0 %v5252
    %v5254 = vpop.xlane.xlu0 %5253
    %v5255 = vsel %vm340, %v5251, 0.0
    %5256 = vadd.xlane.f32.xlu0 %v5255
    %v5257 = vpop.xlane.xlu0 %5256
    %v5258 = vmul.f32 %v5254, %v347
    %v5259 = vmul.f32 %v5257, %v347
    %v5260 = vadd.f32 %v5258, 1e-12
    %v5261 = vadd.f32 %v5259, 1e-12
    %v5262 = vrsqrt.pop %v5260
    %v5263 = vrsqrt.pop %v5261
    %v5264 = vmul.f32 %v5248, %v5262
    %v5265 = vmul.f32 %v5249, %v5263
    %v5267 = vlaneseq
    %v5268 = vshrl.u32 %v5267, 7
    %v5269 = vsub.s32 0, %v5268
    %v5270 = vrot.slane %v5237, %v5269
    %v5272 = vmul.f32 %v5264, %v5270
    %v5273 = vmul.f32 %v5265, %v5270
    %v5275 = vlaneseq
    %v5276 = vshrl.u32 %v5275, 7
    %v5277 = vsub.s32 0, %v5276
    %v5278 = vrot.slane %v5239, %v5277
    %v5280 = vadd.f32 %v5272, %v5278
    %v5281 = vadd.f32 %v5273, %v5278
    %v5282 = vld [vmem:[#allocation2] sm:$0xff]
    %v5283 = vld [vmem:[#allocation2 + $0x8] sm:$0xff]
    %v5284 = vld [vmem:[#allocation2 + $0x10] sm:$0xff]
    %v5285 = vld [vmem:[#allocation2 + $0x18] sm:$0xff]
    %v5286 = vld [vmem:[#allocation2 + $0x20] sm:$0xff]
    %v5287 = vld [vmem:[#allocation2 + $0x28] sm:$0xff]
    %v5288 = vld [vmem:[#allocation2 + $0x30] sm:$0xff]
    %v5289 = vld [vmem:[#allocation2 + $0x38] sm:$0xff]
    %v5290 = vld [vmem:[#allocation2 + $0x40] sm:$0xff]
    %v5291 = vld [vmem:[#allocation2 + $0x48] sm:$0xff]
    %v5292 = vld [vmem:[#allocation2 + $0x50] sm:$0xff]
    %v5293 = vld [vmem:[#allocation2 + $0x58] sm:$0xff]
    %v5294 = vld [vmem:[#allocation2 + $0x60] sm:$0xff]
    %v5295 = vld [vmem:[#allocation2 + $0x68] sm:$0xff]
    %v5296 = vld [vmem:[#allocation2 + $0x70] sm:$0xff]
    %v5297 = vld [vmem:[#allocation2 + $0x78] sm:$0xff]
    %v5298 = vpack.c.bf16 %v5281, %v5280
    %v5299 = vld [vmem:[#allocation11 + $0x180] sm:$0xff]
    %v5300 = vld [vmem:[#allocation11 + $0x188] sm:$0xff]
    %v5301 = vld [vmem:[#allocation11 + $0x190] sm:$0xff]
    %v5302 = vld [vmem:[#allocation11 + $0x198] sm:$0xff]
    %v5303 = vld [vmem:[#allocation11 + $0x1a0] sm:$0xff]
    %v5304 = vld [vmem:[#allocation11 + $0x1a8] sm:$0xff]
    %v5305 = vld [vmem:[#allocation11 + $0x1b0] sm:$0xff]
    %v5306 = vld [vmem:[#allocation11 + $0x1b8] sm:$0xff]
    %v5307 = vld [vmem:[#allocation11 + $0x1c0] sm:$0xff]
    %v5308 = vld [vmem:[#allocation11 + $0x1c8] sm:$0xff]
    %v5309 = vld [vmem:[#allocation11 + $0x1d0] sm:$0xff]
    %v5310 = vld [vmem:[#allocation11 + $0x1d8] sm:$0xff]
    %v5311 = vld [vmem:[#allocation11 + $0x1e0] sm:$0xff]
    %v5312 = vld [vmem:[#allocation11 + $0x1e8] sm:$0xff]
    %v5313 = vld [vmem:[#allocation11 + $0x1f0] sm:$0xff]
    %v5314 = vld [vmem:[#allocation11 + $0x1f8] sm:$0xff]
    %v5331 = vunpack.c.l.b16 %v5299
    %v5332 = vunpack.c.h.b16 %v5299
    %v5333 = vunpack.c.l.b16 %v5300
    %v5334 = vunpack.c.h.b16 %v5300
    %v5335 = vunpack.c.l.b16 %v5301
    %v5336 = vunpack.c.h.b16 %v5301
    %v5337 = vunpack.c.l.b16 %v5302
    %v5338 = vunpack.c.h.b16 %v5302
    %v5339 = vunpack.c.l.b16 %v5303
    %v5340 = vunpack.c.h.b16 %v5303
    %v5341 = vunpack.c.l.b16 %v5304
    %v5342 = vunpack.c.h.b16 %v5304
    %v5343 = vunpack.c.l.b16 %v5305
    %v5344 = vunpack.c.h.b16 %v5305
    %v5345 = vunpack.c.l.b16 %v5306
    %v5346 = vunpack.c.h.b16 %v5306
    %v5347 = vunpack.c.l.b16 %v5307
    %v5348 = vunpack.c.h.b16 %v5307
    %v5349 = vunpack.c.l.b16 %v5308
    %v5350 = vunpack.c.h.b16 %v5308
    %v5351 = vunpack.c.l.b16 %v5309
    %v5352 = vunpack.c.h.b16 %v5309
    %v5353 = vunpack.c.l.b16 %v5310
    %v5354 = vunpack.c.h.b16 %v5310
    %v5355 = vunpack.c.l.b16 %v5311
    %v5356 = vunpack.c.h.b16 %v5311
    %v5357 = vunpack.c.l.b16 %v5312
    %v5358 = vunpack.c.h.b16 %v5312
    %v5359 = vunpack.c.l.b16 %v5313
    %v5360 = vunpack.c.h.b16 %v5313
    %v5361 = vunpack.c.l.b16 %v5314
    %v5362 = vunpack.c.h.b16 %v5314
    %v5363 = vpack.c.b16 %v5339, %v5331
    %v5364 = vpack.c.b16 %v5340, %v5332
    %v5365 = vpack.c.b16 %v5341, %v5333
    %v5366 = vpack.c.b16 %v5342, %v5334
    %v5367 = vpack.c.b16 %v5343, %v5335
    %v5368 = vpack.c.b16 %v5344, %v5336
    %v5369 = vpack.c.b16 %v5345, %v5337
    %v5370 = vpack.c.b16 %v5346, %v5338
    %v5371 = vpack.c.b16 %v5355, %v5347
    %v5372 = vpack.c.b16 %v5356, %v5348
    %v5373 = vpack.c.b16 %v5357, %v5349
    %v5374 = vpack.c.b16 %v5358, %v5350
    %v5375 = vpack.c.b16 %v5359, %v5351
    %v5376 = vpack.c.b16 %v5360, %v5352
    %v5377 = vpack.c.b16 %v5361, %v5353
    %v5378 = vpack.c.b16 %v5362, %v5354
    %v5396 = vsel %vm340, %v5298, 0
    %5398 = vmatprep.subr.bf16.mxu0 0
    %5399 = vmatpush1.bf16.msra.mxu0 0
    %5400 = vmatprep.subr.bf16.mxu0 0
    %5401 = vmatpush1.bf16.msra.mxu0 0
    %5402 = vmatprep.subr.bf16.mxu0 0
    %5403 = vmatpush1.bf16.msra.mxu0 0
    %5404 = vmatprep.subr.bf16.mxu0 0
    %5405 = vmatpush1.bf16.msra.mxu0 0
    %5406 = vmatprep.subr.bf16.mxu0 0
    %5407 = vmatpush1.bf16.msra.mxu0 0
    %5408 = vmatprep.subr.bf16.mxu0 0
    %5409 = vmatpush1.bf16.msra.mxu0 0
    %5410 = vmatprep.subr.bf16.mxu0 %v5372
    %5411 = vmatpush1.bf16.msra.mxu0 %v5371
    %5412 = vmatprep.subr.bf16.mxu0 %v5364
    %5413 = vmatpush1.bf16.msra.mxu0 %v5363
    %5414 = vmatprep.subr.bf16.mxu0 0
    %5415 = vmatpush2.bf16.msra.mxu0 0
    %5416 = vmatprep.subr.bf16.mxu0 0
    %5417 = vmatpush2.bf16.msra.mxu0 0
    %5418 = vmatprep.subr.bf16.mxu0 0
    %5419 = vmatpush2.bf16.msra.mxu0 0
    %5420 = vmatprep.subr.bf16.mxu0 0
    %5421 = vmatpush2.bf16.msra.mxu0 0
    %5422 = vmatprep.subr.bf16.mxu0 0
    %5423 = vmatpush2.bf16.msra.mxu0 0
    %5424 = vmatprep.subr.bf16.mxu0 0
    %5425 = vmatpush2.bf16.msra.mxu0 0
    %5426 = vmatprep.subr.bf16.mxu0 0
    %5427 = vmatpush2.bf16.msra.mxu0 0
    %5428 = vmatprep.subr.bf16.mxu0 0
    %5429 = vmatpush2.bf16.msra.mxu0 0
    %5430 = vmatprep.mubr.bf16.mxu0 0
    %5431 = vmatmul.mubr.bf16.gmra.mxu0 %v5396
    %v5432 = vpop.f32.mrf.mxu0
    %v5433 = vadd.f32 0.0, %v5432
    %v5434 = vpop.f32.mrf.mxu0
    %v5435 = vadd.f32 0.0, %v5434
    %v5436 = vpop.f32.mrf.mxu0
    %v5437 = vadd.f32 0.0, %v5436
    %v5438 = vpop.f32.mrf.mxu0
    %v5439 = vadd.f32 0.0, %v5438
    %5440 = vdwg.mxu0
    %5441 = vmatprep.subr.bf16.mxu0 0
    %5442 = vmatpush1.bf16.msra.mxu0 0
    %5443 = vmatprep.subr.bf16.mxu0 0
    %5444 = vmatpush1.bf16.msra.mxu0 0
    %5445 = vmatprep.subr.bf16.mxu0 0
    %5446 = vmatpush1.bf16.msra.mxu0 0
    %5447 = vmatprep.subr.bf16.mxu0 0
    %5448 = vmatpush1.bf16.msra.mxu0 0
    %5449 = vmatprep.subr.bf16.mxu0 0
    %5450 = vmatpush1.bf16.msra.mxu0 0
    %5451 = vmatprep.subr.bf16.mxu0 0
    %5452 = vmatpush1.bf16.msra.mxu0 0
    %5453 = vmatprep.subr.bf16.mxu0 %v5374
    %5454 = vmatpush1.bf16.msra.mxu0 %v5373
    %5455 = vmatprep.subr.bf16.mxu0 %v5366
    %5456 = vmatpush1.bf16.msra.mxu0 %v5365
    %5457 = vmatprep.subr.bf16.mxu0 0
    %5458 = vmatpush2.bf16.msra.mxu0 0
    %5459 = vmatprep.subr.bf16.mxu0 0
    %5460 = vmatpush2.bf16.msra.mxu0 0
    %5461 = vmatprep.subr.bf16.mxu0 0
    %5462 = vmatpush2.bf16.msra.mxu0 0
    %5463 = vmatprep.subr.bf16.mxu0 0
    %5464 = vmatpush2.bf16.msra.mxu0 0
    %5465 = vmatprep.subr.bf16.mxu0 0
    %5466 = vmatpush2.bf16.msra.mxu0 0
    %5467 = vmatprep.subr.bf16.mxu0 0
    %5468 = vmatpush2.bf16.msra.mxu0 0
    %5469 = vmatprep.subr.bf16.mxu0 0
    %5470 = vmatpush2.bf16.msra.mxu0 0
    %5471 = vmatprep.subr.bf16.mxu0 0
    %5472 = vmatpush2.bf16.msra.mxu0 0
    %5473 = vmatprep.mubr.bf16.mxu0 0
    %5474 = vmatmul.mubr.bf16.gmra.mxu0 %v5396
    %v5475 = vpop.f32.mrf.mxu0
    %v5476 = vadd.f32 0.0, %v5475
    %v5477 = vpop.f32.mrf.mxu0
    %v5478 = vadd.f32 0.0, %v5477
    %v5479 = vpop.f32.mrf.mxu0
    %v5480 = vadd.f32 0.0, %v5479
    %v5481 = vpop.f32.mrf.mxu0
    %v5482 = vadd.f32 0.0, %v5481
    %5483 = vdwg.mxu0
    %5484 = vmatprep.subr.bf16.mxu0 0
    %5485 = vmatpush1.bf16.msra.mxu0 0
    %5486 = vmatprep.subr.bf16.mxu0 0
    %5487 = vmatpush1.bf16.msra.mxu0 0
    %5488 = vmatprep.subr.bf16.mxu0 0
    %5489 = vmatpush1.bf16.msra.mxu0 0
    %5490 = vmatprep.subr.bf16.mxu0 0
    %5491 = vmatpush1.bf16.msra.mxu0 0
    %5492 = vmatprep.subr.bf16.mxu0 0
    %5493 = vmatpush1.bf16.msra.mxu0 0
    %5494 = vmatprep.subr.bf16.mxu0 0
    %5495 = vmatpush1.bf16.msra.mxu0 0
    %5496 = vmatprep.subr.bf16.mxu0 %v5376
    %5497 = vmatpush1.bf16.msra.mxu0 %v5375
    %5498 = vmatprep.subr.bf16.mxu0 %v5368
    %5499 = vmatpush1.bf16.msra.mxu0 %v5367
    %5500 = vmatprep.subr.bf16.mxu0 0
    %5501 = vmatpush2.bf16.msra.mxu0 0
    %5502 = vmatprep.subr.bf16.mxu0 0
    %5503 = vmatpush2.bf16.msra.mxu0 0
    %5504 = vmatprep.subr.bf16.mxu0 0
    %5505 = vmatpush2.bf16.msra.mxu0 0
    %5506 = vmatprep.subr.bf16.mxu0 0
    %5507 = vmatpush2.bf16.msra.mxu0 0
    %5508 = vmatprep.subr.bf16.mxu0 0
    %5509 = vmatpush2.bf16.msra.mxu0 0
    %5510 = vmatprep.subr.bf16.mxu0 0
    %5511 = vmatpush2.bf16.msra.mxu0 0
    %5512 = vmatprep.subr.bf16.mxu0 0
    %5513 = vmatpush2.bf16.msra.mxu0 0
    %5514 = vmatprep.subr.bf16.mxu0 0
    %5515 = vmatpush2.bf16.msra.mxu0 0
    %5516 = vmatprep.mubr.bf16.mxu0 0
    %5517 = vmatmul.mubr.bf16.gmra.mxu0 %v5396
    %v5518 = vpop.f32.mrf.mxu0
    %v5519 = vadd.f32 0.0, %v5518
    %v5520 = vpop.f32.mrf.mxu0
    %v5521 = vadd.f32 0.0, %v5520
    %v5522 = vpop.f32.mrf.mxu0
    %v5523 = vadd.f32 0.0, %v5522
    %v5524 = vpop.f32.mrf.mxu0
    %v5525 = vadd.f32 0.0, %v5524
    %5526 = vdwg.mxu0
    %5527 = vmatprep.subr.bf16.mxu0 0
    %5528 = vmatpush1.bf16.msra.mxu0 0
    %5529 = vmatprep.subr.bf16.mxu0 0
    %5530 = vmatpush1.bf16.msra.mxu0 0
    %5531 = vmatprep.subr.bf16.mxu0 0
    %5532 = vmatpush1.bf16.msra.mxu0 0
    %5533 = vmatprep.subr.bf16.mxu0 0
    %5534 = vmatpush1.bf16.msra.mxu0 0
    %5535 = vmatprep.subr.bf16.mxu0 0
    %5536 = vmatpush1.bf16.msra.mxu0 0
    %5537 = vmatprep.subr.bf16.mxu0 0
    %5538 = vmatpush1.bf16.msra.mxu0 0
    %5539 = vmatprep.subr.bf16.mxu0 %v5378
    %5540 = vmatpush1.bf16.msra.mxu0 %v5377
    %5541 = vmatprep.subr.bf16.mxu0 %v5370
    %5542 = vmatpush1.bf16.msra.mxu0 %v5369
    %5543 = vmatprep.subr.bf16.mxu0 0
    %5544 = vmatpush2.bf16.msra.mxu0 0
    %5545 = vmatprep.subr.bf16.mxu0 0
    %5546 = vmatpush2.bf16.msra.mxu0 0
    %5547 = vmatprep.subr.bf16.mxu0 0
    %5548 = vmatpush2.bf16.msra.mxu0 0
    %5549 = vmatprep.subr.bf16.mxu0 0
    %5550 = vmatpush2.bf16.msra.mxu0 0
    %5551 = vmatprep.subr.bf16.mxu0 0
    %5552 = vmatpush2.bf16.msra.mxu0 0
    %5553 = vmatprep.subr.bf16.mxu0 0
    %5554 = vmatpush2.bf16.msra.mxu0 0
    %5555 = vmatprep.subr.bf16.mxu0 0
    %5556 = vmatpush2.bf16.msra.mxu0 0
    %5557 = vmatprep.subr.bf16.mxu0 0
    %5558 = vmatpush2.bf16.msra.mxu0 0
    %5559 = vmatprep.mubr.bf16.mxu0 0
    %5560 = vmatmul.mubr.bf16.gmra.mxu0 %v5396
    %v5561 = vpop.f32.mrf.mxu0
    %v5562 = vadd.f32 0.0, %v5561
    %v5563 = vpop.f32.mrf.mxu0
    %v5564 = vadd.f32 0.0, %v5563
    %v5565 = vpop.f32.mrf.mxu0
    %v5566 = vadd.f32 0.0, %v5565
    %v5567 = vpop.f32.mrf.mxu0
    %v5568 = vadd.f32 0.0, %v5567
    %5569 = vdwg.mxu0
    %v5570 = vadd.f32 %v5282, %v5433
    %v5571 = vadd.f32 %v5283, %v5435
    %v5572 = vadd.f32 %v5284, %v5476
    %v5573 = vadd.f32 %v5285, %v5478
    %v5574 = vadd.f32 %v5286, %v5519
    %v5575 = vadd.f32 %v5287, %v5521
    %v5576 = vadd.f32 %v5288, %v5562
    %v5577 = vadd.f32 %v5289, %v5564
    %v5578 = vadd.f32 %v5290, %v5437
    %v5579 = vadd.f32 %v5291, %v5439
    %v5580 = vadd.f32 %v5292, %v5480
    %v5581 = vadd.f32 %v5293, %v5482
    %v5582 = vadd.f32 %v5294, %v5523
    %v5583 = vadd.f32 %v5295, %v5525
    %v5584 = vadd.f32 %v5296, %v5566
    %v5585 = vadd.f32 %v5297, %v5568
    %5586 = vst [vmem:[#allocation2] sm:$0xff] %v5570
    %5587 = vst [vmem:[#allocation2 + $0x8] sm:$0xff] %v5571
    %5588 = vst [vmem:[#allocation2 + $0x10] sm:$0xff] %v5572
    %5589 = vst [vmem:[#allocation2 + $0x18] sm:$0xff] %v5573
    %5590 = vst [vmem:[#allocation2 + $0x20] sm:$0xff] %v5574
    %5591 = vst [vmem:[#allocation2 + $0x28] sm:$0xff] %v5575
    %5592 = vst [vmem:[#allocation2 + $0x30] sm:$0xff] %v5576
    %5593 = vst [vmem:[#allocation2 + $0x38] sm:$0xff] %v5577
    %5594 = vst [vmem:[#allocation2 + $0x40] sm:$0xff] %v5578
    %5595 = vst [vmem:[#allocation2 + $0x48] sm:$0xff] %v5579
    %5596 = vst [vmem:[#allocation2 + $0x50] sm:$0xff] %v5580
    %5597 = vst [vmem:[#allocation2 + $0x58] sm:$0xff] %v5581
    %5598 = vst [vmem:[#allocation2 + $0x60] sm:$0xff] %v5582
    %5599 = vst [vmem:[#allocation2 + $0x68] sm:$0xff] %v5583
    %5600 = vst [vmem:[#allocation2 + $0x70] sm:$0xff] %v5584
    %5601 = vst [vmem:[#allocation2 + $0x78] sm:$0xff] %v5585
    %s5602 = scalar_lea.vmem %s15, 48
    %v5603 = vld [vmem:[%s5602] sm:$0xf]
    %v5604 = vld [vmem:[%s5602 + $0x4] sm:$0xf]
    %v5605 = vld [vmem:[%s5602 + $0x8] sm:$0xf]
    %v5606 = vld [vmem:[%s5602 + $0xc] sm:$0xf]
    %s5607 = scalar_lea.vmem %s17, 3
    %v5608 = vld [vmem:[%s5607] sm:$0x1]
    %v5610 = vlaneseq
    %v5611 = vshrl.u32 %v5610, 7
    %v5612 = vsub.s32 0, %v5611
    %v5613 = vrot.slane %v5608, %v5612
    %v5619 = vunpack.c.l.b16 %v5603
    %v5620 = vunpack.c.l.b16 %v5604
    %v5621 = vunpack.c.l.b16 %v5605
    %v5622 = vunpack.c.l.b16 %v5606
    %v5623 = vpack.c.b16 %v5620, %v5619
    %v5624 = vpack.c.b16 %v5622, %v5621
    %5627 = vmatprep.subr.bf16.mxu0 0
    %5628 = vmatpush1.bf16.msra.mxu0 0
    %5629 = vmatprep.subr.bf16.mxu0 0
    %5630 = vmatpush1.bf16.msra.mxu0 0
    %5631 = vmatprep.subr.bf16.mxu0 0
    %5632 = vmatpush1.bf16.msra.mxu0 0
    %5633 = vmatprep.subr.bf16.mxu0 0
    %5634 = vmatpush1.bf16.msra.mxu0 0
    %5635 = vmatprep.subr.bf16.mxu0 0
    %5636 = vmatpush1.bf16.msra.mxu0 0
    %5637 = vmatprep.subr.bf16.mxu0 0
    %5638 = vmatpush1.bf16.msra.mxu0 0
    %5639 = vmatprep.subr.bf16.mxu0 0
    %5640 = vmatpush1.bf16.msra.mxu0 %v5624
    %5641 = vmatprep.subr.bf16.mxu0 0
    %5642 = vmatpush1.bf16.msra.mxu0 %v5623
    %5643 = vmatprep.subr.bf16.mxu0 0
    %5644 = vmatpush2.bf16.msra.mxu0 0
    %5645 = vmatprep.subr.bf16.mxu0 0
    %5646 = vmatpush2.bf16.msra.mxu0 0
    %5647 = vmatprep.subr.bf16.mxu0 0
    %5648 = vmatpush2.bf16.msra.mxu0 0
    %5649 = vmatprep.subr.bf16.mxu0 0
    %5650 = vmatpush2.bf16.msra.mxu0 0
    %5651 = vmatprep.subr.bf16.mxu0 0
    %5652 = vmatpush2.bf16.msra.mxu0 0
    %5653 = vmatprep.subr.bf16.mxu0 0
    %5654 = vmatpush2.bf16.msra.mxu0 0
    %5655 = vmatprep.subr.bf16.mxu0 0
    %5656 = vmatpush2.bf16.msra.mxu0 0
    %5657 = vmatprep.subr.bf16.mxu0 0
    %5658 = vmatpush2.bf16.msra.mxu0 0
    %5659 = vmatprep.mubr.bf16.mxu0 0
    %5660 = vmatmul.mubr.bf16.gmra.mxu0 %v5396
    %v5661 = vpop.f32.mrf.mxu0
    %v5662 = vadd.f32 %v5613, %v5661
    %v5663 = vpop.f32.mrf.mxu0
    %v5664 = vpop.f32.mrf.mxu0
    %v5665 = vadd.f32 %v5613, %v5664
    %v5666 = vpop.f32.mrf.mxu0
    %5667 = vdwg.mxu0
    %s5668 = scalar_lea.vmem %s19, 48
    %v5669 = vld [vmem:[%s5668] sm:$0xf]
    %v5670 = vld [vmem:[%s5668 + $0x4] sm:$0xf]
    %v5671 = vld [vmem:[%s5668 + $0x8] sm:$0xf]
    %v5672 = vld [vmem:[%s5668 + $0xc] sm:$0xf]
    %s5673 = scalar_lea.vmem %s21, 3
    %v5674 = vld [vmem:[%s5673] sm:$0x1]
    %v5676 = vlaneseq
    %v5677 = vshrl.u32 %v5676, 7
    %v5678 = vsub.s32 0, %v5677
    %v5679 = vrot.slane %v5674, %v5678
    %v5685 = vunpack.c.l.b16 %v5669
    %v5686 = vunpack.c.l.b16 %v5670
    %v5687 = vunpack.c.l.b16 %v5671
    %v5688 = vunpack.c.l.b16 %v5672
    %v5689 = vpack.c.b16 %v5686, %v5685
    %v5690 = vpack.c.b16 %v5688, %v5687
    %5693 = vmatprep.subr.bf16.mxu0 0
    %5694 = vmatpush1.bf16.msra.mxu0 0
    %5695 = vmatprep.subr.bf16.mxu0 0
    %5696 = vmatpush1.bf16.msra.mxu0 0
    %5697 = vmatprep.subr.bf16.mxu0 0
    %5698 = vmatpush1.bf16.msra.mxu0 0
    %5699 = vmatprep.subr.bf16.mxu0 0
    %5700 = vmatpush1.bf16.msra.mxu0 0
    %5701 = vmatprep.subr.bf16.mxu0 0
    %5702 = vmatpush1.bf16.msra.mxu0 0
    %5703 = vmatprep.subr.bf16.mxu0 0
    %5704 = vmatpush1.bf16.msra.mxu0 0
    %5705 = vmatprep.subr.bf16.mxu0 0
    %5706 = vmatpush1.bf16.msra.mxu0 %v5690
    %5707 = vmatprep.subr.bf16.mxu0 0
    %5708 = vmatpush1.bf16.msra.mxu0 %v5689
    %5709 = vmatprep.subr.bf16.mxu0 0
    %5710 = vmatpush2.bf16.msra.mxu0 0
    %5711 = vmatprep.subr.bf16.mxu0 0
    %5712 = vmatpush2.bf16.msra.mxu0 0
    %5713 = vmatprep.subr.bf16.mxu0 0
    %5714 = vmatpush2.bf16.msra.mxu0 0
    %5715 = vmatprep.subr.bf16.mxu0 0
    %5716 = vmatpush2.bf16.msra.mxu0 0
    %5717 = vmatprep.subr.bf16.mxu0 0
    %5718 = vmatpush2.bf16.msra.mxu0 0
    %5719 = vmatprep.subr.bf16.mxu0 0
    %5720 = vmatpush2.bf16.msra.mxu0 0
    %5721 = vmatprep.subr.bf16.mxu0 0
    %5722 = vmatpush2.bf16.msra.mxu0 0
    %5723 = vmatprep.subr.bf16.mxu0 0
    %5724 = vmatpush2.bf16.msra.mxu0 0
    %5725 = vmatprep.mubr.bf16.mxu0 0
    %5726 = vmatmul.mubr.bf16.gmra.mxu0 %v5396
    %v5727 = vpop.f32.mrf.mxu0
    %v5728 = vadd.f32 %v5679, %v5727
    %v5729 = vpop.f32.mrf.mxu0
    %v5730 = vpop.f32.mrf.mxu0
    %v5731 = vadd.f32 %v5679, %v5730
    %v5732 = vpop.f32.mrf.mxu0
    %5733 = vdwg.mxu0
    %s5734 = scalar_lea.vmem %s23, 48
    %v5735 = vld [vmem:[%s5734] sm:$0xf]
    %v5736 = vld [vmem:[%s5734 + $0x4] sm:$0xf]
    %v5737 = vld [vmem:[%s5734 + $0x8] sm:$0xf]
    %v5738 = vld [vmem:[%s5734 + $0xc] sm:$0xf]
    %s5739 = scalar_lea.vmem %s25, 3
    %v5740 = vld [vmem:[%s5739] sm:$0x1]
    %v5742 = vlaneseq
    %v5743 = vshrl.u32 %v5742, 7
    %v5744 = vsub.s32 0, %v5743
    %v5745 = vrot.slane %v5740, %v5744
    %v5751 = vunpack.c.l.b16 %v5735
    %v5752 = vunpack.c.l.b16 %v5736
    %v5753 = vunpack.c.l.b16 %v5737
    %v5754 = vunpack.c.l.b16 %v5738
    %v5755 = vpack.c.b16 %v5752, %v5751
    %v5756 = vpack.c.b16 %v5754, %v5753
    %5759 = vmatprep.subr.bf16.mxu0 0
    %5760 = vmatpush1.bf16.msra.mxu0 0
    %5761 = vmatprep.subr.bf16.mxu0 0
    %5762 = vmatpush1.bf16.msra.mxu0 0
    %5763 = vmatprep.subr.bf16.mxu0 0
    %5764 = vmatpush1.bf16.msra.mxu0 0
    %5765 = vmatprep.subr.bf16.mxu0 0
    %5766 = vmatpush1.bf16.msra.mxu0 0
    %5767 = vmatprep.subr.bf16.mxu0 0
    %5768 = vmatpush1.bf16.msra.mxu0 0
    %5769 = vmatprep.subr.bf16.mxu0 0
    %5770 = vmatpush1.bf16.msra.mxu0 0
    %5771 = vmatprep.subr.bf16.mxu0 0
    %5772 = vmatpush1.bf16.msra.mxu0 %v5756
    %5773 = vmatprep.subr.bf16.mxu0 0
    %5774 = vmatpush1.bf16.msra.mxu0 %v5755
    %5775 = vmatprep.subr.bf16.mxu0 0
    %5776 = vmatpush2.bf16.msra.mxu0 0
    %5777 = vmatprep.subr.bf16.mxu0 0
    %5778 = vmatpush2.bf16.msra.mxu0 0
    %5779 = vmatprep.subr.bf16.mxu0 0
    %5780 = vmatpush2.bf16.msra.mxu0 0
    %5781 = vmatprep.subr.bf16.mxu0 0
    %5782 = vmatpush2.bf16.msra.mxu0 0
    %5783 = vmatprep.subr.bf16.mxu0 0
    %5784 = vmatpush2.bf16.msra.mxu0 0
    %5785 = vmatprep.subr.bf16.mxu0 0
    %5786 = vmatpush2.bf16.msra.mxu0 0
    %5787 = vmatprep.subr.bf16.mxu0 0
    %5788 = vmatpush2.bf16.msra.mxu0 0
    %5789 = vmatprep.subr.bf16.mxu0 0
    %5790 = vmatpush2.bf16.msra.mxu0 0
    %5791 = vmatprep.mubr.bf16.mxu0 0
    %5792 = vmatmul.mubr.bf16.gmra.mxu0 %v5396
    %v5793 = vpop.f32.mrf.mxu0
    %v5794 = vadd.f32 %v5745, %v5793
    %v5795 = vpop.f32.mrf.mxu0
    %v5796 = vpop.f32.mrf.mxu0
    %v5797 = vadd.f32 %v5745, %v5796
    %v5798 = vpop.f32.mrf.mxu0
    %5799 = vdwg.mxu0
    %v5800 = vmul.f32 %v5662, %v885
    %v5801 = vmul.f32 %v5665, %v885
    %v5803 = vsel %vm340, %v5800, 0
    %v5806 = vsel %vm340, %v5801, 0
    %v5809 = vsel %vm340, %v5728, 0
    %v5812 = vsel %vm340, %v5731, 0
    %5814 = vmatprep.subr.mxu0 0.0
    %5815 = vmatpush1.xpose.msra.mxu0 0.0
    %5816 = vmatprep.subr.mxu0 0.0
    %5817 = vmatpush1.xpose.msra.mxu0 0.0
    %5818 = vmatprep.subr.mxu0 0.0
    %5819 = vmatpush1.xpose.msra.mxu0 0.0
    %5820 = vmatprep.subr.mxu0 0.0
    %5821 = vmatpush1.xpose.msra.mxu0 0.0
    %5822 = vmatprep.subr.mxu0 0.0
    %5823 = vmatpush1.xpose.msra.mxu0 0.0
    %5824 = vmatprep.subr.mxu0 0.0
    %5825 = vmatpush1.xpose.msra.mxu0 0.0
    %5826 = vmatprep.subr.mxu0 0.0
    %5827 = vmatpush1.xpose.msra.mxu0 0.0
    %5828 = vmatprep.subr.mxu0 0.0
    %5829 = vmatpush1.xpose.msra.mxu0 0.0
    %5830 = vmatprep.subr.mxu0 0.0
    %5831 = vmatpush1.xpose.msra.mxu0 0.0
    %5832 = vmatprep.subr.mxu0 0.0
    %5833 = vmatpush1.xpose.msra.mxu0 0.0
    %5834 = vmatprep.subr.mxu0 0.0
    %5835 = vmatpush1.xpose.msra.mxu0 0.0
    %5836 = vmatprep.subr.mxu0 0.0
    %5837 = vmatpush1.xpose.msra.mxu0 0.0
    %5838 = vmatprep.subr.mxu0 0.0
    %5839 = vmatpush1.xpose.msra.mxu0 0.0
    %5840 = vmatprep.subr.mxu0 0.0
    %5841 = vmatpush1.xpose.msra.mxu0 0.0
    %5842 = vmatprep.subr.mxu0 0.0
    %5843 = vmatpush1.xpose.msra.mxu0 %v5812
    %5844 = vmatprep.subr.mxu0 0.0
    %5845 = vmatpush1.xpose.msra.mxu0 %v5809
    %5846 = vmatprep.subr.mxu0 0.0
    %5847 = vmatpush2.xpose.msra.mxu0 0.0
    %5848 = vmatprep.subr.mxu0 0.0
    %5849 = vmatpush2.xpose.msra.mxu0 0.0
    %5850 = vmatprep.subr.mxu0 0.0
    %5851 = vmatpush2.xpose.msra.mxu0 0.0
    %5852 = vmatprep.subr.mxu0 0.0
    %5853 = vmatpush2.xpose.msra.mxu0 0.0
    %5854 = vmatprep.subr.mxu0 0.0
    %5855 = vmatpush2.xpose.msra.mxu0 0.0
    %5856 = vmatprep.subr.mxu0 0.0
    %5857 = vmatpush2.xpose.msra.mxu0 0.0
    %5858 = vmatprep.subr.mxu0 0.0
    %5859 = vmatpush2.xpose.msra.mxu0 0.0
    %5860 = vmatprep.subr.mxu0 0.0
    %5861 = vmatpush2.xpose.msra.mxu0 0.0
    %5862 = vmatprep.subr.mxu0 0.0
    %5863 = vmatpush2.xpose.msra.mxu0 0.0
    %5864 = vmatprep.subr.mxu0 0.0
    %5865 = vmatpush2.xpose.msra.mxu0 0.0
    %5866 = vmatprep.subr.mxu0 0.0
    %5867 = vmatpush2.xpose.msra.mxu0 0.0
    %5868 = vmatprep.subr.mxu0 0.0
    %5869 = vmatpush2.xpose.msra.mxu0 0.0
    %5870 = vmatprep.subr.mxu0 0.0
    %5871 = vmatpush2.xpose.msra.mxu0 0.0
    %5872 = vmatprep.subr.mxu0 0.0
    %5873 = vmatpush2.xpose.msra.mxu0 0.0
    %5874 = vmatprep.subr.mxu0 0.0
    %5875 = vmatpush2.xpose.msra.mxu0 0.0
    %5876 = vmatprep.subr.mxu0 0.0
    %5877 = vmatpush2.xpose.msra.mxu0 0.0
    %5878 = vmatprep.mubr.f32.mxu0 0.0
    %5879 = vmatmul.mubr.f32.gmra.mxu0 %v5803
    %v5880 = vpop.f32.mrf.mxu0
    %v5881 = vadd.f32 0.0, %v5880
    %v5882 = vpop.f32.mrf.mxu0
    %5883 = vmatprep.mubr.f32.mxu0 0.0
    %5884 = vmatmul.mubr.f32.gmra.mxu0 %v5806
    %v5885 = vpop.f32.mrf.mxu0
    %v5886 = vadd.f32 0.0, %v5885
    %v5887 = vpop.f32.mrf.mxu0
    %5888 = vdwg.mxu0
    %v5889 = vmul.f32 %v5881, 0.35355338
    %v5890 = vmul.f32 %v5886, 0.35355338
    %v5891 = vadd.f32 %v5889, %v399
    %v5892 = vadd.f32 %v5890, %v400
    %v5893 = vsel %vm979, %v5891, -inf
    %5894 = vmax.xlane.f32.xlu0 %v5893
    %v5895 = vpop.xlane.xlu0 %5894
    %v5896 = vsel %vm979, %v5892, -inf
    %5897 = vmax.xlane.f32.xlu0 %v5896
    %v5898 = vpop.xlane.xlu0 %5897
    %v5899 = vsub.f32 %v5891, %v5895
    %v5900 = vsub.f32 %v5892, %v5898
    %v5901 = vmul.f32 %v5899, 1.442695
    %v5902 = vpow.pop %v5901
    %v5903 = vmul.f32 %v5900, 1.442695
    %v5904 = vpow.pop %v5903
    %v5905 = vsel %vm979, %v5902, 0.0
    %5906 = vadd.xlane.f32.xlu0 %v5905
    %v5907 = vpop.xlane.xlu0 %5906
    %v5908 = vsel %vm979, %v5904, 0.0
    %5909 = vadd.xlane.f32.xlu0 %v5908
    %v5910 = vpop.xlane.xlu0 %5909
    %v5911 = vrcp.pop %v5907
    %v5912 = vrcp.pop %v5910
    %v5913 = vmul.f32 %v5902, %v5911
    %v5914 = vmul.f32 %v5904, %v5912
    %v5915 = vmul.f32 %v5794, %v885
    %v5916 = vmul.f32 %v5797, %v885
    %v5917 = vmul.f32 %v5662, %v1008
    %v5918 = vmul.f32 %v5665, %v1008
    %v5920 = vsel %vm340, %v5917, 0
    %v5923 = vsel %vm340, %v5918, 0
    %5925 = vmatprep.subr.mxu0 0.0
    %5926 = vmatpush1.xpose.msra.mxu0 0.0
    %5927 = vmatprep.subr.mxu0 0.0
    %5928 = vmatpush1.xpose.msra.mxu0 0.0
    %5929 = vmatprep.subr.mxu0 0.0
    %5930 = vmatpush1.xpose.msra.mxu0 0.0
    %5931 = vmatprep.subr.mxu0 0.0
    %5932 = vmatpush1.xpose.msra.mxu0 0.0
    %5933 = vmatprep.subr.mxu0 0.0
    %5934 = vmatpush1.xpose.msra.mxu0 0.0
    %5935 = vmatprep.subr.mxu0 0.0
    %5936 = vmatpush1.xpose.msra.mxu0 0.0
    %5937 = vmatprep.subr.mxu0 0.0
    %5938 = vmatpush1.xpose.msra.mxu0 0.0
    %5939 = vmatprep.subr.mxu0 0.0
    %5940 = vmatpush1.xpose.msra.mxu0 0.0
    %5941 = vmatprep.subr.mxu0 0.0
    %5942 = vmatpush1.xpose.msra.mxu0 0.0
    %5943 = vmatprep.subr.mxu0 0.0
    %5944 = vmatpush1.xpose.msra.mxu0 0.0
    %5945 = vmatprep.subr.mxu0 0.0
    %5946 = vmatpush1.xpose.msra.mxu0 0.0
    %5947 = vmatprep.subr.mxu0 0.0
    %5948 = vmatpush1.xpose.msra.mxu0 0.0
    %5949 = vmatprep.subr.mxu0 0.0
    %5950 = vmatpush1.xpose.msra.mxu0 0.0
    %5951 = vmatprep.subr.mxu0 0.0
    %5952 = vmatpush1.xpose.msra.mxu0 0.0
    %5953 = vmatprep.subr.mxu0 0.0
    %5954 = vmatpush1.xpose.msra.mxu0 %v5812
    %5955 = vmatprep.subr.mxu0 0.0
    %5956 = vmatpush1.xpose.msra.mxu0 %v5809
    %5957 = vmatprep.subr.mxu0 0.0
    %5958 = vmatpush2.xpose.msra.mxu0 0.0
    %5959 = vmatprep.subr.mxu0 0.0
    %5960 = vmatpush2.xpose.msra.mxu0 0.0
    %5961 = vmatprep.subr.mxu0 0.0
    %5962 = vmatpush2.xpose.msra.mxu0 0.0
    %5963 = vmatprep.subr.mxu0 0.0
    %5964 = vmatpush2.xpose.msra.mxu0 0.0
    %5965 = vmatprep.subr.mxu0 0.0
    %5966 = vmatpush2.xpose.msra.mxu0 0.0
    %5967 = vmatprep.subr.mxu0 0.0
    %5968 = vmatpush2.xpose.msra.mxu0 0.0
    %5969 = vmatprep.subr.mxu0 0.0
    %5970 = vmatpush2.xpose.msra.mxu0 0.0
    %5971 = vmatprep.subr.mxu0 0.0
    %5972 = vmatpush2.xpose.msra.mxu0 0.0
    %5973 = vmatprep.subr.mxu0 0.0
    %5974 = vmatpush2.xpose.msra.mxu0 0.0
    %5975 = vmatprep.subr.mxu0 0.0
    %5976 = vmatpush2.xpose.msra.mxu0 0.0
    %5977 = vmatprep.subr.mxu0 0.0
    %5978 = vmatpush2.xpose.msra.mxu0 0.0
    %5979 = vmatprep.subr.mxu0 0.0
    %5980 = vmatpush2.xpose.msra.mxu0 0.0
    %5981 = vmatprep.subr.mxu0 0.0
    %5982 = vmatpush2.xpose.msra.mxu0 0.0
    %5983 = vmatprep.subr.mxu0 0.0
    %5984 = vmatpush2.xpose.msra.mxu0 0.0
    %5985 = vmatprep.subr.mxu0 0.0
    %5986 = vmatpush2.xpose.msra.mxu0 0.0
    %5987 = vmatprep.subr.mxu0 0.0
    %5988 = vmatpush2.xpose.msra.mxu0 0.0
    %5989 = vmatprep.mubr.f32.mxu0 0.0
    %5990 = vmatmul.mubr.f32.gmra.mxu0 %v5920
    %v5991 = vpop.f32.mrf.mxu0
    %v5992 = vadd.f32 0.0, %v5991
    %v5993 = vpop.f32.mrf.mxu0
    %5994 = vmatprep.mubr.f32.mxu0 0.0
    %5995 = vmatmul.mubr.f32.gmra.mxu0 %v5923
    %v5996 = vpop.f32.mrf.mxu0
    %v5997 = vadd.f32 0.0, %v5996
    %v5998 = vpop.f32.mrf.mxu0
    %5999 = vdwg.mxu0
    %v6000 = vmul.f32 %v5992, 0.35355338
    %v6001 = vmul.f32 %v5997, 0.35355338
    %v6002 = vadd.f32 %v6000, %v399
    %v6003 = vadd.f32 %v6001, %v400
    %v6004 = vsel %vm979, %v6002, -inf
    %6005 = vmax.xlane.f32.xlu0 %v6004
    %v6006 = vpop.xlane.xlu0 %6005
    %v6007 = vsel %vm979, %v6003, -inf
    %6008 = vmax.xlane.f32.xlu0 %v6007
    %v6009 = vpop.xlane.xlu0 %6008
    %v6010 = vsub.f32 %v6002, %v6006
    %v6011 = vsub.f32 %v6003, %v6009
    %v6012 = vmul.f32 %v6010, 1.442695
    %v6013 = vpow.pop %v6012
    %v6014 = vmul.f32 %v6011, 1.442695
    %v6015 = vpow.pop %v6014
    %v6016 = vsel %vm979, %v6013, 0.0
    %6017 = vadd.xlane.f32.xlu0 %v6016
    %v6018 = vpop.xlane.xlu0 %6017
    %v6019 = vsel %vm979, %v6015, 0.0
    %6020 = vadd.xlane.f32.xlu0 %v6019
    %v6021 = vpop.xlane.xlu0 %6020
    %v6022 = vrcp.pop %v6018
    %v6023 = vrcp.pop %v6021
    %v6024 = vmul.f32 %v6013, %v6022
    %v6025 = vmul.f32 %v6015, %v6023
    %v6026 = vmul.f32 %v5794, %v1008
    %v6027 = vmul.f32 %v5797, %v1008
    %v6029 = vsel %vm979, %v6024, 0
    %v6032 = vsel %vm979, %v6025, 0
    %6034 = vmatprep.subr.mxu0 0.0
    %6035 = vmatpush1.msra.mxu0 0.0
    %6036 = vmatprep.subr.mxu0 0.0
    %6037 = vmatpush1.msra.mxu0 0.0
    %6038 = vmatprep.subr.mxu0 0.0
    %6039 = vmatpush1.msra.mxu0 0.0
    %6040 = vmatprep.subr.mxu0 0.0
    %6041 = vmatpush1.msra.mxu0 0.0
    %6042 = vmatprep.subr.mxu0 0.0
    %6043 = vmatpush1.msra.mxu0 0.0
    %6044 = vmatprep.subr.mxu0 0.0
    %6045 = vmatpush1.msra.mxu0 0.0
    %6046 = vmatprep.subr.mxu0 0.0
    %6047 = vmatpush1.msra.mxu0 0.0
    %6048 = vmatprep.subr.mxu0 0.0
    %6049 = vmatpush1.msra.mxu0 0.0
    %6050 = vmatprep.subr.mxu0 0.0
    %6051 = vmatpush1.msra.mxu0 0.0
    %6052 = vmatprep.subr.mxu0 0.0
    %6053 = vmatpush1.msra.mxu0 0.0
    %6054 = vmatprep.subr.mxu0 0.0
    %6055 = vmatpush1.msra.mxu0 0.0
    %6056 = vmatprep.subr.mxu0 0.0
    %6057 = vmatpush1.msra.mxu0 0.0
    %6058 = vmatprep.subr.mxu0 0.0
    %6059 = vmatpush1.msra.mxu0 0.0
    %6060 = vmatprep.subr.mxu0 0.0
    %6061 = vmatpush1.msra.mxu0 0.0
    %6062 = vmatprep.subr.mxu0 0.0
    %6063 = vmatpush1.msra.mxu0 %v6027
    %6064 = vmatprep.subr.mxu0 0.0
    %6065 = vmatpush1.msra.mxu0 %v6026
    %6066 = vmatprep.subr.mxu0 0.0
    %6067 = vmatpush2.msra.mxu0 0.0
    %6068 = vmatprep.subr.mxu0 0.0
    %6069 = vmatpush2.msra.mxu0 0.0
    %6070 = vmatprep.subr.mxu0 0.0
    %6071 = vmatpush2.msra.mxu0 0.0
    %6072 = vmatprep.subr.mxu0 0.0
    %6073 = vmatpush2.msra.mxu0 0.0
    %6074 = vmatprep.subr.mxu0 0.0
    %6075 = vmatpush2.msra.mxu0 0.0
    %6076 = vmatprep.subr.mxu0 0.0
    %6077 = vmatpush2.msra.mxu0 0.0
    %6078 = vmatprep.subr.mxu0 0.0
    %6079 = vmatpush2.msra.mxu0 0.0
    %6080 = vmatprep.subr.mxu0 0.0
    %6081 = vmatpush2.msra.mxu0 0.0
    %6082 = vmatprep.subr.mxu0 0.0
    %6083 = vmatpush2.msra.mxu0 0.0
    %6084 = vmatprep.subr.mxu0 0.0
    %6085 = vmatpush2.msra.mxu0 0.0
    %6086 = vmatprep.subr.mxu0 0.0
    %6087 = vmatpush2.msra.mxu0 0.0
    %6088 = vmatprep.subr.mxu0 0.0
    %6089 = vmatpush2.msra.mxu0 0.0
    %6090 = vmatprep.subr.mxu0 0.0
    %6091 = vmatpush2.msra.mxu0 0.0
    %6092 = vmatprep.subr.mxu0 0.0
    %6093 = vmatpush2.msra.mxu0 0.0
    %6094 = vmatprep.subr.mxu0 0.0
    %6095 = vmatpush2.msra.mxu0 0.0
    %6096 = vmatprep.subr.mxu0 0.0
    %6097 = vmatpush2.msra.mxu0 0.0
    %6098 = vmatprep.mubr.f32.mxu0 0.0
    %6099 = vmatmul.mubr.f32.gmra.mxu0 %v6029
    %v6100 = vpop.f32.mrf.mxu0
    %v6101 = vadd.f32 0.0, %v6100
    %v6102 = vpop.f32.mrf.mxu0
    %6103 = vmatprep.mubr.f32.mxu0 0.0
    %6104 = vmatmul.mubr.f32.gmra.mxu0 %v6032
    %v6105 = vpop.f32.mrf.mxu0
    %v6106 = vadd.f32 0.0, %v6105
    %v6107 = vpop.f32.mrf.mxu0
    %6108 = vdwg.mxu0
    %v6110 = vsel %vm979, %v5913, 0
    %v6113 = vsel %vm979, %v5914, 0
    %6115 = vmatprep.subr.mxu0 0.0
    %6116 = vmatpush1.msra.mxu0 0.0
    %6117 = vmatprep.subr.mxu0 0.0
    %6118 = vmatpush1.msra.mxu0 0.0
    %6119 = vmatprep.subr.mxu0 0.0
    %6120 = vmatpush1.msra.mxu0 0.0
    %6121 = vmatprep.subr.mxu0 0.0
    %6122 = vmatpush1.msra.mxu0 0.0
    %6123 = vmatprep.subr.mxu0 0.0
    %6124 = vmatpush1.msra.mxu0 0.0
    %6125 = vmatprep.subr.mxu0 0.0
    %6126 = vmatpush1.msra.mxu0 0.0
    %6127 = vmatprep.subr.mxu0 0.0
    %6128 = vmatpush1.msra.mxu0 0.0
    %6129 = vmatprep.subr.mxu0 0.0
    %6130 = vmatpush1.msra.mxu0 0.0
    %6131 = vmatprep.subr.mxu0 0.0
    %6132 = vmatpush1.msra.mxu0 0.0
    %6133 = vmatprep.subr.mxu0 0.0
    %6134 = vmatpush1.msra.mxu0 0.0
    %6135 = vmatprep.subr.mxu0 0.0
    %6136 = vmatpush1.msra.mxu0 0.0
    %6137 = vmatprep.subr.mxu0 0.0
    %6138 = vmatpush1.msra.mxu0 0.0
    %6139 = vmatprep.subr.mxu0 0.0
    %6140 = vmatpush1.msra.mxu0 0.0
    %6141 = vmatprep.subr.mxu0 0.0
    %6142 = vmatpush1.msra.mxu0 0.0
    %6143 = vmatprep.subr.mxu0 0.0
    %6144 = vmatpush1.msra.mxu0 %v5916
    %6145 = vmatprep.subr.mxu0 0.0
    %6146 = vmatpush1.msra.mxu0 %v5915
    %6147 = vmatprep.subr.mxu0 0.0
    %6148 = vmatpush2.msra.mxu0 0.0
    %6149 = vmatprep.subr.mxu0 0.0
    %6150 = vmatpush2.msra.mxu0 0.0
    %6151 = vmatprep.subr.mxu0 0.0
    %6152 = vmatpush2.msra.mxu0 0.0
    %6153 = vmatprep.subr.mxu0 0.0
    %6154 = vmatpush2.msra.mxu0 0.0
    %6155 = vmatprep.subr.mxu0 0.0
    %6156 = vmatpush2.msra.mxu0 0.0
    %6157 = vmatprep.subr.mxu0 0.0
    %6158 = vmatpush2.msra.mxu0 0.0
    %6159 = vmatprep.subr.mxu0 0.0
    %6160 = vmatpush2.msra.mxu0 0.0
    %6161 = vmatprep.subr.mxu0 0.0
    %6162 = vmatpush2.msra.mxu0 0.0
    %6163 = vmatprep.subr.mxu0 0.0
    %6164 = vmatpush2.msra.mxu0 0.0
    %6165 = vmatprep.subr.mxu0 0.0
    %6166 = vmatpush2.msra.mxu0 0.0
    %6167 = vmatprep.subr.mxu0 0.0
    %6168 = vmatpush2.msra.mxu0 0.0
    %6169 = vmatprep.subr.mxu0 0.0
    %6170 = vmatpush2.msra.mxu0 0.0
    %6171 = vmatprep.subr.mxu0 0.0
    %6172 = vmatpush2.msra.mxu0 0.0
    %6173 = vmatprep.subr.mxu0 0.0
    %6174 = vmatpush2.msra.mxu0 0.0
    %6175 = vmatprep.subr.mxu0 0.0
    %6176 = vmatpush2.msra.mxu0 0.0
    %6177 = vmatprep.subr.mxu0 0.0
    %6178 = vmatpush2.msra.mxu0 0.0
    %6179 = vmatprep.mubr.f32.mxu0 0.0
    %6180 = vmatmul.mubr.f32.gmra.mxu0 %v6110
    %v6181 = vpop.f32.mrf.mxu0
    %v6182 = vadd.f32 %v6101, %v6181
    %v6183 = vpop.f32.mrf.mxu0
    %6184 = vmatprep.mubr.f32.mxu0 0.0
    %6185 = vmatmul.mubr.f32.gmra.mxu0 %v6113
    %v6186 = vpop.f32.mrf.mxu0
    %v6187 = vadd.f32 %v6106, %v6186
    %v6188 = vpop.f32.mrf.mxu0
    %6189 = vdwg.mxu0
    %v6190 = vmul.f32 %v5662, %v1286
    %v6191 = vmul.f32 %v5665, %v1286
    %v6193 = vsel %vm340, %v6190, 0
    %v6196 = vsel %vm340, %v6191, 0
    %6198 = vmatprep.subr.mxu0 0.0
    %6199 = vmatpush1.xpose.msra.mxu0 0.0
    %6200 = vmatprep.subr.mxu0 0.0
    %6201 = vmatpush1.xpose.msra.mxu0 0.0
    %6202 = vmatprep.subr.mxu0 0.0
    %6203 = vmatpush1.xpose.msra.mxu0 0.0
    %6204 = vmatprep.subr.mxu0 0.0
    %6205 = vmatpush1.xpose.msra.mxu0 0.0
    %6206 = vmatprep.subr.mxu0 0.0
    %6207 = vmatpush1.xpose.msra.mxu0 0.0
    %6208 = vmatprep.subr.mxu0 0.0
    %6209 = vmatpush1.xpose.msra.mxu0 0.0
    %6210 = vmatprep.subr.mxu0 0.0
    %6211 = vmatpush1.xpose.msra.mxu0 0.0
    %6212 = vmatprep.subr.mxu0 0.0
    %6213 = vmatpush1.xpose.msra.mxu0 0.0
    %6214 = vmatprep.subr.mxu0 0.0
    %6215 = vmatpush1.xpose.msra.mxu0 0.0
    %6216 = vmatprep.subr.mxu0 0.0
    %6217 = vmatpush1.xpose.msra.mxu0 0.0
    %6218 = vmatprep.subr.mxu0 0.0
    %6219 = vmatpush1.xpose.msra.mxu0 0.0
    %6220 = vmatprep.subr.mxu0 0.0
    %6221 = vmatpush1.xpose.msra.mxu0 0.0
    %6222 = vmatprep.subr.mxu0 0.0
    %6223 = vmatpush1.xpose.msra.mxu0 0.0
    %6224 = vmatprep.subr.mxu0 0.0
    %6225 = vmatpush1.xpose.msra.mxu0 0.0
    %6226 = vmatprep.subr.mxu0 0.0
    %6227 = vmatpush1.xpose.msra.mxu0 %v5812
    %6228 = vmatprep.subr.mxu0 0.0
    %6229 = vmatpush1.xpose.msra.mxu0 %v5809
    %6230 = vmatprep.subr.mxu0 0.0
    %6231 = vmatpush2.xpose.msra.mxu0 0.0
    %6232 = vmatprep.subr.mxu0 0.0
    %6233 = vmatpush2.xpose.msra.mxu0 0.0
    %6234 = vmatprep.subr.mxu0 0.0
    %6235 = vmatpush2.xpose.msra.mxu0 0.0
    %6236 = vmatprep.subr.mxu0 0.0
    %6237 = vmatpush2.xpose.msra.mxu0 0.0
    %6238 = vmatprep.subr.mxu0 0.0
    %6239 = vmatpush2.xpose.msra.mxu0 0.0
    %6240 = vmatprep.subr.mxu0 0.0
    %6241 = vmatpush2.xpose.msra.mxu0 0.0
    %6242 = vmatprep.subr.mxu0 0.0
    %6243 = vmatpush2.xpose.msra.mxu0 0.0
    %6244 = vmatprep.subr.mxu0 0.0
    %6245 = vmatpush2.xpose.msra.mxu0 0.0
    %6246 = vmatprep.subr.mxu0 0.0
    %6247 = vmatpush2.xpose.msra.mxu0 0.0
    %6248 = vmatprep.subr.mxu0 0.0
    %6249 = vmatpush2.xpose.msra.mxu0 0.0
    %6250 = vmatprep.subr.mxu0 0.0
    %6251 = vmatpush2.xpose.msra.mxu0 0.0
    %6252 = vmatprep.subr.mxu0 0.0
    %6253 = vmatpush2.xpose.msra.mxu0 0.0
    %6254 = vmatprep.subr.mxu0 0.0
    %6255 = vmatpush2.xpose.msra.mxu0 0.0
    %6256 = vmatprep.subr.mxu0 0.0
    %6257 = vmatpush2.xpose.msra.mxu0 0.0
    %6258 = vmatprep.subr.mxu0 0.0
    %6259 = vmatpush2.xpose.msra.mxu0 0.0
    %6260 = vmatprep.subr.mxu0 0.0
    %6261 = vmatpush2.xpose.msra.mxu0 0.0
    %6262 = vmatprep.mubr.f32.mxu0 0.0
    %6263 = vmatmul.mubr.f32.gmra.mxu0 %v6193
    %v6264 = vpop.f32.mrf.mxu0
    %v6265 = vadd.f32 0.0, %v6264
    %v6266 = vpop.f32.mrf.mxu0
    %6267 = vmatprep.mubr.f32.mxu0 0.0
    %6268 = vmatmul.mubr.f32.gmra.mxu0 %v6196
    %v6269 = vpop.f32.mrf.mxu0
    %v6270 = vadd.f32 0.0, %v6269
    %v6271 = vpop.f32.mrf.mxu0
    %6272 = vdwg.mxu0
    %v6273 = vmul.f32 %v6265, 0.35355338
    %v6274 = vmul.f32 %v6270, 0.35355338
    %v6275 = vadd.f32 %v6273, %v399
    %v6276 = vadd.f32 %v6274, %v400
    %v6277 = vsel %vm979, %v6275, -inf
    %6278 = vmax.xlane.f32.xlu0 %v6277
    %v6279 = vpop.xlane.xlu0 %6278
    %v6280 = vsel %vm979, %v6276, -inf
    %6281 = vmax.xlane.f32.xlu0 %v6280
    %v6282 = vpop.xlane.xlu0 %6281
    %v6283 = vsub.f32 %v6275, %v6279
    %v6284 = vsub.f32 %v6276, %v6282
    %v6285 = vmul.f32 %v6283, 1.442695
    %v6286 = vpow.pop %v6285
    %v6287 = vmul.f32 %v6284, 1.442695
    %v6288 = vpow.pop %v6287
    %v6289 = vsel %vm979, %v6286, 0.0
    %6290 = vadd.xlane.f32.xlu0 %v6289
    %v6291 = vpop.xlane.xlu0 %6290
    %v6292 = vsel %vm979, %v6288, 0.0
    %6293 = vadd.xlane.f32.xlu0 %v6292
    %v6294 = vpop.xlane.xlu0 %6293
    %v6295 = vrcp.pop %v6291
    %v6296 = vrcp.pop %v6294
    %v6297 = vmul.f32 %v6286, %v6295
    %v6298 = vmul.f32 %v6288, %v6296
    %v6299 = vmul.f32 %v5794, %v1286
    %v6300 = vmul.f32 %v5797, %v1286
    %v6302 = vsel %vm979, %v6297, 0
    %v6305 = vsel %vm979, %v6298, 0
    %6307 = vmatprep.subr.mxu0 0.0
    %6308 = vmatpush1.msra.mxu0 0.0
    %6309 = vmatprep.subr.mxu0 0.0
    %6310 = vmatpush1.msra.mxu0 0.0
    %6311 = vmatprep.subr.mxu0 0.0
    %6312 = vmatpush1.msra.mxu0 0.0
    %6313 = vmatprep.subr.mxu0 0.0
    %6314 = vmatpush1.msra.mxu0 0.0
    %6315 = vmatprep.subr.mxu0 0.0
    %6316 = vmatpush1.msra.mxu0 0.0
    %6317 = vmatprep.subr.mxu0 0.0
    %6318 = vmatpush1.msra.mxu0 0.0
    %6319 = vmatprep.subr.mxu0 0.0
    %6320 = vmatpush1.msra.mxu0 0.0
    %6321 = vmatprep.subr.mxu0 0.0
    %6322 = vmatpush1.msra.mxu0 0.0
    %6323 = vmatprep.subr.mxu0 0.0
    %6324 = vmatpush1.msra.mxu0 0.0
    %6325 = vmatprep.subr.mxu0 0.0
    %6326 = vmatpush1.msra.mxu0 0.0
    %6327 = vmatprep.subr.mxu0 0.0
    %6328 = vmatpush1.msra.mxu0 0.0
    %6329 = vmatprep.subr.mxu0 0.0
    %6330 = vmatpush1.msra.mxu0 0.0
    %6331 = vmatprep.subr.mxu0 0.0
    %6332 = vmatpush1.msra.mxu0 0.0
    %6333 = vmatprep.subr.mxu0 0.0
    %6334 = vmatpush1.msra.mxu0 0.0
    %6335 = vmatprep.subr.mxu0 0.0
    %6336 = vmatpush1.msra.mxu0 %v6300
    %6337 = vmatprep.subr.mxu0 0.0
    %6338 = vmatpush1.msra.mxu0 %v6299
    %6339 = vmatprep.subr.mxu0 0.0
    %6340 = vmatpush2.msra.mxu0 0.0
    %6341 = vmatprep.subr.mxu0 0.0
    %6342 = vmatpush2.msra.mxu0 0.0
    %6343 = vmatprep.subr.mxu0 0.0
    %6344 = vmatpush2.msra.mxu0 0.0
    %6345 = vmatprep.subr.mxu0 0.0
    %6346 = vmatpush2.msra.mxu0 0.0
    %6347 = vmatprep.subr.mxu0 0.0
    %6348 = vmatpush2.msra.mxu0 0.0
    %6349 = vmatprep.subr.mxu0 0.0
    %6350 = vmatpush2.msra.mxu0 0.0
    %6351 = vmatprep.subr.mxu0 0.0
    %6352 = vmatpush2.msra.mxu0 0.0
    %6353 = vmatprep.subr.mxu0 0.0
    %6354 = vmatpush2.msra.mxu0 0.0
    %6355 = vmatprep.subr.mxu0 0.0
    %6356 = vmatpush2.msra.mxu0 0.0
    %6357 = vmatprep.subr.mxu0 0.0
    %6358 = vmatpush2.msra.mxu0 0.0
    %6359 = vmatprep.subr.mxu0 0.0
    %6360 = vmatpush2.msra.mxu0 0.0
    %6361 = vmatprep.subr.mxu0 0.0
    %6362 = vmatpush2.msra.mxu0 0.0
    %6363 = vmatprep.subr.mxu0 0.0
    %6364 = vmatpush2.msra.mxu0 0.0
    %6365 = vmatprep.subr.mxu0 0.0
    %6366 = vmatpush2.msra.mxu0 0.0
    %6367 = vmatprep.subr.mxu0 0.0
    %6368 = vmatpush2.msra.mxu0 0.0
    %6369 = vmatprep.subr.mxu0 0.0
    %6370 = vmatpush2.msra.mxu0 0.0
    %6371 = vmatprep.mubr.f32.mxu0 0.0
    %6372 = vmatmul.mubr.f32.gmra.mxu0 %v6302
    %v6373 = vpop.f32.mrf.mxu0
    %v6374 = vadd.f32 0.0, %v6373
    %v6375 = vpop.f32.mrf.mxu0
    %6376 = vmatprep.mubr.f32.mxu0 0.0
    %6377 = vmatmul.mubr.f32.gmra.mxu0 %v6305
    %v6378 = vpop.f32.mrf.mxu0
    %v6379 = vadd.f32 0.0, %v6378
    %v6380 = vpop.f32.mrf.mxu0
    %6381 = vdwg.mxu0
    %v6382 = vadd.f32 %v6182, %v6374
    %v6383 = vadd.f32 %v6187, %v6379
    %v6384 = vmul.f32 %v5662, %v1485
    %v6385 = vmul.f32 %v5665, %v1485
    %v6387 = vsel %vm340, %v6384, 0
    %v6390 = vsel %vm340, %v6385, 0
    %6392 = vmatprep.subr.mxu0 0.0
    %6393 = vmatpush1.xpose.msra.mxu0 0.0
    %6394 = vmatprep.subr.mxu0 0.0
    %6395 = vmatpush1.xpose.msra.mxu0 0.0
    %6396 = vmatprep.subr.mxu0 0.0
    %6397 = vmatpush1.xpose.msra.mxu0 0.0
    %6398 = vmatprep.subr.mxu0 0.0
    %6399 = vmatpush1.xpose.msra.mxu0 0.0
    %6400 = vmatprep.subr.mxu0 0.0
    %6401 = vmatpush1.xpose.msra.mxu0 0.0
    %6402 = vmatprep.subr.mxu0 0.0
    %6403 = vmatpush1.xpose.msra.mxu0 0.0
    %6404 = vmatprep.subr.mxu0 0.0
    %6405 = vmatpush1.xpose.msra.mxu0 0.0
    %6406 = vmatprep.subr.mxu0 0.0
    %6407 = vmatpush1.xpose.msra.mxu0 0.0
    %6408 = vmatprep.subr.mxu0 0.0
    %6409 = vmatpush1.xpose.msra.mxu0 0.0
    %6410 = vmatprep.subr.mxu0 0.0
    %6411 = vmatpush1.xpose.msra.mxu0 0.0
    %6412 = vmatprep.subr.mxu0 0.0
    %6413 = vmatpush1.xpose.msra.mxu0 0.0
    %6414 = vmatprep.subr.mxu0 0.0
    %6415 = vmatpush1.xpose.msra.mxu0 0.0
    %6416 = vmatprep.subr.mxu0 0.0
    %6417 = vmatpush1.xpose.msra.mxu0 0.0
    %6418 = vmatprep.subr.mxu0 0.0
    %6419 = vmatpush1.xpose.msra.mxu0 0.0
    %6420 = vmatprep.subr.mxu0 0.0
    %6421 = vmatpush1.xpose.msra.mxu0 %v5812
    %6422 = vmatprep.subr.mxu0 0.0
    %6423 = vmatpush1.xpose.msra.mxu0 %v5809
    %6424 = vmatprep.subr.mxu0 0.0
    %6425 = vmatpush2.xpose.msra.mxu0 0.0
    %6426 = vmatprep.subr.mxu0 0.0
    %6427 = vmatpush2.xpose.msra.mxu0 0.0
    %6428 = vmatprep.subr.mxu0 0.0
    %6429 = vmatpush2.xpose.msra.mxu0 0.0
    %6430 = vmatprep.subr.mxu0 0.0
    %6431 = vmatpush2.xpose.msra.mxu0 0.0
    %6432 = vmatprep.subr.mxu0 0.0
    %6433 = vmatpush2.xpose.msra.mxu0 0.0
    %6434 = vmatprep.subr.mxu0 0.0
    %6435 = vmatpush2.xpose.msra.mxu0 0.0
    %6436 = vmatprep.subr.mxu0 0.0
    %6437 = vmatpush2.xpose.msra.mxu0 0.0
    %6438 = vmatprep.subr.mxu0 0.0
    %6439 = vmatpush2.xpose.msra.mxu0 0.0
    %6440 = vmatprep.subr.mxu0 0.0
    %6441 = vmatpush2.xpose.msra.mxu0 0.0
    %6442 = vmatprep.subr.mxu0 0.0
    %6443 = vmatpush2.xpose.msra.mxu0 0.0
    %6444 = vmatprep.subr.mxu0 0.0
    %6445 = vmatpush2.xpose.msra.mxu0 0.0
    %6446 = vmatprep.subr.mxu0 0.0
    %6447 = vmatpush2.xpose.msra.mxu0 0.0
    %6448 = vmatprep.subr.mxu0 0.0
    %6449 = vmatpush2.xpose.msra.mxu0 0.0
    %6450 = vmatprep.subr.mxu0 0.0
    %6451 = vmatpush2.xpose.msra.mxu0 0.0
    %6452 = vmatprep.subr.mxu0 0.0
    %6453 = vmatpush2.xpose.msra.mxu0 0.0
    %6454 = vmatprep.subr.mxu0 0.0
    %6455 = vmatpush2.xpose.msra.mxu0 0.0
    %6456 = vmatprep.mubr.f32.mxu0 0.0
    %6457 = vmatmul.mubr.f32.gmra.mxu0 %v6387
    %v6458 = vpop.f32.mrf.mxu0
    %v6459 = vadd.f32 0.0, %v6458
    %v6460 = vpop.f32.mrf.mxu0
    %6461 = vmatprep.mubr.f32.mxu0 0.0
    %6462 = vmatmul.mubr.f32.gmra.mxu0 %v6390
    %v6463 = vpop.f32.mrf.mxu0
    %v6464 = vadd.f32 0.0, %v6463
    %v6465 = vpop.f32.mrf.mxu0
    %6466 = vdwg.mxu0
    %v6467 = vmul.f32 %v6459, 0.35355338
    %v6468 = vmul.f32 %v6464, 0.35355338
    %v6469 = vadd.f32 %v6467, %v399
    %v6470 = vadd.f32 %v6468, %v400
    %v6471 = vsel %vm979, %v6469, -inf
    %6472 = vmax.xlane.f32.xlu0 %v6471
    %v6473 = vpop.xlane.xlu0 %6472
    %v6474 = vsel %vm979, %v6470, -inf
    %6475 = vmax.xlane.f32.xlu0 %v6474
    %v6476 = vpop.xlane.xlu0 %6475
    %v6477 = vsub.f32 %v6469, %v6473
    %v6478 = vsub.f32 %v6470, %v6476
    %v6479 = vmul.f32 %v6477, 1.442695
    %v6480 = vpow.pop %v6479
    %v6481 = vmul.f32 %v6478, 1.442695
    %v6482 = vpow.pop %v6481
    %v6483 = vsel %vm979, %v6480, 0.0
    %6484 = vadd.xlane.f32.xlu0 %v6483
    %v6485 = vpop.xlane.xlu0 %6484
    %v6486 = vsel %vm979, %v6482, 0.0
    %6487 = vadd.xlane.f32.xlu0 %v6486
    %v6488 = vpop.xlane.xlu0 %6487
    %v6489 = vrcp.pop %v6485
    %v6490 = vrcp.pop %v6488
    %v6491 = vmul.f32 %v6480, %v6489
    %v6492 = vmul.f32 %v6482, %v6490
    %v6493 = vmul.f32 %v5794, %v1485
    %v6494 = vmul.f32 %v5797, %v1485
    %v6496 = vsel %vm979, %v6491, 0
    %v6499 = vsel %vm979, %v6492, 0
    %6501 = vmatprep.subr.mxu0 0.0
    %6502 = vmatpush1.msra.mxu0 0.0
    %6503 = vmatprep.subr.mxu0 0.0
    %6504 = vmatpush1.msra.mxu0 0.0
    %6505 = vmatprep.subr.mxu0 0.0
    %6506 = vmatpush1.msra.mxu0 0.0
    %6507 = vmatprep.subr.mxu0 0.0
    %6508 = vmatpush1.msra.mxu0 0.0
    %6509 = vmatprep.subr.mxu0 0.0
    %6510 = vmatpush1.msra.mxu0 0.0
    %6511 = vmatprep.subr.mxu0 0.0
    %6512 = vmatpush1.msra.mxu0 0.0
    %6513 = vmatprep.subr.mxu0 0.0
    %6514 = vmatpush1.msra.mxu0 0.0
    %6515 = vmatprep.subr.mxu0 0.0
    %6516 = vmatpush1.msra.mxu0 0.0
    %6517 = vmatprep.subr.mxu0 0.0
    %6518 = vmatpush1.msra.mxu0 0.0
    %6519 = vmatprep.subr.mxu0 0.0
    %6520 = vmatpush1.msra.mxu0 0.0
    %6521 = vmatprep.subr.mxu0 0.0
    %6522 = vmatpush1.msra.mxu0 0.0
    %6523 = vmatprep.subr.mxu0 0.0
    %6524 = vmatpush1.msra.mxu0 0.0
    %6525 = vmatprep.subr.mxu0 0.0
    %6526 = vmatpush1.msra.mxu0 0.0
    %6527 = vmatprep.subr.mxu0 0.0
    %6528 = vmatpush1.msra.mxu0 0.0
    %6529 = vmatprep.subr.mxu0 0.0
    %6530 = vmatpush1.msra.mxu0 %v6494
    %6531 = vmatprep.subr.mxu0 0.0
    %6532 = vmatpush1.msra.mxu0 %v6493
    %6533 = vmatprep.subr.mxu0 0.0
    %6534 = vmatpush2.msra.mxu0 0.0
    %6535 = vmatprep.subr.mxu0 0.0
    %6536 = vmatpush2.msra.mxu0 0.0
    %6537 = vmatprep.subr.mxu0 0.0
    %6538 = vmatpush2.msra.mxu0 0.0
    %6539 = vmatprep.subr.mxu0 0.0
    %6540 = vmatpush2.msra.mxu0 0.0
    %6541 = vmatprep.subr.mxu0 0.0
    %6542 = vmatpush2.msra.mxu0 0.0
    %6543 = vmatprep.subr.mxu0 0.0
    %6544 = vmatpush2.msra.mxu0 0.0
    %6545 = vmatprep.subr.mxu0 0.0
    %6546 = vmatpush2.msra.mxu0 0.0
    %6547 = vmatprep.subr.mxu0 0.0
    %6548 = vmatpush2.msra.mxu0 0.0
    %6549 = vmatprep.subr.mxu0 0.0
    %6550 = vmatpush2.msra.mxu0 0.0
    %6551 = vmatprep.subr.mxu0 0.0
    %6552 = vmatpush2.msra.mxu0 0.0
    %6553 = vmatprep.subr.mxu0 0.0
    %6554 = vmatpush2.msra.mxu0 0.0
    %6555 = vmatprep.subr.mxu0 0.0
    %6556 = vmatpush2.msra.mxu0 0.0
    %6557 = vmatprep.subr.mxu0 0.0
    %6558 = vmatpush2.msra.mxu0 0.0
    %6559 = vmatprep.subr.mxu0 0.0
    %6560 = vmatpush2.msra.mxu0 0.0
    %6561 = vmatprep.subr.mxu0 0.0
    %6562 = vmatpush2.msra.mxu0 0.0
    %6563 = vmatprep.subr.mxu0 0.0
    %6564 = vmatpush2.msra.mxu0 0.0
    %6565 = vmatprep.mubr.f32.mxu0 0.0
    %6566 = vmatmul.mubr.f32.gmra.mxu0 %v6496
    %v6567 = vpop.f32.mrf.mxu0
    %v6568 = vadd.f32 0.0, %v6567
    %v6569 = vpop.f32.mrf.mxu0
    %6570 = vmatprep.mubr.f32.mxu0 0.0
    %6571 = vmatmul.mubr.f32.gmra.mxu0 %v6499
    %v6572 = vpop.f32.mrf.mxu0
    %v6573 = vadd.f32 0.0, %v6572
    %v6574 = vpop.f32.mrf.mxu0
    %6575 = vdwg.mxu0
    %v6576 = vadd.f32 %v6382, %v6568
    %v6577 = vadd.f32 %v6383, %v6573
    %v6578 = vpack.c.bf16 %v6577, %v6576
    %s6579 = scalar_lea.vmem %s27, 48
    %v6580 = vld [vmem:[%s6579] sm:$0xf]
    %v6581 = vld [vmem:[%s6579 + $0x4] sm:$0xf]
    %v6582 = vld [vmem:[%s6579 + $0x8] sm:$0xf]
    %v6583 = vld [vmem:[%s6579 + $0xc] sm:$0xf]
    %s6584 = scalar_lea.vmem %s29, 3
    %v6585 = vld [vmem:[%s6584] sm:$0x1]
    %v6587 = vlaneseq
    %v6588 = vshrl.u32 %v6587, 7
    %v6589 = vsub.s32 0, %v6588
    %v6590 = vrot.slane %v6585, %v6589
    %v6596 = vunpack.c.l.b16 %v6580
    %v6597 = vunpack.c.l.b16 %v6581
    %v6598 = vunpack.c.l.b16 %v6582
    %v6599 = vunpack.c.l.b16 %v6583
    %v6600 = vpack.c.b16 %v6597, %v6596
    %v6601 = vpack.c.b16 %v6599, %v6598
    %v6605 = vsel %vm340, %v6578, 0
    %6607 = vmatprep.subr.bf16.mxu0 0
    %6608 = vmatpush1.bf16.msra.mxu0 0
    %6609 = vmatprep.subr.bf16.mxu0 0
    %6610 = vmatpush1.bf16.msra.mxu0 0
    %6611 = vmatprep.subr.bf16.mxu0 0
    %6612 = vmatpush1.bf16.msra.mxu0 0
    %6613 = vmatprep.subr.bf16.mxu0 0
    %6614 = vmatpush1.bf16.msra.mxu0 0
    %6615 = vmatprep.subr.bf16.mxu0 0
    %6616 = vmatpush1.bf16.msra.mxu0 0
    %6617 = vmatprep.subr.bf16.mxu0 0
    %6618 = vmatpush1.bf16.msra.mxu0 0
    %6619 = vmatprep.subr.bf16.mxu0 0
    %6620 = vmatpush1.bf16.msra.mxu0 %v6601
    %6621 = vmatprep.subr.bf16.mxu0 0
    %6622 = vmatpush1.bf16.msra.mxu0 %v6600
    %6623 = vmatprep.subr.bf16.mxu0 0
    %6624 = vmatpush2.bf16.msra.mxu0 0
    %6625 = vmatprep.subr.bf16.mxu0 0
    %6626 = vmatpush2.bf16.msra.mxu0 0
    %6627 = vmatprep.subr.bf16.mxu0 0
    %6628 = vmatpush2.bf16.msra.mxu0 0
    %6629 = vmatprep.subr.bf16.mxu0 0
    %6630 = vmatpush2.bf16.msra.mxu0 0
    %6631 = vmatprep.subr.bf16.mxu0 0
    %6632 = vmatpush2.bf16.msra.mxu0 0
    %6633 = vmatprep.subr.bf16.mxu0 0
    %6634 = vmatpush2.bf16.msra.mxu0 0
    %6635 = vmatprep.subr.bf16.mxu0 0
    %6636 = vmatpush2.bf16.msra.mxu0 0
    %6637 = vmatprep.subr.bf16.mxu0 0
    %6638 = vmatpush2.bf16.msra.mxu0 0
    %6639 = vmatprep.mubr.bf16.mxu0 0
    %6640 = vmatmul.mubr.bf16.gmra.mxu0 %v6605
    %v6641 = vpop.f32.mrf.mxu0
    %v6642 = vadd.f32 %v6590, %v6641
    %v6643 = vpop.f32.mrf.mxu0
    %v6644 = vpop.f32.mrf.mxu0
    %v6645 = vadd.f32 %v6590, %v6644
    %v6646 = vpop.f32.mrf.mxu0
    %6647 = vdwg.mxu0
    %v6648 = vadd.f32 %v5280, %v6642
    %v6649 = vadd.f32 %v5281, %v6645
    %s6650 = scalar_lea.vmem [#allocation4], 3
    %v6651 = vld [vmem:[%s6650] sm:$0x1]
    %s6652 = scalar_lea.vmem [#allocation6], 3
    %v6653 = vld [vmem:[%s6652] sm:$0x1]
    %v6654 = vsel %vm340, %v6648, 0.0
    %6655 = vadd.xlane.f32.xlu0 %v6654
    %v6656 = vpop.xlane.xlu0 %6655
    %v6657 = vsel %vm340, %v6649, 0.0
    %6658 = vadd.xlane.f32.xlu0 %v6657
    %v6659 = vpop.xlane.xlu0 %6658
    %v6660 = vmul.f32 %v6656, %v347
    %v6661 = vmul.f32 %v6659, %v347
    %v6662 = vsub.f32 %v6648, %v6660
    %v6663 = vsub.f32 %v6649, %v6661
    %v6664 = vmul.f32 %v6662, %v6662
    %v6665 = vmul.f32 %v6663, %v6663
    %v6666 = vsel %vm340, %v6664, 0.0
    %6667 = vadd.xlane.f32.xlu0 %v6666
    %v6668 = vpop.xlane.xlu0 %6667
    %v6669 = vsel %vm340, %v6665, 0.0
    %6670 = vadd.xlane.f32.xlu0 %v6669
    %v6671 = vpop.xlane.xlu0 %6670
    %v6672 = vmul.f32 %v6668, %v347
    %v6673 = vmul.f32 %v6671, %v347
    %v6674 = vadd.f32 %v6672, 1e-12
    %v6675 = vadd.f32 %v6673, 1e-12
    %v6676 = vrsqrt.pop %v6674
    %v6677 = vrsqrt.pop %v6675
    %v6678 = vmul.f32 %v6662, %v6676
    %v6679 = vmul.f32 %v6663, %v6677
    %v6681 = vlaneseq
    %v6682 = vshrl.u32 %v6681, 7
    %v6683 = vsub.s32 0, %v6682
    %v6684 = vrot.slane %v6651, %v6683
    %v6686 = vmul.f32 %v6678, %v6684
    %v6687 = vmul.f32 %v6679, %v6684
    %v6689 = vlaneseq
    %v6690 = vshrl.u32 %v6689, 7
    %v6691 = vsub.s32 0, %v6690
    %v6692 = vrot.slane %v6653, %v6691
    %v6694 = vadd.f32 %v6686, %v6692
    %v6695 = vadd.f32 %v6687, %v6692
    %v6696 = vpack.c.bf16 %v6695, %v6694
    %s6697 = scalar_lea.vmem %s31, 48
    %v6698 = vld [vmem:[%s6697] sm:$0xf]
    %v6699 = vld [vmem:[%s6697 + $0x4] sm:$0xf]
    %v6700 = vld [vmem:[%s6697 + $0x8] sm:$0xf]
    %v6701 = vld [vmem:[%s6697 + $0xc] sm:$0xf]
    %s6702 = scalar_lea.vmem %s33, 3
    %v6703 = vld [vmem:[%s6702] sm:$0x1]
    %v6705 = vlaneseq
    %v6706 = vshrl.u32 %v6705, 7
    %v6707 = vsub.s32 0, %v6706
    %v6708 = vrot.slane %v6703, %v6707
    %v6714 = vunpack.c.l.b16 %v6698
    %v6715 = vunpack.c.l.b16 %v6699
    %v6716 = vunpack.c.l.b16 %v6700
    %v6717 = vunpack.c.l.b16 %v6701
    %v6718 = vpack.c.b16 %v6715, %v6714
    %v6719 = vpack.c.b16 %v6717, %v6716
    %v6723 = vsel %vm340, %v6696, 0
    %6725 = vmatprep.subr.bf16.mxu0 0
    %6726 = vmatpush1.bf16.msra.mxu0 0
    %6727 = vmatprep.subr.bf16.mxu0 0
    %6728 = vmatpush1.bf16.msra.mxu0 0
    %6729 = vmatprep.subr.bf16.mxu0 0
    %6730 = vmatpush1.bf16.msra.mxu0 0
    %6731 = vmatprep.subr.bf16.mxu0 0
    %6732 = vmatpush1.bf16.msra.mxu0 0
    %6733 = vmatprep.subr.bf16.mxu0 0
    %6734 = vmatpush1.bf16.msra.mxu0 0
    %6735 = vmatprep.subr.bf16.mxu0 0
    %6736 = vmatpush1.bf16.msra.mxu0 0
    %6737 = vmatprep.subr.bf16.mxu0 0
    %6738 = vmatpush1.bf16.msra.mxu0 %v6719
    %6739 = vmatprep.subr.bf16.mxu0 0
    %6740 = vmatpush1.bf16.msra.mxu0 %v6718
    %6741 = vmatprep.subr.bf16.mxu0 0
    %6742 = vmatpush2.bf16.msra.mxu0 0
    %6743 = vmatprep.subr.bf16.mxu0 0
    %6744 = vmatpush2.bf16.msra.mxu0 0
    %6745 = vmatprep.subr.bf16.mxu0 0
    %6746 = vmatpush2.bf16.msra.mxu0 0
    %6747 = vmatprep.subr.bf16.mxu0 0
    %6748 = vmatpush2.bf16.msra.mxu0 0
    %6749 = vmatprep.subr.bf16.mxu0 0
    %6750 = vmatpush2.bf16.msra.mxu0 0
    %6751 = vmatprep.subr.bf16.mxu0 0
    %6752 = vmatpush2.bf16.msra.mxu0 0
    %6753 = vmatprep.subr.bf16.mxu0 0
    %6754 = vmatpush2.bf16.msra.mxu0 0
    %6755 = vmatprep.subr.bf16.mxu0 0
    %6756 = vmatpush2.bf16.msra.mxu0 0
    %6757 = vmatprep.mubr.bf16.mxu0 0
    %6758 = vmatmul.mubr.bf16.gmra.mxu0 %v6723
    %v6759 = vpop.f32.mrf.mxu0
    %v6760 = vadd.f32 %v6708, %v6759
    %v6761 = vpop.f32.mrf.mxu0
    %v6762 = vpop.f32.mrf.mxu0
    %v6763 = vadd.f32 %v6708, %v6762
    %v6764 = vpop.f32.mrf.mxu0
    %6765 = vdwg.mxu0
    %v6766 = vmul.f32 %v6760, 0.5
    %v6767 = vmul.f32 %v6763, 0.5
    %v6768 = vmul.f32 %v6760, 0.044715
    %v6769 = vmul.f32 %v6763, 0.044715
    %v6770 = vmul.f32 %v6768, %v6760
    %v6771 = vmul.f32 %v6769, %v6763
    %v6772 = vmul.f32 %v6770, %v6760
    %v6773 = vmul.f32 %v6771, %v6763
    %v6774 = vadd.f32 %v6760, %v6772
    %v6775 = vadd.f32 %v6763, %v6773
    %v6776 = vmul.f32 %v6774, 0.7978846
    %v6777 = vmul.f32 %v6775, 0.7978846
    %v6778 = vtanh.pop %v6776
    %v6779 = vtanh.pop %v6777
    %v6780 = vadd.f32 %v6778, 1.0
    %v6781 = vadd.f32 %v6779, 1.0
    %v6782 = vmul.f32 %v6766, %v6780
    %v6783 = vmul.f32 %v6767, %v6781
    %v6784 = vpack.c.bf16 %v6783, %v6782
    %s6785 = scalar_lea.vmem %s35, 96
    %v6786 = vld [vmem:[%s6785] sm:$0xf]
    %v6787 = vld [vmem:[%s6785 + $0x4] sm:$0xf]
    %v6788 = vld [vmem:[%s6785 + $0x8] sm:$0xf]
    %v6789 = vld [vmem:[%s6785 + $0xc] sm:$0xf]
    %v6790 = vld [vmem:[%s6785 + $0x10] sm:$0xf]
    %v6791 = vld [vmem:[%s6785 + $0x14] sm:$0xf]
    %v6792 = vld [vmem:[%s6785 + $0x18] sm:$0xf]
    %v6793 = vld [vmem:[%s6785 + $0x1c] sm:$0xf]
    %s6794 = scalar_lea.vmem %s37, 3
    %v6795 = vld [vmem:[%s6794] sm:$0x1]
    %v6797 = vlaneseq
    %v6798 = vshrl.u32 %v6797, 7
    %v6799 = vsub.s32 0, %v6798
    %v6800 = vrot.slane %v6795, %v6799
    %v6810 = vunpack.c.l.b16 %v6786
    %v6811 = vunpack.c.l.b16 %v6787
    %v6812 = vunpack.c.l.b16 %v6788
    %v6813 = vunpack.c.l.b16 %v6789
    %v6814 = vunpack.c.l.b16 %v6790
    %v6815 = vunpack.c.l.b16 %v6791
    %v6816 = vunpack.c.l.b16 %v6792
    %v6817 = vunpack.c.l.b16 %v6793
    %v6818 = vpack.c.b16 %v6811, %v6810
    %v6819 = vpack.c.b16 %v6813, %v6812
    %v6820 = vpack.c.b16 %v6815, %v6814
    %v6821 = vpack.c.b16 %v6817, %v6816
    %v6827 = vsel %vm256, %v6784, 0
    %6829 = vmatprep.subr.bf16.mxu0 0
    %6830 = vmatpush1.bf16.msra.mxu0 0
    %6831 = vmatprep.subr.bf16.mxu0 0
    %6832 = vmatpush1.bf16.msra.mxu0 0
    %6833 = vmatprep.subr.bf16.mxu0 0
    %6834 = vmatpush1.bf16.msra.mxu0 0
    %6835 = vmatprep.subr.bf16.mxu0 0
    %6836 = vmatpush1.bf16.msra.mxu0 0
    %6837 = vmatprep.subr.bf16.mxu0 0
    %6838 = vmatpush1.bf16.msra.mxu0 %v6821
    %6839 = vmatprep.subr.bf16.mxu0 0
    %6840 = vmatpush1.bf16.msra.mxu0 %v6820
    %6841 = vmatprep.subr.bf16.mxu0 0
    %6842 = vmatpush1.bf16.msra.mxu0 %v6819
    %6843 = vmatprep.subr.bf16.mxu0 0
    %6844 = vmatpush1.bf16.msra.mxu0 %v6818
    %6845 = vmatprep.subr.bf16.mxu0 0
    %6846 = vmatpush2.bf16.msra.mxu0 0
    %6847 = vmatprep.subr.bf16.mxu0 0
    %6848 = vmatpush2.bf16.msra.mxu0 0
    %6849 = vmatprep.subr.bf16.mxu0 0
    %6850 = vmatpush2.bf16.msra.mxu0 0
    %6851 = vmatprep.subr.bf16.mxu0 0
    %6852 = vmatpush2.bf16.msra.mxu0 0
    %6853 = vmatprep.subr.bf16.mxu0 0
    %6854 = vmatpush2.bf16.msra.mxu0 0
    %6855 = vmatprep.subr.bf16.mxu0 0
    %6856 = vmatpush2.bf16.msra.mxu0 0
    %6857 = vmatprep.subr.bf16.mxu0 0
    %6858 = vmatpush2.bf16.msra.mxu0 0
    %6859 = vmatprep.subr.bf16.mxu0 0
    %6860 = vmatpush2.bf16.msra.mxu0 0
    %6861 = vmatprep.mubr.bf16.mxu0 0
    %6862 = vmatmul.mubr.bf16.gmra.mxu0 %v6827
    %v6863 = vpop.f32.mrf.mxu0
    %v6864 = vadd.f32 %v6800, %v6863
    %v6865 = vpop.f32.mrf.mxu0
    %v6866 = vpop.f32.mrf.mxu0
    %v6867 = vadd.f32 %v6800, %v6866
    %v6868 = vpop.f32.mrf.mxu0
    %6869 = vdwg.mxu0
    %v6870 = vadd.f32 %v6694, %v6864
    %v6871 = vadd.f32 %v6695, %v6867
    %s6872 = scalar_lea.vmem [#allocation8], 3
    %v6873 = vld [vmem:[%s6872] sm:$0x1]
    %s6874 = scalar_lea.vmem [#allocation9], 3
    %v6875 = vld [vmem:[%s6874] sm:$0x1]
    %v6876 = vsel %vm340, %v6870, 0.0
    %6877 = vadd.xlane.f32.xlu0 %v6876
    %v6878 = vpop.xlane.xlu0 %6877
    %v6879 = vsel %vm340, %v6871, 0.0
    %6880 = vadd.xlane.f32.xlu0 %v6879
    %v6881 = vpop.xlane.xlu0 %6880
    %v6882 = vmul.f32 %v6878, %v347
    %v6883 = vmul.f32 %v6881, %v347
    %v6884 = vsub.f32 %v6870, %v6882
    %v6885 = vsub.f32 %v6871, %v6883
    %v6886 = vmul.f32 %v6884, %v6884
    %v6887 = vmul.f32 %v6885, %v6885
    %v6888 = vsel %vm340, %v6886, 0.0
    %6889 = vadd.xlane.f32.xlu0 %v6888
    %v6890 = vpop.xlane.xlu0 %6889
    %v6891 = vsel %vm340, %v6887, 0.0
    %6892 = vadd.xlane.f32.xlu0 %v6891
    %v6893 = vpop.xlane.xlu0 %6892
    %v6894 = vmul.f32 %v6890, %v347
    %v6895 = vmul.f32 %v6893, %v347
    %v6896 = vadd.f32 %v6894, 1e-12
    %v6897 = vadd.f32 %v6895, 1e-12
    %v6898 = vrsqrt.pop %v6896
    %v6899 = vrsqrt.pop %v6897
    %v6900 = vmul.f32 %v6884, %v6898
    %v6901 = vmul.f32 %v6885, %v6899
    %v6903 = vlaneseq
    %v6904 = vshrl.u32 %v6903, 7
    %v6905 = vsub.s32 0, %v6904
    %v6906 = vrot.slane %v6873, %v6905
    %v6908 = vmul.f32 %v6900, %v6906
    %v6909 = vmul.f32 %v6901, %v6906
    %v6911 = vlaneseq
    %v6912 = vshrl.u32 %v6911, 7
    %v6913 = vsub.s32 0, %v6912
    %v6914 = vrot.slane %v6875, %v6913
    %v6916 = vadd.f32 %v6908, %v6914
    %v6917 = vadd.f32 %v6909, %v6914
    %v6918 = vld [vmem:[#allocation2] sm:$0xff]
    %v6919 = vld [vmem:[#allocation2 + $0x8] sm:$0xff]
    %v6920 = vld [vmem:[#allocation2 + $0x10] sm:$0xff]
    %v6921 = vld [vmem:[#allocation2 + $0x18] sm:$0xff]
    %v6922 = vld [vmem:[#allocation2 + $0x20] sm:$0xff]
    %v6923 = vld [vmem:[#allocation2 + $0x28] sm:$0xff]
    %v6924 = vld [vmem:[#allocation2 + $0x30] sm:$0xff]
    %v6925 = vld [vmem:[#allocation2 + $0x38] sm:$0xff]
    %v6926 = vld [vmem:[#allocation2 + $0x40] sm:$0xff]
    %v6927 = vld [vmem:[#allocation2 + $0x48] sm:$0xff]
    %v6928 = vld [vmem:[#allocation2 + $0x50] sm:$0xff]
    %v6929 = vld [vmem:[#allocation2 + $0x58] sm:$0xff]
    %v6930 = vld [vmem:[#allocation2 + $0x60] sm:$0xff]
    %v6931 = vld [vmem:[#allocation2 + $0x68] sm:$0xff]
    %v6932 = vld [vmem:[#allocation2 + $0x70] sm:$0xff]
    %v6933 = vld [vmem:[#allocation2 + $0x78] sm:$0xff]
    %v6934 = vpack.c.bf16 %v6917, %v6916
    %v6935 = vld [vmem:[#allocation11 + $0x200] sm:$0xff]
    %v6936 = vld [vmem:[#allocation11 + $0x208] sm:$0xff]
    %v6937 = vld [vmem:[#allocation11 + $0x210] sm:$0xff]
    %v6938 = vld [vmem:[#allocation11 + $0x218] sm:$0xff]
    %v6939 = vld [vmem:[#allocation11 + $0x220] sm:$0xff]
    %v6940 = vld [vmem:[#allocation11 + $0x228] sm:$0xff]
    %v6941 = vld [vmem:[#allocation11 + $0x230] sm:$0xff]
    %v6942 = vld [vmem:[#allocation11 + $0x238] sm:$0xff]
    %v6943 = vld [vmem:[#allocation11 + $0x240] sm:$0xff]
    %v6944 = vld [vmem:[#allocation11 + $0x248] sm:$0xff]
    %v6945 = vld [vmem:[#allocation11 + $0x250] sm:$0xff]
    %v6946 = vld [vmem:[#allocation11 + $0x258] sm:$0xff]
    %v6947 = vld [vmem:[#allocation11 + $0x260] sm:$0xff]
    %v6948 = vld [vmem:[#allocation11 + $0x268] sm:$0xff]
    %v6949 = vld [vmem:[#allocation11 + $0x270] sm:$0xff]
    %v6950 = vld [vmem:[#allocation11 + $0x278] sm:$0xff]
    %v6967 = vunpack.c.l.b16 %v6935
    %v6968 = vunpack.c.h.b16 %v6935
    %v6969 = vunpack.c.l.b16 %v6936
    %v6970 = vunpack.c.h.b16 %v6936
    %v6971 = vunpack.c.l.b16 %v6937
    %v6972 = vunpack.c.h.b16 %v6937
    %v6973 = vunpack.c.l.b16 %v6938
    %v6974 = vunpack.c.h.b16 %v6938
    %v6975 = vunpack.c.l.b16 %v6939
    %v6976 = vunpack.c.h.b16 %v6939
    %v6977 = vunpack.c.l.b16 %v6940
    %v6978 = vunpack.c.h.b16 %v6940
    %v6979 = vunpack.c.l.b16 %v6941
    %v6980 = vunpack.c.h.b16 %v6941
    %v6981 = vunpack.c.l.b16 %v6942
    %v6982 = vunpack.c.h.b16 %v6942
    %v6983 = vunpack.c.l.b16 %v6943
    %v6984 = vunpack.c.h.b16 %v6943
    %v6985 = vunpack.c.l.b16 %v6944
    %v6986 = vunpack.c.h.b16 %v6944
    %v6987 = vunpack.c.l.b16 %v6945
    %v6988 = vunpack.c.h.b16 %v6945
    %v6989 = vunpack.c.l.b16 %v6946
    %v6990 = vunpack.c.h.b16 %v6946
    %v6991 = vunpack.c.l.b16 %v6947
    %v6992 = vunpack.c.h.b16 %v6947
    %v6993 = vunpack.c.l.b16 %v6948
    %v6994 = vunpack.c.h.b16 %v6948
    %v6995 = vunpack.c.l.b16 %v6949
    %v6996 = vunpack.c.h.b16 %v6949
    %v6997 = vunpack.c.l.b16 %v6950
    %v6998 = vunpack.c.h.b16 %v6950
    %v6999 = vpack.c.b16 %v6975, %v6967
    %v7000 = vpack.c.b16 %v6976, %v6968
    %v7001 = vpack.c.b16 %v6977, %v6969
    %v7002 = vpack.c.b16 %v6978, %v6970
    %v7003 = vpack.c.b16 %v6979, %v6971
    %v7004 = vpack.c.b16 %v6980, %v6972
    %v7005 = vpack.c.b16 %v6981, %v6973
    %v7006 = vpack.c.b16 %v6982, %v6974
    %v7007 = vpack.c.b16 %v6991, %v6983
    %v7008 = vpack.c.b16 %v6992, %v6984
    %v7009 = vpack.c.b16 %v6993, %v6985
    %v7010 = vpack.c.b16 %v6994, %v6986
    %v7011 = vpack.c.b16 %v6995, %v6987
    %v7012 = vpack.c.b16 %v6996, %v6988
    %v7013 = vpack.c.b16 %v6997, %v6989
    %v7014 = vpack.c.b16 %v6998, %v6990
    %v7032 = vsel %vm340, %v6934, 0
    %7034 = vmatprep.subr.bf16.mxu0 0
    %7035 = vmatpush1.bf16.msra.mxu0 0
    %7036 = vmatprep.subr.bf16.mxu0 0
    %7037 = vmatpush1.bf16.msra.mxu0 0
    %7038 = vmatprep.subr.bf16.mxu0 0
    %7039 = vmatpush1.bf16.msra.mxu0 0
    %7040 = vmatprep.subr.bf16.mxu0 0
    %7041 = vmatpush1.bf16.msra.mxu0 0
    %7042 = vmatprep.subr.bf16.mxu0 0
    %7043 = vmatpush1.bf16.msra.mxu0 0
    %7044 = vmatprep.subr.bf16.mxu0 0
    %7045 = vmatpush1.bf16.msra.mxu0 0
    %7046 = vmatprep.subr.bf16.mxu0 %v7008
    %7047 = vmatpush1.bf16.msra.mxu0 %v7007
    %7048 = vmatprep.subr.bf16.mxu0 %v7000
    %7049 = vmatpush1.bf16.msra.mxu0 %v6999
    %7050 = vmatprep.subr.bf16.mxu0 0
    %7051 = vmatpush2.bf16.msra.mxu0 0
    %7052 = vmatprep.subr.bf16.mxu0 0
    %7053 = vmatpush2.bf16.msra.mxu0 0
    %7054 = vmatprep.subr.bf16.mxu0 0
    %7055 = vmatpush2.bf16.msra.mxu0 0
    %7056 = vmatprep.subr.bf16.mxu0 0
    %7057 = vmatpush2.bf16.msra.mxu0 0
    %7058 = vmatprep.subr.bf16.mxu0 0
    %7059 = vmatpush2.bf16.msra.mxu0 0
    %7060 = vmatprep.subr.bf16.mxu0 0
    %7061 = vmatpush2.bf16.msra.mxu0 0
    %7062 = vmatprep.subr.bf16.mxu0 0
    %7063 = vmatpush2.bf16.msra.mxu0 0
    %7064 = vmatprep.subr.bf16.mxu0 0
    %7065 = vmatpush2.bf16.msra.mxu0 0
    %7066 = vmatprep.mubr.bf16.mxu0 0
    %7067 = vmatmul.mubr.bf16.gmra.mxu0 %v7032
    %v7068 = vpop.f32.mrf.mxu0
    %v7069 = vadd.f32 0.0, %v7068
    %v7070 = vpop.f32.mrf.mxu0
    %v7071 = vadd.f32 0.0, %v7070
    %v7072 = vpop.f32.mrf.mxu0
    %v7073 = vadd.f32 0.0, %v7072
    %v7074 = vpop.f32.mrf.mxu0
    %v7075 = vadd.f32 0.0, %v7074
    %7076 = vdwg.mxu0
    %7077 = vmatprep.subr.bf16.mxu0 0
    %7078 = vmatpush1.bf16.msra.mxu0 0
    %7079 = vmatprep.subr.bf16.mxu0 0
    %7080 = vmatpush1.bf16.msra.mxu0 0
    %7081 = vmatprep.subr.bf16.mxu0 0
    %7082 = vmatpush1.bf16.msra.mxu0 0
    %7083 = vmatprep.subr.bf16.mxu0 0
    %7084 = vmatpush1.bf16.msra.mxu0 0
    %7085 = vmatprep.subr.bf16.mxu0 0
    %7086 = vmatpush1.bf16.msra.mxu0 0
    %7087 = vmatprep.subr.bf16.mxu0 0
    %7088 = vmatpush1.bf16.msra.mxu0 0
    %7089 = vmatprep.subr.bf16.mxu0 %v7010
    %7090 = vmatpush1.bf16.msra.mxu0 %v7009
    %7091 = vmatprep.subr.bf16.mxu0 %v7002
    %7092 = vmatpush1.bf16.msra.mxu0 %v7001
    %7093 = vmatprep.subr.bf16.mxu0 0
    %7094 = vmatpush2.bf16.msra.mxu0 0
    %7095 = vmatprep.subr.bf16.mxu0 0
    %7096 = vmatpush2.bf16.msra.mxu0 0
    %7097 = vmatprep.subr.bf16.mxu0 0
    %7098 = vmatpush2.bf16.msra.mxu0 0
    %7099 = vmatprep.subr.bf16.mxu0 0
    %7100 = vmatpush2.bf16.msra.mxu0 0
    %7101 = vmatprep.subr.bf16.mxu0 0
    %7102 = vmatpush2.bf16.msra.mxu0 0
    %7103 = vmatprep.subr.bf16.mxu0 0
    %7104 = vmatpush2.bf16.msra.mxu0 0
    %7105 = vmatprep.subr.bf16.mxu0 0
    %7106 = vmatpush2.bf16.msra.mxu0 0
    %7107 = vmatprep.subr.bf16.mxu0 0
    %7108 = vmatpush2.bf16.msra.mxu0 0
    %7109 = vmatprep.mubr.bf16.mxu0 0
    %7110 = vmatmul.mubr.bf16.gmra.mxu0 %v7032
    %v7111 = vpop.f32.mrf.mxu0
    %v7112 = vadd.f32 0.0, %v7111
    %v7113 = vpop.f32.mrf.mxu0
    %v7114 = vadd.f32 0.0, %v7113
    %v7115 = vpop.f32.mrf.mxu0
    %v7116 = vadd.f32 0.0, %v7115
    %v7117 = vpop.f32.mrf.mxu0
    %v7118 = vadd.f32 0.0, %v7117
    %7119 = vdwg.mxu0
    %7120 = vmatprep.subr.bf16.mxu0 0
    %7121 = vmatpush1.bf16.msra.mxu0 0
    %7122 = vmatprep.subr.bf16.mxu0 0
    %7123 = vmatpush1.bf16.msra.mxu0 0
    %7124 = vmatprep.subr.bf16.mxu0 0
    %7125 = vmatpush1.bf16.msra.mxu0 0
    %7126 = vmatprep.subr.bf16.mxu0 0
    %7127 = vmatpush1.bf16.msra.mxu0 0
    %7128 = vmatprep.subr.bf16.mxu0 0
    %7129 = vmatpush1.bf16.msra.mxu0 0
    %7130 = vmatprep.subr.bf16.mxu0 0
    %7131 = vmatpush1.bf16.msra.mxu0 0
    %7132 = vmatprep.subr.bf16.mxu0 %v7012
    %7133 = vmatpush1.bf16.msra.mxu0 %v7011
    %7134 = vmatprep.subr.bf16.mxu0 %v7004
    %7135 = vmatpush1.bf16.msra.mxu0 %v7003
    %7136 = vmatprep.subr.bf16.mxu0 0
    %7137 = vmatpush2.bf16.msra.mxu0 0
    %7138 = vmatprep.subr.bf16.mxu0 0
    %7139 = vmatpush2.bf16.msra.mxu0 0
    %7140 = vmatprep.subr.bf16.mxu0 0
    %7141 = vmatpush2.bf16.msra.mxu0 0
    %7142 = vmatprep.subr.bf16.mxu0 0
    %7143 = vmatpush2.bf16.msra.mxu0 0
    %7144 = vmatprep.subr.bf16.mxu0 0
    %7145 = vmatpush2.bf16.msra.mxu0 0
    %7146 = vmatprep.subr.bf16.mxu0 0
    %7147 = vmatpush2.bf16.msra.mxu0 0
    %7148 = vmatprep.subr.bf16.mxu0 0
    %7149 = vmatpush2.bf16.msra.mxu0 0
    %7150 = vmatprep.subr.bf16.mxu0 0
    %7151 = vmatpush2.bf16.msra.mxu0 0
    %7152 = vmatprep.mubr.bf16.mxu0 0
    %7153 = vmatmul.mubr.bf16.gmra.mxu0 %v7032
    %v7154 = vpop.f32.mrf.mxu0
    %v7155 = vadd.f32 0.0, %v7154
    %v7156 = vpop.f32.mrf.mxu0
    %v7157 = vadd.f32 0.0, %v7156
    %v7158 = vpop.f32.mrf.mxu0
    %v7159 = vadd.f32 0.0, %v7158
    %v7160 = vpop.f32.mrf.mxu0
    %v7161 = vadd.f32 0.0, %v7160
    %7162 = vdwg.mxu0
    %7163 = vmatprep.subr.bf16.mxu0 0
    %7164 = vmatpush1.bf16.msra.mxu0 0
    %7165 = vmatprep.subr.bf16.mxu0 0
    %7166 = vmatpush1.bf16.msra.mxu0 0
    %7167 = vmatprep.subr.bf16.mxu0 0
    %7168 = vmatpush1.bf16.msra.mxu0 0
    %7169 = vmatprep.subr.bf16.mxu0 0
    %7170 = vmatpush1.bf16.msra.mxu0 0
    %7171 = vmatprep.subr.bf16.mxu0 0
    %7172 = vmatpush1.bf16.msra.mxu0 0
    %7173 = vmatprep.subr.bf16.mxu0 0
    %7174 = vmatpush1.bf16.msra.mxu0 0
    %7175 = vmatprep.subr.bf16.mxu0 %v7014
    %7176 = vmatpush1.bf16.msra.mxu0 %v7013
    %7177 = vmatprep.subr.bf16.mxu0 %v7006
    %7178 = vmatpush1.bf16.msra.mxu0 %v7005
    %7179 = vmatprep.subr.bf16.mxu0 0
    %7180 = vmatpush2.bf16.msra.mxu0 0
    %7181 = vmatprep.subr.bf16.mxu0 0
    %7182 = vmatpush2.bf16.msra.mxu0 0
    %7183 = vmatprep.subr.bf16.mxu0 0
    %7184 = vmatpush2.bf16.msra.mxu0 0
    %7185 = vmatprep.subr.bf16.mxu0 0
    %7186 = vmatpush2.bf16.msra.mxu0 0
    %7187 = vmatprep.subr.bf16.mxu0 0
    %7188 = vmatpush2.bf16.msra.mxu0 0
    %7189 = vmatprep.subr.bf16.mxu0 0
    %7190 = vmatpush2.bf16.msra.mxu0 0
    %7191 = vmatprep.subr.bf16.mxu0 0
    %7192 = vmatpush2.bf16.msra.mxu0 0
    %7193 = vmatprep.subr.bf16.mxu0 0
    %7194 = vmatpush2.bf16.msra.mxu0 0
    %7195 = vmatprep.mubr.bf16.mxu0 0
    %7196 = vmatmul.mubr.bf16.gmra.mxu0 %v7032
    %v7197 = vpop.f32.mrf.mxu0
    %v7198 = vadd.f32 0.0, %v7197
    %v7199 = vpop.f32.mrf.mxu0
    %v7200 = vadd.f32 0.0, %v7199
    %v7201 = vpop.f32.mrf.mxu0
    %v7202 = vadd.f32 0.0, %v7201
    %v7203 = vpop.f32.mrf.mxu0
    %v7204 = vadd.f32 0.0, %v7203
    %7205 = vdwg.mxu0
    %v7206 = vadd.f32 %v6918, %v7069
    %v7207 = vadd.f32 %v6919, %v7071
    %v7208 = vadd.f32 %v6920, %v7112
    %v7209 = vadd.f32 %v6921, %v7114
    %v7210 = vadd.f32 %v6922, %v7155
    %v7211 = vadd.f32 %v6923, %v7157
    %v7212 = vadd.f32 %v6924, %v7198
    %v7213 = vadd.f32 %v6925, %v7200
    %v7214 = vadd.f32 %v6926, %v7073
    %v7215 = vadd.f32 %v6927, %v7075
    %v7216 = vadd.f32 %v6928, %v7116
    %v7217 = vadd.f32 %v6929, %v7118
    %v7218 = vadd.f32 %v6930, %v7159
    %v7219 = vadd.f32 %v6931, %v7161
    %v7220 = vadd.f32 %v6932, %v7202
    %v7221 = vadd.f32 %v6933, %v7204
    %7222 = vst [vmem:[#allocation2] sm:$0xff] %v7206
    %7223 = vst [vmem:[#allocation2 + $0x8] sm:$0xff] %v7207
    %7224 = vst [vmem:[#allocation2 + $0x10] sm:$0xff] %v7208
    %7225 = vst [vmem:[#allocation2 + $0x18] sm:$0xff] %v7209
    %7226 = vst [vmem:[#allocation2 + $0x20] sm:$0xff] %v7210
    %7227 = vst [vmem:[#allocation2 + $0x28] sm:$0xff] %v7211
    %7228 = vst [vmem:[#allocation2 + $0x30] sm:$0xff] %v7212
    %7229 = vst [vmem:[#allocation2 + $0x38] sm:$0xff] %v7213
    %7230 = vst [vmem:[#allocation2 + $0x40] sm:$0xff] %v7214
    %7231 = vst [vmem:[#allocation2 + $0x48] sm:$0xff] %v7215
    %7232 = vst [vmem:[#allocation2 + $0x50] sm:$0xff] %v7216
    %7233 = vst [vmem:[#allocation2 + $0x58] sm:$0xff] %v7217
    %7234 = vst [vmem:[#allocation2 + $0x60] sm:$0xff] %v7218
    %7235 = vst [vmem:[#allocation2 + $0x68] sm:$0xff] %v7219
    %7236 = vst [vmem:[#allocation2 + $0x70] sm:$0xff] %v7220
    %7237 = vst [vmem:[#allocation2 + $0x78] sm:$0xff] %v7221
    %v7238 = vld [vmem:[#allocation2] sm:$0xff]
    %v7239 = vld [vmem:[#allocation2 + $0x8] sm:$0xff]
    %v7240 = vld [vmem:[#allocation2 + $0x10] sm:$0xff]
    %v7241 = vld [vmem:[#allocation2 + $0x18] sm:$0xff]
    %v7242 = vld [vmem:[#allocation2 + $0x20] sm:$0xff]
    %v7243 = vld [vmem:[#allocation2 + $0x28] sm:$0xff]
    %v7244 = vld [vmem:[#allocation2 + $0x30] sm:$0xff]
    %v7245 = vld [vmem:[#allocation2 + $0x38] sm:$0xff]
    %v7246 = vld [vmem:[#allocation2 + $0x40] sm:$0xff]
    %v7247 = vld [vmem:[#allocation2 + $0x48] sm:$0xff]
    %v7248 = vld [vmem:[#allocation2 + $0x50] sm:$0xff]
    %v7249 = vld [vmem:[#allocation2 + $0x58] sm:$0xff]
    %v7250 = vld [vmem:[#allocation2 + $0x60] sm:$0xff]
    %v7251 = vld [vmem:[#allocation2 + $0x68] sm:$0xff]
    %v7252 = vld [vmem:[#allocation2 + $0x70] sm:$0xff]
    %v7253 = vld [vmem:[#allocation2 + $0x78] sm:$0xff]
    %v7254 = vld [vmem:[%s49] sm:$0xff]
    %v7256 = vlaneseq
    %v7257 = vshrl.u32 %v7256, 7
    %v7258 = vsub.s32 0, %v7257
    %v7259 = vrot.slane %v7254, %v7258
    %v7260 = vlaneseq
    %v7261 = vshrl.u32 %v7260, 7
    %v7262 = vsub.s32 1, %v7261
    %v7263 = vrot.slane %v7254, %v7262
    %v7264 = vlaneseq
    %v7265 = vshrl.u32 %v7264, 7
    %v7266 = vsub.s32 2, %v7265
    %v7267 = vrot.slane %v7254, %v7266
    %v7268 = vlaneseq
    %v7269 = vshrl.u32 %v7268, 7
    %v7270 = vsub.s32 3, %v7269
    %v7271 = vrot.slane %v7254, %v7270
    %v7272 = vlaneseq
    %v7273 = vshrl.u32 %v7272, 7
    %v7274 = vsub.s32 4, %v7273
    %v7275 = vrot.slane %v7254, %v7274
    %v7276 = vlaneseq
    %v7277 = vshrl.u32 %v7276, 7
    %v7278 = vsub.s32 5, %v7277
    %v7279 = vrot.slane %v7254, %v7278
    %v7280 = vlaneseq
    %v7281 = vshrl.u32 %v7280, 7
    %v7282 = vsub.s32 6, %v7281
    %v7283 = vrot.slane %v7254, %v7282
    %v7284 = vlaneseq
    %v7285 = vshrl.u32 %v7284, 7
    %v7286 = vsub.s32 7, %v7285
    %v7287 = vrot.slane %v7254, %v7286
    %v7296 = vadd.f32 %v7238, %v7259
    %v7297 = vadd.f32 %v7239, %v7263
    %v7298 = vadd.f32 %v7240, %v7267
    %v7299 = vadd.f32 %v7241, %v7271
    %v7300 = vadd.f32 %v7242, %v7275
    %v7301 = vadd.f32 %v7243, %v7279
    %v7302 = vadd.f32 %v7244, %v7283
    %v7303 = vadd.f32 %v7245, %v7287
    %v7304 = vadd.f32 %v7246, %v7259
    %v7305 = vadd.f32 %v7247, %v7263
    %v7306 = vadd.f32 %v7248, %v7267
    %v7307 = vadd.f32 %v7249, %v7271
    %v7308 = vadd.f32 %v7250, %v7275
    %v7309 = vadd.f32 %v7251, %v7279
    %v7310 = vadd.f32 %v7252, %v7283
    %v7311 = vadd.f32 %v7253, %v7287
    %v7312 = vmax.f32 %v7296, 0.0
    %v7313 = vmax.f32 %v7297, 0.0
    %v7314 = vmax.f32 %v7298, 0.0
    %v7315 = vmax.f32 %v7299, 0.0
    %v7316 = vmax.f32 %v7300, 0.0
    %v7317 = vmax.f32 %v7301, 0.0
    %v7318 = vmax.f32 %v7302, 0.0
    %v7319 = vmax.f32 %v7303, 0.0
    %v7320 = vmax.f32 %v7304, 0.0
    %v7321 = vmax.f32 %v7305, 0.0
    %v7322 = vmax.f32 %v7306, 0.0
    %v7323 = vmax.f32 %v7307, 0.0
    %v7324 = vmax.f32 %v7308, 0.0
    %v7325 = vmax.f32 %v7309, 0.0
    %v7326 = vmax.f32 %v7310, 0.0
    %v7327 = vmax.f32 %v7311, 0.0
    %v7328 = vpack.c.bf16 %v7320, %v7312
    %v7329 = vpack.c.bf16 %v7321, %v7313
    %v7330 = vpack.c.bf16 %v7322, %v7314
    %v7331 = vpack.c.bf16 %v7323, %v7315
    %v7332 = vpack.c.bf16 %v7324, %v7316
    %v7333 = vpack.c.bf16 %v7325, %v7317
    %v7334 = vpack.c.bf16 %v7326, %v7318
    %v7335 = vpack.c.bf16 %v7327, %v7319
    %v7336 = vld [vmem:[#allocation12] sm:$0xf]
    %v7337 = vld [vmem:[#allocation12 + $0x4] sm:$0xf]
    %v7338 = vld [vmem:[#allocation12 + $0x8] sm:$0xf]
    %v7339 = vld [vmem:[#allocation12 + $0xc] sm:$0xf]
    %v7340 = vld [vmem:[#allocation12 + $0x10] sm:$0xf]
    %v7341 = vld [vmem:[#allocation12 + $0x14] sm:$0xf]
    %v7342 = vld [vmem:[#allocation12 + $0x18] sm:$0xf]
    %v7343 = vld [vmem:[#allocation12 + $0x1c] sm:$0xf]
    %v7344 = vld [vmem:[#allocation12 + $0x20] sm:$0xf]
    %v7345 = vld [vmem:[#allocation12 + $0x24] sm:$0xf]
    %v7346 = vld [vmem:[#allocation12 + $0x28] sm:$0xf]
    %v7347 = vld [vmem:[#allocation12 + $0x2c] sm:$0xf]
    %v7348 = vld [vmem:[#allocation12 + $0x30] sm:$0xf]
    %v7349 = vld [vmem:[#allocation12 + $0x34] sm:$0xf]
    %v7350 = vld [vmem:[#allocation12 + $0x38] sm:$0xf]
    %v7351 = vld [vmem:[#allocation12 + $0x3c] sm:$0xf]
    %v7352 = vld [vmem:[#allocation12 + $0x40] sm:$0xf]
    %v7353 = vld [vmem:[#allocation12 + $0x44] sm:$0xf]
    %v7354 = vld [vmem:[#allocation12 + $0x48] sm:$0xf]
    %v7355 = vld [vmem:[#allocation12 + $0x4c] sm:$0xf]
    %v7356 = vld [vmem:[#allocation12 + $0x50] sm:$0xf]
    %v7357 = vld [vmem:[#allocation12 + $0x54] sm:$0xf]
    %v7358 = vld [vmem:[#allocation12 + $0x58] sm:$0xf]
    %v7359 = vld [vmem:[#allocation12 + $0x5c] sm:$0xf]
    %v7360 = vld [vmem:[#allocation12 + $0x60] sm:$0xf]
    %v7361 = vld [vmem:[#allocation12 + $0x64] sm:$0xf]
    %v7362 = vld [vmem:[#allocation12 + $0x68] sm:$0xf]
    %v7363 = vld [vmem:[#allocation12 + $0x6c] sm:$0xf]
    %v7364 = vld [vmem:[#allocation12 + $0x70] sm:$0xf]
    %v7365 = vld [vmem:[#allocation12 + $0x74] sm:$0xf]
    %v7366 = vld [vmem:[#allocation12 + $0x78] sm:$0xf]
    %v7367 = vld [vmem:[#allocation12 + $0x7c] sm:$0xf]
    %v7368 = vld [vmem:[#allocation12 + $0x80] sm:$0xf]
    %v7369 = vld [vmem:[#allocation12 + $0x84] sm:$0xf]
    %v7370 = vld [vmem:[#allocation12 + $0x88] sm:$0xf]
    %v7371 = vld [vmem:[#allocation12 + $0x8c] sm:$0xf]
    %v7372 = vld [vmem:[#allocation12 + $0x90] sm:$0xf]
    %v7373 = vld [vmem:[#allocation12 + $0x94] sm:$0xf]
    %v7374 = vld [vmem:[#allocation12 + $0x98] sm:$0xf]
    %v7375 = vld [vmem:[#allocation12 + $0x9c] sm:$0xf]
    %v7376 = vld [vmem:[#allocation12 + $0xa0] sm:$0xf]
    %v7377 = vld [vmem:[#allocation12 + $0xa4] sm:$0xf]
    %v7378 = vld [vmem:[#allocation12 + $0xa8] sm:$0xf]
    %v7379 = vld [vmem:[#allocation12 + $0xac] sm:$0xf]
    %v7380 = vld [vmem:[#allocation12 + $0xb0] sm:$0xf]
    %v7381 = vld [vmem:[#allocation12 + $0xb4] sm:$0xf]
    %v7382 = vld [vmem:[#allocation12 + $0xb8] sm:$0xf]
    %v7383 = vld [vmem:[#allocation12 + $0xbc] sm:$0xf]
    %v7384 = vld [vmem:[#allocation12 + $0xc0] sm:$0xf]
    %v7385 = vld [vmem:[#allocation12 + $0xc4] sm:$0xf]
    %v7386 = vld [vmem:[#allocation12 + $0xc8] sm:$0xf]
    %v7387 = vld [vmem:[#allocation12 + $0xcc] sm:$0xf]
    %v7388 = vld [vmem:[#allocation12 + $0xd0] sm:$0xf]
    %v7389 = vld [vmem:[#allocation12 + $0xd4] sm:$0xf]
    %v7390 = vld [vmem:[#allocation12 + $0xd8] sm:$0xf]
    %v7391 = vld [vmem:[#allocation12 + $0xdc] sm:$0xf]
    %v7392 = vld [vmem:[#allocation12 + $0xe0] sm:$0xf]
    %v7393 = vld [vmem:[#allocation12 + $0xe4] sm:$0xf]
    %v7394 = vld [vmem:[#allocation12 + $0xe8] sm:$0xf]
    %v7395 = vld [vmem:[#allocation12 + $0xec] sm:$0xf]
    %v7396 = vld [vmem:[#allocation12 + $0xf0] sm:$0xf]
    %v7397 = vld [vmem:[#allocation12 + $0xf4] sm:$0xf]
    %v7398 = vld [vmem:[#allocation12 + $0xf8] sm:$0xf]
    %v7399 = vld [vmem:[#allocation12 + $0xfc] sm:$0xf]
    %v7400 = vld [vmem:[#allocation12 + $0x100] sm:$0xf]
    %v7401 = vld [vmem:[#allocation12 + $0x104] sm:$0xf]
    %v7402 = vld [vmem:[#allocation12 + $0x108] sm:$0xf]
    %v7403 = vld [vmem:[#allocation12 + $0x10c] sm:$0xf]
    %v7404 = vld [vmem:[#allocation12 + $0x110] sm:$0xf]
    %v7405 = vld [vmem:[#allocation12 + $0x114] sm:$0xf]
    %v7406 = vld [vmem:[#allocation12 + $0x118] sm:$0xf]
    %v7407 = vld [vmem:[#allocation12 + $0x11c] sm:$0xf]
    %v7408 = vld [vmem:[#allocation12 + $0x120] sm:$0xf]
    %v7409 = vld [vmem:[#allocation12 + $0x124] sm:$0xf]
    %v7410 = vld [vmem:[#allocation12 + $0x128] sm:$0xf]
    %v7411 = vld [vmem:[#allocation12 + $0x12c] sm:$0xf]
    %v7412 = vld [vmem:[#allocation12 + $0x130] sm:$0xf]
    %v7413 = vld [vmem:[#allocation12 + $0x134] sm:$0xf]
    %v7414 = vld [vmem:[#allocation12 + $0x138] sm:$0xf]
    %v7415 = vld [vmem:[#allocation12 + $0x13c] sm:$0xf]
    %v7416 = vld [vmem:[#allocation12 + $0x140] sm:$0xf]
    %v7417 = vld [vmem:[#allocation12 + $0x144] sm:$0xf]
    %v7418 = vld [vmem:[#allocation12 + $0x148] sm:$0xf]
    %v7419 = vld [vmem:[#allocation12 + $0x14c] sm:$0xf]
    %v7420 = vld [vmem:[#allocation12 + $0x150] sm:$0xf]
    %v7421 = vld [vmem:[#allocation12 + $0x154] sm:$0xf]
    %v7422 = vld [vmem:[#allocation12 + $0x158] sm:$0xf]
    %v7423 = vld [vmem:[#allocation12 + $0x15c] sm:$0xf]
    %v7424 = vld [vmem:[#allocation12 + $0x160] sm:$0xf]
    %v7425 = vld [vmem:[#allocation12 + $0x164] sm:$0xf]
    %v7426 = vld [vmem:[#allocation12 + $0x168] sm:$0xf]
    %v7427 = vld [vmem:[#allocation12 + $0x16c] sm:$0xf]
    %v7428 = vld [vmem:[#allocation12 + $0x170] sm:$0xf]
    %v7429 = vld [vmem:[#allocation12 + $0x174] sm:$0xf]
    %v7430 = vld [vmem:[#allocation12 + $0x178] sm:$0xf]
    %v7431 = vld [vmem:[#allocation12 + $0x17c] sm:$0xf]
    %v7432 = vld [vmem:[#allocation12 + $0x180] sm:$0xf]
    %v7433 = vld [vmem:[#allocation12 + $0x184] sm:$0xf]
    %v7434 = vld [vmem:[#allocation12 + $0x188] sm:$0xf]
    %v7435 = vld [vmem:[#allocation12 + $0x18c] sm:$0xf]
    %v7436 = vld [vmem:[#allocation12 + $0x190] sm:$0xf]
    %v7437 = vld [vmem:[#allocation12 + $0x194] sm:$0xf]
    %v7438 = vld [vmem:[#allocation12 + $0x198] sm:$0xf]
    %v7439 = vld [vmem:[#allocation12 + $0x19c] sm:$0xf]
    %v7440 = vld [vmem:[#allocation12 + $0x1a0] sm:$0xf]
    %v7441 = vld [vmem:[#allocation12 + $0x1a4] sm:$0xf]
    %v7442 = vld [vmem:[#allocation12 + $0x1a8] sm:$0xf]
    %v7443 = vld [vmem:[#allocation12 + $0x1ac] sm:$0xf]
    %v7444 = vld [vmem:[#allocation12 + $0x1b0] sm:$0xf]
    %v7445 = vld [vmem:[#allocation12 + $0x1b4] sm:$0xf]
    %v7446 = vld [vmem:[#allocation12 + $0x1b8] sm:$0xf]
    %v7447 = vld [vmem:[#allocation12 + $0x1bc] sm:$0xf]
    %v7448 = vld [vmem:[#allocation12 + $0x1c0] sm:$0xf]
    %v7449 = vld [vmem:[#allocation12 + $0x1c4] sm:$0xf]
    %v7450 = vld [vmem:[#allocation12 + $0x1c8] sm:$0xf]
    %v7451 = vld [vmem:[#allocation12 + $0x1cc] sm:$0xf]
    %v7452 = vld [vmem:[#allocation12 + $0x1d0] sm:$0xf]
    %v7453 = vld [vmem:[#allocation12 + $0x1d4] sm:$0xf]
    %v7454 = vld [vmem:[#allocation12 + $0x1d8] sm:$0xf]
    %v7455 = vld [vmem:[#allocation12 + $0x1dc] sm:$0xf]
    %v7456 = vld [vmem:[#allocation12 + $0x1e0] sm:$0xf]
    %v7457 = vld [vmem:[#allocation12 + $0x1e4] sm:$0xf]
    %v7458 = vld [vmem:[#allocation12 + $0x1e8] sm:$0xf]
    %v7459 = vld [vmem:[#allocation12 + $0x1ec] sm:$0xf]
    %v7460 = vld [vmem:[#allocation12 + $0x1f0] sm:$0xf]
    %v7461 = vld [vmem:[#allocation12 + $0x1f4] sm:$0xf]
    %v7462 = vld [vmem:[#allocation12 + $0x1f8] sm:$0xf]
    %v7463 = vld [vmem:[#allocation12 + $0x1fc] sm:$0xf]
    %v7464 = vld [vmem:[#allocation14] sm:$0x1]
    %v7466 = vlaneseq
    %v7467 = vshrl.u32 %v7466, 7
    %v7468 = vsub.s32 0, %v7467
    %v7469 = vrot.slane %v7464, %v7468
    %v7599 = vunpack.c.l.b16 %v7336
    %v7600 = vunpack.c.l.b16 %v7337
    %v7601 = vunpack.c.l.b16 %v7338
    %v7602 = vunpack.c.l.b16 %v7339
    %v7603 = vunpack.c.l.b16 %v7340
    %v7604 = vunpack.c.l.b16 %v7341
    %v7605 = vunpack.c.l.b16 %v7342
    %v7606 = vunpack.c.l.b16 %v7343
    %v7607 = vunpack.c.l.b16 %v7344
    %v7608 = vunpack.c.l.b16 %v7345
    %v7609 = vunpack.c.l.b16 %v7346
    %v7610 = vunpack.c.l.b16 %v7347
    %v7611 = vunpack.c.l.b16 %v7348
    %v7612 = vunpack.c.l.b16 %v7349
    %v7613 = vunpack.c.l.b16 %v7350
    %v7614 = vunpack.c.l.b16 %v7351
    %v7615 = vunpack.c.l.b16 %v7352
    %v7616 = vunpack.c.l.b16 %v7353
    %v7617 = vunpack.c.l.b16 %v7354
    %v7618 = vunpack.c.l.b16 %v7355
    %v7619 = vunpack.c.l.b16 %v7356
    %v7620 = vunpack.c.l.b16 %v7357
    %v7621 = vunpack.c.l.b16 %v7358
    %v7622 = vunpack.c.l.b16 %v7359
    %v7623 = vunpack.c.l.b16 %v7360
    %v7624 = vunpack.c.l.b16 %v7361
    %v7625 = vunpack.c.l.b16 %v7362
    %v7626 = vunpack.c.l.b16 %v7363
    %v7627 = vunpack.c.l.b16 %v7364
    %v7628 = vunpack.c.l.b16 %v7365
    %v7629 = vunpack.c.l.b16 %v7366
    %v7630 = vunpack.c.l.b16 %v7367
    %v7631 = vunpack.c.l.b16 %v7368
    %v7632 = vunpack.c.l.b16 %v7369
    %v7633 = vunpack.c.l.b16 %v7370
    %v7634 = vunpack.c.l.b16 %v7371
    %v7635 = vunpack.c.l.b16 %v7372
    %v7636 = vunpack.c.l.b16 %v7373
    %v7637 = vunpack.c.l.b16 %v7374
    %v7638 = vunpack.c.l.b16 %v7375
    %v7639 = vunpack.c.l.b16 %v7376
    %v7640 = vunpack.c.l.b16 %v7377
    %v7641 = vunpack.c.l.b16 %v7378
    %v7642 = vunpack.c.l.b16 %v7379
    %v7643 = vunpack.c.l.b16 %v7380
    %v7644 = vunpack.c.l.b16 %v7381
    %v7645 = vunpack.c.l.b16 %v7382
    %v7646 = vunpack.c.l.b16 %v7383
    %v7647 = vunpack.c.l.b16 %v7384
    %v7648 = vunpack.c.l.b16 %v7385
    %v7649 = vunpack.c.l.b16 %v7386
    %v7650 = vunpack.c.l.b16 %v7387
    %v7651 = vunpack.c.l.b16 %v7388
    %v7652 = vunpack.c.l.b16 %v7389
    %v7653 = vunpack.c.l.b16 %v7390
    %v7654 = vunpack.c.l.b16 %v7391
    %v7655 = vunpack.c.l.b16 %v7392
    %v7656 = vunpack.c.l.b16 %v7393
    %v7657 = vunpack.c.l.b16 %v7394
    %v7658 = vunpack.c.l.b16 %v7395
    %v7659 = vunpack.c.l.b16 %v7396
    %v7660 = vunpack.c.l.b16 %v7397
    %v7661 = vunpack.c.l.b16 %v7398
    %v7662 = vunpack.c.l.b16 %v7399
    %v7663 = vunpack.c.l.b16 %v7400
    %v7664 = vunpack.c.l.b16 %v7401
    %v7665 = vunpack.c.l.b16 %v7402
    %v7666 = vunpack.c.l.b16 %v7403
    %v7667 = vunpack.c.l.b16 %v7404
    %v7668 = vunpack.c.l.b16 %v7405
    %v7669 = vunpack.c.l.b16 %v7406
    %v7670 = vunpack.c.l.b16 %v7407
    %v7671 = vunpack.c.l.b16 %v7408
    %v7672 = vunpack.c.l.b16 %v7409
    %v7673 = vunpack.c.l.b16 %v7410
    %v7674 = vunpack.c.l.b16 %v7411
    %v7675 = vunpack.c.l.b16 %v7412
    %v7676 = vunpack.c.l.b16 %v7413
    %v7677 = vunpack.c.l.b16 %v7414
    %v7678 = vunpack.c.l.b16 %v7415
    %v7679 = vunpack.c.l.b16 %v7416
    %v7680 = vunpack.c.l.b16 %v7417
    %v7681 = vunpack.c.l.b16 %v7418
    %v7682 = vunpack.c.l.b16 %v7419
    %v7683 = vunpack.c.l.b16 %v7420
    %v7684 = vunpack.c.l.b16 %v7421
    %v7685 = vunpack.c.l.b16 %v7422
    %v7686 = vunpack.c.l.b16 %v7423
    %v7687 = vunpack.c.l.b16 %v7424
    %v7688 = vunpack.c.l.b16 %v7425
    %v7689 = vunpack.c.l.b16 %v7426
    %v7690 = vunpack.c.l.b16 %v7427
    %v7691 = vunpack.c.l.b16 %v7428
    %v7692 = vunpack.c.l.b16 %v7429
    %v7693 = vunpack.c.l.b16 %v7430
    %v7694 = vunpack.c.l.b16 %v7431
    %v7695 = vunpack.c.l.b16 %v7432
    %v7696 = vunpack.c.l.b16 %v7433
    %v7697 = vunpack.c.l.b16 %v7434
    %v7698 = vunpack.c.l.b16 %v7435
    %v7699 = vunpack.c.l.b16 %v7436
    %v7700 = vunpack.c.l.b16 %v7437
    %v7701 = vunpack.c.l.b16 %v7438
    %v7702 = vunpack.c.l.b16 %v7439
    %v7703 = vunpack.c.l.b16 %v7440
    %v7704 = vunpack.c.l.b16 %v7441
    %v7705 = vunpack.c.l.b16 %v7442
    %v7706 = vunpack.c.l.b16 %v7443
    %v7707 = vunpack.c.l.b16 %v7444
    %v7708 = vunpack.c.l.b16 %v7445
    %v7709 = vunpack.c.l.b16 %v7446
    %v7710 = vunpack.c.l.b16 %v7447
    %v7711 = vunpack.c.l.b16 %v7448
    %v7712 = vunpack.c.l.b16 %v7449
    %v7713 = vunpack.c.l.b16 %v7450
    %v7714 = vunpack.c.l.b16 %v7451
    %v7715 = vunpack.c.l.b16 %v7452
    %v7716 = vunpack.c.l.b16 %v7453
    %v7717 = vunpack.c.l.b16 %v7454
    %v7718 = vunpack.c.l.b16 %v7455
    %v7719 = vunpack.c.l.b16 %v7456
    %v7720 = vunpack.c.l.b16 %v7457
    %v7721 = vunpack.c.l.b16 %v7458
    %v7722 = vunpack.c.l.b16 %v7459
    %v7723 = vunpack.c.l.b16 %v7460
    %v7724 = vunpack.c.l.b16 %v7461
    %v7725 = vunpack.c.l.b16 %v7462
    %v7726 = vunpack.c.l.b16 %v7463
    %v7727 = vpack.c.b16 %v7600, %v7599
    %v7728 = vpack.c.b16 %v7602, %v7601
    %v7729 = vpack.c.b16 %v7604, %v7603
    %v7730 = vpack.c.b16 %v7606, %v7605
    %v7731 = vpack.c.b16 %v7608, %v7607
    %v7732 = vpack.c.b16 %v7610, %v7609
    %v7733 = vpack.c.b16 %v7612, %v7611
    %v7734 = vpack.c.b16 %v7614, %v7613
    %v7735 = vpack.c.b16 %v7616, %v7615
    %v7736 = vpack.c.b16 %v7618, %v7617
    %v7737 = vpack.c.b16 %v7620, %v7619
    %v7738 = vpack.c.b16 %v7622, %v7621
    %v7739 = vpack.c.b16 %v7624, %v7623
    %v7740 = vpack.c.b16 %v7626, %v7625
    %v7741 = vpack.c.b16 %v7628, %v7627
    %v7742 = vpack.c.b16 %v7630, %v7629
    %v7743 = vpack.c.b16 %v7632, %v7631
    %v7744 = vpack.c.b16 %v7634, %v7633
    %v7745 = vpack.c.b16 %v7636, %v7635
    %v7746 = vpack.c.b16 %v7638, %v7637
    %v7747 = vpack.c.b16 %v7640, %v7639
    %v7748 = vpack.c.b16 %v7642, %v7641
    %v7749 = vpack.c.b16 %v7644, %v7643
    %v7750 = vpack.c.b16 %v7646, %v7645
    %v7751 = vpack.c.b16 %v7648, %v7647
    %v7752 = vpack.c.b16 %v7650, %v7649
    %v7753 = vpack.c.b16 %v7652, %v7651
    %v7754 = vpack.c.b16 %v7654, %v7653
    %v7755 = vpack.c.b16 %v7656, %v7655
    %v7756 = vpack.c.b16 %v7658, %v7657
    %v7757 = vpack.c.b16 %v7660, %v7659
    %v7758 = vpack.c.b16 %v7662, %v7661
    %v7759 = vpack.c.b16 %v7664, %v7663
    %v7760 = vpack.c.b16 %v7666, %v7665
    %v7761 = vpack.c.b16 %v7668, %v7667
    %v7762 = vpack.c.b16 %v7670, %v7669
    %v7763 = vpack.c.b16 %v7672, %v7671
    %v7764 = vpack.c.b16 %v7674, %v7673
    %v7765 = vpack.c.b16 %v7676, %v7675
    %v7766 = vpack.c.b16 %v7678, %v7677
    %v7767 = vpack.c.b16 %v7680, %v7679
    %v7768 = vpack.c.b16 %v7682, %v7681
    %v7769 = vpack.c.b16 %v7684, %v7683
    %v7770 = vpack.c.b16 %v7686, %v7685
    %v7771 = vpack.c.b16 %v7688, %v7687
    %v7772 = vpack.c.b16 %v7690, %v7689
    %v7773 = vpack.c.b16 %v7692, %v7691
    %v7774 = vpack.c.b16 %v7694, %v7693
    %v7775 = vpack.c.b16 %v7696, %v7695
    %v7776 = vpack.c.b16 %v7698, %v7697
    %v7777 = vpack.c.b16 %v7700, %v7699
    %v7778 = vpack.c.b16 %v7702, %v7701
    %v7779 = vpack.c.b16 %v7704, %v7703
    %v7780 = vpack.c.b16 %v7706, %v7705
    %v7781 = vpack.c.b16 %v7708, %v7707
    %v7782 = vpack.c.b16 %v7710, %v7709
    %v7783 = vpack.c.b16 %v7712, %v7711
    %v7784 = vpack.c.b16 %v7714, %v7713
    %v7785 = vpack.c.b16 %v7716, %v7715
    %v7786 = vpack.c.b16 %v7718, %v7717
    %v7787 = vpack.c.b16 %v7720, %v7719
    %v7788 = vpack.c.b16 %v7722, %v7721
    %v7789 = vpack.c.b16 %v7724, %v7723
    %v7790 = vpack.c.b16 %v7726, %v7725
    %7855 = vmatprep.subr.bf16.mxu0 0
    %7856 = vmatpush1.bf16.msra.mxu0 %v7734
    %7857 = vmatprep.subr.bf16.mxu0 0
    %7858 = vmatpush1.bf16.msra.mxu0 %v7733
    %7859 = vmatprep.subr.bf16.mxu0 0
    %7860 = vmatpush1.bf16.msra.mxu0 %v7732
    %7861 = vmatprep.subr.bf16.mxu0 0
    %7862 = vmatpush1.bf16.msra.mxu0 %v7731
    %7863 = vmatprep.subr.bf16.mxu0 0
    %7864 = vmatpush1.bf16.msra.mxu0 %v7730
    %7865 = vmatprep.subr.bf16.mxu0 0
    %7866 = vmatpush1.bf16.msra.mxu0 %v7729
    %7867 = vmatprep.subr.bf16.mxu0 0
    %7868 = vmatpush1.bf16.msra.mxu0 %v7728
    %7869 = vmatprep.subr.bf16.mxu0 0
    %7870 = vmatpush1.bf16.msra.mxu0 %v7727
    %7871 = vmatprep.subr.bf16.mxu0 0
    %7872 = vmatpush2.bf16.msra.mxu0 %v7742
    %7873 = vmatprep.subr.bf16.mxu0 0
    %7874 = vmatpush2.bf16.msra.mxu0 %v7741
    %7875 = vmatprep.subr.bf16.mxu0 0
    %7876 = vmatpush2.bf16.msra.mxu0 %v7740
    %7877 = vmatprep.subr.bf16.mxu0 0
    %7878 = vmatpush2.bf16.msra.mxu0 %v7739
    %7879 = vmatprep.subr.bf16.mxu0 0
    %7880 = vmatpush2.bf16.msra.mxu0 %v7738
    %7881 = vmatprep.subr.bf16.mxu0 0
    %7882 = vmatpush2.bf16.msra.mxu0 %v7737
    %7883 = vmatprep.subr.bf16.mxu0 0
    %7884 = vmatpush2.bf16.msra.mxu0 %v7736
    %7885 = vmatprep.subr.bf16.mxu0 0
    %7886 = vmatpush2.bf16.msra.mxu0 %v7735
    %7887 = vmatprep.mubr.bf16.mxu0 %v7329
    %7888 = vmatmul.mubr.bf16.gmra.mxu0 %v7328
    %v7889 = vpop.f32.mrf.mxu0
    %v7890 = vadd.f32 %v7469, %v7889
    %v7891 = vpop.f32.mrf.mxu0
    %v7892 = vpop.f32.mrf.mxu0
    %v7893 = vadd.f32 %v7469, %v7892
    %v7894 = vpop.f32.mrf.mxu0
    %7895 = vdwg.mxu0
    %7896 = vmatprep.subr.bf16.mxu0 0
    %7897 = vmatpush1.bf16.msra.mxu0 %v7750
    %7898 = vmatprep.subr.bf16.mxu0 0
    %7899 = vmatpush1.bf16.msra.mxu0 %v7749
    %7900 = vmatprep.subr.bf16.mxu0 0
    %7901 = vmatpush1.bf16.msra.mxu0 %v7748
    %7902 = vmatprep.subr.bf16.mxu0 0
    %7903 = vmatpush1.bf16.msra.mxu0 %v7747
    %7904 = vmatprep.subr.bf16.mxu0 0
    %7905 = vmatpush1.bf16.msra.mxu0 %v7746
    %7906 = vmatprep.subr.bf16.mxu0 0
    %7907 = vmatpush1.bf16.msra.mxu0 %v7745
    %7908 = vmatprep.subr.bf16.mxu0 0
    %7909 = vmatpush1.bf16.msra.mxu0 %v7744
    %7910 = vmatprep.subr.bf16.mxu0 0
    %7911 = vmatpush1.bf16.msra.mxu0 %v7743
    %7912 = vmatprep.subr.bf16.mxu0 0
    %7913 = vmatpush2.bf16.msra.mxu0 %v7758
    %7914 = vmatprep.subr.bf16.mxu0 0
    %7915 = vmatpush2.bf16.msra.mxu0 %v7757
    %7916 = vmatprep.subr.bf16.mxu0 0
    %7917 = vmatpush2.bf16.msra.mxu0 %v7756
    %7918 = vmatprep.subr.bf16.mxu0 0
    %7919 = vmatpush2.bf16.msra.mxu0 %v7755
    %7920 = vmatprep.subr.bf16.mxu0 0
    %7921 = vmatpush2.bf16.msra.mxu0 %v7754
    %7922 = vmatprep.subr.bf16.mxu0 0
    %7923 = vmatpush2.bf16.msra.mxu0 %v7753
    %7924 = vmatprep.subr.bf16.mxu0 0
    %7925 = vmatpush2.bf16.msra.mxu0 %v7752
    %7926 = vmatprep.subr.bf16.mxu0 0
    %7927 = vmatpush2.bf16.msra.mxu0 %v7751
    %7928 = vmatprep.mubr.bf16.mxu0 %v7331
    %7929 = vmatmul.mubr.bf16.gmra.mxu0 %v7330
    %v7930 = vpop.f32.mrf.mxu0
    %v7931 = vadd.f32 %v7890, %v7930
    %v7932 = vpop.f32.mrf.mxu0
    %v7933 = vpop.f32.mrf.mxu0
    %v7934 = vadd.f32 %v7893, %v7933
    %v7935 = vpop.f32.mrf.mxu0
    %7936 = vdwg.mxu0
    %7937 = vmatprep.subr.bf16.mxu0 0
    %7938 = vmatpush1.bf16.msra.mxu0 %v7766
    %7939 = vmatprep.subr.bf16.mxu0 0
    %7940 = vmatpush1.bf16.msra.mxu0 %v7765
    %7941 = vmatprep.subr.bf16.mxu0 0
    %7942 = vmatpush1.bf16.msra.mxu0 %v7764
    %7943 = vmatprep.subr.bf16.mxu0 0
    %7944 = vmatpush1.bf16.msra.mxu0 %v7763
    %7945 = vmatprep.subr.bf16.mxu0 0
    %7946 = vmatpush1.bf16.msra.mxu0 %v7762
    %7947 = vmatprep.subr.bf16.mxu0 0
    %7948 = vmatpush1.bf16.msra.mxu0 %v7761
    %7949 = vmatprep.subr.bf16.mxu0 0
    %7950 = vmatpush1.bf16.msra.mxu0 %v7760
    %7951 = vmatprep.subr.bf16.mxu0 0
    %7952 = vmatpush1.bf16.msra.mxu0 %v7759
    %7953 = vmatprep.subr.bf16.mxu0 0
    %7954 = vmatpush2.bf16.msra.mxu0 %v7774
    %7955 = vmatprep.subr.bf16.mxu0 0
    %7956 = vmatpush2.bf16.msra.mxu0 %v7773
    %7957 = vmatprep.subr.bf16.mxu0 0
    %7958 = vmatpush2.bf16.msra.mxu0 %v7772
    %7959 = vmatprep.subr.bf16.mxu0 0
    %7960 = vmatpush2.bf16.msra.mxu0 %v7771
    %7961 = vmatprep.subr.bf16.mxu0 0
    %7962 = vmatpush2.bf16.msra.mxu0 %v7770
    %7963 = vmatprep.subr.bf16.mxu0 0
    %7964 = vmatpush2.bf16.msra.mxu0 %v7769
    %7965 = vmatprep.subr.bf16.mxu0 0
    %7966 = vmatpush2.bf16.msra.mxu0 %v7768
    %7967 = vmatprep.subr.bf16.mxu0 0
    %7968 = vmatpush2.bf16.msra.mxu0 %v7767
    %7969 = vmatprep.mubr.bf16.mxu0 %v7333
    %7970 = vmatmul.mubr.bf16.gmra.mxu0 %v7332
    %v7971 = vpop.f32.mrf.mxu0
    %v7972 = vadd.f32 %v7931, %v7971
    %v7973 = vpop.f32.mrf.mxu0
    %v7974 = vpop.f32.mrf.mxu0
    %v7975 = vadd.f32 %v7934, %v7974
    %v7976 = vpop.f32.mrf.mxu0
    %7977 = vdwg.mxu0
    %7978 = vmatprep.subr.bf16.mxu0 0
    %7979 = vmatpush1.bf16.msra.mxu0 %v7782
    %7980 = vmatprep.subr.bf16.mxu0 0
    %7981 = vmatpush1.bf16.msra.mxu0 %v7781
    %7982 = vmatprep.subr.bf16.mxu0 0
    %7983 = vmatpush1.bf16.msra.mxu0 %v7780
    %7984 = vmatprep.subr.bf16.mxu0 0
    %7985 = vmatpush1.bf16.msra.mxu0 %v7779
    %7986 = vmatprep.subr.bf16.mxu0 0
    %7987 = vmatpush1.bf16.msra.mxu0 %v7778
    %7988 = vmatprep.subr.bf16.mxu0 0
    %7989 = vmatpush1.bf16.msra.mxu0 %v7777
    %7990 = vmatprep.subr.bf16.mxu0 0
    %7991 = vmatpush1.bf16.msra.mxu0 %v7776
    %7992 = vmatprep.subr.bf16.mxu0 0
    %7993 = vmatpush1.bf16.msra.mxu0 %v7775
    %7994 = vmatprep.subr.bf16.mxu0 0
    %7995 = vmatpush2.bf16.msra.mxu0 %v7790
    %7996 = vmatprep.subr.bf16.mxu0 0
    %7997 = vmatpush2.bf16.msra.mxu0 %v7789
    %7998 = vmatprep.subr.bf16.mxu0 0
    %7999 = vmatpush2.bf16.msra.mxu0 %v7788
    %8000 = vmatprep.subr.bf16.mxu0 0
    %8001 = vmatpush2.bf16.msra.mxu0 %v7787
    %8002 = vmatprep.subr.bf16.mxu0 0
    %8003 = vmatpush2.bf16.msra.mxu0 %v7786
    %8004 = vmatprep.subr.bf16.mxu0 0
    %8005 = vmatpush2.bf16.msra.mxu0 %v7785
    %8006 = vmatprep.subr.bf16.mxu0 0
    %8007 = vmatpush2.bf16.msra.mxu0 %v7784
    %8008 = vmatprep.subr.bf16.mxu0 0
    %8009 = vmatpush2.bf16.msra.mxu0 %v7783
    %8010 = vmatprep.mubr.bf16.mxu0 %v7335
    %8011 = vmatmul.mubr.bf16.gmra.mxu0 %v7334
    %v8012 = vpop.f32.mrf.mxu0
    %v8013 = vadd.f32 %v7972, %v8012
    %v8014 = vpop.f32.mrf.mxu0
    %v8015 = vpop.f32.mrf.mxu0
    %v8016 = vadd.f32 %v7975, %v8015
    %v8017 = vpop.f32.mrf.mxu0
    %8018 = vdwg.mxu0
    %v8019 = vmax.f32 %v8013, 0.0
    %v8020 = vmax.f32 %v8016, 0.0
    %v8021 = vld [vmem:[#allocation15] sm:$0x1]
    %v8023 = vlaneseq
    %v8024 = vshrl.u32 %v8023, 7
    %v8025 = vsub.s32 0, %v8024
    %v8026 = vrot.slane %v8021, %v8025
    %v8028 = vmul.f32 %v8019, %v8026
    %v8029 = vmul.f32 %v8020, %v8026
    %8030 = vadd.xlane.f32.xlu0 %v8028
    %v8031 = vpop.xlane.xlu0 %8030
    %8032 = vadd.xlane.f32.xlu0 %v8029
    %v8033 = vpop.xlane.xlu0 %8032
    %v8034 = vld [vmem:[#allocation3] sm:$0x1]
    %v8036 = vlaneseq
    %v8037 = vshrl.u32 %v8036, 7
    %v8038 = vsub.s32 0, %v8037
    %v8039 = vrot.slane %v8034, %v8038
    %v8041 = vadd.f32 %v8031, %v8039
    %v8042 = vadd.f32 %v8033, %v8039
    %v8043 = vsub.f32 0.0, %v8041
    %v8044 = vsub.f32 0.0, %v8042
    %v8045 = vmul.f32 %v8043, 1.442695
    %v8046 = vpow.pop %v8045
    %v8047 = vmul.f32 %v8044, 1.442695
    %v8048 = vpow.pop %v8047
    %v8049 = vadd.f32 %v8046, 1.0
    %v8050 = vadd.f32 %v8048, 1.0
    %v8051 = vrcp.pop %v8049
    %v8052 = vmul.f32 1.0, %v8051
    %v8053 = vrcp.pop %v8050
    %v8054 = vmul.f32 1.0, %v8053
    %8056 = vset.pattern.permute.xlu0 0
    %8057 = vperm.xlu0 %8056, %v8052
    %v8058 = vpop.permute.xlu0 %8057
    %8061 = vset.pattern.permute.xlu0 0
    %8062 = vperm.xlu0 %8061, %v8054
    %v8063 = vpop.permute.xlu0 %8062
    %8065 = vst [vmem:[%s59] sm:$0xff] %v8058
    %8066 = vst [vmem:[%s59 + $0x8] sm:$0xff] %v8063
    // Predicated region
    $region150: #{transformer_model_forward.1} parent=1 // pred_check
      _
    $region151: #{transformer_model_forward.1} parent=1 // pred_check_branch
      %8068 = sbr.rel (0) target = $region153
    $region152: #{transformer_model_forward.1} parent=1 // pred_region
      _
    $region153: #{transformer_model_forward.1} parent=1 // pred_fallthru
      _
    // Predicated region
    $region154: #{transformer_model_forward.1} parent=1 // pred_check
      _
    $region155: #{transformer_model_forward.1} parent=1 // pred_check_branch
      %8070 = sbr.rel (0) target = $region157
    $region156: #{transformer_model_forward.1} parent=1 // pred_region
      _
    $region157: #{transformer_model_forward.1} parent=1 // pred_fallthru
      _
    %8071 = vsyncpa [#allocation5], 1
    %8072 = vsyncpa [#allocation7], 1
    %8073 = vsyncpa [#allocation10], 1
    %8074 = vsyncpa [#allocation13], 1
    %8075 = vsyncpa [#allocation16], 1

</llo_original>
